<compile_context>
chip_gen: v7x
topology: tpu7x:2x2x1
jax: 0.10.0
libtpu: 0.0.40
codegen_flags: <defaults>
</compile_context>

<pallas_src>
import jax
import jax.numpy as jnp
from jax.experimental import pallas as pl
from jax.experimental.pallas import tpu as pltpu


# ------------------------------ fused kernel -------------------------------

def _fcn_fused_kernel(x_ref,
                      w1, b1, w2, b2, w3, b3, w4, b4, w5, b5,
                      fcw_ref, fcb_ref, ow_ref, ob_ref,
                      o_ref):
    # x_ref: (L*tb, Cin) f32, time-major rows (row = t*tb + b).
    # conv w refs: (K, Cin, Cout) bf16 taps; biases (1, Cout) f32.
    # fcw_ref: (L, C5, 1024) bf16 (torch NCW-flatten permutation folded in).
    # ow_ref: (1024, W) bf16.  o_ref: (tb, W) f32.
    tb = o_ref.shape[0]            # batch rows per grid step
    L = fcw_ref.shape[0]           # window size
    wdt = fcw_ref.dtype            # bf16 (MXU-native)

    def conv_relu(h, w_ref, b_ref):
        # Conv1d(stride=1, dilation=1, padding='same') + ReLU.
        K, cin, cout = w_ref.shape
        left = (K - 1) // 2                        # torch 'same' left pad
        right = K - 1 - left
        parts = []
        if left:
            parts.append(jnp.zeros((left * tb, cin), jnp.float32))
        parts.append(h)
        if right:
            parts.append(jnp.zeros((right * tb, cin), jnp.float32))
        # Time-major rows: shifting time by d == shifting rows by d*tb, and the
        # global zero pad exactly reproduces per-sample 'same' padding (no
        # cross-sample bleed, no masking needed).
        hp = (jnp.concatenate(parts, axis=0) if len(parts) > 1 else h).astype(wdt)
        acc = jnp.zeros((L * tb, cout), jnp.float32)
        for k in range(K):                         # static unroll: K per-tap GEMMs
            xk = hp[k * tb:(k + L) * tb, :]
            if cin == 1:
                # Degenerate contraction (first layer): broadcast multiply on the
                # VPU instead of a K=1 MXU matmul.  f32 products (exact for bf16).
                acc = acc + xk.astype(jnp.float32) * w_ref[k].astype(jnp.float32)
            else:
                acc = acc + jnp.dot(xk, w_ref[k],
                                    preferred_element_type=jnp.float32)
        return jnp.maximum(acc + b_ref[...], 0.0)  # f32 bias + ReLU

    h = x_ref[...]
    for w_ref, b_ref in ((w1, b1), (w2, b2), (w3, b3), (w4, b4), (w5, b5)):
        h = conv_relu(h, w_ref, b_ref)

    # Flatten(start_dim=1) + LazyLinear(1024): torch flattens NCW as c*L + t; that
    # permutation is folded into fcw (L, C5, 1024), so the FC is a sum over time
    # of (tb, C5) x (C5, 1024) GEMMs on contiguous row blocks.
    nh = fcw_ref.shape[2]
    z = jnp.zeros((tb, nh), jnp.float32)
    for t in range(L):                             # static unroll
        z = z + jnp.dot(h[t * tb:(t + 1) * tb, :].astype(wdt), fcw_ref[t],
                        preferred_element_type=jnp.float32)
    z = z + fcb_ref[...]
    # TODO(synk): nn.Dropout(0.2) is identity at inference; training-mode masking
    # (pltpu.prng_*) is not implemented.
    o_ref[...] = jnp.dot(z.astype(wdt), ow_ref[...],
                         preferred_element_type=jnp.float32) + ob_ref[...]


# ------------------------------ param handling -----------------------------

def init_params(key, window_size, c_in=1):
    """Random params in a PyTorch-equivalent layout (all f32).
    Conv taps stored as (K, Cin, Cout) = torch weight (Cout, Cin, K) transposed;
    fc_w rows are in torch's NCW flatten order (index = c*L + t)."""
    conv_shapes = [(10, c_in, 30), (8, 30, 30), (6, 30, 40), (5, 40, 50), (5, 50, 50)]
    keys = jax.random.split(key, 2 * len(conv_shapes) + 4)
    params = {"convs": []}
    i = 0
    for (K, ci, co) in conv_shapes:
        w = jax.random.normal(keys[i], (K, ci, co), jnp.float32) * 0.05
        b = jax.random.normal(keys[i + 1], (co,), jnp.float32) * 0.05
        params["convs"].append((w, b))
        i += 2
    c5 = conv_shapes[-1][-1]
    din = c5 * window_size  # LazyLinear resolves to 50 * L after the conv stack
    params["fc_w"] = jax.random.normal(keys[i], (din, 1024), jnp.float32) * 0.02
    params["fc_b"] = jax.random.normal(keys[i + 1], (1024,), jnp.float32) * 0.02
    params["out_w"] = jax.random.normal(keys[i + 2], (1024, window_size), jnp.float32) * 0.02
    params["out_b"] = jax.random.normal(keys[i + 3], (window_size,), jnp.float32) * 0.02
    return params


def prepare_params(params, window_size, weight_dtype=jnp.bfloat16):
    """Turn torch-layout params into kernel-ready constants (once, off the hot path).
    Conv weights stay as COMPACT taps (K, Cin, Cout) — no banded/Toeplitz blow-up."""
    L = window_size
    prep = {"convs": []}
    for (w, b) in params["convs"]:
        prep["convs"].append((w.astype(weight_dtype),
                              b.reshape(1, -1).astype(jnp.float32)))
    # Fold torch's NCW Flatten (row index c*L + t) into fc_w -> (L, C5, 1024),
    # so the kernel contracts per time step over contiguous channel slices.
    c5 = params["convs"][-1][0].shape[-1]
    fc_w = params["fc_w"].reshape(c5, L, -1).transpose(1, 0, 2)   # (L, C5, 1024)
    prep["fc_w"] = fc_w.astype(weight_dtype)
    prep["fc_b"] = params["fc_b"].reshape(1, -1).astype(jnp.float32)
    prep["out_w"] = params["out_w"].astype(weight_dtype)
    prep["out_b"] = params["out_b"].reshape(1, -1).astype(jnp.float32)
    return prep


# --------------------------------- wrapper ----------------------------------

def _round_up(x, m):
    return ((x + m - 1) // m) * m


def fcn_forward(prepared, x_ncw, *, tile_b_cap=256):
    """x_ncw: (B, c_in, L) like the PyTorch module.  Returns (B, 1, window_size)."""
    B, c_in, L = x_ncw.shape
    W = prepared["out_b"].shape[-1]

    # Batch tile: >=8 rows (sublane alignment -> all in-kernel row offsets are
    # 8-aligned), capped for large-batch weight-resident streaming.
    tile_b = min(tile_b_cap, _round_up(B, 8))
    n_tiles = pl.cdiv(B, tile_b)
    b_pad = n_tiles * tile_b

    # NCW -> time-major rows per tile: (n_tiles, L*tile_b, Cin), row = t*tile_b + b.
    xt = jnp.transpose(x_ncw, (2, 0, 1))                     # (L, B, Cin)
    if b_pad != B:
        xt = jnp.pad(xt, ((0, 0), (0, b_pad - B), (0, 0)))
    x_rows = (xt.reshape(L, n_tiles, tile_b, c_in)
                .transpose(1, 0, 2, 3)
                .reshape(n_tiles, L * tile_b, c_in))

    args = [x_rows]
    in_specs = [pl.BlockSpec((None, L * tile_b, c_in), lambda i: (i, 0, 0))]
    for w, b in prepared["convs"]:
        args += [w, b]
        # Constant index maps -> weights DMA'd once, stay resident across tiles.
        in_specs += [pl.BlockSpec(w.shape, lambda i: (0, 0, 0)),
                     pl.BlockSpec(b.shape, lambda i: (0, 0))]
    args += [prepared["fc_w"], prepared["fc_b"], prepared["out_w"], prepared["out_b"]]
    in_specs += [pl.BlockSpec(prepared["fc_w"].shape, lambda i: (0, 0, 0)),
                 pl.BlockSpec(prepared["fc_b"].shape, lambda i: (0, 0)),
                 pl.BlockSpec(prepared["out_w"].shape, lambda i: (0, 0)),
                 pl.BlockSpec(prepared["out_b"].shape, lambda i: (0, 0))]

    # Only split tiles across cores when there is more than one tile; otherwise
    # "parallel" would just duplicate the (dominant) weight DMA on v7x.
    semantics = ("parallel",) if n_tiles > 1 else ("arbitrary",)

    out = pl.pallas_call(
        _fcn_fused_kernel,
        out_shape=jax.ShapeDtypeStruct((n_tiles, tile_b, W), jnp.float32),
        grid=(n_tiles,),
        in_specs=in_specs,
        out_specs=pl.BlockSpec((None, tile_b, W), lambda i: (i, 0, 0)),
        compiler_params=pltpu.CompilerParams(
            dimension_semantics=semantics,
            vmem_limit_bytes=32 * 1024 * 1024),
    )(*args)

    out = out.reshape(b_pad, W)[:B]
    return out[:, None, :]                                   # unsqueeze(1) for seq2seq


# ------------------------- pure-JAX reference check --------------------------

def fcn_reference(params, x_ncw):
    """Plain-JAX emulation of the PyTorch forward (weights/activations quantized to
    bf16 at the same points as the kernel, f32 accumulation) for a tight check."""
    qc = lambda a: a.astype(jnp.bfloat16).astype(jnp.float32)
    B, _, L = x_ncw.shape
    h = jnp.transpose(x_ncw, (0, 2, 1))                      # (B, L, C)
    for (w, b) in params["convs"]:
        K, _, cout = w.shape
        left = (K - 1) // 2
        hp = jnp.pad(h, ((0, 0), (left, K - 1 - left), (0, 0)))
        hpq, wq = qc(hp), qc(w)
        y = jnp.zeros((B, L, cout), jnp.float32)
        for k in range(K):                                   # cross-correlation, 'same'
            y = y + jnp.einsum("blc,co->blo", hpq[:, k:k + L, :], wq[k],
                               preferred_element_type=jnp.float32)
        h = jax.nn.relu(y + b[None, None, :])
    hf = jnp.transpose(h, (0, 2, 1)).reshape(B, -1)          # torch Flatten on NCW: c*L + t
    z = qc(hf) @ qc(params["fc_w"]) + params["fc_b"][None, :]
    out = qc(z) @ qc(params["out_w"]) + params["out_b"][None, :]
    return out[:, None, :]


if __name__ == "__main__":
    window_size = 16
    batch = 2
    c_in = 1

    key = jax.random.PRNGKey(0)
    k_param, k_x = jax.random.split(key)
    params = init_params(k_param, window_size, c_in)
    prepared = prepare_params(params, window_size)
    x = jax.random.normal(k_x, (batch, c_in, window_size), jnp.float32)

    out = jax.jit(fcn_forward)(prepared, x)
    jax.block_until_ready(out)
    assert out.shape == (batch, 1, window_size), out.shape

    ref = fcn_reference(params, x)
    err = float(jnp.max(jnp.abs(out - ref)))
    assert err < 2e-3, f"max abs diff vs reference = {err}"
    print("KERNEL_OK")
</pallas_src>

<mosaic_0001>
module attributes {stable_mosaic.version = 11 : i64} {
  func.func @_fcn_fused_kernel(%arg0: i32, %arg1: memref<1x128x1xf32, #tpu.memory_space<vmem>>, %arg2: memref<10x1x30xbf16, #tpu.memory_space<vmem>>, %arg3: memref<1x30xf32, #tpu.memory_space<vmem>>, %arg4: memref<8x30x30xbf16, #tpu.memory_space<vmem>>, %arg5: memref<1x30xf32, #tpu.memory_space<vmem>>, %arg6: memref<6x30x40xbf16, #tpu.memory_space<vmem>>, %arg7: memref<1x40xf32, #tpu.memory_space<vmem>>, %arg8: memref<5x40x50xbf16, #tpu.memory_space<vmem>>, %arg9: memref<1x50xf32, #tpu.memory_space<vmem>>, %arg10: memref<5x50x50xbf16, #tpu.memory_space<vmem>>, %arg11: memref<1x50xf32, #tpu.memory_space<vmem>>, %arg12: memref<16x50x1024xbf16, #tpu.memory_space<vmem>>, %arg13: memref<1x1024xf32, #tpu.memory_space<vmem>>, %arg14: memref<1024x16xbf16, #tpu.memory_space<vmem>>, %arg15: memref<1x16xf32, #tpu.memory_space<vmem>>, %arg16: memref<1x8x16xf32, #tpu.memory_space<vmem>>) attributes {dimension_semantics = [#tpu.dimension_semantics<arbitrary>], iteration_bounds = array<i64: 1>, scalar_prefetch = 0 : i64, scratch_operands = 0 : i64, tpu.core_type = #tpu.core_type<tc>, window_params = [{transform_indices = @transform_0, window_bounds = array<i64: 1, 128, 1>}, {pipeline_mode = #tpu.pipeline_mode<synchronous>, transform_indices = @transform_1, window_bounds = array<i64: 10, 1, 30>}, {pipeline_mode = #tpu.pipeline_mode<synchronous>, transform_indices = @transform_2, window_bounds = array<i64: 1, 30>}, {pipeline_mode = #tpu.pipeline_mode<synchronous>, transform_indices = @transform_3, window_bounds = array<i64: 8, 30, 30>}, {pipeline_mode = #tpu.pipeline_mode<synchronous>, transform_indices = @transform_4, window_bounds = array<i64: 1, 30>}, {pipeline_mode = #tpu.pipeline_mode<synchronous>, transform_indices = @transform_5, window_bounds = array<i64: 6, 30, 40>}, {pipeline_mode = #tpu.pipeline_mode<synchronous>, transform_indices = @transform_6, window_bounds = array<i64: 1, 40>}, {pipeline_mode = #tpu.pipeline_mode<synchronous>, transform_indices = @transform_7, window_bounds = array<i64: 5, 40, 50>}, {pipeline_mode = #tpu.pipeline_mode<synchronous>, transform_indices = @transform_8, window_bounds = array<i64: 1, 50>}, {pipeline_mode = #tpu.pipeline_mode<synchronous>, transform_indices = @transform_9, window_bounds = array<i64: 5, 50, 50>}, {pipeline_mode = #tpu.pipeline_mode<synchronous>, transform_indices = @transform_10, window_bounds = array<i64: 1, 50>}, {pipeline_mode = #tpu.pipeline_mode<synchronous>, transform_indices = @transform_11, window_bounds = array<i64: 16, 50, 1024>}, {pipeline_mode = #tpu.pipeline_mode<synchronous>, transform_indices = @transform_12, window_bounds = array<i64: 1, 1024>}, {pipeline_mode = #tpu.pipeline_mode<synchronous>, transform_indices = @transform_13, window_bounds = array<i64: 1024, 16>}, {pipeline_mode = #tpu.pipeline_mode<synchronous>, transform_indices = @transform_14, window_bounds = array<i64: 1, 16>}, {transform_indices = @transform_15, window_bounds = array<i64: 1, 8, 16>}]} {
    %c0 = arith.constant 0 : index
    %c0_0 = arith.constant 0 : index
    %c0_1 = arith.constant 0 : index
    %0 = vector.load %arg1[%c0, %c0_0, %c0_1] : memref<1x128x1xf32, #tpu.memory_space<vmem>>, vector<1x128x1xf32>
    %1 = vector.shape_cast %0 : vector<1x128x1xf32> to vector<128x1xf32>
    %cst = arith.constant 0.000000e+00 : f32
    %2 = vector.broadcast %cst : f32 to vector<32x1xf32>
    %cst_2 = arith.constant 0.000000e+00 : f32
    %3 = vector.broadcast %cst_2 : f32 to vector<40x1xf32>
    %4 = tpu.concatenate %2, %1, %3 in 0 : vector<32x1xf32>, vector<128x1xf32>, vector<40x1xf32> -> vector<200x1xf32>
    %5 = arith.truncf %4 : vector<200x1xf32> to vector<200x1xbf16>
    %cst_3 = arith.constant 0.000000e+00 : f32
    %6 = vector.broadcast %cst_3 : f32 to vector<128x30xf32>
    %7 = vector.extract_strided_slice %5 {offsets = [0, 0], sizes = [128, 1], strides = [1, 1]} : vector<200x1xbf16> to vector<128x1xbf16>
    %8 = arith.extf %7 : vector<128x1xbf16> to vector<128x1xf32>
    %c0_4 = arith.constant 0 : index
    %c0_5 = arith.constant 0 : index
    %c0_6 = arith.constant 0 : index
    %9 = vector.load %arg2[%c0_4, %c0_5, %c0_6] : memref<10x1x30xbf16, #tpu.memory_space<vmem>>, vector<1x1x30xbf16>
    %10 = vector.shape_cast %9 : vector<1x1x30xbf16> to vector<1x30xbf16>
    %11 = arith.extf %10 : vector<1x30xbf16> to vector<1x30xf32>
    %12 = vector.broadcast %8 : vector<128x1xf32> to vector<128x30xf32>
    %13 = vector.broadcast %11 : vector<1x30xf32> to vector<128x30xf32>
    %14 = arith.mulf %12, %13 : vector<128x30xf32>
    %15 = arith.addf %6, %14 : vector<128x30xf32>
    %16 = vector.extract_strided_slice %5 {offsets = [8, 0], sizes = [128, 1], strides = [1, 1]} : vector<200x1xbf16> to vector<128x1xbf16>
    %17 = arith.extf %16 : vector<128x1xbf16> to vector<128x1xf32>
    %c1 = arith.constant 1 : index
    %c0_7 = arith.constant 0 : index
    %c0_8 = arith.constant 0 : index
    %18 = vector.load %arg2[%c1, %c0_7, %c0_8] : memref<10x1x30xbf16, #tpu.memory_space<vmem>>, vector<1x1x30xbf16>
    %19 = vector.shape_cast %18 : vector<1x1x30xbf16> to vector<1x30xbf16>
    %20 = arith.extf %19 : vector<1x30xbf16> to vector<1x30xf32>
    %21 = vector.broadcast %17 : vector<128x1xf32> to vector<128x30xf32>
    %22 = vector.broadcast %20 : vector<1x30xf32> to vector<128x30xf32>
    %23 = arith.mulf %21, %22 : vector<128x30xf32>
    %24 = arith.addf %15, %23 : vector<128x30xf32>
    %25 = vector.extract_strided_slice %5 {offsets = [16, 0], sizes = [128, 1], strides = [1, 1]} : vector<200x1xbf16> to vector<128x1xbf16>
    %26 = arith.extf %25 : vector<128x1xbf16> to vector<128x1xf32>
    %c2 = arith.constant 2 : index
    %c0_9 = arith.constant 0 : index
    %c0_10 = arith.constant 0 : index
    %27 = vector.load %arg2[%c2, %c0_9, %c0_10] : memref<10x1x30xbf16, #tpu.memory_space<vmem>>, vector<1x1x30xbf16>
    %28 = vector.shape_cast %27 : vector<1x1x30xbf16> to vector<1x30xbf16>
    %29 = arith.extf %28 : vector<1x30xbf16> to vector<1x30xf32>
    %30 = vector.broadcast %26 : vector<128x1xf32> to vector<128x30xf32>
    %31 = vector.broadcast %29 : vector<1x30xf32> to vector<128x30xf32>
    %32 = arith.mulf %30, %31 : vector<128x30xf32>
    %33 = arith.addf %24, %32 : vector<128x30xf32>
    %34 = vector.extract_strided_slice %5 {offsets = [24, 0], sizes = [128, 1], strides = [1, 1]} : vector<200x1xbf16> to vector<128x1xbf16>
    %35 = arith.extf %34 : vector<128x1xbf16> to vector<128x1xf32>
    %c3 = arith.constant 3 : index
    %c0_11 = arith.constant 0 : index
    %c0_12 = arith.constant 0 : index
    %36 = vector.load %arg2[%c3, %c0_11, %c0_12] : memref<10x1x30xbf16, #tpu.memory_space<vmem>>, vector<1x1x30xbf16>
    %37 = vector.shape_cast %36 : vector<1x1x30xbf16> to vector<1x30xbf16>
    %38 = arith.extf %37 : vector<1x30xbf16> to vector<1x30xf32>
    %39 = vector.broadcast %35 : vector<128x1xf32> to vector<128x30xf32>
    %40 = vector.broadcast %38 : vector<1x30xf32> to vector<128x30xf32>
    %41 = arith.mulf %39, %40 : vector<128x30xf32>
    %42 = arith.addf %33, %41 : vector<128x30xf32>
    %43 = vector.extract_strided_slice %5 {offsets = [32, 0], sizes = [128, 1], strides = [1, 1]} : vector<200x1xbf16> to vector<128x1xbf16>
    %44 = arith.extf %43 : vector<128x1xbf16> to vector<128x1xf32>
    %c4 = arith.constant 4 : index
    %c0_13 = arith.constant 0 : index
    %c0_14 = arith.constant 0 : index
    %45 = vector.load %arg2[%c4, %c0_13, %c0_14] : memref<10x1x30xbf16, #tpu.memory_space<vmem>>, vector<1x1x30xbf16>
    %46 = vector.shape_cast %45 : vector<1x1x30xbf16> to vector<1x30xbf16>
    %47 = arith.extf %46 : vector<1x30xbf16> to vector<1x30xf32>
    %48 = vector.broadcast %44 : vector<128x1xf32> to vector<128x30xf32>
    %49 = vector.broadcast %47 : vector<1x30xf32> to vector<128x30xf32>
    %50 = arith.mulf %48, %49 : vector<128x30xf32>
    %51 = arith.addf %42, %50 : vector<128x30xf32>
    %52 = vector.extract_strided_slice %5 {offsets = [40, 0], sizes = [128, 1], strides = [1, 1]} : vector<200x1xbf16> to vector<128x1xbf16>
    %53 = arith.extf %52 : vector<128x1xbf16> to vector<128x1xf32>
    %c5 = arith.constant 5 : index
    %c0_15 = arith.constant 0 : index
    %c0_16 = arith.constant 0 : index
    %54 = vector.load %arg2[%c5, %c0_15, %c0_16] : memref<10x1x30xbf16, #tpu.memory_space<vmem>>, vector<1x1x30xbf16>
    %55 = vector.shape_cast %54 : vector<1x1x30xbf16> to vector<1x30xbf16>
    %56 = arith.extf %55 : vector<1x30xbf16> to vector<1x30xf32>
    %57 = vector.broadcast %53 : vector<128x1xf32> to vector<128x30xf32>
    %58 = vector.broadcast %56 : vector<1x30xf32> to vector<128x30xf32>
    %59 = arith.mulf %57, %58 : vector<128x30xf32>
    %60 = arith.addf %51, %59 : vector<128x30xf32>
    %61 = vector.extract_strided_slice %5 {offsets = [48, 0], sizes = [128, 1], strides = [1, 1]} : vector<200x1xbf16> to vector<128x1xbf16>
    %62 = arith.extf %61 : vector<128x1xbf16> to vector<128x1xf32>
    %c6 = arith.constant 6 : index
    %c0_17 = arith.constant 0 : index
    %c0_18 = arith.constant 0 : index
    %63 = vector.load %arg2[%c6, %c0_17, %c0_18] : memref<10x1x30xbf16, #tpu.memory_space<vmem>>, vector<1x1x30xbf16>
    %64 = vector.shape_cast %63 : vector<1x1x30xbf16> to vector<1x30xbf16>
    %65 = arith.extf %64 : vector<1x30xbf16> to vector<1x30xf32>
    %66 = vector.broadcast %62 : vector<128x1xf32> to vector<128x30xf32>
    %67 = vector.broadcast %65 : vector<1x30xf32> to vector<128x30xf32>
    %68 = arith.mulf %66, %67 : vector<128x30xf32>
    %69 = arith.addf %60, %68 : vector<128x30xf32>
    %70 = vector.extract_strided_slice %5 {offsets = [56, 0], sizes = [128, 1], strides = [1, 1]} : vector<200x1xbf16> to vector<128x1xbf16>
    %71 = arith.extf %70 : vector<128x1xbf16> to vector<128x1xf32>
    %c7 = arith.constant 7 : index
    %c0_19 = arith.constant 0 : index
    %c0_20 = arith.constant 0 : index
    %72 = vector.load %arg2[%c7, %c0_19, %c0_20] : memref<10x1x30xbf16, #tpu.memory_space<vmem>>, vector<1x1x30xbf16>
    %73 = vector.shape_cast %72 : vector<1x1x30xbf16> to vector<1x30xbf16>
    %74 = arith.extf %73 : vector<1x30xbf16> to vector<1x30xf32>
    %75 = vector.broadcast %71 : vector<128x1xf32> to vector<128x30xf32>
    %76 = vector.broadcast %74 : vector<1x30xf32> to vector<128x30xf32>
    %77 = arith.mulf %75, %76 : vector<128x30xf32>
    %78 = arith.addf %69, %77 : vector<128x30xf32>
    %79 = vector.extract_strided_slice %5 {offsets = [64, 0], sizes = [128, 1], strides = [1, 1]} : vector<200x1xbf16> to vector<128x1xbf16>
    %80 = arith.extf %79 : vector<128x1xbf16> to vector<128x1xf32>
    %c8 = arith.constant 8 : index
    %c0_21 = arith.constant 0 : index
    %c0_22 = arith.constant 0 : index
    %81 = vector.load %arg2[%c8, %c0_21, %c0_22] : memref<10x1x30xbf16, #tpu.memory_space<vmem>>, vector<1x1x30xbf16>
    %82 = vector.shape_cast %81 : vector<1x1x30xbf16> to vector<1x30xbf16>
    %83 = arith.extf %82 : vector<1x30xbf16> to vector<1x30xf32>
    %84 = vector.broadcast %80 : vector<128x1xf32> to vector<128x30xf32>
    %85 = vector.broadcast %83 : vector<1x30xf32> to vector<128x30xf32>
    %86 = arith.mulf %84, %85 : vector<128x30xf32>
    %87 = arith.addf %78, %86 : vector<128x30xf32>
    %88 = vector.extract_strided_slice %5 {offsets = [72, 0], sizes = [128, 1], strides = [1, 1]} : vector<200x1xbf16> to vector<128x1xbf16>
    %89 = arith.extf %88 : vector<128x1xbf16> to vector<128x1xf32>
    %c9 = arith.constant 9 : index
    %c0_23 = arith.constant 0 : index
    %c0_24 = arith.constant 0 : index
    %90 = vector.load %arg2[%c9, %c0_23, %c0_24] : memref<10x1x30xbf16, #tpu.memory_space<vmem>>, vector<1x1x30xbf16>
    %91 = vector.shape_cast %90 : vector<1x1x30xbf16> to vector<1x30xbf16>
    %92 = arith.extf %91 : vector<1x30xbf16> to vector<1x30xf32>
    %93 = vector.broadcast %89 : vector<128x1xf32> to vector<128x30xf32>
    %94 = vector.broadcast %92 : vector<1x30xf32> to vector<128x30xf32>
    %95 = arith.mulf %93, %94 : vector<128x30xf32>
    %96 = arith.addf %87, %95 : vector<128x30xf32>
    %c0_25 = arith.constant 0 : index
    %c0_26 = arith.constant 0 : index
    %97 = vector.load %arg3[%c0_25, %c0_26] : memref<1x30xf32, #tpu.memory_space<vmem>>, vector<1x30xf32>
    %98 = vector.broadcast %97 : vector<1x30xf32> to vector<128x30xf32>
    %99 = arith.addf %96, %98 : vector<128x30xf32>
    %cst_27 = arith.constant 0.000000e+00 : f32
    %100 = vector.broadcast %cst_27 : f32 to vector<128x30xf32>
    %101 = arith.maximumf %99, %100 : vector<128x30xf32>
    %cst_28 = arith.constant 0.000000e+00 : f32
    %102 = vector.broadcast %cst_28 : f32 to vector<24x30xf32>
    %cst_29 = arith.constant 0.000000e+00 : f32
    %103 = vector.broadcast %cst_29 : f32 to vector<32x30xf32>
    %104 = tpu.concatenate %102, %101, %103 in 0 : vector<24x30xf32>, vector<128x30xf32>, vector<32x30xf32> -> vector<184x30xf32>
    %105 = arith.truncf %104 : vector<184x30xf32> to vector<184x30xbf16>
    %cst_30 = arith.constant 0.000000e+00 : f32
    %106 = vector.broadcast %cst_30 : f32 to vector<128x30xf32>
    %107 = vector.extract_strided_slice %105 {offsets = [0, 0], sizes = [128, 30], strides = [1, 1]} : vector<184x30xbf16> to vector<128x30xbf16>
    %c0_31 = arith.constant 0 : index
    %c0_32 = arith.constant 0 : index
    %c0_33 = arith.constant 0 : index
    %108 = vector.load %arg4[%c0_31, %c0_32, %c0_33] : memref<8x30x30xbf16, #tpu.memory_space<vmem>>, vector<1x30x30xbf16>
    %109 = vector.shape_cast %108 : vector<1x30x30xbf16> to vector<30x30xbf16>
    %cst_34 = arith.constant dense<0.000000e+00> : vector<128x30xf32>
    %110 = tpu.matmul %107, %109, %cst_34 {dimension_numbers = #tpu.dot_dimension_numbers<[1], [0], [0], [1], [0, 0, 1, 1], [], []>} : vector<128x30xbf16>, vector<30x30xbf16>, vector<128x30xf32> -> vector<128x30xf32>
    %111 = arith.addf %106, %110 : vector<128x30xf32>
    %112 = vector.extract_strided_slice %105 {offsets = [8, 0], sizes = [128, 30], strides = [1, 1]} : vector<184x30xbf16> to vector<128x30xbf16>
    %c1_35 = arith.constant 1 : index
    %c0_36 = arith.constant 0 : index
    %c0_37 = arith.constant 0 : index
    %113 = vector.load %arg4[%c1_35, %c0_36, %c0_37] : memref<8x30x30xbf16, #tpu.memory_space<vmem>>, vector<1x30x30xbf16>
    %114 = vector.shape_cast %113 : vector<1x30x30xbf16> to vector<30x30xbf16>
    %cst_38 = arith.constant dense<0.000000e+00> : vector<128x30xf32>
    %115 = tpu.matmul %112, %114, %cst_38 {dimension_numbers = #tpu.dot_dimension_numbers<[1], [0], [0], [1], [0, 0, 1, 1], [], []>} : vector<128x30xbf16>, vector<30x30xbf16>, vector<128x30xf32> -> vector<128x30xf32>
    %116 = arith.addf %111, %115 : vector<128x30xf32>
    %117 = vector.extract_strided_slice %105 {offsets = [16, 0], sizes = [128, 30], strides = [1, 1]} : vector<184x30xbf16> to vector<128x30xbf16>
    %c2_39 = arith.constant 2 : index
    %c0_40 = arith.constant 0 : index
    %c0_41 = arith.constant 0 : index
    %118 = vector.load %arg4[%c2_39, %c0_40, %c0_41] : memref<8x30x30xbf16, #tpu.memory_space<vmem>>, vector<1x30x30xbf16>
    %119 = vector.shape_cast %118 : vector<1x30x30xbf16> to vector<30x30xbf16>
    %cst_42 = arith.constant dense<0.000000e+00> : vector<128x30xf32>
    %120 = tpu.matmul %117, %119, %cst_42 {dimension_numbers = #tpu.dot_dimension_numbers<[1], [0], [0], [1], [0, 0, 1, 1], [], []>} : vector<128x30xbf16>, vector<30x30xbf16>, vector<128x30xf32> -> vector<128x30xf32>
    %121 = arith.addf %116, %120 : vector<128x30xf32>
    %122 = vector.extract_strided_slice %105 {offsets = [24, 0], sizes = [128, 30], strides = [1, 1]} : vector<184x30xbf16> to vector<128x30xbf16>
    %c3_43 = arith.constant 3 : index
    %c0_44 = arith.constant 0 : index
    %c0_45 = arith.constant 0 : index
    %123 = vector.load %arg4[%c3_43, %c0_44, %c0_45] : memref<8x30x30xbf16, #tpu.memory_space<vmem>>, vector<1x30x30xbf16>
    %124 = vector.shape_cast %123 : vector<1x30x30xbf16> to vector<30x30xbf16>
    %cst_46 = arith.constant dense<0.000000e+00> : vector<128x30xf32>
    %125 = tpu.matmul %122, %124, %cst_46 {dimension_numbers = #tpu.dot_dimension_numbers<[1], [0], [0], [1], [0, 0, 1, 1], [], []>} : vector<128x30xbf16>, vector<30x30xbf16>, vector<128x30xf32> -> vector<128x30xf32>
    %126 = arith.addf %121, %125 : vector<128x30xf32>
    %127 = vector.extract_strided_slice %105 {offsets = [32, 0], sizes = [128, 30], strides = [1, 1]} : vector<184x30xbf16> to vector<128x30xbf16>
    %c4_47 = arith.constant 4 : index
    %c0_48 = arith.constant 0 : index
    %c0_49 = arith.constant 0 : index
    %128 = vector.load %arg4[%c4_47, %c0_48, %c0_49] : memref<8x30x30xbf16, #tpu.memory_space<vmem>>, vector<1x30x30xbf16>
    %129 = vector.shape_cast %128 : vector<1x30x30xbf16> to vector<30x30xbf16>
    %cst_50 = arith.constant dense<0.000000e+00> : vector<128x30xf32>
    %130 = tpu.matmul %127, %129, %cst_50 {dimension_numbers = #tpu.dot_dimension_numbers<[1], [0], [0], [1], [0, 0, 1, 1], [], []>} : vector<128x30xbf16>, vector<30x30xbf16>, vector<128x30xf32> -> vector<128x30xf32>
    %131 = arith.addf %126, %130 : vector<128x30xf32>
    %132 = vector.extract_strided_slice %105 {offsets = [40, 0], sizes = [128, 30], strides = [1, 1]} : vector<184x30xbf16> to vector<128x30xbf16>
    %c5_51 = arith.constant 5 : index
    %c0_52 = arith.constant 0 : index
    %c0_53 = arith.constant 0 : index
    %133 = vector.load %arg4[%c5_51, %c0_52, %c0_53] : memref<8x30x30xbf16, #tpu.memory_space<vmem>>, vector<1x30x30xbf16>
    %134 = vector.shape_cast %133 : vector<1x30x30xbf16> to vector<30x30xbf16>
    %cst_54 = arith.constant dense<0.000000e+00> : vector<128x30xf32>
    %135 = tpu.matmul %132, %134, %cst_54 {dimension_numbers = #tpu.dot_dimension_numbers<[1], [0], [0], [1], [0, 0, 1, 1], [], []>} : vector<128x30xbf16>, vector<30x30xbf16>, vector<128x30xf32> -> vector<128x30xf32>
    %136 = arith.addf %131, %135 : vector<128x30xf32>
    %137 = vector.extract_strided_slice %105 {offsets = [48, 0], sizes = [128, 30], strides = [1, 1]} : vector<184x30xbf16> to vector<128x30xbf16>
    %c6_55 = arith.constant 6 : index
    %c0_56 = arith.constant 0 : index
    %c0_57 = arith.constant 0 : index
    %138 = vector.load %arg4[%c6_55, %c0_56, %c0_57] : memref<8x30x30xbf16, #tpu.memory_space<vmem>>, vector<1x30x30xbf16>
    %139 = vector.shape_cast %138 : vector<1x30x30xbf16> to vector<30x30xbf16>
    %cst_58 = arith.constant dense<0.000000e+00> : vector<128x30xf32>
    %140 = tpu.matmul %137, %139, %cst_58 {dimension_numbers = #tpu.dot_dimension_numbers<[1], [0], [0], [1], [0, 0, 1, 1], [], []>} : vector<128x30xbf16>, vector<30x30xbf16>, vector<128x30xf32> -> vector<128x30xf32>
    %141 = arith.addf %136, %140 : vector<128x30xf32>
    %142 = vector.extract_strided_slice %105 {offsets = [56, 0], sizes = [128, 30], strides = [1, 1]} : vector<184x30xbf16> to vector<128x30xbf16>
    %c7_59 = arith.constant 7 : index
    %c0_60 = arith.constant 0 : index
    %c0_61 = arith.constant 0 : index
    %143 = vector.load %arg4[%c7_59, %c0_60, %c0_61] : memref<8x30x30xbf16, #tpu.memory_space<vmem>>, vector<1x30x30xbf16>
    %144 = vector.shape_cast %143 : vector<1x30x30xbf16> to vector<30x30xbf16>
    %cst_62 = arith.constant dense<0.000000e+00> : vector<128x30xf32>
    %145 = tpu.matmul %142, %144, %cst_62 {dimension_numbers = #tpu.dot_dimension_numbers<[1], [0], [0], [1], [0, 0, 1, 1], [], []>} : vector<128x30xbf16>, vector<30x30xbf16>, vector<128x30xf32> -> vector<128x30xf32>
    %146 = arith.addf %141, %145 : vector<128x30xf32>
    %c0_63 = arith.constant 0 : index
    %c0_64 = arith.constant 0 : index
    %147 = vector.load %arg5[%c0_63, %c0_64] : memref<1x30xf32, #tpu.memory_space<vmem>>, vector<1x30xf32>
    %148 = vector.broadcast %147 : vector<1x30xf32> to vector<128x30xf32>
    %149 = arith.addf %146, %148 : vector<128x30xf32>
    %cst_65 = arith.constant 0.000000e+00 : f32
    %150 = vector.broadcast %cst_65 : f32 to vector<128x30xf32>
    %151 = arith.maximumf %149, %150 : vector<128x30xf32>
    %cst_66 = arith.constant 0.000000e+00 : f32
    %152 = vector.broadcast %cst_66 : f32 to vector<16x30xf32>
    %cst_67 = arith.constant 0.000000e+00 : f32
    %153 = vector.broadcast %cst_67 : f32 to vector<24x30xf32>
    %154 = tpu.concatenate %152, %151, %153 in 0 : vector<16x30xf32>, vector<128x30xf32>, vector<24x30xf32> -> vector<168x30xf32>
    %155 = arith.truncf %154 : vector<168x30xf32> to vector<168x30xbf16>
    %cst_68 = arith.constant 0.000000e+00 : f32
    %156 = vector.broadcast %cst_68 : f32 to vector<128x40xf32>
    %157 = vector.extract_strided_slice %155 {offsets = [0, 0], sizes = [128, 30], strides = [1, 1]} : vector<168x30xbf16> to vector<128x30xbf16>
    %c0_69 = arith.constant 0 : index
    %c0_70 = arith.constant 0 : index
    %c0_71 = arith.constant 0 : index
    %158 = vector.load %arg6[%c0_69, %c0_70, %c0_71] : memref<6x30x40xbf16, #tpu.memory_space<vmem>>, vector<1x30x40xbf16>
    %159 = vector.shape_cast %158 : vector<1x30x40xbf16> to vector<30x40xbf16>
    %cst_72 = arith.constant dense<0.000000e+00> : vector<128x40xf32>
    %160 = tpu.matmul %157, %159, %cst_72 {dimension_numbers = #tpu.dot_dimension_numbers<[1], [0], [0], [1], [0, 0, 1, 1], [], []>} : vector<128x30xbf16>, vector<30x40xbf16>, vector<128x40xf32> -> vector<128x40xf32>
    %161 = arith.addf %156, %160 : vector<128x40xf32>
    %162 = vector.extract_strided_slice %155 {offsets = [8, 0], sizes = [128, 30], strides = [1, 1]} : vector<168x30xbf16> to vector<128x30xbf16>
    %c1_73 = arith.constant 1 : index
    %c0_74 = arith.constant 0 : index
    %c0_75 = arith.constant 0 : index
    %163 = vector.load %arg6[%c1_73, %c0_74, %c0_75] : memref<6x30x40xbf16, #tpu.memory_space<vmem>>, vector<1x30x40xbf16>
    %164 = vector.shape_cast %163 : vector<1x30x40xbf16> to vector<30x40xbf16>
    %cst_76 = arith.constant dense<0.000000e+00> : vector<128x40xf32>
    %165 = tpu.matmul %162, %164, %cst_76 {dimension_numbers = #tpu.dot_dimension_numbers<[1], [0], [0], [1], [0, 0, 1, 1], [], []>} : vector<128x30xbf16>, vector<30x40xbf16>, vector<128x40xf32> -> vector<128x40xf32>
    %166 = arith.addf %161, %165 : vector<128x40xf32>
    %167 = vector.extract_strided_slice %155 {offsets = [16, 0], sizes = [128, 30], strides = [1, 1]} : vector<168x30xbf16> to vector<128x30xbf16>
    %c2_77 = arith.constant 2 : index
    %c0_78 = arith.constant 0 : index
    %c0_79 = arith.constant 0 : index
    %168 = vector.load %arg6[%c2_77, %c0_78, %c0_79] : memref<6x30x40xbf16, #tpu.memory_space<vmem>>, vector<1x30x40xbf16>
    %169 = vector.shape_cast %168 : vector<1x30x40xbf16> to vector<30x40xbf16>
    %cst_80 = arith.constant dense<0.000000e+00> : vector<128x40xf32>
    %170 = tpu.matmul %167, %169, %cst_80 {dimension_numbers = #tpu.dot_dimension_numbers<[1], [0], [0], [1], [0, 0, 1, 1], [], []>} : vector<128x30xbf16>, vector<30x40xbf16>, vector<128x40xf32> -> vector<128x40xf32>
    %171 = arith.addf %166, %170 : vector<128x40xf32>
    %172 = vector.extract_strided_slice %155 {offsets = [24, 0], sizes = [128, 30], strides = [1, 1]} : vector<168x30xbf16> to vector<128x30xbf16>
    %c3_81 = arith.constant 3 : index
    %c0_82 = arith.constant 0 : index
    %c0_83 = arith.constant 0 : index
    %173 = vector.load %arg6[%c3_81, %c0_82, %c0_83] : memref<6x30x40xbf16, #tpu.memory_space<vmem>>, vector<1x30x40xbf16>
    %174 = vector.shape_cast %173 : vector<1x30x40xbf16> to vector<30x40xbf16>
    %cst_84 = arith.constant dense<0.000000e+00> : vector<128x40xf32>
    %175 = tpu.matmul %172, %174, %cst_84 {dimension_numbers = #tpu.dot_dimension_numbers<[1], [0], [0], [1], [0, 0, 1, 1], [], []>} : vector<128x30xbf16>, vector<30x40xbf16>, vector<128x40xf32> -> vector<128x40xf32>
    %176 = arith.addf %171, %175 : vector<128x40xf32>
    %177 = vector.extract_strided_slice %155 {offsets = [32, 0], sizes = [128, 30], strides = [1, 1]} : vector<168x30xbf16> to vector<128x30xbf16>
    %c4_85 = arith.constant 4 : index
    %c0_86 = arith.constant 0 : index
    %c0_87 = arith.constant 0 : index
    %178 = vector.load %arg6[%c4_85, %c0_86, %c0_87] : memref<6x30x40xbf16, #tpu.memory_space<vmem>>, vector<1x30x40xbf16>
    %179 = vector.shape_cast %178 : vector<1x30x40xbf16> to vector<30x40xbf16>
    %cst_88 = arith.constant dense<0.000000e+00> : vector<128x40xf32>
    %180 = tpu.matmul %177, %179, %cst_88 {dimension_numbers = #tpu.dot_dimension_numbers<[1], [0], [0], [1], [0, 0, 1, 1], [], []>} : vector<128x30xbf16>, vector<30x40xbf16>, vector<128x40xf32> -> vector<128x40xf32>
    %181 = arith.addf %176, %180 : vector<128x40xf32>
    %182 = vector.extract_strided_slice %155 {offsets = [40, 0], sizes = [128, 30], strides = [1, 1]} : vector<168x30xbf16> to vector<128x30xbf16>
    %c5_89 = arith.constant 5 : index
    %c0_90 = arith.constant 0 : index
    %c0_91 = arith.constant 0 : index
    %183 = vector.load %arg6[%c5_89, %c0_90, %c0_91] : memref<6x30x40xbf16, #tpu.memory_space<vmem>>, vector<1x30x40xbf16>
    %184 = vector.shape_cast %183 : vector<1x30x40xbf16> to vector<30x40xbf16>
    %cst_92 = arith.constant dense<0.000000e+00> : vector<128x40xf32>
    %185 = tpu.matmul %182, %184, %cst_92 {dimension_numbers = #tpu.dot_dimension_numbers<[1], [0], [0], [1], [0, 0, 1, 1], [], []>} : vector<128x30xbf16>, vector<30x40xbf16>, vector<128x40xf32> -> vector<128x40xf32>
    %186 = arith.addf %181, %185 : vector<128x40xf32>
    %c0_93 = arith.constant 0 : index
    %c0_94 = arith.constant 0 : index
    %187 = vector.load %arg7[%c0_93, %c0_94] : memref<1x40xf32, #tpu.memory_space<vmem>>, vector<1x40xf32>
    %188 = vector.broadcast %187 : vector<1x40xf32> to vector<128x40xf32>
    %189 = arith.addf %186, %188 : vector<128x40xf32>
    %cst_95 = arith.constant 0.000000e+00 : f32
    %190 = vector.broadcast %cst_95 : f32 to vector<128x40xf32>
    %191 = arith.maximumf %189, %190 : vector<128x40xf32>
    %cst_96 = arith.constant 0.000000e+00 : f32
    %192 = vector.broadcast %cst_96 : f32 to vector<16x40xf32>
    %cst_97 = arith.constant 0.000000e+00 : f32
    %193 = vector.broadcast %cst_97 : f32 to vector<16x40xf32>
    %194 = tpu.concatenate %192, %191, %193 in 0 : vector<16x40xf32>, vector<128x40xf32>, vector<16x40xf32> -> vector<160x40xf32>
    %195 = arith.truncf %194 : vector<160x40xf32> to vector<160x40xbf16>
    %cst_98 = arith.constant 0.000000e+00 : f32
    %196 = vector.broadcast %cst_98 : f32 to vector<128x50xf32>
    %197 = vector.extract_strided_slice %195 {offsets = [0, 0], sizes = [128, 40], strides = [1, 1]} : vector<160x40xbf16> to vector<128x40xbf16>
    %c0_99 = arith.constant 0 : index
    %c0_100 = arith.constant 0 : index
    %c0_101 = arith.constant 0 : index
    %198 = vector.load %arg8[%c0_99, %c0_100, %c0_101] : memref<5x40x50xbf16, #tpu.memory_space<vmem>>, vector<1x40x50xbf16>
    %199 = vector.shape_cast %198 : vector<1x40x50xbf16> to vector<40x50xbf16>
    %cst_102 = arith.constant dense<0.000000e+00> : vector<128x50xf32>
    %200 = tpu.matmul %197, %199, %cst_102 {dimension_numbers = #tpu.dot_dimension_numbers<[1], [0], [0], [1], [0, 0, 1, 1], [], []>} : vector<128x40xbf16>, vector<40x50xbf16>, vector<128x50xf32> -> vector<128x50xf32>
    %201 = arith.addf %196, %200 : vector<128x50xf32>
    %202 = vector.extract_strided_slice %195 {offsets = [8, 0], sizes = [128, 40], strides = [1, 1]} : vector<160x40xbf16> to vector<128x40xbf16>
    %c1_103 = arith.constant 1 : index
    %c0_104 = arith.constant 0 : index
    %c0_105 = arith.constant 0 : index
    %203 = vector.load %arg8[%c1_103, %c0_104, %c0_105] : memref<5x40x50xbf16, #tpu.memory_space<vmem>>, vector<1x40x50xbf16>
    %204 = vector.shape_cast %203 : vector<1x40x50xbf16> to vector<40x50xbf16>
    %cst_106 = arith.constant dense<0.000000e+00> : vector<128x50xf32>
    %205 = tpu.matmul %202, %204, %cst_106 {dimension_numbers = #tpu.dot_dimension_numbers<[1], [0], [0], [1], [0, 0, 1, 1], [], []>} : vector<128x40xbf16>, vector<40x50xbf16>, vector<128x50xf32> -> vector<128x50xf32>
    %206 = arith.addf %201, %205 : vector<128x50xf32>
    %207 = vector.extract_strided_slice %195 {offsets = [16, 0], sizes = [128, 40], strides = [1, 1]} : vector<160x40xbf16> to vector<128x40xbf16>
    %c2_107 = arith.constant 2 : index
    %c0_108 = arith.constant 0 : index
    %c0_109 = arith.constant 0 : index
    %208 = vector.load %arg8[%c2_107, %c0_108, %c0_109] : memref<5x40x50xbf16, #tpu.memory_space<vmem>>, vector<1x40x50xbf16>
    %209 = vector.shape_cast %208 : vector<1x40x50xbf16> to vector<40x50xbf16>
    %cst_110 = arith.constant dense<0.000000e+00> : vector<128x50xf32>
    %210 = tpu.matmul %207, %209, %cst_110 {dimension_numbers = #tpu.dot_dimension_numbers<[1], [0], [0], [1], [0, 0, 1, 1], [], []>} : vector<128x40xbf16>, vector<40x50xbf16>, vector<128x50xf32> -> vector<128x50xf32>
    %211 = arith.addf %206, %210 : vector<128x50xf32>
    %212 = vector.extract_strided_slice %195 {offsets = [24, 0], sizes = [128, 40], strides = [1, 1]} : vector<160x40xbf16> to vector<128x40xbf16>
    %c3_111 = arith.constant 3 : index
    %c0_112 = arith.constant 0 : index
    %c0_113 = arith.constant 0 : index
    %213 = vector.load %arg8[%c3_111, %c0_112, %c0_113] : memref<5x40x50xbf16, #tpu.memory_space<vmem>>, vector<1x40x50xbf16>
    %214 = vector.shape_cast %213 : vector<1x40x50xbf16> to vector<40x50xbf16>
    %cst_114 = arith.constant dense<0.000000e+00> : vector<128x50xf32>
    %215 = tpu.matmul %212, %214, %cst_114 {dimension_numbers = #tpu.dot_dimension_numbers<[1], [0], [0], [1], [0, 0, 1, 1], [], []>} : vector<128x40xbf16>, vector<40x50xbf16>, vector<128x50xf32> -> vector<128x50xf32>
    %216 = arith.addf %211, %215 : vector<128x50xf32>
    %217 = vector.extract_strided_slice %195 {offsets = [32, 0], sizes = [128, 40], strides = [1, 1]} : vector<160x40xbf16> to vector<128x40xbf16>
    %c4_115 = arith.constant 4 : index
    %c0_116 = arith.constant 0 : index
    %c0_117 = arith.constant 0 : index
    %218 = vector.load %arg8[%c4_115, %c0_116, %c0_117] : memref<5x40x50xbf16, #tpu.memory_space<vmem>>, vector<1x40x50xbf16>
    %219 = vector.shape_cast %218 : vector<1x40x50xbf16> to vector<40x50xbf16>
    %cst_118 = arith.constant dense<0.000000e+00> : vector<128x50xf32>
    %220 = tpu.matmul %217, %219, %cst_118 {dimension_numbers = #tpu.dot_dimension_numbers<[1], [0], [0], [1], [0, 0, 1, 1], [], []>} : vector<128x40xbf16>, vector<40x50xbf16>, vector<128x50xf32> -> vector<128x50xf32>
    %221 = arith.addf %216, %220 : vector<128x50xf32>
    %c0_119 = arith.constant 0 : index
    %c0_120 = arith.constant 0 : index
    %222 = vector.load %arg9[%c0_119, %c0_120] : memref<1x50xf32, #tpu.memory_space<vmem>>, vector<1x50xf32>
    %223 = vector.broadcast %222 : vector<1x50xf32> to vector<128x50xf32>
    %224 = arith.addf %221, %223 : vector<128x50xf32>
    %cst_121 = arith.constant 0.000000e+00 : f32
    %225 = vector.broadcast %cst_121 : f32 to vector<128x50xf32>
    %226 = arith.maximumf %224, %225 : vector<128x50xf32>
    %cst_122 = arith.constant 0.000000e+00 : f32
    %227 = vector.broadcast %cst_122 : f32 to vector<16x50xf32>
    %cst_123 = arith.constant 0.000000e+00 : f32
    %228 = vector.broadcast %cst_123 : f32 to vector<16x50xf32>
    %229 = tpu.concatenate %227, %226, %228 in 0 : vector<16x50xf32>, vector<128x50xf32>, vector<16x50xf32> -> vector<160x50xf32>
    %230 = arith.truncf %229 : vector<160x50xf32> to vector<160x50xbf16>
    %cst_124 = arith.constant 0.000000e+00 : f32
    %231 = vector.broadcast %cst_124 : f32 to vector<128x50xf32>
    %232 = vector.extract_strided_slice %230 {offsets = [0, 0], sizes = [128, 50], strides = [1, 1]} : vector<160x50xbf16> to vector<128x50xbf16>
    %c0_125 = arith.constant 0 : index
    %c0_126 = arith.constant 0 : index
    %c0_127 = arith.constant 0 : index
    %233 = vector.load %arg10[%c0_125, %c0_126, %c0_127] : memref<5x50x50xbf16, #tpu.memory_space<vmem>>, vector<1x50x50xbf16>
    %234 = vector.shape_cast %233 : vector<1x50x50xbf16> to vector<50x50xbf16>
    %cst_128 = arith.constant dense<0.000000e+00> : vector<128x50xf32>
    %235 = tpu.matmul %232, %234, %cst_128 {dimension_numbers = #tpu.dot_dimension_numbers<[1], [0], [0], [1], [0, 0, 1, 1], [], []>} : vector<128x50xbf16>, vector<50x50xbf16>, vector<128x50xf32> -> vector<128x50xf32>
    %236 = arith.addf %231, %235 : vector<128x50xf32>
    %237 = vector.extract_strided_slice %230 {offsets = [8, 0], sizes = [128, 50], strides = [1, 1]} : vector<160x50xbf16> to vector<128x50xbf16>
    %c1_129 = arith.constant 1 : index
    %c0_130 = arith.constant 0 : index
    %c0_131 = arith.constant 0 : index
    %238 = vector.load %arg10[%c1_129, %c0_130, %c0_131] : memref<5x50x50xbf16, #tpu.memory_space<vmem>>, vector<1x50x50xbf16>
    %239 = vector.shape_cast %238 : vector<1x50x50xbf16> to vector<50x50xbf16>
    %cst_132 = arith.constant dense<0.000000e+00> : vector<128x50xf32>
    %240 = tpu.matmul %237, %239, %cst_132 {dimension_numbers = #tpu.dot_dimension_numbers<[1], [0], [0], [1], [0, 0, 1, 1], [], []>} : vector<128x50xbf16>, vector<50x50xbf16>, vector<128x50xf32> -> vector<128x50xf32>
    %241 = arith.addf %236, %240 : vector<128x50xf32>
    %242 = vector.extract_strided_slice %230 {offsets = [16, 0], sizes = [128, 50], strides = [1, 1]} : vector<160x50xbf16> to vector<128x50xbf16>
    %c2_133 = arith.constant 2 : index
    %c0_134 = arith.constant 0 : index
    %c0_135 = arith.constant 0 : index
    %243 = vector.load %arg10[%c2_133, %c0_134, %c0_135] : memref<5x50x50xbf16, #tpu.memory_space<vmem>>, vector<1x50x50xbf16>
    %244 = vector.shape_cast %243 : vector<1x50x50xbf16> to vector<50x50xbf16>
    %cst_136 = arith.constant dense<0.000000e+00> : vector<128x50xf32>
    %245 = tpu.matmul %242, %244, %cst_136 {dimension_numbers = #tpu.dot_dimension_numbers<[1], [0], [0], [1], [0, 0, 1, 1], [], []>} : vector<128x50xbf16>, vector<50x50xbf16>, vector<128x50xf32> -> vector<128x50xf32>
    %246 = arith.addf %241, %245 : vector<128x50xf32>
    %247 = vector.extract_strided_slice %230 {offsets = [24, 0], sizes = [128, 50], strides = [1, 1]} : vector<160x50xbf16> to vector<128x50xbf16>
    %c3_137 = arith.constant 3 : index
    %c0_138 = arith.constant 0 : index
    %c0_139 = arith.constant 0 : index
    %248 = vector.load %arg10[%c3_137, %c0_138, %c0_139] : memref<5x50x50xbf16, #tpu.memory_space<vmem>>, vector<1x50x50xbf16>
    %249 = vector.shape_cast %248 : vector<1x50x50xbf16> to vector<50x50xbf16>
    %cst_140 = arith.constant dense<0.000000e+00> : vector<128x50xf32>
    %250 = tpu.matmul %247, %249, %cst_140 {dimension_numbers = #tpu.dot_dimension_numbers<[1], [0], [0], [1], [0, 0, 1, 1], [], []>} : vector<128x50xbf16>, vector<50x50xbf16>, vector<128x50xf32> -> vector<128x50xf32>
    %251 = arith.addf %246, %250 : vector<128x50xf32>
    %252 = vector.extract_strided_slice %230 {offsets = [32, 0], sizes = [128, 50], strides = [1, 1]} : vector<160x50xbf16> to vector<128x50xbf16>
    %c4_141 = arith.constant 4 : index
    %c0_142 = arith.constant 0 : index
    %c0_143 = arith.constant 0 : index
    %253 = vector.load %arg10[%c4_141, %c0_142, %c0_143] : memref<5x50x50xbf16, #tpu.memory_space<vmem>>, vector<1x50x50xbf16>
    %254 = vector.shape_cast %253 : vector<1x50x50xbf16> to vector<50x50xbf16>
    %cst_144 = arith.constant dense<0.000000e+00> : vector<128x50xf32>
    %255 = tpu.matmul %252, %254, %cst_144 {dimension_numbers = #tpu.dot_dimension_numbers<[1], [0], [0], [1], [0, 0, 1, 1], [], []>} : vector<128x50xbf16>, vector<50x50xbf16>, vector<128x50xf32> -> vector<128x50xf32>
    %256 = arith.addf %251, %255 : vector<128x50xf32>
    %c0_145 = arith.constant 0 : index
    %c0_146 = arith.constant 0 : index
    %257 = vector.load %arg11[%c0_145, %c0_146] : memref<1x50xf32, #tpu.memory_space<vmem>>, vector<1x50xf32>
    %258 = vector.broadcast %257 : vector<1x50xf32> to vector<128x50xf32>
    %259 = arith.addf %256, %258 : vector<128x50xf32>
    %cst_147 = arith.constant 0.000000e+00 : f32
    %260 = vector.broadcast %cst_147 : f32 to vector<128x50xf32>
    %261 = arith.maximumf %259, %260 : vector<128x50xf32>
    %cst_148 = arith.constant 0.000000e+00 : f32
    %262 = vector.broadcast %cst_148 : f32 to vector<8x1024xf32>
    %263 = vector.extract_strided_slice %261 {offsets = [0, 0], sizes = [8, 50], strides = [1, 1]} : vector<128x50xf32> to vector<8x50xf32>
    %264 = arith.truncf %263 : vector<8x50xf32> to vector<8x50xbf16>
    %c0_149 = arith.constant 0 : index
    %c0_150 = arith.constant 0 : index
    %c0_151 = arith.constant 0 : index
    %265 = vector.load %arg12[%c0_149, %c0_150, %c0_151] : memref<16x50x1024xbf16, #tpu.memory_space<vmem>>, vector<1x50x1024xbf16>
    %266 = vector.shape_cast %265 : vector<1x50x1024xbf16> to vector<50x1024xbf16>
    %cst_152 = arith.constant dense<0.000000e+00> : vector<8x1024xf32>
    %267 = tpu.matmul %264, %266, %cst_152 {dimension_numbers = #tpu.dot_dimension_numbers<[1], [0], [0], [1], [0, 0, 1, 1], [], []>} : vector<8x50xbf16>, vector<50x1024xbf16>, vector<8x1024xf32> -> vector<8x1024xf32>
    %268 = arith.addf %262, %267 : vector<8x1024xf32>
    %269 = vector.extract_strided_slice %261 {offsets = [8, 0], sizes = [8, 50], strides = [1, 1]} : vector<128x50xf32> to vector<8x50xf32>
    %270 = arith.truncf %269 : vector<8x50xf32> to vector<8x50xbf16>
    %c1_153 = arith.constant 1 : index
    %c0_154 = arith.constant 0 : index
    %c0_155 = arith.constant 0 : index
    %271 = vector.load %arg12[%c1_153, %c0_154, %c0_155] : memref<16x50x1024xbf16, #tpu.memory_space<vmem>>, vector<1x50x1024xbf16>
    %272 = vector.shape_cast %271 : vector<1x50x1024xbf16> to vector<50x1024xbf16>
    %cst_156 = arith.constant dense<0.000000e+00> : vector<8x1024xf32>
    %273 = tpu.matmul %270, %272, %cst_156 {dimension_numbers = #tpu.dot_dimension_numbers<[1], [0], [0], [1], [0, 0, 1, 1], [], []>} : vector<8x50xbf16>, vector<50x1024xbf16>, vector<8x1024xf32> -> vector<8x1024xf32>
    %274 = arith.addf %268, %273 : vector<8x1024xf32>
    %275 = vector.extract_strided_slice %261 {offsets = [16, 0], sizes = [8, 50], strides = [1, 1]} : vector<128x50xf32> to vector<8x50xf32>
    %276 = arith.truncf %275 : vector<8x50xf32> to vector<8x50xbf16>
    %c2_157 = arith.constant 2 : index
    %c0_158 = arith.constant 0 : index
    %c0_159 = arith.constant 0 : index
    %277 = vector.load %arg12[%c2_157, %c0_158, %c0_159] : memref<16x50x1024xbf16, #tpu.memory_space<vmem>>, vector<1x50x1024xbf16>
    %278 = vector.shape_cast %277 : vector<1x50x1024xbf16> to vector<50x1024xbf16>
    %cst_160 = arith.constant dense<0.000000e+00> : vector<8x1024xf32>
    %279 = tpu.matmul %276, %278, %cst_160 {dimension_numbers = #tpu.dot_dimension_numbers<[1], [0], [0], [1], [0, 0, 1, 1], [], []>} : vector<8x50xbf16>, vector<50x1024xbf16>, vector<8x1024xf32> -> vector<8x1024xf32>
    %280 = arith.addf %274, %279 : vector<8x1024xf32>
    %281 = vector.extract_strided_slice %261 {offsets = [24, 0], sizes = [8, 50], strides = [1, 1]} : vector<128x50xf32> to vector<8x50xf32>
    %282 = arith.truncf %281 : vector<8x50xf32> to vector<8x50xbf16>
    %c3_161 = arith.constant 3 : index
    %c0_162 = arith.constant 0 : index
    %c0_163 = arith.constant 0 : index
    %283 = vector.load %arg12[%c3_161, %c0_162, %c0_163] : memref<16x50x1024xbf16, #tpu.memory_space<vmem>>, vector<1x50x1024xbf16>
    %284 = vector.shape_cast %283 : vector<1x50x1024xbf16> to vector<50x1024xbf16>
    %cst_164 = arith.constant dense<0.000000e+00> : vector<8x1024xf32>
    %285 = tpu.matmul %282, %284, %cst_164 {dimension_numbers = #tpu.dot_dimension_numbers<[1], [0], [0], [1], [0, 0, 1, 1], [], []>} : vector<8x50xbf16>, vector<50x1024xbf16>, vector<8x1024xf32> -> vector<8x1024xf32>
    %286 = arith.addf %280, %285 : vector<8x1024xf32>
    %287 = vector.extract_strided_slice %261 {offsets = [32, 0], sizes = [8, 50], strides = [1, 1]} : vector<128x50xf32> to vector<8x50xf32>
    %288 = arith.truncf %287 : vector<8x50xf32> to vector<8x50xbf16>
    %c4_165 = arith.constant 4 : index
    %c0_166 = arith.constant 0 : index
    %c0_167 = arith.constant 0 : index
    %289 = vector.load %arg12[%c4_165, %c0_166, %c0_167] : memref<16x50x1024xbf16, #tpu.memory_space<vmem>>, vector<1x50x1024xbf16>
    %290 = vector.shape_cast %289 : vector<1x50x1024xbf16> to vector<50x1024xbf16>
    %cst_168 = arith.constant dense<0.000000e+00> : vector<8x1024xf32>
    %291 = tpu.matmul %288, %290, %cst_168 {dimension_numbers = #tpu.dot_dimension_numbers<[1], [0], [0], [1], [0, 0, 1, 1], [], []>} : vector<8x50xbf16>, vector<50x1024xbf16>, vector<8x1024xf32> -> vector<8x1024xf32>
    %292 = arith.addf %286, %291 : vector<8x1024xf32>
    %293 = vector.extract_strided_slice %261 {offsets = [40, 0], sizes = [8, 50], strides = [1, 1]} : vector<128x50xf32> to vector<8x50xf32>
    %294 = arith.truncf %293 : vector<8x50xf32> to vector<8x50xbf16>
    %c5_169 = arith.constant 5 : index
    %c0_170 = arith.constant 0 : index
    %c0_171 = arith.constant 0 : index
    %295 = vector.load %arg12[%c5_169, %c0_170, %c0_171] : memref<16x50x1024xbf16, #tpu.memory_space<vmem>>, vector<1x50x1024xbf16>
    %296 = vector.shape_cast %295 : vector<1x50x1024xbf16> to vector<50x1024xbf16>
    %cst_172 = arith.constant dense<0.000000e+00> : vector<8x1024xf32>
    %297 = tpu.matmul %294, %296, %cst_172 {dimension_numbers = #tpu.dot_dimension_numbers<[1], [0], [0], [1], [0, 0, 1, 1], [], []>} : vector<8x50xbf16>, vector<50x1024xbf16>, vector<8x1024xf32> -> vector<8x1024xf32>
    %298 = arith.addf %292, %297 : vector<8x1024xf32>
    %299 = vector.extract_strided_slice %261 {offsets = [48, 0], sizes = [8, 50], strides = [1, 1]} : vector<128x50xf32> to vector<8x50xf32>
    %300 = arith.truncf %299 : vector<8x50xf32> to vector<8x50xbf16>
    %c6_173 = arith.constant 6 : index
    %c0_174 = arith.constant 0 : index
    %c0_175 = arith.constant 0 : index
    %301 = vector.load %arg12[%c6_173, %c0_174, %c0_175] : memref<16x50x1024xbf16, #tpu.memory_space<vmem>>, vector<1x50x1024xbf16>
    %302 = vector.shape_cast %301 : vector<1x50x1024xbf16> to vector<50x1024xbf16>
    %cst_176 = arith.constant dense<0.000000e+00> : vector<8x1024xf32>
    %303 = tpu.matmul %300, %302, %cst_176 {dimension_numbers = #tpu.dot_dimension_numbers<[1], [0], [0], [1], [0, 0, 1, 1], [], []>} : vector<8x50xbf16>, vector<50x1024xbf16>, vector<8x1024xf32> -> vector<8x1024xf32>
    %304 = arith.addf %298, %303 : vector<8x1024xf32>
    %305 = vector.extract_strided_slice %261 {offsets = [56, 0], sizes = [8, 50], strides = [1, 1]} : vector<128x50xf32> to vector<8x50xf32>
    %306 = arith.truncf %305 : vector<8x50xf32> to vector<8x50xbf16>
    %c7_177 = arith.constant 7 : index
    %c0_178 = arith.constant 0 : index
    %c0_179 = arith.constant 0 : index
    %307 = vector.load %arg12[%c7_177, %c0_178, %c0_179] : memref<16x50x1024xbf16, #tpu.memory_space<vmem>>, vector<1x50x1024xbf16>
    %308 = vector.shape_cast %307 : vector<1x50x1024xbf16> to vector<50x1024xbf16>
    %cst_180 = arith.constant dense<0.000000e+00> : vector<8x1024xf32>
    %309 = tpu.matmul %306, %308, %cst_180 {dimension_numbers = #tpu.dot_dimension_numbers<[1], [0], [0], [1], [0, 0, 1, 1], [], []>} : vector<8x50xbf16>, vector<50x1024xbf16>, vector<8x1024xf32> -> vector<8x1024xf32>
    %310 = arith.addf %304, %309 : vector<8x1024xf32>
    %311 = vector.extract_strided_slice %261 {offsets = [64, 0], sizes = [8, 50], strides = [1, 1]} : vector<128x50xf32> to vector<8x50xf32>
    %312 = arith.truncf %311 : vector<8x50xf32> to vector<8x50xbf16>
    %c8_181 = arith.constant 8 : index
    %c0_182 = arith.constant 0 : index
    %c0_183 = arith.constant 0 : index
    %313 = vector.load %arg12[%c8_181, %c0_182, %c0_183] : memref<16x50x1024xbf16, #tpu.memory_space<vmem>>, vector<1x50x1024xbf16>
    %314 = vector.shape_cast %313 : vector<1x50x1024xbf16> to vector<50x1024xbf16>
    %cst_184 = arith.constant dense<0.000000e+00> : vector<8x1024xf32>
    %315 = tpu.matmul %312, %314, %cst_184 {dimension_numbers = #tpu.dot_dimension_numbers<[1], [0], [0], [1], [0, 0, 1, 1], [], []>} : vector<8x50xbf16>, vector<50x1024xbf16>, vector<8x1024xf32> -> vector<8x1024xf32>
    %316 = arith.addf %310, %315 : vector<8x1024xf32>
    %317 = vector.extract_strided_slice %261 {offsets = [72, 0], sizes = [8, 50], strides = [1, 1]} : vector<128x50xf32> to vector<8x50xf32>
    %318 = arith.truncf %317 : vector<8x50xf32> to vector<8x50xbf16>
    %c9_185 = arith.constant 9 : index
    %c0_186 = arith.constant 0 : index
    %c0_187 = arith.constant 0 : index
    %319 = vector.load %arg12[%c9_185, %c0_186, %c0_187] : memref<16x50x1024xbf16, #tpu.memory_space<vmem>>, vector<1x50x1024xbf16>
    %320 = vector.shape_cast %319 : vector<1x50x1024xbf16> to vector<50x1024xbf16>
    %cst_188 = arith.constant dense<0.000000e+00> : vector<8x1024xf32>
    %321 = tpu.matmul %318, %320, %cst_188 {dimension_numbers = #tpu.dot_dimension_numbers<[1], [0], [0], [1], [0, 0, 1, 1], [], []>} : vector<8x50xbf16>, vector<50x1024xbf16>, vector<8x1024xf32> -> vector<8x1024xf32>
    %322 = arith.addf %316, %321 : vector<8x1024xf32>
    %323 = vector.extract_strided_slice %261 {offsets = [80, 0], sizes = [8, 50], strides = [1, 1]} : vector<128x50xf32> to vector<8x50xf32>
    %324 = arith.truncf %323 : vector<8x50xf32> to vector<8x50xbf16>
    %c10 = arith.constant 10 : index
    %c0_189 = arith.constant 0 : index
    %c0_190 = arith.constant 0 : index
    %325 = vector.load %arg12[%c10, %c0_189, %c0_190] : memref<16x50x1024xbf16, #tpu.memory_space<vmem>>, vector<1x50x1024xbf16>
    %326 = vector.shape_cast %325 : vector<1x50x1024xbf16> to vector<50x1024xbf16>
    %cst_191 = arith.constant dense<0.000000e+00> : vector<8x1024xf32>
    %327 = tpu.matmul %324, %326, %cst_191 {dimension_numbers = #tpu.dot_dimension_numbers<[1], [0], [0], [1], [0, 0, 1, 1], [], []>} : vector<8x50xbf16>, vector<50x1024xbf16>, vector<8x1024xf32> -> vector<8x1024xf32>
    %328 = arith.addf %322, %327 : vector<8x1024xf32>
    %329 = vector.extract_strided_slice %261 {offsets = [88, 0], sizes = [8, 50], strides = [1, 1]} : vector<128x50xf32> to vector<8x50xf32>
    %330 = arith.truncf %329 : vector<8x50xf32> to vector<8x50xbf16>
    %c11 = arith.constant 11 : index
    %c0_192 = arith.constant 0 : index
    %c0_193 = arith.constant 0 : index
    %331 = vector.load %arg12[%c11, %c0_192, %c0_193] : memref<16x50x1024xbf16, #tpu.memory_space<vmem>>, vector<1x50x1024xbf16>
    %332 = vector.shape_cast %331 : vector<1x50x1024xbf16> to vector<50x1024xbf16>
    %cst_194 = arith.constant dense<0.000000e+00> : vector<8x1024xf32>
    %333 = tpu.matmul %330, %332, %cst_194 {dimension_numbers = #tpu.dot_dimension_numbers<[1], [0], [0], [1], [0, 0, 1, 1], [], []>} : vector<8x50xbf16>, vector<50x1024xbf16>, vector<8x1024xf32> -> vector<8x1024xf32>
    %334 = arith.addf %328, %333 : vector<8x1024xf32>
    %335 = vector.extract_strided_slice %261 {offsets = [96, 0], sizes = [8, 50], strides = [1, 1]} : vector<128x50xf32> to vector<8x50xf32>
    %336 = arith.truncf %335 : vector<8x50xf32> to vector<8x50xbf16>
    %c12 = arith.constant 12 : index
    %c0_195 = arith.constant 0 : index
    %c0_196 = arith.constant 0 : index
    %337 = vector.load %arg12[%c12, %c0_195, %c0_196] : memref<16x50x1024xbf16, #tpu.memory_space<vmem>>, vector<1x50x1024xbf16>
    %338 = vector.shape_cast %337 : vector<1x50x1024xbf16> to vector<50x1024xbf16>
    %cst_197 = arith.constant dense<0.000000e+00> : vector<8x1024xf32>
    %339 = tpu.matmul %336, %338, %cst_197 {dimension_numbers = #tpu.dot_dimension_numbers<[1], [0], [0], [1], [0, 0, 1, 1], [], []>} : vector<8x50xbf16>, vector<50x1024xbf16>, vector<8x1024xf32> -> vector<8x1024xf32>
    %340 = arith.addf %334, %339 : vector<8x1024xf32>
    %341 = vector.extract_strided_slice %261 {offsets = [104, 0], sizes = [8, 50], strides = [1, 1]} : vector<128x50xf32> to vector<8x50xf32>
    %342 = arith.truncf %341 : vector<8x50xf32> to vector<8x50xbf16>
    %c13 = arith.constant 13 : index
    %c0_198 = arith.constant 0 : index
    %c0_199 = arith.constant 0 : index
    %343 = vector.load %arg12[%c13, %c0_198, %c0_199] : memref<16x50x1024xbf16, #tpu.memory_space<vmem>>, vector<1x50x1024xbf16>
    %344 = vector.shape_cast %343 : vector<1x50x1024xbf16> to vector<50x1024xbf16>
    %cst_200 = arith.constant dense<0.000000e+00> : vector<8x1024xf32>
    %345 = tpu.matmul %342, %344, %cst_200 {dimension_numbers = #tpu.dot_dimension_numbers<[1], [0], [0], [1], [0, 0, 1, 1], [], []>} : vector<8x50xbf16>, vector<50x1024xbf16>, vector<8x1024xf32> -> vector<8x1024xf32>
    %346 = arith.addf %340, %345 : vector<8x1024xf32>
    %347 = vector.extract_strided_slice %261 {offsets = [112, 0], sizes = [8, 50], strides = [1, 1]} : vector<128x50xf32> to vector<8x50xf32>
    %348 = arith.truncf %347 : vector<8x50xf32> to vector<8x50xbf16>
    %c14 = arith.constant 14 : index
    %c0_201 = arith.constant 0 : index
    %c0_202 = arith.constant 0 : index
    %349 = vector.load %arg12[%c14, %c0_201, %c0_202] : memref<16x50x1024xbf16, #tpu.memory_space<vmem>>, vector<1x50x1024xbf16>
    %350 = vector.shape_cast %349 : vector<1x50x1024xbf16> to vector<50x1024xbf16>
    %cst_203 = arith.constant dense<0.000000e+00> : vector<8x1024xf32>
    %351 = tpu.matmul %348, %350, %cst_203 {dimension_numbers = #tpu.dot_dimension_numbers<[1], [0], [0], [1], [0, 0, 1, 1], [], []>} : vector<8x50xbf16>, vector<50x1024xbf16>, vector<8x1024xf32> -> vector<8x1024xf32>
    %352 = arith.addf %346, %351 : vector<8x1024xf32>
    %353 = vector.extract_strided_slice %261 {offsets = [120, 0], sizes = [8, 50], strides = [1, 1]} : vector<128x50xf32> to vector<8x50xf32>
    %354 = arith.truncf %353 : vector<8x50xf32> to vector<8x50xbf16>
    %c15 = arith.constant 15 : index
    %c0_204 = arith.constant 0 : index
    %c0_205 = arith.constant 0 : index
    %355 = vector.load %arg12[%c15, %c0_204, %c0_205] : memref<16x50x1024xbf16, #tpu.memory_space<vmem>>, vector<1x50x1024xbf16>
    %356 = vector.shape_cast %355 : vector<1x50x1024xbf16> to vector<50x1024xbf16>
    %cst_206 = arith.constant dense<0.000000e+00> : vector<8x1024xf32>
    %357 = tpu.matmul %354, %356, %cst_206 {dimension_numbers = #tpu.dot_dimension_numbers<[1], [0], [0], [1], [0, 0, 1, 1], [], []>} : vector<8x50xbf16>, vector<50x1024xbf16>, vector<8x1024xf32> -> vector<8x1024xf32>
    %358 = arith.addf %352, %357 : vector<8x1024xf32>
    %c0_207 = arith.constant 0 : index
    %c0_208 = arith.constant 0 : index
    %359 = vector.load %arg13[%c0_207, %c0_208] : memref<1x1024xf32, #tpu.memory_space<vmem>>, vector<1x1024xf32>
    %360 = vector.broadcast %359 : vector<1x1024xf32> to vector<8x1024xf32>
    %361 = arith.addf %358, %360 : vector<8x1024xf32>
    %362 = arith.truncf %361 : vector<8x1024xf32> to vector<8x1024xbf16>
    %c0_209 = arith.constant 0 : index
    %c0_210 = arith.constant 0 : index
    %363 = vector.load %arg14[%c0_209, %c0_210] : memref<1024x16xbf16, #tpu.memory_space<vmem>>, vector<1024x16xbf16>
    %cst_211 = arith.constant dense<0.000000e+00> : vector<8x16xf32>
    %364 = tpu.matmul %362, %363, %cst_211 {dimension_numbers = #tpu.dot_dimension_numbers<[1], [0], [0], [1], [0, 0, 1, 1], [], []>} : vector<8x1024xbf16>, vector<1024x16xbf16>, vector<8x16xf32> -> vector<8x16xf32>
    %c0_212 = arith.constant 0 : index
    %c0_213 = arith.constant 0 : index
    %365 = vector.load %arg15[%c0_212, %c0_213] : memref<1x16xf32, #tpu.memory_space<vmem>>, vector<1x16xf32>
    %366 = vector.broadcast %365 : vector<1x16xf32> to vector<8x16xf32>
    %367 = arith.addf %364, %366 : vector<8x16xf32>
    %c0_214 = arith.constant 0 : index
    %c0_215 = arith.constant 0 : index
    %c0_216 = arith.constant 0 : index
    %368 = vector.load %arg16[%c0_214, %c0_215, %c0_216] : memref<1x8x16xf32, #tpu.memory_space<vmem>>, vector<1x8x16xf32>
    %369 = vector.shape_cast %368 : vector<1x8x16xf32> to vector<8x16xf32>
    %370 = vector.shape_cast %367 : vector<8x16xf32> to vector<1x8x16xf32>
    tpu.vector_store %arg16[%c0_214, %c0_215, %c0_216], %370 {strides = array<i32>} : memref<1x8x16xf32, #tpu.memory_space<vmem>>, vector<1x8x16xf32>,
    return
  }
  func.func @transform_0(%arg0: i32) -> (i32, i32, i32) {
    %c0_i32 = arith.constant 0 : i32
    %c0_i32_0 = arith.constant 0 : i32
    %c0_i32_1 = arith.constant 0 : i32
    return %arg0, %c0_i32, %c0_i32_0 : i32, i32, i32
  }
  func.func @transform_1(%arg0: i32) -> (i32, i32, i32) {
    %c0_i32 = arith.constant 0 : i32
    %c0_i32_0 = arith.constant 0 : i32
    %c0_i32_1 = arith.constant 0 : i32
    %c0_i32_2 = arith.constant 0 : i32
    return %c0_i32, %c0_i32_0, %c0_i32_1 : i32, i32, i32
  }
  func.func @transform_2(%arg0: i32) -> (i32, i32) {
    %c0_i32 = arith.constant 0 : i32
    %c0_i32_0 = arith.constant 0 : i32
    %c0_i32_1 = arith.constant 0 : i32
    return %c0_i32, %c0_i32_0 : i32, i32
  }
  func.func @transform_3(%arg0: i32) -> (i32, i32, i32) {
    %c0_i32 = arith.constant 0 : i32
    %c0_i32_0 = arith.constant 0 : i32
    %c0_i32_1 = arith.constant 0 : i32
    %c0_i32_2 = arith.constant 0 : i32
    return %c0_i32, %c0_i32_0, %c0_i32_1 : i32, i32, i32
  }
  func.func @transform_4(%arg0: i32) -> (i32, i32) {
    %c0_i32 = arith.constant 0 : i32
    %c0_i32_0 = arith.constant 0 : i32
    %c0_i32_1 = arith.constant 0 : i32
    return %c0_i32, %c0_i32_0 : i32, i32
  }
  func.func @transform_5(%arg0: i32) -> (i32, i32, i32) {
    %c0_i32 = arith.constant 0 : i32
    %c0_i32_0 = arith.constant 0 : i32
    %c0_i32_1 = arith.constant 0 : i32
    %c0_i32_2 = arith.constant 0 : i32
    return %c0_i32, %c0_i32_0, %c0_i32_1 : i32, i32, i32
  }
  func.func @transform_6(%arg0: i32) -> (i32, i32) {
    %c0_i32 = arith.constant 0 : i32
    %c0_i32_0 = arith.constant 0 : i32
    %c0_i32_1 = arith.constant 0 : i32
    return %c0_i32, %c0_i32_0 : i32, i32
  }
  func.func @transform_7(%arg0: i32) -> (i32, i32, i32) {
    %c0_i32 = arith.constant 0 : i32
    %c0_i32_0 = arith.constant 0 : i32
    %c0_i32_1 = arith.constant 0 : i32
    %c0_i32_2 = arith.constant 0 : i32
    return %c0_i32, %c0_i32_0, %c0_i32_1 : i32, i32, i32
  }
  func.func @transform_8(%arg0: i32) -> (i32, i32) {
    %c0_i32 = arith.constant 0 : i32
    %c0_i32_0 = arith.constant 0 : i32
    %c0_i32_1 = arith.constant 0 : i32
    return %c0_i32, %c0_i32_0 : i32, i32
  }
  func.func @transform_9(%arg0: i32) -> (i32, i32, i32) {
    %c0_i32 = arith.constant 0 : i32
    %c0_i32_0 = arith.constant 0 : i32
    %c0_i32_1 = arith.constant 0 : i32
    %c0_i32_2 = arith.constant 0 : i32
    return %c0_i32, %c0_i32_0, %c0_i32_1 : i32, i32, i32
  }
  func.func @transform_10(%arg0: i32) -> (i32, i32) {
    %c0_i32 = arith.constant 0 : i32
    %c0_i32_0 = arith.constant 0 : i32
    %c0_i32_1 = arith.constant 0 : i32
    return %c0_i32, %c0_i32_0 : i32, i32
  }
  func.func @transform_11(%arg0: i32) -> (i32, i32, i32) {
    %c0_i32 = arith.constant 0 : i32
    %c0_i32_0 = arith.constant 0 : i32
    %c0_i32_1 = arith.constant 0 : i32
    %c0_i32_2 = arith.constant 0 : i32
    return %c0_i32, %c0_i32_0, %c0_i32_1 : i32, i32, i32
  }
  func.func @transform_12(%arg0: i32) -> (i32, i32) {
    %c0_i32 = arith.constant 0 : i32
    %c0_i32_0 = arith.constant 0 : i32
    %c0_i32_1 = arith.constant 0 : i32
    return %c0_i32, %c0_i32_0 : i32, i32
  }
  func.func @transform_13(%arg0: i32) -> (i32, i32) {
    %c0_i32 = arith.constant 0 : i32
    %c0_i32_0 = arith.constant 0 : i32
    %c0_i32_1 = arith.constant 0 : i32
    return %c0_i32, %c0_i32_0 : i32, i32
  }
  func.func @transform_14(%arg0: i32) -> (i32, i32) {
    %c0_i32 = arith.constant 0 : i32
    %c0_i32_0 = arith.constant 0 : i32
    %c0_i32_1 = arith.constant 0 : i32
    return %c0_i32, %c0_i32_0 : i32, i32
  }
  func.func @transform_15(%arg0: i32) -> (i32, i32, i32) {
    %c0_i32 = arith.constant 0 : i32
    %c0_i32_0 = arith.constant 0 : i32
    %c0_i32_1 = arith.constant 0 : i32
    return %arg0, %c0_i32, %c0_i32_0 : i32, i32, i32
  }
}

</mosaic_0001>

<llo_original>
// kernel: fcn_forward.1
$region0: #{fcn_forward.1}
  #allocation0 [shape = 'u32[]', space=smem, size = 0x4, offset = 0x4, fixed_abs, tag = 'smem constant byte address 0x4 - core index']
  #allocation1 [shape = 'u32[144,128]{1,0:T(1,128)}', space=vmem, size = 0x12000, scoped, tag = 'internal scratch']
  %s0 = inlined_call_operand.vmem [shape: f32[1,128,1], index: 0, kind: input, shape index: {}]
  %s1 = inlined_call_operand.vmem [shape: bf16[10,1,30], index: 1, kind: input, shape index: {}]
  %s2 = inlined_call_operand.vmem [shape: f32[1,30], index: 2, kind: input, shape index: {}]
  %s3 = inlined_call_operand.vmem [shape: bf16[8,30,30], index: 3, kind: input, shape index: {}]
  %s4 = inlined_call_operand.vmem [shape: f32[1,30], index: 4, kind: input, shape index: {}]
  %s5 = inlined_call_operand.vmem [shape: bf16[6,30,40], index: 5, kind: input, shape index: {}]
  %s6 = inlined_call_operand.vmem [shape: f32[1,40], index: 6, kind: input, shape index: {}]
  %s7 = inlined_call_operand.vmem [shape: bf16[5,40,50], index: 7, kind: input, shape index: {}]
  %s8 = inlined_call_operand.vmem [shape: f32[1,50], index: 8, kind: input, shape index: {}]
  %s9 = inlined_call_operand.vmem [shape: bf16[5,50,50], index: 9, kind: input, shape index: {}]
  %s10 = inlined_call_operand.vmem [shape: f32[1,50], index: 10, kind: input, shape index: {}]
  %s11 = inlined_call_operand.vmem [shape: bf16[16,50,1024], index: 11, kind: input, shape index: {}]
  %s12 = inlined_call_operand.vmem [shape: f32[1,1024], index: 12, kind: input, shape index: {}]
  %s13 = inlined_call_operand.vmem [shape: bf16[1024,16], index: 13, kind: input, shape index: {}]
  %s14 = inlined_call_operand.vmem [shape: f32[1,16], index: 14, kind: input, shape index: {}]
  %s15 = inlined_call_operand.vmem [shape: f32[1,8,16], index: 15, kind: output, shape index: {}]
  %s16 = sld [smem:[#allocation0]]
  $region70: #{fcn_forward.1} parent=0
    _
  %s18 = ssub.s32 1, %s16
  %s19 = scalar_select 0, %s18, %s16
  // Predicated region
  $region2: #{fcn_forward.1} parent=0 // pred_check
    _
  $region3: #{fcn_forward.1} parent=0 // pred_check_branch
    %21 = sbr.rel (0) target = $region5
  $region4: #{fcn_forward.1} parent=0 // pred_region
    _
  $region5: #{fcn_forward.1} parent=0 // pred_fallthru
    _
  // Predicated region
  $region6: #{fcn_forward.1} parent=0 // pred_check
    _
  $region7: #{fcn_forward.1} parent=0 // pred_check_branch
    %23 = sbr.rel (0) target = $region9
  $region8: #{fcn_forward.1} parent=0 // pred_region
    _
  $region9: #{fcn_forward.1} parent=0 // pred_fallthru
    _
  // Predicated region
  $region10: #{fcn_forward.1} parent=0 // pred_check
    _
  $region11: #{fcn_forward.1} parent=0 // pred_check_branch
    %25 = sbr.rel (0) target = $region13
  $region12: #{fcn_forward.1} parent=0 // pred_region
    _
  $region13: #{fcn_forward.1} parent=0 // pred_fallthru
    _
  // Predicated region
  $region14: #{fcn_forward.1} parent=0 // pred_check
    _
  $region15: #{fcn_forward.1} parent=0 // pred_check_branch
    %27 = sbr.rel (0) target = $region17
  $region16: #{fcn_forward.1} parent=0 // pred_region
    _
  $region17: #{fcn_forward.1} parent=0 // pred_fallthru
    _
  // Predicated region
  $region18: #{fcn_forward.1} parent=0 // pred_check
    _
  $region19: #{fcn_forward.1} parent=0 // pred_check_branch
    %29 = sbr.rel (0) target = $region21
  $region20: #{fcn_forward.1} parent=0 // pred_region
    _
  $region21: #{fcn_forward.1} parent=0 // pred_fallthru
    _
  // Predicated region
  $region22: #{fcn_forward.1} parent=0 // pred_check
    _
  $region23: #{fcn_forward.1} parent=0 // pred_check_branch
    %31 = sbr.rel (0) target = $region25
  $region24: #{fcn_forward.1} parent=0 // pred_region
    _
  $region25: #{fcn_forward.1} parent=0 // pred_fallthru
    _
  // Predicated region
  $region26: #{fcn_forward.1} parent=0 // pred_check
    _
  $region27: #{fcn_forward.1} parent=0 // pred_check_branch
    %33 = sbr.rel (0) target = $region29
  $region28: #{fcn_forward.1} parent=0 // pred_region
    _
  $region29: #{fcn_forward.1} parent=0 // pred_fallthru
    _
  // Predicated region
  $region30: #{fcn_forward.1} parent=0 // pred_check
    _
  $region31: #{fcn_forward.1} parent=0 // pred_check_branch
    %35 = sbr.rel (0) target = $region33
  $region32: #{fcn_forward.1} parent=0 // pred_region
    _
  $region33: #{fcn_forward.1} parent=0 // pred_fallthru
    _
  // Predicated region
  $region34: #{fcn_forward.1} parent=0 // pred_check
    _
  $region35: #{fcn_forward.1} parent=0 // pred_check_branch
    %37 = sbr.rel (0) target = $region37
  $region36: #{fcn_forward.1} parent=0 // pred_region
    _
  $region37: #{fcn_forward.1} parent=0 // pred_fallthru
    _
  // Predicated region
  $region38: #{fcn_forward.1} parent=0 // pred_check
    _
  $region39: #{fcn_forward.1} parent=0 // pred_check_branch
    %39 = sbr.rel (0) target = $region41
  $region40: #{fcn_forward.1} parent=0 // pred_region
    _
  $region41: #{fcn_forward.1} parent=0 // pred_fallthru
    _
  // Predicated region
  $region42: #{fcn_forward.1} parent=0 // pred_check
    _
  $region43: #{fcn_forward.1} parent=0 // pred_check_branch
    %41 = sbr.rel (0) target = $region45
  $region44: #{fcn_forward.1} parent=0 // pred_region
    _
  $region45: #{fcn_forward.1} parent=0 // pred_fallthru
    _
  // Predicated region
  $region46: #{fcn_forward.1} parent=0 // pred_check
    _
  $region47: #{fcn_forward.1} parent=0 // pred_check_branch
    %43 = sbr.rel (0) target = $region49
  $region48: #{fcn_forward.1} parent=0 // pred_region
    _
  $region49: #{fcn_forward.1} parent=0 // pred_fallthru
    _
  // Predicated region
  $region50: #{fcn_forward.1} parent=0 // pred_check
    _
  $region51: #{fcn_forward.1} parent=0 // pred_check_branch
    %45 = sbr.rel (0) target = $region53
  $region52: #{fcn_forward.1} parent=0 // pred_region
    _
  $region53: #{fcn_forward.1} parent=0 // pred_fallthru
    _
  // Predicated region
  $region54: #{fcn_forward.1} parent=0 // pred_check
    _
  $region55: #{fcn_forward.1} parent=0 // pred_check_branch
    %47 = sbr.rel (0) target = $region57
  $region56: #{fcn_forward.1} parent=0 // pred_region
    _
  $region57: #{fcn_forward.1} parent=0 // pred_fallthru
    _
  // Predicated region
  $region58: #{fcn_forward.1} parent=0 // pred_check
    _
  $region59: #{fcn_forward.1} parent=0 // pred_check_branch
    %49 = sbr.rel (0) target = $region61
  $region60: #{fcn_forward.1} parent=0 // pred_region
    _
  $region61: #{fcn_forward.1} parent=0 // pred_fallthru
    _
  %v51 = vld [vmem:[%s0] sm:$0xff]
  %v52 = vld [vmem:[%s0 + $0x8] sm:$0xff]
  %v53 = vld [vmem:[%s0 + $0x10] sm:$0xff]
  %v54 = vld [vmem:[%s0 + $0x18] sm:$0xff]
  %v55 = vld [vmem:[%s0 + $0x20] sm:$0xff]
  %v56 = vld [vmem:[%s0 + $0x28] sm:$0xff]
  %v57 = vld [vmem:[%s0 + $0x30] sm:$0xff]
  %v58 = vld [vmem:[%s0 + $0x38] sm:$0xff]
  %v59 = vld [vmem:[%s0 + $0x40] sm:$0xff]
  %v60 = vld [vmem:[%s0 + $0x48] sm:$0xff]
  %v61 = vld [vmem:[%s0 + $0x50] sm:$0xff]
  %v62 = vld [vmem:[%s0 + $0x58] sm:$0xff]
  %v63 = vld [vmem:[%s0 + $0x60] sm:$0xff]
  %v64 = vld [vmem:[%s0 + $0x68] sm:$0xff]
  %v65 = vld [vmem:[%s0 + $0x70] sm:$0xff]
  %v66 = vld [vmem:[%s0 + $0x78] sm:$0xff]
  %v67 = vpack.c.bf16 0.0, 0.0
  %v68 = vpack.c.bf16 %v52, %v51
  %v69 = vpack.c.bf16 %v54, %v53
  %v70 = vpack.c.bf16 %v56, %v55
  %v71 = vpack.c.bf16 %v58, %v57
  %v72 = vpack.c.bf16 %v60, %v59
  %v73 = vpack.c.bf16 %v62, %v61
  %v74 = vpack.c.bf16 %v64, %v63
  %v75 = vpack.c.bf16 %v66, %v65
  %v76 = vunpack.c.l.bf16 %v67
  %v77 = vunpack.c.h.bf16 %v67
  %v78 = vunpack.c.l.bf16 %v68
  %v79 = vunpack.c.h.bf16 %v68
  %v80 = vunpack.c.l.bf16 %v69
  %v81 = vunpack.c.h.bf16 %v69
  %v82 = vunpack.c.l.bf16 %v70
  %v83 = vunpack.c.h.bf16 %v70
  %v84 = vunpack.c.l.bf16 %v71
  %v85 = vunpack.c.h.bf16 %v71
  %v86 = vunpack.c.l.bf16 %v72
  %v87 = vunpack.c.h.bf16 %v72
  %v88 = vunpack.c.l.bf16 %v73
  %v89 = vunpack.c.h.bf16 %v73
  %v90 = vld [vmem:[%s1] sm:$0x1]
  %v91 = vunpack.c.l.bf16 %v90
  %93 = vset.pattern.permute.xlu0 0
  %94 = vperm.xlu0 %93, %v76
  %v95 = vpop.permute.xlu0 %94
  %98 = vset.pattern.permute.xlu0 0
  %99 = vperm.xlu0 %98, %v77
  %v100 = vpop.permute.xlu0 %99
  %103 = vset.pattern.permute.xlu0 0
  %104 = vperm.xlu0 %103, %v78
  %v105 = vpop.permute.xlu0 %104
  %108 = vset.pattern.permute.xlu0 0
  %109 = vperm.xlu0 %108, %v79
  %v110 = vpop.permute.xlu0 %109
  %113 = vset.pattern.permute.xlu0 0
  %114 = vperm.xlu0 %113, %v80
  %v115 = vpop.permute.xlu0 %114
  %118 = vset.pattern.permute.xlu0 0
  %119 = vperm.xlu0 %118, %v81
  %v120 = vpop.permute.xlu0 %119
  %123 = vset.pattern.permute.xlu0 0
  %124 = vperm.xlu0 %123, %v82
  %v125 = vpop.permute.xlu0 %124
  %128 = vset.pattern.permute.xlu0 0
  %129 = vperm.xlu0 %128, %v83
  %v130 = vpop.permute.xlu0 %129
  %133 = vset.pattern.permute.xlu0 0
  %134 = vperm.xlu0 %133, %v84
  %v135 = vpop.permute.xlu0 %134
  %138 = vset.pattern.permute.xlu0 0
  %139 = vperm.xlu0 %138, %v85
  %v140 = vpop.permute.xlu0 %139
  %143 = vset.pattern.permute.xlu0 0
  %144 = vperm.xlu0 %143, %v86
  %v145 = vpop.permute.xlu0 %144
  %148 = vset.pattern.permute.xlu0 0
  %149 = vperm.xlu0 %148, %v87
  %v150 = vpop.permute.xlu0 %149
  %153 = vset.pattern.permute.xlu0 0
  %154 = vperm.xlu0 %153, %v88
  %v155 = vpop.permute.xlu0 %154
  %158 = vset.pattern.permute.xlu0 0
  %159 = vperm.xlu0 %158, %v89
  %v160 = vpop.permute.xlu0 %159
  %v162 = vlaneseq
  %v163 = vshrl.u32 %v162, 7
  %v164 = vsub.s32 0, %v163
  %v165 = vrot.slane %v91, %v164
  %v166 = vmul.f32 %v95, %v165
  %v167 = vmul.f32 %v100, %v165
  %v168 = vmul.f32 %v105, %v165
  %v169 = vmul.f32 %v110, %v165
  %v170 = vmul.f32 %v115, %v165
  %v171 = vmul.f32 %v120, %v165
  %v172 = vmul.f32 %v125, %v165
  %v173 = vmul.f32 %v130, %v165
  %v174 = vmul.f32 %v135, %v165
  %v175 = vmul.f32 %v140, %v165
  %v176 = vmul.f32 %v145, %v165
  %v177 = vmul.f32 %v150, %v165
  %v178 = vmul.f32 %v155, %v165
  %v179 = vmul.f32 %v160, %v165
  %v180 = vadd.f32 %v166, 0.0
  %v181 = vadd.f32 %v167, 0.0
  %v182 = vadd.f32 %v168, 0.0
  %v183 = vadd.f32 %v169, 0.0
  %v184 = vadd.f32 %v170, 0.0
  %v185 = vadd.f32 %v171, 0.0
  %v186 = vadd.f32 %v172, 0.0
  %v187 = vadd.f32 %v173, 0.0
  %v188 = vadd.f32 %v174, 0.0
  %v189 = vadd.f32 %v175, 0.0
  %v190 = vadd.f32 %v176, 0.0
  %v191 = vadd.f32 %v177, 0.0
  %v192 = vadd.f32 %v178, 0.0
  %v193 = vadd.f32 %v179, 0.0
  %vm202 = vcmask 1043456
  %v203 = vrot.slane %v67, 4
  %v204 = vsel %vm202, %v203, %v203
  %v205 = vrot.slane %v68, 4
  %v206 = vsel %vm202, %v203, %v205
  %v207 = vrot.slane %v69, 4
  %v208 = vsel %vm202, %v205, %v207
  %v209 = vrot.slane %v70, 4
  %v210 = vsel %vm202, %v207, %v209
  %v211 = vrot.slane %v71, 4
  %v212 = vsel %vm202, %v209, %v211
  %v213 = vrot.slane %v72, 4
  %v214 = vsel %vm202, %v211, %v213
  %v215 = vrot.slane %v73, 4
  %v216 = vsel %vm202, %v213, %v215
  %v217 = vrot.slane %v74, 4
  %v218 = vsel %vm202, %v215, %v217
  %v227 = vunpack.c.l.bf16 %v204
  %v228 = vunpack.c.h.bf16 %v204
  %v229 = vunpack.c.l.bf16 %v206
  %v230 = vunpack.c.h.bf16 %v206
  %v231 = vunpack.c.l.bf16 %v208
  %v232 = vunpack.c.h.bf16 %v208
  %v233 = vunpack.c.l.bf16 %v210
  %v234 = vunpack.c.h.bf16 %v210
  %v235 = vunpack.c.l.bf16 %v212
  %v236 = vunpack.c.h.bf16 %v212
  %v237 = vunpack.c.l.bf16 %v214
  %v238 = vunpack.c.h.bf16 %v214
  %v239 = vunpack.c.l.bf16 %v216
  %v240 = vunpack.c.h.bf16 %v216
  %v241 = vunpack.c.l.bf16 %v218
  %v242 = vunpack.c.h.bf16 %v218
  %s243 = scalar_lea.vmem %s1, 1
  %v244 = vld [vmem:[%s243] sm:$0x1]
  %v245 = vunpack.c.l.bf16 %v244
  %247 = vset.pattern.permute.xlu0 0
  %248 = vperm.xlu0 %247, %v227
  %v249 = vpop.permute.xlu0 %248
  %252 = vset.pattern.permute.xlu0 0
  %253 = vperm.xlu0 %252, %v228
  %v254 = vpop.permute.xlu0 %253
  %257 = vset.pattern.permute.xlu0 0
  %258 = vperm.xlu0 %257, %v229
  %v259 = vpop.permute.xlu0 %258
  %262 = vset.pattern.permute.xlu0 0
  %263 = vperm.xlu0 %262, %v230
  %v264 = vpop.permute.xlu0 %263
  %267 = vset.pattern.permute.xlu0 0
  %268 = vperm.xlu0 %267, %v231
  %v269 = vpop.permute.xlu0 %268
  %272 = vset.pattern.permute.xlu0 0
  %273 = vperm.xlu0 %272, %v232
  %v274 = vpop.permute.xlu0 %273
  %277 = vset.pattern.permute.xlu0 0
  %278 = vperm.xlu0 %277, %v233
  %v279 = vpop.permute.xlu0 %278
  %282 = vset.pattern.permute.xlu0 0
  %283 = vperm.xlu0 %282, %v234
  %v284 = vpop.permute.xlu0 %283
  %287 = vset.pattern.permute.xlu0 0
  %288 = vperm.xlu0 %287, %v235
  %v289 = vpop.permute.xlu0 %288
  %292 = vset.pattern.permute.xlu0 0
  %293 = vperm.xlu0 %292, %v236
  %v294 = vpop.permute.xlu0 %293
  %297 = vset.pattern.permute.xlu0 0
  %298 = vperm.xlu0 %297, %v237
  %v299 = vpop.permute.xlu0 %298
  %302 = vset.pattern.permute.xlu0 0
  %303 = vperm.xlu0 %302, %v238
  %v304 = vpop.permute.xlu0 %303
  %307 = vset.pattern.permute.xlu0 0
  %308 = vperm.xlu0 %307, %v239
  %v309 = vpop.permute.xlu0 %308
  %312 = vset.pattern.permute.xlu0 0
  %313 = vperm.xlu0 %312, %v240
  %v314 = vpop.permute.xlu0 %313
  %317 = vset.pattern.permute.xlu0 0
  %318 = vperm.xlu0 %317, %v241
  %v319 = vpop.permute.xlu0 %318
  %322 = vset.pattern.permute.xlu0 0
  %323 = vperm.xlu0 %322, %v242
  %v324 = vpop.permute.xlu0 %323
  %v326 = vlaneseq
  %v327 = vshrl.u32 %v326, 7
  %v328 = vsub.s32 0, %v327
  %v329 = vrot.slane %v245, %v328
  %v330 = vmul.f32 %v249, %v329
  %v331 = vmul.f32 %v254, %v329
  %v332 = vmul.f32 %v259, %v329
  %v333 = vmul.f32 %v264, %v329
  %v334 = vmul.f32 %v269, %v329
  %v335 = vmul.f32 %v274, %v329
  %v336 = vmul.f32 %v279, %v329
  %v337 = vmul.f32 %v284, %v329
  %v338 = vmul.f32 %v289, %v329
  %v339 = vmul.f32 %v294, %v329
  %v340 = vmul.f32 %v299, %v329
  %v341 = vmul.f32 %v304, %v329
  %v342 = vmul.f32 %v309, %v329
  %v343 = vmul.f32 %v314, %v329
  %v344 = vmul.f32 %v319, %v329
  %v345 = vmul.f32 %v324, %v329
  %v346 = vadd.f32 %v180, %v330
  %v347 = vadd.f32 %v181, %v331
  %v348 = vadd.f32 %v180, %v332
  %v349 = vadd.f32 %v181, %v333
  %v350 = vadd.f32 %v182, %v334
  %v351 = vadd.f32 %v183, %v335
  %v352 = vadd.f32 %v184, %v336
  %v353 = vadd.f32 %v185, %v337
  %v354 = vadd.f32 %v186, %v338
  %v355 = vadd.f32 %v187, %v339
  %v356 = vadd.f32 %v188, %v340
  %v357 = vadd.f32 %v189, %v341
  %v358 = vadd.f32 %v190, %v342
  %v359 = vadd.f32 %v191, %v343
  %v360 = vadd.f32 %v192, %v344
  %v361 = vadd.f32 %v193, %v345
  %v362 = vunpack.c.l.bf16 %v74
  %v363 = vunpack.c.h.bf16 %v74
  %s364 = scalar_lea.vmem %s1, 2
  %v365 = vld [vmem:[%s364] sm:$0x1]
  %v366 = vunpack.c.l.bf16 %v365
  %368 = vset.pattern.permute.xlu0 0
  %369 = vperm.xlu0 %368, %v362
  %v370 = vpop.permute.xlu0 %369
  %373 = vset.pattern.permute.xlu0 0
  %374 = vperm.xlu0 %373, %v363
  %v375 = vpop.permute.xlu0 %374
  %v377 = vlaneseq
  %v378 = vshrl.u32 %v377, 7
  %v379 = vsub.s32 0, %v378
  %v380 = vrot.slane %v366, %v379
  %v381 = vmul.f32 %v95, %v380
  %v382 = vmul.f32 %v100, %v380
  %v383 = vmul.f32 %v105, %v380
  %v384 = vmul.f32 %v110, %v380
  %v385 = vmul.f32 %v115, %v380
  %v386 = vmul.f32 %v120, %v380
  %v387 = vmul.f32 %v125, %v380
  %v388 = vmul.f32 %v130, %v380
  %v389 = vmul.f32 %v135, %v380
  %v390 = vmul.f32 %v140, %v380
  %v391 = vmul.f32 %v145, %v380
  %v392 = vmul.f32 %v150, %v380
  %v393 = vmul.f32 %v155, %v380
  %v394 = vmul.f32 %v160, %v380
  %v395 = vmul.f32 %v370, %v380
  %v396 = vmul.f32 %v375, %v380
  %v397 = vadd.f32 %v346, %v381
  %v398 = vadd.f32 %v347, %v382
  %v399 = vadd.f32 %v348, %v383
  %v400 = vadd.f32 %v349, %v384
  %v401 = vadd.f32 %v350, %v385
  %v402 = vadd.f32 %v351, %v386
  %v403 = vadd.f32 %v352, %v387
  %v404 = vadd.f32 %v353, %v388
  %v405 = vadd.f32 %v354, %v389
  %v406 = vadd.f32 %v355, %v390
  %v407 = vadd.f32 %v356, %v391
  %v408 = vadd.f32 %v357, %v392
  %v409 = vadd.f32 %v358, %v393
  %v410 = vadd.f32 %v359, %v394
  %v411 = vadd.f32 %v360, %v395
  %v412 = vadd.f32 %v361, %v396
  %v414 = vrot.slane %v75, 4
  %v415 = vsel %vm202, %v217, %v414
  %v417 = vunpack.c.l.bf16 %v415
  %v418 = vunpack.c.h.bf16 %v415
  %s419 = scalar_lea.vmem %s1, 3
  %v420 = vld [vmem:[%s419] sm:$0x1]
  %v421 = vunpack.c.l.bf16 %v420
  %423 = vset.pattern.permute.xlu0 0
  %424 = vperm.xlu0 %423, %v417
  %v425 = vpop.permute.xlu0 %424
  %428 = vset.pattern.permute.xlu0 0
  %429 = vperm.xlu0 %428, %v418
  %v430 = vpop.permute.xlu0 %429
  %v432 = vlaneseq
  %v433 = vshrl.u32 %v432, 7
  %v434 = vsub.s32 0, %v433
  %v435 = vrot.slane %v421, %v434
  %v436 = vmul.f32 %v259, %v435
  %v437 = vmul.f32 %v264, %v435
  %v438 = vmul.f32 %v269, %v435
  %v439 = vmul.f32 %v274, %v435
  %v440 = vmul.f32 %v279, %v435
  %v441 = vmul.f32 %v284, %v435
  %v442 = vmul.f32 %v289, %v435
  %v443 = vmul.f32 %v294, %v435
  %v444 = vmul.f32 %v299, %v435
  %v445 = vmul.f32 %v304, %v435
  %v446 = vmul.f32 %v309, %v435
  %v447 = vmul.f32 %v314, %v435
  %v448 = vmul.f32 %v319, %v435
  %v449 = vmul.f32 %v324, %v435
  %v450 = vmul.f32 %v425, %v435
  %v451 = vmul.f32 %v430, %v435
  %v452 = vadd.f32 %v397, %v436
  %v453 = vadd.f32 %v398, %v437
  %v454 = vadd.f32 %v399, %v438
  %v455 = vadd.f32 %v400, %v439
  %v456 = vadd.f32 %v401, %v440
  %v457 = vadd.f32 %v402, %v441
  %v458 = vadd.f32 %v403, %v442
  %v459 = vadd.f32 %v404, %v443
  %v460 = vadd.f32 %v405, %v444
  %v461 = vadd.f32 %v406, %v445
  %v462 = vadd.f32 %v407, %v446
  %v463 = vadd.f32 %v408, %v447
  %v464 = vadd.f32 %v409, %v448
  %v465 = vadd.f32 %v410, %v449
  %v466 = vadd.f32 %v411, %v450
  %v467 = vadd.f32 %v412, %v451
  %v468 = vunpack.c.l.bf16 %v75
  %v469 = vunpack.c.h.bf16 %v75
  %s470 = scalar_lea.vmem %s1, 4
  %v471 = vld [vmem:[%s470] sm:$0x1]
  %v472 = vunpack.c.l.bf16 %v471
  %474 = vset.pattern.permute.xlu0 0
  %475 = vperm.xlu0 %474, %v468
  %v476 = vpop.permute.xlu0 %475
  %479 = vset.pattern.permute.xlu0 0
  %480 = vperm.xlu0 %479, %v469
  %v481 = vpop.permute.xlu0 %480
  %v483 = vlaneseq
  %v484 = vshrl.u32 %v483, 7
  %v485 = vsub.s32 0, %v484
  %v486 = vrot.slane %v472, %v485
  %v487 = vmul.f32 %v105, %v486
  %v488 = vmul.f32 %v110, %v486
  %v489 = vmul.f32 %v115, %v486
  %v490 = vmul.f32 %v120, %v486
  %v491 = vmul.f32 %v125, %v486
  %v492 = vmul.f32 %v130, %v486
  %v493 = vmul.f32 %v135, %v486
  %v494 = vmul.f32 %v140, %v486
  %v495 = vmul.f32 %v145, %v486
  %v496 = vmul.f32 %v150, %v486
  %v497 = vmul.f32 %v155, %v486
  %v498 = vmul.f32 %v160, %v486
  %v499 = vmul.f32 %v370, %v486
  %v500 = vmul.f32 %v375, %v486
  %v501 = vmul.f32 %v476, %v486
  %v502 = vmul.f32 %v481, %v486
  %v503 = vadd.f32 %v452, %v487
  %v504 = vadd.f32 %v453, %v488
  %v505 = vadd.f32 %v454, %v489
  %v506 = vadd.f32 %v455, %v490
  %v507 = vadd.f32 %v456, %v491
  %v508 = vadd.f32 %v457, %v492
  %v509 = vadd.f32 %v458, %v493
  %v510 = vadd.f32 %v459, %v494
  %v511 = vadd.f32 %v460, %v495
  %v512 = vadd.f32 %v461, %v496
  %v513 = vadd.f32 %v462, %v497
  %v514 = vadd.f32 %v463, %v498
  %v515 = vadd.f32 %v464, %v499
  %v516 = vadd.f32 %v465, %v500
  %v517 = vadd.f32 %v466, %v501
  %v518 = vadd.f32 %v467, %v502
  %v519 = vsel %vm202, %v414, %v203
  %v521 = vunpack.c.l.bf16 %v519
  %v522 = vunpack.c.h.bf16 %v519
  %s523 = scalar_lea.vmem %s1, 5
  %v524 = vld [vmem:[%s523] sm:$0x1]
  %v525 = vunpack.c.l.bf16 %v524
  %527 = vset.pattern.permute.xlu0 0
  %528 = vperm.xlu0 %527, %v521
  %v529 = vpop.permute.xlu0 %528
  %532 = vset.pattern.permute.xlu0 0
  %533 = vperm.xlu0 %532, %v522
  %v534 = vpop.permute.xlu0 %533
  %v536 = vlaneseq
  %v537 = vshrl.u32 %v536, 7
  %v538 = vsub.s32 0, %v537
  %v539 = vrot.slane %v525, %v538
  %v540 = vmul.f32 %v269, %v539
  %v541 = vmul.f32 %v274, %v539
  %v542 = vmul.f32 %v279, %v539
  %v543 = vmul.f32 %v284, %v539
  %v544 = vmul.f32 %v289, %v539
  %v545 = vmul.f32 %v294, %v539
  %v546 = vmul.f32 %v299, %v539
  %v547 = vmul.f32 %v304, %v539
  %v548 = vmul.f32 %v309, %v539
  %v549 = vmul.f32 %v314, %v539
  %v550 = vmul.f32 %v319, %v539
  %v551 = vmul.f32 %v324, %v539
  %v552 = vmul.f32 %v425, %v539
  %v553 = vmul.f32 %v430, %v539
  %v554 = vmul.f32 %v529, %v539
  %v555 = vmul.f32 %v534, %v539
  %v556 = vadd.f32 %v503, %v540
  %v557 = vadd.f32 %v504, %v541
  %v558 = vadd.f32 %v505, %v542
  %v559 = vadd.f32 %v506, %v543
  %v560 = vadd.f32 %v507, %v544
  %v561 = vadd.f32 %v508, %v545
  %v562 = vadd.f32 %v509, %v546
  %v563 = vadd.f32 %v510, %v547
  %v564 = vadd.f32 %v511, %v548
  %v565 = vadd.f32 %v512, %v549
  %v566 = vadd.f32 %v513, %v550
  %v567 = vadd.f32 %v514, %v551
  %v568 = vadd.f32 %v515, %v552
  %v569 = vadd.f32 %v516, %v553
  %v570 = vadd.f32 %v517, %v554
  %v571 = vadd.f32 %v518, %v555
  %s572 = scalar_lea.vmem %s1, 6
  %v573 = vld [vmem:[%s572] sm:$0x1]
  %v574 = vunpack.c.l.bf16 %v573
  %v575 = vlaneseq
  %v576 = vshrl.u32 %v575, 7
  %v577 = vsub.s32 0, %v576
  %v578 = vrot.slane %v574, %v577
  %v579 = vmul.f32 %v115, %v578
  %v580 = vmul.f32 %v120, %v578
  %v581 = vmul.f32 %v125, %v578
  %v582 = vmul.f32 %v130, %v578
  %v583 = vmul.f32 %v135, %v578
  %v584 = vmul.f32 %v140, %v578
  %v585 = vmul.f32 %v145, %v578
  %v586 = vmul.f32 %v150, %v578
  %v587 = vmul.f32 %v155, %v578
  %v588 = vmul.f32 %v160, %v578
  %v589 = vmul.f32 %v370, %v578
  %v590 = vmul.f32 %v375, %v578
  %v591 = vmul.f32 %v476, %v578
  %v592 = vmul.f32 %v481, %v578
  %v593 = vmul.f32 %v95, %v578
  %v594 = vmul.f32 %v100, %v578
  %v595 = vadd.f32 %v556, %v579
  %v596 = vadd.f32 %v557, %v580
  %v597 = vadd.f32 %v558, %v581
  %v598 = vadd.f32 %v559, %v582
  %v599 = vadd.f32 %v560, %v583
  %v600 = vadd.f32 %v561, %v584
  %v601 = vadd.f32 %v562, %v585
  %v602 = vadd.f32 %v563, %v586
  %v603 = vadd.f32 %v564, %v587
  %v604 = vadd.f32 %v565, %v588
  %v605 = vadd.f32 %v566, %v589
  %v606 = vadd.f32 %v567, %v590
  %v607 = vadd.f32 %v568, %v591
  %v608 = vadd.f32 %v569, %v592
  %v609 = vadd.f32 %v570, %v593
  %v610 = vadd.f32 %v571, %v594
  %s611 = scalar_lea.vmem %s1, 7
  %v612 = vld [vmem:[%s611] sm:$0x1]
  %v613 = vunpack.c.l.bf16 %v612
  %v614 = vlaneseq
  %v615 = vshrl.u32 %v614, 7
  %v616 = vsub.s32 0, %v615
  %v617 = vrot.slane %v613, %v616
  %v618 = vmul.f32 %v279, %v617
  %v619 = vmul.f32 %v284, %v617
  %v620 = vmul.f32 %v289, %v617
  %v621 = vmul.f32 %v294, %v617
  %v622 = vmul.f32 %v299, %v617
  %v623 = vmul.f32 %v304, %v617
  %v624 = vmul.f32 %v309, %v617
  %v625 = vmul.f32 %v314, %v617
  %v626 = vmul.f32 %v319, %v617
  %v627 = vmul.f32 %v324, %v617
  %v628 = vmul.f32 %v425, %v617
  %v629 = vmul.f32 %v430, %v617
  %v630 = vmul.f32 %v529, %v617
  %v631 = vmul.f32 %v534, %v617
  %v632 = vmul.f32 %v249, %v617
  %v633 = vmul.f32 %v254, %v617
  %v634 = vadd.f32 %v595, %v618
  %v635 = vadd.f32 %v596, %v619
  %v636 = vadd.f32 %v597, %v620
  %v637 = vadd.f32 %v598, %v621
  %v638 = vadd.f32 %v599, %v622
  %v639 = vadd.f32 %v600, %v623
  %v640 = vadd.f32 %v601, %v624
  %v641 = vadd.f32 %v602, %v625
  %v642 = vadd.f32 %v603, %v626
  %v643 = vadd.f32 %v604, %v627
  %v644 = vadd.f32 %v605, %v628
  %v645 = vadd.f32 %v606, %v629
  %v646 = vadd.f32 %v607, %v630
  %v647 = vadd.f32 %v608, %v631
  %v648 = vadd.f32 %v609, %v632
  %v649 = vadd.f32 %v610, %v633
  %s650 = scalar_lea.vmem %s1, 8
  %v651 = vld [vmem:[%s650] sm:$0x1]
  %v652 = vunpack.c.l.bf16 %v651
  %v653 = vlaneseq
  %v654 = vshrl.u32 %v653, 7
  %v655 = vsub.s32 0, %v654
  %v656 = vrot.slane %v652, %v655
  %v657 = vmul.f32 %v125, %v656
  %v658 = vmul.f32 %v130, %v656
  %v659 = vmul.f32 %v135, %v656
  %v660 = vmul.f32 %v140, %v656
  %v661 = vmul.f32 %v145, %v656
  %v662 = vmul.f32 %v150, %v656
  %v663 = vmul.f32 %v155, %v656
  %v664 = vmul.f32 %v160, %v656
  %v665 = vmul.f32 %v370, %v656
  %v666 = vmul.f32 %v375, %v656
  %v667 = vmul.f32 %v476, %v656
  %v668 = vmul.f32 %v481, %v656
  %v669 = vmul.f32 %v95, %v656
  %v670 = vmul.f32 %v100, %v656
  %v671 = vadd.f32 %v634, %v657
  %v672 = vadd.f32 %v635, %v658
  %v673 = vadd.f32 %v636, %v659
  %v674 = vadd.f32 %v637, %v660
  %v675 = vadd.f32 %v638, %v661
  %v676 = vadd.f32 %v639, %v662
  %v677 = vadd.f32 %v640, %v663
  %v678 = vadd.f32 %v641, %v664
  %v679 = vadd.f32 %v642, %v665
  %v680 = vadd.f32 %v643, %v666
  %v681 = vadd.f32 %v644, %v667
  %v682 = vadd.f32 %v645, %v668
  %v683 = vadd.f32 %v646, %v669
  %v684 = vadd.f32 %v647, %v670
  %v685 = vadd.f32 %v648, %v669
  %v686 = vadd.f32 %v649, %v670
  %s687 = scalar_lea.vmem %s1, 9
  %v688 = vld [vmem:[%s687] sm:$0x1]
  %v689 = vunpack.c.l.bf16 %v688
  %690 = vset.pattern.permute.xlu0 0
  %691 = vperm.xlu0 %690, %v227
  %v692 = vpop.permute.xlu0 %691
  %694 = vset.pattern.permute.xlu0 0
  %695 = vperm.xlu0 %694, %v228
  %v696 = vpop.permute.xlu0 %695
  %v698 = vlaneseq
  %v699 = vshrl.u32 %v698, 7
  %v700 = vsub.s32 0, %v699
  %v701 = vrot.slane %v689, %v700
  %v702 = vmul.f32 %v289, %v701
  %v703 = vmul.f32 %v294, %v701
  %v704 = vmul.f32 %v299, %v701
  %v705 = vmul.f32 %v304, %v701
  %v706 = vmul.f32 %v309, %v701
  %v707 = vmul.f32 %v314, %v701
  %v708 = vmul.f32 %v319, %v701
  %v709 = vmul.f32 %v324, %v701
  %v710 = vmul.f32 %v425, %v701
  %v711 = vmul.f32 %v430, %v701
  %v712 = vmul.f32 %v529, %v701
  %v713 = vmul.f32 %v534, %v701
  %v714 = vmul.f32 %v249, %v701
  %v715 = vmul.f32 %v254, %v701
  %v716 = vmul.f32 %v692, %v701
  %v717 = vmul.f32 %v696, %v701
  %v718 = vadd.f32 %v671, %v702
  %v719 = vadd.f32 %v672, %v703
  %v720 = vadd.f32 %v673, %v704
  %v721 = vadd.f32 %v674, %v705
  %v722 = vadd.f32 %v675, %v706
  %v723 = vadd.f32 %v676, %v707
  %v724 = vadd.f32 %v677, %v708
  %v725 = vadd.f32 %v678, %v709
  %v726 = vadd.f32 %v679, %v710
  %v727 = vadd.f32 %v680, %v711
  %v728 = vadd.f32 %v681, %v712
  %v729 = vadd.f32 %v682, %v713
  %v730 = vadd.f32 %v683, %v714
  %v731 = vadd.f32 %v684, %v715
  %v732 = vadd.f32 %v685, %v716
  %v733 = vadd.f32 %v686, %v717
  %v734 = vld [vmem:[%s2] sm:$0x1]
  %v736 = vlaneseq
  %v737 = vshrl.u32 %v736, 7
  %v738 = vsub.s32 0, %v737
  %v739 = vrot.slane %v734, %v738
  %v741 = vadd.f32 %v718, %v739
  %v742 = vadd.f32 %v719, %v739
  %v743 = vadd.f32 %v720, %v739
  %v744 = vadd.f32 %v721, %v739
  %v745 = vadd.f32 %v722, %v739
  %v746 = vadd.f32 %v723, %v739
  %v747 = vadd.f32 %v724, %v739
  %v748 = vadd.f32 %v725, %v739
  %v749 = vadd.f32 %v726, %v739
  %v750 = vadd.f32 %v727, %v739
  %v751 = vadd.f32 %v728, %v739
  %v752 = vadd.f32 %v729, %v739
  %v753 = vadd.f32 %v730, %v739
  %v754 = vadd.f32 %v731, %v739
  %v755 = vadd.f32 %v732, %v739
  %v756 = vadd.f32 %v733, %v739
  %v757 = vmax.f32 %v741, 0.0
  %v758 = vmax.f32 %v742, 0.0
  %v759 = vmax.f32 %v743, 0.0
  %v760 = vmax.f32 %v744, 0.0
  %v761 = vmax.f32 %v745, 0.0
  %v762 = vmax.f32 %v746, 0.0
  %v763 = vmax.f32 %v747, 0.0
  %v764 = vmax.f32 %v748, 0.0
  %v765 = vmax.f32 %v749, 0.0
  %v766 = vmax.f32 %v750, 0.0
  %v767 = vmax.f32 %v751, 0.0
  %v768 = vmax.f32 %v752, 0.0
  %v769 = vmax.f32 %v753, 0.0
  %v770 = vmax.f32 %v754, 0.0
  %v771 = vmax.f32 %v755, 0.0
  %v772 = vmax.f32 %v756, 0.0
  %v773 = vpack.c.bf16 %v757, 0.0
  %v774 = vpack.c.bf16 %v759, %v758
  %v775 = vpack.c.bf16 %v761, %v760
  %v776 = vpack.c.bf16 %v763, %v762
  %v777 = vpack.c.bf16 %v765, %v764
  %v778 = vpack.c.bf16 %v767, %v766
  %v779 = vpack.c.bf16 %v769, %v768
  %v780 = vpack.c.bf16 %v771, %v770
  %v781 = vpack.c.bf16 0.0, %v772
  %v782 = vld [vmem:[%s3] sm:$0xf]
  %v783 = vld [vmem:[%s3 + $0x4] sm:$0xf]
  %v784 = vld [vmem:[%s3 + $0x8] sm:$0xf]
  %v785 = vld [vmem:[%s3 + $0xc] sm:$0x7]
  %s786 = scalar_lea.vmem %s3, 16
  %v787 = vld [vmem:[%s786] sm:$0xf]
  %v788 = vld [vmem:[%s786 + $0x4] sm:$0xf]
  %v789 = vld [vmem:[%s786 + $0x8] sm:$0xf]
  %v790 = vld [vmem:[%s786 + $0xc] sm:$0x7]
  %v799 = vrot.slane %v773, 4
  %v800 = vsel %vm202, %v203, %v799
  %v801 = vrot.slane %v774, 4
  %v802 = vsel %vm202, %v799, %v801
  %v803 = vrot.slane %v775, 4
  %v804 = vsel %vm202, %v801, %v803
  %v805 = vrot.slane %v776, 4
  %v806 = vsel %vm202, %v803, %v805
  %v807 = vrot.slane %v777, 4
  %v808 = vsel %vm202, %v805, %v807
  %v809 = vrot.slane %v778, 4
  %v810 = vsel %vm202, %v807, %v809
  %v811 = vrot.slane %v779, 4
  %v812 = vsel %vm202, %v809, %v811
  %v813 = vrot.slane %v780, 4
  %v814 = vsel %vm202, %v811, %v813
  %v819 = vunpack.c.l.b16 %v787
  %v820 = vunpack.c.l.b16 %v788
  %v821 = vunpack.c.l.b16 %v789
  %v822 = vunpack.c.l.b16 %v790
  %v823 = vpack.c.b16 %v820, %v819
  %v824 = vpack.c.b16 %v822, %v821
  %vm826 = vcmask 244736
  %v828 = vsel %vm826, %v800, 0
  %v831 = vsel %vm826, %v802, 0
  %v834 = vsel %vm826, %v804, 0
  %v837 = vsel %vm826, %v806, 0
  %v840 = vsel %vm826, %v808, 0
  %v843 = vsel %vm826, %v810, 0
  %v846 = vsel %vm826, %v812, 0
  %v849 = vsel %vm826, %v814, 0
  %vm851 = vcmask 1046528
  %v853 = vsel %vm851, %v824, 0
  %855 = vmatprep.subr.bf16.mxu0 0
  %856 = vmatpush1.bf16.msra.mxu0 %v823
  %857 = vmatprep.subr.bf16.mxu0 0
  %858 = vmatpush1.bf16.msra.mxu0 %v853
  %859 = vmatprep.subr.bf16.mxu0 0
  %860 = vmatpush1.bf16.msra.mxu0 0
  %861 = vmatprep.subr.bf16.mxu0 0
  %862 = vmatpush1.bf16.msra.mxu0 0
  %863 = vmatprep.subr.bf16.mxu0 0
  %864 = vmatpush1.bf16.msra.mxu0 0
  %865 = vmatprep.subr.bf16.mxu0 0
  %866 = vmatpush1.bf16.msra.mxu0 0
  %867 = vmatprep.subr.bf16.mxu0 0
  %868 = vmatpush1.bf16.msra.mxu0 0
  %869 = vmatprep.subr.bf16.mxu0 0
  %870 = vmatpush1.bf16.msra.mxu0 0
  %871 = vmatprep.subr.bf16.mxu0 0
  %872 = vmatpush1.bf16.msra.mxu0 0
  %873 = vmatprep.subr.bf16.mxu0 0
  %874 = vmatpush1.bf16.msra.mxu0 0
  %875 = vmatprep.subr.bf16.mxu0 0
  %876 = vmatpush1.bf16.msra.mxu0 0
  %877 = vmatprep.subr.bf16.mxu0 0
  %878 = vmatpush1.bf16.msra.mxu0 0
  %879 = vmatprep.subr.bf16.mxu0 0
  %880 = vmatpush1.bf16.msra.mxu0 0
  %881 = vmatprep.subr.bf16.mxu0 0
  %882 = vmatpush1.bf16.msra.mxu0 0
  %883 = vmatprep.subr.bf16.mxu0 0
  %884 = vmatpush1.bf16.msra.mxu0 0
  %885 = vmatprep.subr.bf16.mxu0 0
  %886 = vmatpush1.bf16.msra.mxu0 0
  %887 = vmatprep.mubr.bf16.mxu0 0
  %888 = vmatmul.mubr.bf16.gmra.mrb[0].mxu0 %v828
  %v889 = vpop.f32.mrb[0].mxu0
  %v890 = vadd.f32 0.0, %v889
  %v891 = vpop.f32.mrb[0].mxu0
  %v892 = vpop.f32.mrb[0].mxu0
  %v893 = vadd.f32 0.0, %v892
  %v894 = vpop.f32.mrb[0].mxu0
  %895 = vmatprep.mubr.bf16.mxu0 0
  %896 = vmatmul.mubr.bf16.gmra.mrb[0].mxu0 %v831
  %v897 = vpop.f32.mrb[0].mxu0
  %v898 = vadd.f32 0.0, %v897
  %v899 = vpop.f32.mrb[0].mxu0
  %v900 = vpop.f32.mrb[0].mxu0
  %v901 = vadd.f32 0.0, %v900
  %v902 = vpop.f32.mrb[0].mxu0
  %903 = vmatprep.mubr.bf16.mxu0 0
  %904 = vmatmul.mubr.bf16.gmra.mrb[0].mxu0 %v834
  %v905 = vpop.f32.mrb[0].mxu0
  %v906 = vadd.f32 0.0, %v905
  %v907 = vpop.f32.mrb[0].mxu0
  %v908 = vpop.f32.mrb[0].mxu0
  %v909 = vadd.f32 0.0, %v908
  %v910 = vpop.f32.mrb[0].mxu0
  %911 = vmatprep.mubr.bf16.mxu0 0
  %912 = vmatmul.mubr.bf16.gmra.mrb[0].mxu0 %v837
  %v913 = vpop.f32.mrb[0].mxu0
  %v914 = vadd.f32 0.0, %v913
  %v915 = vpop.f32.mrb[0].mxu0
  %v916 = vpop.f32.mrb[0].mxu0
  %v917 = vadd.f32 0.0, %v916
  %v918 = vpop.f32.mrb[0].mxu0
  %919 = vmatprep.mubr.bf16.mxu0 0
  %920 = vmatmul.mubr.bf16.gmra.mrb[0].mxu0 %v840
  %v921 = vpop.f32.mrb[0].mxu0
  %v922 = vadd.f32 0.0, %v921
  %v923 = vpop.f32.mrb[0].mxu0
  %v924 = vpop.f32.mrb[0].mxu0
  %v925 = vadd.f32 0.0, %v924
  %v926 = vpop.f32.mrb[0].mxu0
  %927 = vmatprep.mubr.bf16.mxu0 0
  %928 = vmatmul.mubr.bf16.gmra.mrb[0].mxu0 %v843
  %v929 = vpop.f32.mrb[0].mxu0
  %v930 = vadd.f32 0.0, %v929
  %v931 = vpop.f32.mrb[0].mxu0
  %v932 = vpop.f32.mrb[0].mxu0
  %v933 = vadd.f32 0.0, %v932
  %v934 = vpop.f32.mrb[0].mxu0
  %935 = vmatprep.mubr.bf16.mxu0 0
  %936 = vmatmul.mubr.bf16.gmra.mrb[0].mxu0 %v846
  %v937 = vpop.f32.mrb[0].mxu0
  %v938 = vadd.f32 0.0, %v937
  %v939 = vpop.f32.mrb[0].mxu0
  %v940 = vpop.f32.mrb[0].mxu0
  %v941 = vadd.f32 0.0, %v940
  %v942 = vpop.f32.mrb[0].mxu0
  %943 = vmatprep.mubr.bf16.mxu0 0
  %944 = vmatmul.mubr.bf16.gmra.mrb[0].mxu0 %v849
  %v945 = vpop.f32.mrb[0].mxu0
  %v946 = vadd.f32 0.0, %v945
  %v947 = vpop.f32.mrb[0].mxu0
  %v948 = vpop.f32.mrb[0].mxu0
  %v949 = vadd.f32 0.0, %v948
  %v950 = vpop.f32.mrb[0].mxu0
  %951 = vdwg.mxu0
  %v956 = vunpack.c.l.b16 %v782
  %v957 = vunpack.c.l.b16 %v783
  %v958 = vunpack.c.l.b16 %v784
  %v959 = vunpack.c.l.b16 %v785
  %v960 = vpack.c.b16 %v957, %v956
  %v961 = vpack.c.b16 %v959, %v958
  %v964 = vsel %vm826, %v67, 0
  %v967 = vsel %vm826, %v773, 0
  %v970 = vsel %vm826, %v774, 0
  %v973 = vsel %vm826, %v775, 0
  %v976 = vsel %vm826, %v776, 0
  %v979 = vsel %vm826, %v777, 0
  %v982 = vsel %vm826, %v778, 0
  %v985 = vsel %vm826, %v779, 0
  %v988 = vsel %vm851, %v961, 0
  %990 = vmatprep.subr.bf16.mxu0 0
  %991 = vmatpush1.bf16.msra.mxu0 %v960
  %992 = vmatprep.subr.bf16.mxu0 0
  %993 = vmatpush1.bf16.msra.mxu0 %v988
  %994 = vmatprep.subr.bf16.mxu0 0
  %995 = vmatpush1.bf16.msra.mxu0 0
  %996 = vmatprep.subr.bf16.mxu0 0
  %997 = vmatpush1.bf16.msra.mxu0 0
  %998 = vmatprep.subr.bf16.mxu0 0
  %999 = vmatpush1.bf16.msra.mxu0 0
  %1000 = vmatprep.subr.bf16.mxu0 0
  %1001 = vmatpush1.bf16.msra.mxu0 0
  %1002 = vmatprep.subr.bf16.mxu0 0
  %1003 = vmatpush1.bf16.msra.mxu0 0
  %1004 = vmatprep.subr.bf16.mxu0 0
  %1005 = vmatpush1.bf16.msra.mxu0 0
  %1006 = vmatprep.subr.bf16.mxu0 0
  %1007 = vmatpush1.bf16.msra.mxu0 0
  %1008 = vmatprep.subr.bf16.mxu0 0
  %1009 = vmatpush1.bf16.msra.mxu0 0
  %1010 = vmatprep.subr.bf16.mxu0 0
  %1011 = vmatpush1.bf16.msra.mxu0 0
  %1012 = vmatprep.subr.bf16.mxu0 0
  %1013 = vmatpush1.bf16.msra.mxu0 0
  %1014 = vmatprep.subr.bf16.mxu0 0
  %1015 = vmatpush1.bf16.msra.mxu0 0
  %1016 = vmatprep.subr.bf16.mxu0 0
  %1017 = vmatpush1.bf16.msra.mxu0 0
  %1018 = vmatprep.subr.bf16.mxu0 0
  %1019 = vmatpush1.bf16.msra.mxu0 0
  %1020 = vmatprep.subr.bf16.mxu0 0
  %1021 = vmatpush1.bf16.msra.mxu0 0
  %1022 = vmatprep.mubr.bf16.mxu0 0
  %1023 = vmatmul.mubr.bf16.gmra.mrb[0].mxu0 %v964
  %v1024 = vpop.f32.mrb[0].mxu0
  %v1025 = vadd.f32 %v890, %v1024
  %v1026 = vpop.f32.mrb[0].mxu0
  %v1027 = vpop.f32.mrb[0].mxu0
  %v1028 = vadd.f32 %v893, %v1027
  %v1029 = vpop.f32.mrb[0].mxu0
  %1030 = vmatprep.mubr.bf16.mxu0 0
  %1031 = vmatmul.mubr.bf16.gmra.mrb[0].mxu0 %v967
  %v1032 = vpop.f32.mrb[0].mxu0
  %v1033 = vadd.f32 %v898, %v1032
  %v1034 = vpop.f32.mrb[0].mxu0
  %v1035 = vpop.f32.mrb[0].mxu0
  %v1036 = vadd.f32 %v901, %v1035
  %v1037 = vpop.f32.mrb[0].mxu0
  %1038 = vmatprep.mubr.bf16.mxu0 0
  %1039 = vmatmul.mubr.bf16.gmra.mrb[0].mxu0 %v970
  %v1040 = vpop.f32.mrb[0].mxu0
  %v1041 = vadd.f32 %v906, %v1040
  %v1042 = vpop.f32.mrb[0].mxu0
  %v1043 = vpop.f32.mrb[0].mxu0
  %v1044 = vadd.f32 %v909, %v1043
  %v1045 = vpop.f32.mrb[0].mxu0
  %1046 = vmatprep.mubr.bf16.mxu0 0
  %1047 = vmatmul.mubr.bf16.gmra.mrb[0].mxu0 %v973
  %v1048 = vpop.f32.mrb[0].mxu0
  %v1049 = vadd.f32 %v914, %v1048
  %v1050 = vpop.f32.mrb[0].mxu0
  %v1051 = vpop.f32.mrb[0].mxu0
  %v1052 = vadd.f32 %v917, %v1051
  %v1053 = vpop.f32.mrb[0].mxu0
  %1054 = vmatprep.mubr.bf16.mxu0 0
  %1055 = vmatmul.mubr.bf16.gmra.mrb[0].mxu0 %v976
  %v1056 = vpop.f32.mrb[0].mxu0
  %v1057 = vadd.f32 %v922, %v1056
  %v1058 = vpop.f32.mrb[0].mxu0
  %v1059 = vpop.f32.mrb[0].mxu0
  %v1060 = vadd.f32 %v925, %v1059
  %v1061 = vpop.f32.mrb[0].mxu0
  %1062 = vmatprep.mubr.bf16.mxu0 0
  %1063 = vmatmul.mubr.bf16.gmra.mrb[0].mxu0 %v979
  %v1064 = vpop.f32.mrb[0].mxu0
  %v1065 = vadd.f32 %v930, %v1064
  %v1066 = vpop.f32.mrb[0].mxu0
  %v1067 = vpop.f32.mrb[0].mxu0
  %v1068 = vadd.f32 %v933, %v1067
  %v1069 = vpop.f32.mrb[0].mxu0
  %1070 = vmatprep.mubr.bf16.mxu0 0
  %1071 = vmatmul.mubr.bf16.gmra.mrb[0].mxu0 %v982
  %v1072 = vpop.f32.mrb[0].mxu0
  %v1073 = vadd.f32 %v938, %v1072
  %v1074 = vpop.f32.mrb[0].mxu0
  %v1075 = vpop.f32.mrb[0].mxu0
  %v1076 = vadd.f32 %v941, %v1075
  %v1077 = vpop.f32.mrb[0].mxu0
  %1078 = vmatprep.mubr.bf16.mxu0 0
  %1079 = vmatmul.mubr.bf16.gmra.mrb[0].mxu0 %v985
  %v1080 = vpop.f32.mrb[0].mxu0
  %v1081 = vadd.f32 %v946, %v1080
  %v1082 = vpop.f32.mrb[0].mxu0
  %v1083 = vpop.f32.mrb[0].mxu0
  %v1084 = vadd.f32 %v949, %v1083
  %v1085 = vpop.f32.mrb[0].mxu0
  %1086 = vdwg.mxu0
  %s1087 = scalar_lea.vmem %s3, 32
  %v1088 = vld [vmem:[%s1087] sm:$0xf]
  %v1089 = vld [vmem:[%s1087 + $0x4] sm:$0xf]
  %v1090 = vld [vmem:[%s1087 + $0x8] sm:$0xf]
  %v1091 = vld [vmem:[%s1087 + $0xc] sm:$0x7]
  %v1096 = vunpack.c.l.b16 %v1088
  %v1097 = vunpack.c.l.b16 %v1089
  %v1098 = vunpack.c.l.b16 %v1090
  %v1099 = vunpack.c.l.b16 %v1091
  %v1100 = vpack.c.b16 %v1097, %v1096
  %v1101 = vpack.c.b16 %v1099, %v1098
  %v1104 = vsel %vm826, %v780, 0
  %v1107 = vsel %vm851, %v1101, 0
  %1109 = vmatprep.subr.bf16.mxu0 0
  %1110 = vmatpush1.bf16.msra.mxu0 %v1100
  %1111 = vmatprep.subr.bf16.mxu0 0
  %1112 = vmatpush1.bf16.msra.mxu0 %v1107
  %1113 = vmatprep.subr.bf16.mxu0 0
  %1114 = vmatpush1.bf16.msra.mxu0 0
  %1115 = vmatprep.subr.bf16.mxu0 0
  %1116 = vmatpush1.bf16.msra.mxu0 0
  %1117 = vmatprep.subr.bf16.mxu0 0
  %1118 = vmatpush1.bf16.msra.mxu0 0
  %1119 = vmatprep.subr.bf16.mxu0 0
  %1120 = vmatpush1.bf16.msra.mxu0 0
  %1121 = vmatprep.subr.bf16.mxu0 0
  %1122 = vmatpush1.bf16.msra.mxu0 0
  %1123 = vmatprep.subr.bf16.mxu0 0
  %1124 = vmatpush1.bf16.msra.mxu0 0
  %1125 = vmatprep.subr.bf16.mxu0 0
  %1126 = vmatpush1.bf16.msra.mxu0 0
  %1127 = vmatprep.subr.bf16.mxu0 0
  %1128 = vmatpush1.bf16.msra.mxu0 0
  %1129 = vmatprep.subr.bf16.mxu0 0
  %1130 = vmatpush1.bf16.msra.mxu0 0
  %1131 = vmatprep.subr.bf16.mxu0 0
  %1132 = vmatpush1.bf16.msra.mxu0 0
  %1133 = vmatprep.subr.bf16.mxu0 0
  %1134 = vmatpush1.bf16.msra.mxu0 0
  %1135 = vmatprep.subr.bf16.mxu0 0
  %1136 = vmatpush1.bf16.msra.mxu0 0
  %1137 = vmatprep.subr.bf16.mxu0 0
  %1138 = vmatpush1.bf16.msra.mxu0 0
  %1139 = vmatprep.subr.bf16.mxu0 0
  %1140 = vmatpush1.bf16.msra.mxu0 0
  %1141 = vmatprep.mubr.bf16.mxu0 0
  %1142 = vmatmul.mubr.bf16.gmra.mrb[0].mxu0 %v967
  %v1143 = vpop.f32.mrb[0].mxu0
  %v1144 = vadd.f32 0.0, %v1143
  %v1145 = vpop.f32.mrb[0].mxu0
  %v1146 = vpop.f32.mrb[0].mxu0
  %v1147 = vadd.f32 0.0, %v1146
  %v1148 = vpop.f32.mrb[0].mxu0
  %1149 = vmatprep.mubr.bf16.mxu0 0
  %1150 = vmatmul.mubr.bf16.gmra.mrb[0].mxu0 %v970
  %v1151 = vpop.f32.mrb[0].mxu0
  %v1152 = vadd.f32 0.0, %v1151
  %v1153 = vpop.f32.mrb[0].mxu0
  %v1154 = vpop.f32.mrb[0].mxu0
  %v1155 = vadd.f32 0.0, %v1154
  %v1156 = vpop.f32.mrb[0].mxu0
  %1157 = vmatprep.mubr.bf16.mxu0 0
  %1158 = vmatmul.mubr.bf16.gmra.mrb[0].mxu0 %v973
  %v1159 = vpop.f32.mrb[0].mxu0
  %v1160 = vadd.f32 0.0, %v1159
  %v1161 = vpop.f32.mrb[0].mxu0
  %v1162 = vpop.f32.mrb[0].mxu0
  %v1163 = vadd.f32 0.0, %v1162
  %v1164 = vpop.f32.mrb[0].mxu0
  %1165 = vmatprep.mubr.bf16.mxu0 0
  %1166 = vmatmul.mubr.bf16.gmra.mrb[0].mxu0 %v976
  %v1167 = vpop.f32.mrb[0].mxu0
  %v1168 = vadd.f32 0.0, %v1167
  %v1169 = vpop.f32.mrb[0].mxu0
  %v1170 = vpop.f32.mrb[0].mxu0
  %v1171 = vadd.f32 0.0, %v1170
  %v1172 = vpop.f32.mrb[0].mxu0
  %1173 = vmatprep.mubr.bf16.mxu0 0
  %1174 = vmatmul.mubr.bf16.gmra.mrb[0].mxu0 %v979
  %v1175 = vpop.f32.mrb[0].mxu0
  %v1176 = vadd.f32 0.0, %v1175
  %v1177 = vpop.f32.mrb[0].mxu0
  %v1178 = vpop.f32.mrb[0].mxu0
  %v1179 = vadd.f32 0.0, %v1178
  %v1180 = vpop.f32.mrb[0].mxu0
  %1181 = vmatprep.mubr.bf16.mxu0 0
  %1182 = vmatmul.mubr.bf16.gmra.mrb[0].mxu0 %v982
  %v1183 = vpop.f32.mrb[0].mxu0
  %v1184 = vadd.f32 0.0, %v1183
  %v1185 = vpop.f32.mrb[0].mxu0
  %v1186 = vpop.f32.mrb[0].mxu0
  %v1187 = vadd.f32 0.0, %v1186
  %v1188 = vpop.f32.mrb[0].mxu0
  %1189 = vmatprep.mubr.bf16.mxu0 0
  %1190 = vmatmul.mubr.bf16.gmra.mrb[0].mxu0 %v985
  %v1191 = vpop.f32.mrb[0].mxu0
  %v1192 = vadd.f32 0.0, %v1191
  %v1193 = vpop.f32.mrb[0].mxu0
  %v1194 = vpop.f32.mrb[0].mxu0
  %v1195 = vadd.f32 0.0, %v1194
  %v1196 = vpop.f32.mrb[0].mxu0
  %1197 = vmatprep.mubr.bf16.mxu0 0
  %1198 = vmatmul.mubr.bf16.gmra.mrb[0].mxu0 %v1104
  %v1199 = vpop.f32.mrb[0].mxu0
  %v1200 = vadd.f32 0.0, %v1199
  %v1201 = vpop.f32.mrb[0].mxu0
  %v1202 = vpop.f32.mrb[0].mxu0
  %v1203 = vadd.f32 0.0, %v1202
  %v1204 = vpop.f32.mrb[0].mxu0
  %1205 = vdwg.mxu0
  %v1206 = vadd.f32 %v1025, %v1144
  %v1207 = vadd.f32 %v1028, %v1147
  %v1208 = vadd.f32 %v1033, %v1152
  %v1209 = vadd.f32 %v1036, %v1155
  %v1210 = vadd.f32 %v1041, %v1160
  %v1211 = vadd.f32 %v1044, %v1163
  %v1212 = vadd.f32 %v1049, %v1168
  %v1213 = vadd.f32 %v1052, %v1171
  %v1214 = vadd.f32 %v1057, %v1176
  %v1215 = vadd.f32 %v1060, %v1179
  %v1216 = vadd.f32 %v1065, %v1184
  %v1217 = vadd.f32 %v1068, %v1187
  %v1218 = vadd.f32 %v1073, %v1192
  %v1219 = vadd.f32 %v1076, %v1195
  %v1220 = vadd.f32 %v1081, %v1200
  %v1221 = vadd.f32 %v1084, %v1203
  %s1222 = scalar_lea.vmem %s3, 48
  %v1223 = vld [vmem:[%s1222] sm:$0xf]
  %v1224 = vld [vmem:[%s1222 + $0x4] sm:$0xf]
  %v1225 = vld [vmem:[%s1222 + $0x8] sm:$0xf]
  %v1226 = vld [vmem:[%s1222 + $0xc] sm:$0x7]
  %v1228 = vrot.slane %v781, 4
  %v1229 = vsel %vm202, %v813, %v1228
  %v1234 = vunpack.c.l.b16 %v1223
  %v1235 = vunpack.c.l.b16 %v1224
  %v1236 = vunpack.c.l.b16 %v1225
  %v1237 = vunpack.c.l.b16 %v1226
  %v1238 = vpack.c.b16 %v1235, %v1234
  %v1239 = vpack.c.b16 %v1237, %v1236
  %v1242 = vsel %vm826, %v1229, 0
  %v1245 = vsel %vm851, %v1239, 0
  %1247 = vmatprep.subr.bf16.mxu0 0
  %1248 = vmatpush1.bf16.msra.mxu0 %v1238
  %1249 = vmatprep.subr.bf16.mxu0 0
  %1250 = vmatpush1.bf16.msra.mxu0 %v1245
  %1251 = vmatprep.subr.bf16.mxu0 0
  %1252 = vmatpush1.bf16.msra.mxu0 0
  %1253 = vmatprep.subr.bf16.mxu0 0
  %1254 = vmatpush1.bf16.msra.mxu0 0
  %1255 = vmatprep.subr.bf16.mxu0 0
  %1256 = vmatpush1.bf16.msra.mxu0 0
  %1257 = vmatprep.subr.bf16.mxu0 0
  %1258 = vmatpush1.bf16.msra.mxu0 0
  %1259 = vmatprep.subr.bf16.mxu0 0
  %1260 = vmatpush1.bf16.msra.mxu0 0
  %1261 = vmatprep.subr.bf16.mxu0 0
  %1262 = vmatpush1.bf16.msra.mxu0 0
  %1263 = vmatprep.subr.bf16.mxu0 0
  %1264 = vmatpush1.bf16.msra.mxu0 0
  %1265 = vmatprep.subr.bf16.mxu0 0
  %1266 = vmatpush1.bf16.msra.mxu0 0
  %1267 = vmatprep.subr.bf16.mxu0 0
  %1268 = vmatpush1.bf16.msra.mxu0 0
  %1269 = vmatprep.subr.bf16.mxu0 0
  %1270 = vmatpush1.bf16.msra.mxu0 0
  %1271 = vmatprep.subr.bf16.mxu0 0
  %1272 = vmatpush1.bf16.msra.mxu0 0
  %1273 = vmatprep.subr.bf16.mxu0 0
  %1274 = vmatpush1.bf16.msra.mxu0 0
  %1275 = vmatprep.subr.bf16.mxu0 0
  %1276 = vmatpush1.bf16.msra.mxu0 0
  %1277 = vmatprep.subr.bf16.mxu0 0
  %1278 = vmatpush1.bf16.msra.mxu0 0
  %1279 = vmatprep.mubr.bf16.mxu0 0
  %1280 = vmatmul.mubr.bf16.gmra.mrb[0].mxu0 %v831
  %v1281 = vpop.f32.mrb[0].mxu0
  %v1282 = vadd.f32 0.0, %v1281
  %v1283 = vpop.f32.mrb[0].mxu0
  %v1284 = vpop.f32.mrb[0].mxu0
  %v1285 = vadd.f32 0.0, %v1284
  %v1286 = vpop.f32.mrb[0].mxu0
  %1287 = vmatprep.mubr.bf16.mxu0 0
  %1288 = vmatmul.mubr.bf16.gmra.mrb[0].mxu0 %v834
  %v1289 = vpop.f32.mrb[0].mxu0
  %v1290 = vadd.f32 0.0, %v1289
  %v1291 = vpop.f32.mrb[0].mxu0
  %v1292 = vpop.f32.mrb[0].mxu0
  %v1293 = vadd.f32 0.0, %v1292
  %v1294 = vpop.f32.mrb[0].mxu0
  %1295 = vmatprep.mubr.bf16.mxu0 0
  %1296 = vmatmul.mubr.bf16.gmra.mrb[0].mxu0 %v837
  %v1297 = vpop.f32.mrb[0].mxu0
  %v1298 = vadd.f32 0.0, %v1297
  %v1299 = vpop.f32.mrb[0].mxu0
  %v1300 = vpop.f32.mrb[0].mxu0
  %v1301 = vadd.f32 0.0, %v1300
  %v1302 = vpop.f32.mrb[0].mxu0
  %1303 = vmatprep.mubr.bf16.mxu0 0
  %1304 = vmatmul.mubr.bf16.gmra.mrb[0].mxu0 %v840
  %v1305 = vpop.f32.mrb[0].mxu0
  %v1306 = vadd.f32 0.0, %v1305
  %v1307 = vpop.f32.mrb[0].mxu0
  %v1308 = vpop.f32.mrb[0].mxu0
  %v1309 = vadd.f32 0.0, %v1308
  %v1310 = vpop.f32.mrb[0].mxu0
  %1311 = vmatprep.mubr.bf16.mxu0 0
  %1312 = vmatmul.mubr.bf16.gmra.mrb[0].mxu0 %v843
  %v1313 = vpop.f32.mrb[0].mxu0
  %v1314 = vadd.f32 0.0, %v1313
  %v1315 = vpop.f32.mrb[0].mxu0
  %v1316 = vpop.f32.mrb[0].mxu0
  %v1317 = vadd.f32 0.0, %v1316
  %v1318 = vpop.f32.mrb[0].mxu0
  %1319 = vmatprep.mubr.bf16.mxu0 0
  %1320 = vmatmul.mubr.bf16.gmra.mrb[0].mxu0 %v846
  %v1321 = vpop.f32.mrb[0].mxu0
  %v1322 = vadd.f32 0.0, %v1321
  %v1323 = vpop.f32.mrb[0].mxu0
  %v1324 = vpop.f32.mrb[0].mxu0
  %v1325 = vadd.f32 0.0, %v1324
  %v1326 = vpop.f32.mrb[0].mxu0
  %1327 = vmatprep.mubr.bf16.mxu0 0
  %1328 = vmatmul.mubr.bf16.gmra.mrb[0].mxu0 %v849
  %v1329 = vpop.f32.mrb[0].mxu0
  %v1330 = vadd.f32 0.0, %v1329
  %v1331 = vpop.f32.mrb[0].mxu0
  %v1332 = vpop.f32.mrb[0].mxu0
  %v1333 = vadd.f32 0.0, %v1332
  %v1334 = vpop.f32.mrb[0].mxu0
  %1335 = vmatprep.mubr.bf16.mxu0 0
  %1336 = vmatmul.mubr.bf16.gmra.mrb[0].mxu0 %v1242
  %v1337 = vpop.f32.mrb[0].mxu0
  %v1338 = vadd.f32 0.0, %v1337
  %v1339 = vpop.f32.mrb[0].mxu0
  %v1340 = vpop.f32.mrb[0].mxu0
  %v1341 = vadd.f32 0.0, %v1340
  %v1342 = vpop.f32.mrb[0].mxu0
  %1343 = vdwg.mxu0
  %v1344 = vadd.f32 %v1206, %v1282
  %v1345 = vadd.f32 %v1207, %v1285
  %v1346 = vadd.f32 %v1208, %v1290
  %v1347 = vadd.f32 %v1209, %v1293
  %v1348 = vadd.f32 %v1210, %v1298
  %v1349 = vadd.f32 %v1211, %v1301
  %v1350 = vadd.f32 %v1212, %v1306
  %v1351 = vadd.f32 %v1213, %v1309
  %v1352 = vadd.f32 %v1214, %v1314
  %v1353 = vadd.f32 %v1215, %v1317
  %v1354 = vadd.f32 %v1216, %v1322
  %v1355 = vadd.f32 %v1217, %v1325
  %v1356 = vadd.f32 %v1218, %v1330
  %v1357 = vadd.f32 %v1219, %v1333
  %v1358 = vadd.f32 %v1220, %v1338
  %v1359 = vadd.f32 %v1221, %v1341
  %s1360 = scalar_lea.vmem %s3, 64
  %v1361 = vld [vmem:[%s1360] sm:$0xf]
  %v1362 = vld [vmem:[%s1360 + $0x4] sm:$0xf]
  %v1363 = vld [vmem:[%s1360 + $0x8] sm:$0xf]
  %v1364 = vld [vmem:[%s1360 + $0xc] sm:$0x7]
  %v1369 = vunpack.c.l.b16 %v1361
  %v1370 = vunpack.c.l.b16 %v1362
  %v1371 = vunpack.c.l.b16 %v1363
  %v1372 = vunpack.c.l.b16 %v1364
  %v1373 = vpack.c.b16 %v1370, %v1369
  %v1374 = vpack.c.b16 %v1372, %v1371
  %v1377 = vsel %vm826, %v781, 0
  %v1380 = vsel %vm851, %v1374, 0
  %1382 = vmatprep.subr.bf16.mxu0 0
  %1383 = vmatpush1.bf16.msra.mxu0 %v1373
  %1384 = vmatprep.subr.bf16.mxu0 0
  %1385 = vmatpush1.bf16.msra.mxu0 %v1380
  %1386 = vmatprep.subr.bf16.mxu0 0
  %1387 = vmatpush1.bf16.msra.mxu0 0
  %1388 = vmatprep.subr.bf16.mxu0 0
  %1389 = vmatpush1.bf16.msra.mxu0 0
  %1390 = vmatprep.subr.bf16.mxu0 0
  %1391 = vmatpush1.bf16.msra.mxu0 0
  %1392 = vmatprep.subr.bf16.mxu0 0
  %1393 = vmatpush1.bf16.msra.mxu0 0
  %1394 = vmatprep.subr.bf16.mxu0 0
  %1395 = vmatpush1.bf16.msra.mxu0 0
  %1396 = vmatprep.subr.bf16.mxu0 0
  %1397 = vmatpush1.bf16.msra.mxu0 0
  %1398 = vmatprep.subr.bf16.mxu0 0
  %1399 = vmatpush1.bf16.msra.mxu0 0
  %1400 = vmatprep.subr.bf16.mxu0 0
  %1401 = vmatpush1.bf16.msra.mxu0 0
  %1402 = vmatprep.subr.bf16.mxu0 0
  %1403 = vmatpush1.bf16.msra.mxu0 0
  %1404 = vmatprep.subr.bf16.mxu0 0
  %1405 = vmatpush1.bf16.msra.mxu0 0
  %1406 = vmatprep.subr.bf16.mxu0 0
  %1407 = vmatpush1.bf16.msra.mxu0 0
  %1408 = vmatprep.subr.bf16.mxu0 0
  %1409 = vmatpush1.bf16.msra.mxu0 0
  %1410 = vmatprep.subr.bf16.mxu0 0
  %1411 = vmatpush1.bf16.msra.mxu0 0
  %1412 = vmatprep.subr.bf16.mxu0 0
  %1413 = vmatpush1.bf16.msra.mxu0 0
  %1414 = vmatprep.mubr.bf16.mxu0 0
  %1415 = vmatmul.mubr.bf16.gmra.mrb[0].mxu0 %v970
  %v1416 = vpop.f32.mrb[0].mxu0
  %v1417 = vadd.f32 0.0, %v1416
  %v1418 = vpop.f32.mrb[0].mxu0
  %v1419 = vpop.f32.mrb[0].mxu0
  %v1420 = vadd.f32 0.0, %v1419
  %v1421 = vpop.f32.mrb[0].mxu0
  %1422 = vmatprep.mubr.bf16.mxu0 0
  %1423 = vmatmul.mubr.bf16.gmra.mrb[0].mxu0 %v973
  %v1424 = vpop.f32.mrb[0].mxu0
  %v1425 = vadd.f32 0.0, %v1424
  %v1426 = vpop.f32.mrb[0].mxu0
  %v1427 = vpop.f32.mrb[0].mxu0
  %v1428 = vadd.f32 0.0, %v1427
  %v1429 = vpop.f32.mrb[0].mxu0
  %1430 = vmatprep.mubr.bf16.mxu0 0
  %1431 = vmatmul.mubr.bf16.gmra.mrb[0].mxu0 %v976
  %v1432 = vpop.f32.mrb[0].mxu0
  %v1433 = vadd.f32 0.0, %v1432
  %v1434 = vpop.f32.mrb[0].mxu0
  %v1435 = vpop.f32.mrb[0].mxu0
  %v1436 = vadd.f32 0.0, %v1435
  %v1437 = vpop.f32.mrb[0].mxu0
  %1438 = vmatprep.mubr.bf16.mxu0 0
  %1439 = vmatmul.mubr.bf16.gmra.mrb[0].mxu0 %v979
  %v1440 = vpop.f32.mrb[0].mxu0
  %v1441 = vadd.f32 0.0, %v1440
  %v1442 = vpop.f32.mrb[0].mxu0
  %v1443 = vpop.f32.mrb[0].mxu0
  %v1444 = vadd.f32 0.0, %v1443
  %v1445 = vpop.f32.mrb[0].mxu0
  %1446 = vmatprep.mubr.bf16.mxu0 0
  %1447 = vmatmul.mubr.bf16.gmra.mrb[0].mxu0 %v982
  %v1448 = vpop.f32.mrb[0].mxu0
  %v1449 = vadd.f32 0.0, %v1448
  %v1450 = vpop.f32.mrb[0].mxu0
  %v1451 = vpop.f32.mrb[0].mxu0
  %v1452 = vadd.f32 0.0, %v1451
  %v1453 = vpop.f32.mrb[0].mxu0
  %1454 = vmatprep.mubr.bf16.mxu0 0
  %1455 = vmatmul.mubr.bf16.gmra.mrb[0].mxu0 %v985
  %v1456 = vpop.f32.mrb[0].mxu0
  %v1457 = vadd.f32 0.0, %v1456
  %v1458 = vpop.f32.mrb[0].mxu0
  %v1459 = vpop.f32.mrb[0].mxu0
  %v1460 = vadd.f32 0.0, %v1459
  %v1461 = vpop.f32.mrb[0].mxu0
  %1462 = vmatprep.mubr.bf16.mxu0 0
  %1463 = vmatmul.mubr.bf16.gmra.mrb[0].mxu0 %v1104
  %v1464 = vpop.f32.mrb[0].mxu0
  %v1465 = vadd.f32 0.0, %v1464
  %v1466 = vpop.f32.mrb[0].mxu0
  %v1467 = vpop.f32.mrb[0].mxu0
  %v1468 = vadd.f32 0.0, %v1467
  %v1469 = vpop.f32.mrb[0].mxu0
  %1470 = vmatprep.mubr.bf16.mxu0 0
  %1471 = vmatmul.mubr.bf16.gmra.mrb[0].mxu0 %v1377
  %v1472 = vpop.f32.mrb[0].mxu0
  %v1473 = vadd.f32 0.0, %v1472
  %v1474 = vpop.f32.mrb[0].mxu0
  %v1475 = vpop.f32.mrb[0].mxu0
  %v1476 = vadd.f32 0.0, %v1475
  %v1477 = vpop.f32.mrb[0].mxu0
  %1478 = vdwg.mxu0
  %v1479 = vadd.f32 %v1344, %v1417
  %v1480 = vadd.f32 %v1345, %v1420
  %v1481 = vadd.f32 %v1346, %v1425
  %v1482 = vadd.f32 %v1347, %v1428
  %v1483 = vadd.f32 %v1348, %v1433
  %v1484 = vadd.f32 %v1349, %v1436
  %v1485 = vadd.f32 %v1350, %v1441
  %v1486 = vadd.f32 %v1351, %v1444
  %v1487 = vadd.f32 %v1352, %v1449
  %v1488 = vadd.f32 %v1353, %v1452
  %v1489 = vadd.f32 %v1354, %v1457
  %v1490 = vadd.f32 %v1355, %v1460
  %v1491 = vadd.f32 %v1356, %v1465
  %v1492 = vadd.f32 %v1357, %v1468
  %v1493 = vadd.f32 %v1358, %v1473
  %v1494 = vadd.f32 %v1359, %v1476
  %s1495 = scalar_lea.vmem %s3, 80
  %v1496 = vld [vmem:[%s1495] sm:$0xf]
  %v1497 = vld [vmem:[%s1495 + $0x4] sm:$0xf]
  %v1498 = vld [vmem:[%s1495 + $0x8] sm:$0xf]
  %v1499 = vld [vmem:[%s1495 + $0xc] sm:$0x7]
  %v1500 = vsel %vm202, %v1228, %v203
  %v1505 = vunpack.c.l.b16 %v1496
  %v1506 = vunpack.c.l.b16 %v1497
  %v1507 = vunpack.c.l.b16 %v1498
  %v1508 = vunpack.c.l.b16 %v1499
  %v1509 = vpack.c.b16 %v1506, %v1505
  %v1510 = vpack.c.b16 %v1508, %v1507
  %v1513 = vsel %vm826, %v1500, 0
  %v1516 = vsel %vm851, %v1510, 0
  %1518 = vmatprep.subr.bf16.mxu0 0
  %1519 = vmatpush1.bf16.msra.mxu0 %v1509
  %1520 = vmatprep.subr.bf16.mxu0 0
  %1521 = vmatpush1.bf16.msra.mxu0 %v1516
  %1522 = vmatprep.subr.bf16.mxu0 0
  %1523 = vmatpush1.bf16.msra.mxu0 0
  %1524 = vmatprep.subr.bf16.mxu0 0
  %1525 = vmatpush1.bf16.msra.mxu0 0
  %1526 = vmatprep.subr.bf16.mxu0 0
  %1527 = vmatpush1.bf16.msra.mxu0 0
  %1528 = vmatprep.subr.bf16.mxu0 0
  %1529 = vmatpush1.bf16.msra.mxu0 0
  %1530 = vmatprep.subr.bf16.mxu0 0
  %1531 = vmatpush1.bf16.msra.mxu0 0
  %1532 = vmatprep.subr.bf16.mxu0 0
  %1533 = vmatpush1.bf16.msra.mxu0 0
  %1534 = vmatprep.subr.bf16.mxu0 0
  %1535 = vmatpush1.bf16.msra.mxu0 0
  %1536 = vmatprep.subr.bf16.mxu0 0
  %1537 = vmatpush1.bf16.msra.mxu0 0
  %1538 = vmatprep.subr.bf16.mxu0 0
  %1539 = vmatpush1.bf16.msra.mxu0 0
  %1540 = vmatprep.subr.bf16.mxu0 0
  %1541 = vmatpush1.bf16.msra.mxu0 0
  %1542 = vmatprep.subr.bf16.mxu0 0
  %1543 = vmatpush1.bf16.msra.mxu0 0
  %1544 = vmatprep.subr.bf16.mxu0 0
  %1545 = vmatpush1.bf16.msra.mxu0 0
  %1546 = vmatprep.subr.bf16.mxu0 0
  %1547 = vmatpush1.bf16.msra.mxu0 0
  %1548 = vmatprep.subr.bf16.mxu0 0
  %1549 = vmatpush1.bf16.msra.mxu0 0
  %1550 = vmatprep.mubr.bf16.mxu0 0
  %1551 = vmatmul.mubr.bf16.gmra.mrb[0].mxu0 %v834
  %v1552 = vpop.f32.mrb[0].mxu0
  %v1553 = vadd.f32 0.0, %v1552
  %v1554 = vpop.f32.mrb[0].mxu0
  %v1555 = vpop.f32.mrb[0].mxu0
  %v1556 = vadd.f32 0.0, %v1555
  %v1557 = vpop.f32.mrb[0].mxu0
  %1558 = vmatprep.mubr.bf16.mxu0 0
  %1559 = vmatmul.mubr.bf16.gmra.mrb[0].mxu0 %v837
  %v1560 = vpop.f32.mrb[0].mxu0
  %v1561 = vadd.f32 0.0, %v1560
  %v1562 = vpop.f32.mrb[0].mxu0
  %v1563 = vpop.f32.mrb[0].mxu0
  %v1564 = vadd.f32 0.0, %v1563
  %v1565 = vpop.f32.mrb[0].mxu0
  %1566 = vmatprep.mubr.bf16.mxu0 0
  %1567 = vmatmul.mubr.bf16.gmra.mrb[0].mxu0 %v840
  %v1568 = vpop.f32.mrb[0].mxu0
  %v1569 = vadd.f32 0.0, %v1568
  %v1570 = vpop.f32.mrb[0].mxu0
  %v1571 = vpop.f32.mrb[0].mxu0
  %v1572 = vadd.f32 0.0, %v1571
  %v1573 = vpop.f32.mrb[0].mxu0
  %1574 = vmatprep.mubr.bf16.mxu0 0
  %1575 = vmatmul.mubr.bf16.gmra.mrb[0].mxu0 %v843
  %v1576 = vpop.f32.mrb[0].mxu0
  %v1577 = vadd.f32 0.0, %v1576
  %v1578 = vpop.f32.mrb[0].mxu0
  %v1579 = vpop.f32.mrb[0].mxu0
  %v1580 = vadd.f32 0.0, %v1579
  %v1581 = vpop.f32.mrb[0].mxu0
  %1582 = vmatprep.mubr.bf16.mxu0 0
  %1583 = vmatmul.mubr.bf16.gmra.mrb[0].mxu0 %v846
  %v1584 = vpop.f32.mrb[0].mxu0
  %v1585 = vadd.f32 0.0, %v1584
  %v1586 = vpop.f32.mrb[0].mxu0
  %v1587 = vpop.f32.mrb[0].mxu0
  %v1588 = vadd.f32 0.0, %v1587
  %v1589 = vpop.f32.mrb[0].mxu0
  %1590 = vmatprep.mubr.bf16.mxu0 0
  %1591 = vmatmul.mubr.bf16.gmra.mrb[0].mxu0 %v849
  %v1592 = vpop.f32.mrb[0].mxu0
  %v1593 = vadd.f32 0.0, %v1592
  %v1594 = vpop.f32.mrb[0].mxu0
  %v1595 = vpop.f32.mrb[0].mxu0
  %v1596 = vadd.f32 0.0, %v1595
  %v1597 = vpop.f32.mrb[0].mxu0
  %1598 = vmatprep.mubr.bf16.mxu0 0
  %1599 = vmatmul.mubr.bf16.gmra.mrb[0].mxu0 %v1242
  %v1600 = vpop.f32.mrb[0].mxu0
  %v1601 = vadd.f32 0.0, %v1600
  %v1602 = vpop.f32.mrb[0].mxu0
  %v1603 = vpop.f32.mrb[0].mxu0
  %v1604 = vadd.f32 0.0, %v1603
  %v1605 = vpop.f32.mrb[0].mxu0
  %1606 = vmatprep.mubr.bf16.mxu0 0
  %1607 = vmatmul.mubr.bf16.gmra.mrb[0].mxu0 %v1513
  %v1608 = vpop.f32.mrb[0].mxu0
  %v1609 = vadd.f32 0.0, %v1608
  %v1610 = vpop.f32.mrb[0].mxu0
  %v1611 = vpop.f32.mrb[0].mxu0
  %v1612 = vadd.f32 0.0, %v1611
  %v1613 = vpop.f32.mrb[0].mxu0
  %1614 = vdwg.mxu0
  %v1615 = vadd.f32 %v1479, %v1553
  %v1616 = vadd.f32 %v1480, %v1556
  %v1617 = vadd.f32 %v1481, %v1561
  %v1618 = vadd.f32 %v1482, %v1564
  %v1619 = vadd.f32 %v1483, %v1569
  %v1620 = vadd.f32 %v1484, %v1572
  %v1621 = vadd.f32 %v1485, %v1577
  %v1622 = vadd.f32 %v1486, %v1580
  %v1623 = vadd.f32 %v1487, %v1585
  %v1624 = vadd.f32 %v1488, %v1588
  %v1625 = vadd.f32 %v1489, %v1593
  %v1626 = vadd.f32 %v1490, %v1596
  %v1627 = vadd.f32 %v1491, %v1601
  %v1628 = vadd.f32 %v1492, %v1604
  %v1629 = vadd.f32 %v1493, %v1609
  %v1630 = vadd.f32 %v1494, %v1612
  %s1631 = scalar_lea.vmem %s3, 96
  %v1632 = vld [vmem:[%s1631] sm:$0xf]
  %v1633 = vld [vmem:[%s1631 + $0x4] sm:$0xf]
  %v1634 = vld [vmem:[%s1631 + $0x8] sm:$0xf]
  %v1635 = vld [vmem:[%s1631 + $0xc] sm:$0x7]
  %v1640 = vunpack.c.l.b16 %v1632
  %v1641 = vunpack.c.l.b16 %v1633
  %v1642 = vunpack.c.l.b16 %v1634
  %v1643 = vunpack.c.l.b16 %v1635
  %v1644 = vpack.c.b16 %v1641, %v1640
  %v1645 = vpack.c.b16 %v1643, %v1642
  %v1648 = vsel %vm851, %v1645, 0
  %1650 = vmatprep.subr.bf16.mxu0 0
  %1651 = vmatpush1.bf16.msra.mxu0 %v1644
  %1652 = vmatprep.subr.bf16.mxu0 0
  %1653 = vmatpush1.bf16.msra.mxu0 %v1648
  %1654 = vmatprep.subr.bf16.mxu0 0
  %1655 = vmatpush1.bf16.msra.mxu0 0
  %1656 = vmatprep.subr.bf16.mxu0 0
  %1657 = vmatpush1.bf16.msra.mxu0 0
  %1658 = vmatprep.subr.bf16.mxu0 0
  %1659 = vmatpush1.bf16.msra.mxu0 0
  %1660 = vmatprep.subr.bf16.mxu0 0
  %1661 = vmatpush1.bf16.msra.mxu0 0
  %1662 = vmatprep.subr.bf16.mxu0 0
  %1663 = vmatpush1.bf16.msra.mxu0 0
  %1664 = vmatprep.subr.bf16.mxu0 0
  %1665 = vmatpush1.bf16.msra.mxu0 0
  %1666 = vmatprep.subr.bf16.mxu0 0
  %1667 = vmatpush1.bf16.msra.mxu0 0
  %1668 = vmatprep.subr.bf16.mxu0 0
  %1669 = vmatpush1.bf16.msra.mxu0 0
  %1670 = vmatprep.subr.bf16.mxu0 0
  %1671 = vmatpush1.bf16.msra.mxu0 0
  %1672 = vmatprep.subr.bf16.mxu0 0
  %1673 = vmatpush1.bf16.msra.mxu0 0
  %1674 = vmatprep.subr.bf16.mxu0 0
  %1675 = vmatpush1.bf16.msra.mxu0 0
  %1676 = vmatprep.subr.bf16.mxu0 0
  %1677 = vmatpush1.bf16.msra.mxu0 0
  %1678 = vmatprep.subr.bf16.mxu0 0
  %1679 = vmatpush1.bf16.msra.mxu0 0
  %1680 = vmatprep.subr.bf16.mxu0 0
  %1681 = vmatpush1.bf16.msra.mxu0 0
  %1682 = vmatprep.mubr.bf16.mxu0 0
  %1683 = vmatmul.mubr.bf16.gmra.mrb[0].mxu0 %v973
  %v1684 = vpop.f32.mrb[0].mxu0
  %v1685 = vadd.f32 0.0, %v1684
  %v1686 = vpop.f32.mrb[0].mxu0
  %v1687 = vpop.f32.mrb[0].mxu0
  %v1688 = vadd.f32 0.0, %v1687
  %v1689 = vpop.f32.mrb[0].mxu0
  %1690 = vmatprep.mubr.bf16.mxu0 0
  %1691 = vmatmul.mubr.bf16.gmra.mrb[0].mxu0 %v976
  %v1692 = vpop.f32.mrb[0].mxu0
  %v1693 = vadd.f32 0.0, %v1692
  %v1694 = vpop.f32.mrb[0].mxu0
  %v1695 = vpop.f32.mrb[0].mxu0
  %v1696 = vadd.f32 0.0, %v1695
  %v1697 = vpop.f32.mrb[0].mxu0
  %1698 = vmatprep.mubr.bf16.mxu0 0
  %1699 = vmatmul.mubr.bf16.gmra.mrb[0].mxu0 %v979
  %v1700 = vpop.f32.mrb[0].mxu0
  %v1701 = vadd.f32 0.0, %v1700
  %v1702 = vpop.f32.mrb[0].mxu0
  %v1703 = vpop.f32.mrb[0].mxu0
  %v1704 = vadd.f32 0.0, %v1703
  %v1705 = vpop.f32.mrb[0].mxu0
  %1706 = vmatprep.mubr.bf16.mxu0 0
  %1707 = vmatmul.mubr.bf16.gmra.mrb[0].mxu0 %v982
  %v1708 = vpop.f32.mrb[0].mxu0
  %v1709 = vadd.f32 0.0, %v1708
  %v1710 = vpop.f32.mrb[0].mxu0
  %v1711 = vpop.f32.mrb[0].mxu0
  %v1712 = vadd.f32 0.0, %v1711
  %v1713 = vpop.f32.mrb[0].mxu0
  %1714 = vmatprep.mubr.bf16.mxu0 0
  %1715 = vmatmul.mubr.bf16.gmra.mrb[0].mxu0 %v985
  %v1716 = vpop.f32.mrb[0].mxu0
  %v1717 = vadd.f32 0.0, %v1716
  %v1718 = vpop.f32.mrb[0].mxu0
  %v1719 = vpop.f32.mrb[0].mxu0
  %v1720 = vadd.f32 0.0, %v1719
  %v1721 = vpop.f32.mrb[0].mxu0
  %1722 = vmatprep.mubr.bf16.mxu0 0
  %1723 = vmatmul.mubr.bf16.gmra.mrb[0].mxu0 %v1104
  %v1724 = vpop.f32.mrb[0].mxu0
  %v1725 = vadd.f32 0.0, %v1724
  %v1726 = vpop.f32.mrb[0].mxu0
  %v1727 = vpop.f32.mrb[0].mxu0
  %v1728 = vadd.f32 0.0, %v1727
  %v1729 = vpop.f32.mrb[0].mxu0
  %1730 = vmatprep.mubr.bf16.mxu0 0
  %1731 = vmatmul.mubr.bf16.gmra.mrb[0].mxu0 %v1377
  %v1732 = vpop.f32.mrb[0].mxu0
  %v1733 = vadd.f32 0.0, %v1732
  %v1734 = vpop.f32.mrb[0].mxu0
  %v1735 = vpop.f32.mrb[0].mxu0
  %v1736 = vadd.f32 0.0, %v1735
  %v1737 = vpop.f32.mrb[0].mxu0
  %1738 = vmatprep.mubr.bf16.mxu0 0
  %1739 = vmatmul.mubr.bf16.gmra.mrb[0].mxu0 %v964
  %v1740 = vpop.f32.mrb[0].mxu0
  %v1741 = vadd.f32 0.0, %v1740
  %v1742 = vpop.f32.mrb[0].mxu0
  %v1743 = vpop.f32.mrb[0].mxu0
  %v1744 = vadd.f32 0.0, %v1743
  %v1745 = vpop.f32.mrb[0].mxu0
  %1746 = vdwg.mxu0
  %v1747 = vadd.f32 %v1615, %v1685
  %v1748 = vadd.f32 %v1616, %v1688
  %v1749 = vadd.f32 %v1617, %v1693
  %v1750 = vadd.f32 %v1618, %v1696
  %v1751 = vadd.f32 %v1619, %v1701
  %v1752 = vadd.f32 %v1620, %v1704
  %v1753 = vadd.f32 %v1621, %v1709
  %v1754 = vadd.f32 %v1622, %v1712
  %v1755 = vadd.f32 %v1623, %v1717
  %v1756 = vadd.f32 %v1624, %v1720
  %v1757 = vadd.f32 %v1625, %v1725
  %v1758 = vadd.f32 %v1626, %v1728
  %v1759 = vadd.f32 %v1627, %v1733
  %v1760 = vadd.f32 %v1628, %v1736
  %v1761 = vadd.f32 %v1629, %v1741
  %v1762 = vadd.f32 %v1630, %v1744
  %s1763 = scalar_lea.vmem %s3, 112
  %v1764 = vld [vmem:[%s1763] sm:$0xf]
  %v1765 = vld [vmem:[%s1763 + $0x4] sm:$0xf]
  %v1766 = vld [vmem:[%s1763 + $0x8] sm:$0xf]
  %v1767 = vld [vmem:[%s1763 + $0xc] sm:$0x7]
  %v1772 = vunpack.c.l.b16 %v1764
  %v1773 = vunpack.c.l.b16 %v1765
  %v1774 = vunpack.c.l.b16 %v1766
  %v1775 = vunpack.c.l.b16 %v1767
  %v1776 = vpack.c.b16 %v1773, %v1772
  %v1777 = vpack.c.b16 %v1775, %v1774
  %v1780 = vsel %vm826, %v204, 0
  %v1783 = vsel %vm851, %v1777, 0
  %1785 = vmatprep.subr.bf16.mxu0 0
  %1786 = vmatpush1.bf16.msra.mxu0 %v1776
  %1787 = vmatprep.subr.bf16.mxu0 0
  %1788 = vmatpush1.bf16.msra.mxu0 %v1783
  %1789 = vmatprep.subr.bf16.mxu0 0
  %1790 = vmatpush1.bf16.msra.mxu0 0
  %1791 = vmatprep.subr.bf16.mxu0 0
  %1792 = vmatpush1.bf16.msra.mxu0 0
  %1793 = vmatprep.subr.bf16.mxu0 0
  %1794 = vmatpush1.bf16.msra.mxu0 0
  %1795 = vmatprep.subr.bf16.mxu0 0
  %1796 = vmatpush1.bf16.msra.mxu0 0
  %1797 = vmatprep.subr.bf16.mxu0 0
  %1798 = vmatpush1.bf16.msra.mxu0 0
  %1799 = vmatprep.subr.bf16.mxu0 0
  %1800 = vmatpush1.bf16.msra.mxu0 0
  %1801 = vmatprep.subr.bf16.mxu0 0
  %1802 = vmatpush1.bf16.msra.mxu0 0
  %1803 = vmatprep.subr.bf16.mxu0 0
  %1804 = vmatpush1.bf16.msra.mxu0 0
  %1805 = vmatprep.subr.bf16.mxu0 0
  %1806 = vmatpush1.bf16.msra.mxu0 0
  %1807 = vmatprep.subr.bf16.mxu0 0
  %1808 = vmatpush1.bf16.msra.mxu0 0
  %1809 = vmatprep.subr.bf16.mxu0 0
  %1810 = vmatpush1.bf16.msra.mxu0 0
  %1811 = vmatprep.subr.bf16.mxu0 0
  %1812 = vmatpush1.bf16.msra.mxu0 0
  %1813 = vmatprep.subr.bf16.mxu0 0
  %1814 = vmatpush1.bf16.msra.mxu0 0
  %1815 = vmatprep.subr.bf16.mxu0 0
  %1816 = vmatpush1.bf16.msra.mxu0 0
  %1817 = vmatprep.mubr.bf16.mxu0 0
  %1818 = vmatmul.mubr.bf16.gmra.mrb[0].mxu0 %v837
  %v1819 = vpop.f32.mrb[0].mxu0
  %v1820 = vadd.f32 0.0, %v1819
  %v1821 = vpop.f32.mrb[0].mxu0
  %v1822 = vpop.f32.mrb[0].mxu0
  %v1823 = vadd.f32 0.0, %v1822
  %v1824 = vpop.f32.mrb[0].mxu0
  %1825 = vmatprep.mubr.bf16.mxu0 0
  %1826 = vmatmul.mubr.bf16.gmra.mrb[0].mxu0 %v840
  %v1827 = vpop.f32.mrb[0].mxu0
  %v1828 = vadd.f32 0.0, %v1827
  %v1829 = vpop.f32.mrb[0].mxu0
  %v1830 = vpop.f32.mrb[0].mxu0
  %v1831 = vadd.f32 0.0, %v1830
  %v1832 = vpop.f32.mrb[0].mxu0
  %1833 = vmatprep.mubr.bf16.mxu0 0
  %1834 = vmatmul.mubr.bf16.gmra.mrb[0].mxu0 %v843
  %v1835 = vpop.f32.mrb[0].mxu0
  %v1836 = vadd.f32 0.0, %v1835
  %v1837 = vpop.f32.mrb[0].mxu0
  %v1838 = vpop.f32.mrb[0].mxu0
  %v1839 = vadd.f32 0.0, %v1838
  %v1840 = vpop.f32.mrb[0].mxu0
  %1841 = vmatprep.mubr.bf16.mxu0 0
  %1842 = vmatmul.mubr.bf16.gmra.mrb[0].mxu0 %v846
  %v1843 = vpop.f32.mrb[0].mxu0
  %v1844 = vadd.f32 0.0, %v1843
  %v1845 = vpop.f32.mrb[0].mxu0
  %v1846 = vpop.f32.mrb[0].mxu0
  %v1847 = vadd.f32 0.0, %v1846
  %v1848 = vpop.f32.mrb[0].mxu0
  %1849 = vmatprep.mubr.bf16.mxu0 0
  %1850 = vmatmul.mubr.bf16.gmra.mrb[0].mxu0 %v849
  %v1851 = vpop.f32.mrb[0].mxu0
  %v1852 = vadd.f32 0.0, %v1851
  %v1853 = vpop.f32.mrb[0].mxu0
  %v1854 = vpop.f32.mrb[0].mxu0
  %v1855 = vadd.f32 0.0, %v1854
  %v1856 = vpop.f32.mrb[0].mxu0
  %1857 = vmatprep.mubr.bf16.mxu0 0
  %1858 = vmatmul.mubr.bf16.gmra.mrb[0].mxu0 %v1242
  %v1859 = vpop.f32.mrb[0].mxu0
  %v1860 = vadd.f32 0.0, %v1859
  %v1861 = vpop.f32.mrb[0].mxu0
  %v1862 = vpop.f32.mrb[0].mxu0
  %v1863 = vadd.f32 0.0, %v1862
  %v1864 = vpop.f32.mrb[0].mxu0
  %1865 = vmatprep.mubr.bf16.mxu0 0
  %1866 = vmatmul.mubr.bf16.gmra.mrb[0].mxu0 %v1513
  %v1867 = vpop.f32.mrb[0].mxu0
  %v1868 = vadd.f32 0.0, %v1867
  %v1869 = vpop.f32.mrb[0].mxu0
  %v1870 = vpop.f32.mrb[0].mxu0
  %v1871 = vadd.f32 0.0, %v1870
  %v1872 = vpop.f32.mrb[0].mxu0
  %1873 = vmatprep.mubr.bf16.mxu0 0
  %1874 = vmatmul.mubr.bf16.gmra.mrb[0].mxu0 %v1780
  %v1875 = vpop.f32.mrb[0].mxu0
  %v1876 = vadd.f32 0.0, %v1875
  %v1877 = vpop.f32.mrb[0].mxu0
  %v1878 = vpop.f32.mrb[0].mxu0
  %v1879 = vadd.f32 0.0, %v1878
  %v1880 = vpop.f32.mrb[0].mxu0
  %1881 = vdwg.mxu0
  %v1882 = vadd.f32 %v1747, %v1820
  %v1883 = vadd.f32 %v1748, %v1823
  %v1884 = vadd.f32 %v1749, %v1828
  %v1885 = vadd.f32 %v1750, %v1831
  %v1886 = vadd.f32 %v1751, %v1836
  %v1887 = vadd.f32 %v1752, %v1839
  %v1888 = vadd.f32 %v1753, %v1844
  %v1889 = vadd.f32 %v1754, %v1847
  %v1890 = vadd.f32 %v1755, %v1852
  %v1891 = vadd.f32 %v1756, %v1855
  %v1892 = vadd.f32 %v1757, %v1860
  %v1893 = vadd.f32 %v1758, %v1863
  %v1894 = vadd.f32 %v1759, %v1868
  %v1895 = vadd.f32 %v1760, %v1871
  %v1896 = vadd.f32 %v1761, %v1876
  %v1897 = vadd.f32 %v1762, %v1879
  %v1898 = vld [vmem:[%s4] sm:$0x1]
  %v1900 = vlaneseq
  %v1901 = vshrl.u32 %v1900, 7
  %v1902 = vsub.s32 0, %v1901
  %v1903 = vrot.slane %v1898, %v1902
  %v1905 = vadd.f32 %v1882, %v1903
  %v1906 = vadd.f32 %v1883, %v1903
  %v1907 = vadd.f32 %v1884, %v1903
  %v1908 = vadd.f32 %v1885, %v1903
  %v1909 = vadd.f32 %v1886, %v1903
  %v1910 = vadd.f32 %v1887, %v1903
  %v1911 = vadd.f32 %v1888, %v1903
  %v1912 = vadd.f32 %v1889, %v1903
  %v1913 = vadd.f32 %v1890, %v1903
  %v1914 = vadd.f32 %v1891, %v1903
  %v1915 = vadd.f32 %v1892, %v1903
  %v1916 = vadd.f32 %v1893, %v1903
  %v1917 = vadd.f32 %v1894, %v1903
  %v1918 = vadd.f32 %v1895, %v1903
  %v1919 = vadd.f32 %v1896, %v1903
  %v1920 = vadd.f32 %v1897, %v1903
  %v1921 = vmax.f32 %v1905, 0.0
  %v1922 = vmax.f32 %v1906, 0.0
  %v1923 = vmax.f32 %v1907, 0.0
  %v1924 = vmax.f32 %v1908, 0.0
  %v1925 = vmax.f32 %v1909, 0.0
  %v1926 = vmax.f32 %v1910, 0.0
  %v1927 = vmax.f32 %v1911, 0.0
  %v1928 = vmax.f32 %v1912, 0.0
  %v1929 = vmax.f32 %v1913, 0.0
  %v1930 = vmax.f32 %v1914, 0.0
  %v1931 = vmax.f32 %v1915, 0.0
  %v1932 = vmax.f32 %v1916, 0.0
  %v1933 = vmax.f32 %v1917, 0.0
  %v1934 = vmax.f32 %v1918, 0.0
  %v1935 = vmax.f32 %v1919, 0.0
  %v1936 = vmax.f32 %v1920, 0.0
  %v1937 = vpack.c.bf16 %v1922, %v1921
  %v1938 = vpack.c.bf16 %v1924, %v1923
  %v1939 = vpack.c.bf16 %v1926, %v1925
  %v1940 = vpack.c.bf16 %v1928, %v1927
  %v1941 = vpack.c.bf16 %v1930, %v1929
  %v1942 = vpack.c.bf16 %v1932, %v1931
  %v1943 = vpack.c.bf16 %v1934, %v1933
  %v1944 = vpack.c.bf16 %v1936, %v1935
  %v1945 = vld [vmem:[%s5] sm:$0xf]
  %v1946 = vld [vmem:[%s5 + $0x4] sm:$0xf]
  %v1947 = vld [vmem:[%s5 + $0x8] sm:$0xf]
  %v1948 = vld [vmem:[%s5 + $0xc] sm:$0x7]
  %s1949 = scalar_lea.vmem %s5, 16
  %v1950 = vld [vmem:[%s1949] sm:$0xf]
  %v1951 = vld [vmem:[%s1949 + $0x4] sm:$0xf]
  %v1952 = vld [vmem:[%s1949 + $0x8] sm:$0xf]
  %v1953 = vld [vmem:[%s1949 + $0xc] sm:$0x7]
  %v1962 = vrot.slane %v1937, 4
  %v1963 = vsel %vm202, %v203, %v1962
  %v1964 = vrot.slane %v1938, 4
  %v1965 = vsel %vm202, %v1962, %v1964
  %v1966 = vrot.slane %v1939, 4
  %v1967 = vsel %vm202, %v1964, %v1966
  %v1968 = vrot.slane %v1940, 4
  %v1969 = vsel %vm202, %v1966, %v1968
  %v1970 = vrot.slane %v1941, 4
  %v1971 = vsel %vm202, %v1968, %v1970
  %v1972 = vrot.slane %v1942, 4
  %v1973 = vsel %vm202, %v1970, %v1972
  %v1974 = vrot.slane %v1943, 4
  %v1975 = vsel %vm202, %v1972, %v1974
  %v1976 = vrot.slane %v1944, 4
  %v1977 = vsel %vm202, %v1974, %v1976
  %v1982 = vunpack.c.l.b16 %v1950
  %v1983 = vunpack.c.l.b16 %v1951
  %v1984 = vunpack.c.l.b16 %v1952
  %v1985 = vunpack.c.l.b16 %v1953
  %v1986 = vpack.c.b16 %v1983, %v1982
  %v1987 = vpack.c.b16 %v1985, %v1984
  %v1990 = vsel %vm826, %v1963, 0
  %v1993 = vsel %vm826, %v1965, 0
  %v1996 = vsel %vm826, %v1967, 0
  %v1999 = vsel %vm826, %v1969, 0
  %v2002 = vsel %vm826, %v1971, 0
  %v2005 = vsel %vm826, %v1973, 0
  %v2008 = vsel %vm826, %v1975, 0
  %v2011 = vsel %vm826, %v1977, 0
  %v2014 = vsel %vm851, %v1987, 0
  %2016 = vmatprep.subr.bf16.mxu0 0
  %2017 = vmatpush1.bf16.msra.mxu0 %v1986
  %2018 = vmatprep.subr.bf16.mxu0 0
  %2019 = vmatpush1.bf16.msra.mxu0 %v2014
  %2020 = vmatprep.subr.bf16.mxu0 0
  %2021 = vmatpush1.bf16.msra.mxu0 0
  %2022 = vmatprep.subr.bf16.mxu0 0
  %2023 = vmatpush1.bf16.msra.mxu0 0
  %2024 = vmatprep.subr.bf16.mxu0 0
  %2025 = vmatpush1.bf16.msra.mxu0 0
  %2026 = vmatprep.subr.bf16.mxu0 0
  %2027 = vmatpush1.bf16.msra.mxu0 0
  %2028 = vmatprep.subr.bf16.mxu0 0
  %2029 = vmatpush1.bf16.msra.mxu0 0
  %2030 = vmatprep.subr.bf16.mxu0 0
  %2031 = vmatpush1.bf16.msra.mxu0 0
  %2032 = vmatprep.subr.bf16.mxu0 0
  %2033 = vmatpush1.bf16.msra.mxu0 0
  %2034 = vmatprep.subr.bf16.mxu0 0
  %2035 = vmatpush1.bf16.msra.mxu0 0
  %2036 = vmatprep.subr.bf16.mxu0 0
  %2037 = vmatpush1.bf16.msra.mxu0 0
  %2038 = vmatprep.subr.bf16.mxu0 0
  %2039 = vmatpush1.bf16.msra.mxu0 0
  %2040 = vmatprep.subr.bf16.mxu0 0
  %2041 = vmatpush1.bf16.msra.mxu0 0
  %2042 = vmatprep.subr.bf16.mxu0 0
  %2043 = vmatpush1.bf16.msra.mxu0 0
  %2044 = vmatprep.subr.bf16.mxu0 0
  %2045 = vmatpush1.bf16.msra.mxu0 0
  %2046 = vmatprep.subr.bf16.mxu0 0
  %2047 = vmatpush1.bf16.msra.mxu0 0
  %2048 = vmatprep.mubr.bf16.mxu0 0
  %2049 = vmatmul.mubr.bf16.gmra.mrb[0].mxu0 %v1990
  %v2050 = vpop.f32.mrb[0].mxu0
  %v2051 = vadd.f32 0.0, %v2050
  %v2052 = vpop.f32.mrb[0].mxu0
  %v2053 = vpop.f32.mrb[0].mxu0
  %v2054 = vadd.f32 0.0, %v2053
  %v2055 = vpop.f32.mrb[0].mxu0
  %2056 = vmatprep.mubr.bf16.mxu0 0
  %2057 = vmatmul.mubr.bf16.gmra.mrb[0].mxu0 %v1993
  %v2058 = vpop.f32.mrb[0].mxu0
  %v2059 = vadd.f32 0.0, %v2058
  %v2060 = vpop.f32.mrb[0].mxu0
  %v2061 = vpop.f32.mrb[0].mxu0
  %v2062 = vadd.f32 0.0, %v2061
  %v2063 = vpop.f32.mrb[0].mxu0
  %2064 = vmatprep.mubr.bf16.mxu0 0
  %2065 = vmatmul.mubr.bf16.gmra.mrb[0].mxu0 %v1996
  %v2066 = vpop.f32.mrb[0].mxu0
  %v2067 = vadd.f32 0.0, %v2066
  %v2068 = vpop.f32.mrb[0].mxu0
  %v2069 = vpop.f32.mrb[0].mxu0
  %v2070 = vadd.f32 0.0, %v2069
  %v2071 = vpop.f32.mrb[0].mxu0
  %2072 = vmatprep.mubr.bf16.mxu0 0
  %2073 = vmatmul.mubr.bf16.gmra.mrb[0].mxu0 %v1999
  %v2074 = vpop.f32.mrb[0].mxu0
  %v2075 = vadd.f32 0.0, %v2074
  %v2076 = vpop.f32.mrb[0].mxu0
  %v2077 = vpop.f32.mrb[0].mxu0
  %v2078 = vadd.f32 0.0, %v2077
  %v2079 = vpop.f32.mrb[0].mxu0
  %2080 = vmatprep.mubr.bf16.mxu0 0
  %2081 = vmatmul.mubr.bf16.gmra.mrb[0].mxu0 %v2002
  %v2082 = vpop.f32.mrb[0].mxu0
  %v2083 = vadd.f32 0.0, %v2082
  %v2084 = vpop.f32.mrb[0].mxu0
  %v2085 = vpop.f32.mrb[0].mxu0
  %v2086 = vadd.f32 0.0, %v2085
  %v2087 = vpop.f32.mrb[0].mxu0
  %2088 = vmatprep.mubr.bf16.mxu0 0
  %2089 = vmatmul.mubr.bf16.gmra.mrb[0].mxu0 %v2005
  %v2090 = vpop.f32.mrb[0].mxu0
  %v2091 = vadd.f32 0.0, %v2090
  %v2092 = vpop.f32.mrb[0].mxu0
  %v2093 = vpop.f32.mrb[0].mxu0
  %v2094 = vadd.f32 0.0, %v2093
  %v2095 = vpop.f32.mrb[0].mxu0
  %2096 = vmatprep.mubr.bf16.mxu0 0
  %2097 = vmatmul.mubr.bf16.gmra.mrb[0].mxu0 %v2008
  %v2098 = vpop.f32.mrb[0].mxu0
  %v2099 = vadd.f32 0.0, %v2098
  %v2100 = vpop.f32.mrb[0].mxu0
  %v2101 = vpop.f32.mrb[0].mxu0
  %v2102 = vadd.f32 0.0, %v2101
  %v2103 = vpop.f32.mrb[0].mxu0
  %2104 = vmatprep.mubr.bf16.mxu0 0
  %2105 = vmatmul.mubr.bf16.gmra.mrb[0].mxu0 %v2011
  %v2106 = vpop.f32.mrb[0].mxu0
  %v2107 = vadd.f32 0.0, %v2106
  %v2108 = vpop.f32.mrb[0].mxu0
  %v2109 = vpop.f32.mrb[0].mxu0
  %v2110 = vadd.f32 0.0, %v2109
  %v2111 = vpop.f32.mrb[0].mxu0
  %2112 = vdwg.mxu0
  %v2117 = vunpack.c.l.b16 %v1945
  %v2118 = vunpack.c.l.b16 %v1946
  %v2119 = vunpack.c.l.b16 %v1947
  %v2120 = vunpack.c.l.b16 %v1948
  %v2121 = vpack.c.b16 %v2118, %v2117
  %v2122 = vpack.c.b16 %v2120, %v2119
  %v2125 = vsel %vm826, %v1937, 0
  %v2128 = vsel %vm826, %v1938, 0
  %v2131 = vsel %vm826, %v1939, 0
  %v2134 = vsel %vm826, %v1940, 0
  %v2137 = vsel %vm826, %v1941, 0
  %v2140 = vsel %vm826, %v1942, 0
  %v2143 = vsel %vm826, %v1943, 0
  %v2146 = vsel %vm851, %v2122, 0
  %2148 = vmatprep.subr.bf16.mxu0 0
  %2149 = vmatpush1.bf16.msra.mxu0 %v2121
  %2150 = vmatprep.subr.bf16.mxu0 0
  %2151 = vmatpush1.bf16.msra.mxu0 %v2146
  %2152 = vmatprep.subr.bf16.mxu0 0
  %2153 = vmatpush1.bf16.msra.mxu0 0
  %2154 = vmatprep.subr.bf16.mxu0 0
  %2155 = vmatpush1.bf16.msra.mxu0 0
  %2156 = vmatprep.subr.bf16.mxu0 0
  %2157 = vmatpush1.bf16.msra.mxu0 0
  %2158 = vmatprep.subr.bf16.mxu0 0
  %2159 = vmatpush1.bf16.msra.mxu0 0
  %2160 = vmatprep.subr.bf16.mxu0 0
  %2161 = vmatpush1.bf16.msra.mxu0 0
  %2162 = vmatprep.subr.bf16.mxu0 0
  %2163 = vmatpush1.bf16.msra.mxu0 0
  %2164 = vmatprep.subr.bf16.mxu0 0
  %2165 = vmatpush1.bf16.msra.mxu0 0
  %2166 = vmatprep.subr.bf16.mxu0 0
  %2167 = vmatpush1.bf16.msra.mxu0 0
  %2168 = vmatprep.subr.bf16.mxu0 0
  %2169 = vmatpush1.bf16.msra.mxu0 0
  %2170 = vmatprep.subr.bf16.mxu0 0
  %2171 = vmatpush1.bf16.msra.mxu0 0
  %2172 = vmatprep.subr.bf16.mxu0 0
  %2173 = vmatpush1.bf16.msra.mxu0 0
  %2174 = vmatprep.subr.bf16.mxu0 0
  %2175 = vmatpush1.bf16.msra.mxu0 0
  %2176 = vmatprep.subr.bf16.mxu0 0
  %2177 = vmatpush1.bf16.msra.mxu0 0
  %2178 = vmatprep.subr.bf16.mxu0 0
  %2179 = vmatpush1.bf16.msra.mxu0 0
  %2180 = vmatprep.mubr.bf16.mxu0 0
  %2181 = vmatmul.mubr.bf16.gmra.mrb[0].mxu0 %v964
  %v2182 = vpop.f32.mrb[0].mxu0
  %v2183 = vadd.f32 %v2051, %v2182
  %v2184 = vpop.f32.mrb[0].mxu0
  %v2185 = vpop.f32.mrb[0].mxu0
  %v2186 = vadd.f32 %v2054, %v2185
  %v2187 = vpop.f32.mrb[0].mxu0
  %2188 = vmatprep.mubr.bf16.mxu0 0
  %2189 = vmatmul.mubr.bf16.gmra.mrb[0].mxu0 %v2125
  %v2190 = vpop.f32.mrb[0].mxu0
  %v2191 = vadd.f32 %v2059, %v2190
  %v2192 = vpop.f32.mrb[0].mxu0
  %v2193 = vpop.f32.mrb[0].mxu0
  %v2194 = vadd.f32 %v2062, %v2193
  %v2195 = vpop.f32.mrb[0].mxu0
  %2196 = vmatprep.mubr.bf16.mxu0 0
  %2197 = vmatmul.mubr.bf16.gmra.mrb[0].mxu0 %v2128
  %v2198 = vpop.f32.mrb[0].mxu0
  %v2199 = vadd.f32 %v2067, %v2198
  %v2200 = vpop.f32.mrb[0].mxu0
  %v2201 = vpop.f32.mrb[0].mxu0
  %v2202 = vadd.f32 %v2070, %v2201
  %v2203 = vpop.f32.mrb[0].mxu0
  %2204 = vmatprep.mubr.bf16.mxu0 0
  %2205 = vmatmul.mubr.bf16.gmra.mrb[0].mxu0 %v2131
  %v2206 = vpop.f32.mrb[0].mxu0
  %v2207 = vadd.f32 %v2075, %v2206
  %v2208 = vpop.f32.mrb[0].mxu0
  %v2209 = vpop.f32.mrb[0].mxu0
  %v2210 = vadd.f32 %v2078, %v2209
  %v2211 = vpop.f32.mrb[0].mxu0
  %2212 = vmatprep.mubr.bf16.mxu0 0
  %2213 = vmatmul.mubr.bf16.gmra.mrb[0].mxu0 %v2134
  %v2214 = vpop.f32.mrb[0].mxu0
  %v2215 = vadd.f32 %v2083, %v2214
  %v2216 = vpop.f32.mrb[0].mxu0
  %v2217 = vpop.f32.mrb[0].mxu0
  %v2218 = vadd.f32 %v2086, %v2217
  %v2219 = vpop.f32.mrb[0].mxu0
  %2220 = vmatprep.mubr.bf16.mxu0 0
  %2221 = vmatmul.mubr.bf16.gmra.mrb[0].mxu0 %v2137
  %v2222 = vpop.f32.mrb[0].mxu0
  %v2223 = vadd.f32 %v2091, %v2222
  %v2224 = vpop.f32.mrb[0].mxu0
  %v2225 = vpop.f32.mrb[0].mxu0
  %v2226 = vadd.f32 %v2094, %v2225
  %v2227 = vpop.f32.mrb[0].mxu0
  %2228 = vmatprep.mubr.bf16.mxu0 0
  %2229 = vmatmul.mubr.bf16.gmra.mrb[0].mxu0 %v2140
  %v2230 = vpop.f32.mrb[0].mxu0
  %v2231 = vadd.f32 %v2099, %v2230
  %v2232 = vpop.f32.mrb[0].mxu0
  %v2233 = vpop.f32.mrb[0].mxu0
  %v2234 = vadd.f32 %v2102, %v2233
  %v2235 = vpop.f32.mrb[0].mxu0
  %2236 = vmatprep.mubr.bf16.mxu0 0
  %2237 = vmatmul.mubr.bf16.gmra.mrb[0].mxu0 %v2143
  %v2238 = vpop.f32.mrb[0].mxu0
  %v2239 = vadd.f32 %v2107, %v2238
  %v2240 = vpop.f32.mrb[0].mxu0
  %v2241 = vpop.f32.mrb[0].mxu0
  %v2242 = vadd.f32 %v2110, %v2241
  %v2243 = vpop.f32.mrb[0].mxu0
  %2244 = vdwg.mxu0
  %s2245 = scalar_lea.vmem %s5, 32
  %v2246 = vld [vmem:[%s2245] sm:$0xf]
  %v2247 = vld [vmem:[%s2245 + $0x4] sm:$0xf]
  %v2248 = vld [vmem:[%s2245 + $0x8] sm:$0xf]
  %v2249 = vld [vmem:[%s2245 + $0xc] sm:$0x7]
  %v2254 = vunpack.c.l.b16 %v2246
  %v2255 = vunpack.c.l.b16 %v2247
  %v2256 = vunpack.c.l.b16 %v2248
  %v2257 = vunpack.c.l.b16 %v2249
  %v2258 = vpack.c.b16 %v2255, %v2254
  %v2259 = vpack.c.b16 %v2257, %v2256
  %v2262 = vsel %vm826, %v1944, 0
  %v2265 = vsel %vm851, %v2259, 0
  %2267 = vmatprep.subr.bf16.mxu0 0
  %2268 = vmatpush1.bf16.msra.mxu0 %v2258
  %2269 = vmatprep.subr.bf16.mxu0 0
  %2270 = vmatpush1.bf16.msra.mxu0 %v2265
  %2271 = vmatprep.subr.bf16.mxu0 0
  %2272 = vmatpush1.bf16.msra.mxu0 0
  %2273 = vmatprep.subr.bf16.mxu0 0
  %2274 = vmatpush1.bf16.msra.mxu0 0
  %2275 = vmatprep.subr.bf16.mxu0 0
  %2276 = vmatpush1.bf16.msra.mxu0 0
  %2277 = vmatprep.subr.bf16.mxu0 0
  %2278 = vmatpush1.bf16.msra.mxu0 0
  %2279 = vmatprep.subr.bf16.mxu0 0
  %2280 = vmatpush1.bf16.msra.mxu0 0
  %2281 = vmatprep.subr.bf16.mxu0 0
  %2282 = vmatpush1.bf16.msra.mxu0 0
  %2283 = vmatprep.subr.bf16.mxu0 0
  %2284 = vmatpush1.bf16.msra.mxu0 0
  %2285 = vmatprep.subr.bf16.mxu0 0
  %2286 = vmatpush1.bf16.msra.mxu0 0
  %2287 = vmatprep.subr.bf16.mxu0 0
  %2288 = vmatpush1.bf16.msra.mxu0 0
  %2289 = vmatprep.subr.bf16.mxu0 0
  %2290 = vmatpush1.bf16.msra.mxu0 0
  %2291 = vmatprep.subr.bf16.mxu0 0
  %2292 = vmatpush1.bf16.msra.mxu0 0
  %2293 = vmatprep.subr.bf16.mxu0 0
  %2294 = vmatpush1.bf16.msra.mxu0 0
  %2295 = vmatprep.subr.bf16.mxu0 0
  %2296 = vmatpush1.bf16.msra.mxu0 0
  %2297 = vmatprep.subr.bf16.mxu0 0
  %2298 = vmatpush1.bf16.msra.mxu0 0
  %2299 = vmatprep.mubr.bf16.mxu0 0
  %2300 = vmatmul.mubr.bf16.gmra.mrb[0].mxu0 %v2125
  %v2301 = vpop.f32.mrb[0].mxu0
  %v2302 = vadd.f32 0.0, %v2301
  %v2303 = vpop.f32.mrb[0].mxu0
  %v2304 = vpop.f32.mrb[0].mxu0
  %v2305 = vadd.f32 0.0, %v2304
  %v2306 = vpop.f32.mrb[0].mxu0
  %2307 = vmatprep.mubr.bf16.mxu0 0
  %2308 = vmatmul.mubr.bf16.gmra.mrb[0].mxu0 %v2128
  %v2309 = vpop.f32.mrb[0].mxu0
  %v2310 = vadd.f32 0.0, %v2309
  %v2311 = vpop.f32.mrb[0].mxu0
  %v2312 = vpop.f32.mrb[0].mxu0
  %v2313 = vadd.f32 0.0, %v2312
  %v2314 = vpop.f32.mrb[0].mxu0
  %2315 = vmatprep.mubr.bf16.mxu0 0
  %2316 = vmatmul.mubr.bf16.gmra.mrb[0].mxu0 %v2131
  %v2317 = vpop.f32.mrb[0].mxu0
  %v2318 = vadd.f32 0.0, %v2317
  %v2319 = vpop.f32.mrb[0].mxu0
  %v2320 = vpop.f32.mrb[0].mxu0
  %v2321 = vadd.f32 0.0, %v2320
  %v2322 = vpop.f32.mrb[0].mxu0
  %2323 = vmatprep.mubr.bf16.mxu0 0
  %2324 = vmatmul.mubr.bf16.gmra.mrb[0].mxu0 %v2134
  %v2325 = vpop.f32.mrb[0].mxu0
  %v2326 = vadd.f32 0.0, %v2325
  %v2327 = vpop.f32.mrb[0].mxu0
  %v2328 = vpop.f32.mrb[0].mxu0
  %v2329 = vadd.f32 0.0, %v2328
  %v2330 = vpop.f32.mrb[0].mxu0
  %2331 = vmatprep.mubr.bf16.mxu0 0
  %2332 = vmatmul.mubr.bf16.gmra.mrb[0].mxu0 %v2137
  %v2333 = vpop.f32.mrb[0].mxu0
  %v2334 = vadd.f32 0.0, %v2333
  %v2335 = vpop.f32.mrb[0].mxu0
  %v2336 = vpop.f32.mrb[0].mxu0
  %v2337 = vadd.f32 0.0, %v2336
  %v2338 = vpop.f32.mrb[0].mxu0
  %2339 = vmatprep.mubr.bf16.mxu0 0
  %2340 = vmatmul.mubr.bf16.gmra.mrb[0].mxu0 %v2140
  %v2341 = vpop.f32.mrb[0].mxu0
  %v2342 = vadd.f32 0.0, %v2341
  %v2343 = vpop.f32.mrb[0].mxu0
  %v2344 = vpop.f32.mrb[0].mxu0
  %v2345 = vadd.f32 0.0, %v2344
  %v2346 = vpop.f32.mrb[0].mxu0
  %2347 = vmatprep.mubr.bf16.mxu0 0
  %2348 = vmatmul.mubr.bf16.gmra.mrb[0].mxu0 %v2143
  %v2349 = vpop.f32.mrb[0].mxu0
  %v2350 = vadd.f32 0.0, %v2349
  %v2351 = vpop.f32.mrb[0].mxu0
  %v2352 = vpop.f32.mrb[0].mxu0
  %v2353 = vadd.f32 0.0, %v2352
  %v2354 = vpop.f32.mrb[0].mxu0
  %2355 = vmatprep.mubr.bf16.mxu0 0
  %2356 = vmatmul.mubr.bf16.gmra.mrb[0].mxu0 %v2262
  %v2357 = vpop.f32.mrb[0].mxu0
  %v2358 = vadd.f32 0.0, %v2357
  %v2359 = vpop.f32.mrb[0].mxu0
  %v2360 = vpop.f32.mrb[0].mxu0
  %v2361 = vadd.f32 0.0, %v2360
  %v2362 = vpop.f32.mrb[0].mxu0
  %2363 = vdwg.mxu0
  %v2364 = vadd.f32 %v2183, %v2302
  %v2365 = vadd.f32 %v2186, %v2305
  %v2366 = vadd.f32 %v2191, %v2310
  %v2367 = vadd.f32 %v2194, %v2313
  %v2368 = vadd.f32 %v2199, %v2318
  %v2369 = vadd.f32 %v2202, %v2321
  %v2370 = vadd.f32 %v2207, %v2326
  %v2371 = vadd.f32 %v2210, %v2329
  %v2372 = vadd.f32 %v2215, %v2334
  %v2373 = vadd.f32 %v2218, %v2337
  %v2374 = vadd.f32 %v2223, %v2342
  %v2375 = vadd.f32 %v2226, %v2345
  %v2376 = vadd.f32 %v2231, %v2350
  %v2377 = vadd.f32 %v2234, %v2353
  %v2378 = vadd.f32 %v2239, %v2358
  %v2379 = vadd.f32 %v2242, %v2361
  %s2380 = scalar_lea.vmem %s5, 48
  %v2381 = vld [vmem:[%s2380] sm:$0xf]
  %v2382 = vld [vmem:[%s2380 + $0x4] sm:$0xf]
  %v2383 = vld [vmem:[%s2380 + $0x8] sm:$0xf]
  %v2384 = vld [vmem:[%s2380 + $0xc] sm:$0x7]
  %v2385 = vsel %vm202, %v1976, %v203
  %v2390 = vunpack.c.l.b16 %v2381
  %v2391 = vunpack.c.l.b16 %v2382
  %v2392 = vunpack.c.l.b16 %v2383
  %v2393 = vunpack.c.l.b16 %v2384
  %v2394 = vpack.c.b16 %v2391, %v2390
  %v2395 = vpack.c.b16 %v2393, %v2392
  %v2398 = vsel %vm826, %v2385, 0
  %v2401 = vsel %vm851, %v2395, 0
  %2403 = vmatprep.subr.bf16.mxu0 0
  %2404 = vmatpush1.bf16.msra.mxu0 %v2394
  %2405 = vmatprep.subr.bf16.mxu0 0
  %2406 = vmatpush1.bf16.msra.mxu0 %v2401
  %2407 = vmatprep.subr.bf16.mxu0 0
  %2408 = vmatpush1.bf16.msra.mxu0 0
  %2409 = vmatprep.subr.bf16.mxu0 0
  %2410 = vmatpush1.bf16.msra.mxu0 0
  %2411 = vmatprep.subr.bf16.mxu0 0
  %2412 = vmatpush1.bf16.msra.mxu0 0
  %2413 = vmatprep.subr.bf16.mxu0 0
  %2414 = vmatpush1.bf16.msra.mxu0 0
  %2415 = vmatprep.subr.bf16.mxu0 0
  %2416 = vmatpush1.bf16.msra.mxu0 0
  %2417 = vmatprep.subr.bf16.mxu0 0
  %2418 = vmatpush1.bf16.msra.mxu0 0
  %2419 = vmatprep.subr.bf16.mxu0 0
  %2420 = vmatpush1.bf16.msra.mxu0 0
  %2421 = vmatprep.subr.bf16.mxu0 0
  %2422 = vmatpush1.bf16.msra.mxu0 0
  %2423 = vmatprep.subr.bf16.mxu0 0
  %2424 = vmatpush1.bf16.msra.mxu0 0
  %2425 = vmatprep.subr.bf16.mxu0 0
  %2426 = vmatpush1.bf16.msra.mxu0 0
  %2427 = vmatprep.subr.bf16.mxu0 0
  %2428 = vmatpush1.bf16.msra.mxu0 0
  %2429 = vmatprep.subr.bf16.mxu0 0
  %2430 = vmatpush1.bf16.msra.mxu0 0
  %2431 = vmatprep.subr.bf16.mxu0 0
  %2432 = vmatpush1.bf16.msra.mxu0 0
  %2433 = vmatprep.subr.bf16.mxu0 0
  %2434 = vmatpush1.bf16.msra.mxu0 0
  %2435 = vmatprep.mubr.bf16.mxu0 0
  %2436 = vmatmul.mubr.bf16.gmra.mrb[0].mxu0 %v1993
  %v2437 = vpop.f32.mrb[0].mxu0
  %v2438 = vadd.f32 0.0, %v2437
  %v2439 = vpop.f32.mrb[0].mxu0
  %v2440 = vpop.f32.mrb[0].mxu0
  %v2441 = vadd.f32 0.0, %v2440
  %v2442 = vpop.f32.mrb[0].mxu0
  %2443 = vmatprep.mubr.bf16.mxu0 0
  %2444 = vmatmul.mubr.bf16.gmra.mrb[0].mxu0 %v1996
  %v2445 = vpop.f32.mrb[0].mxu0
  %v2446 = vadd.f32 0.0, %v2445
  %v2447 = vpop.f32.mrb[0].mxu0
  %v2448 = vpop.f32.mrb[0].mxu0
  %v2449 = vadd.f32 0.0, %v2448
  %v2450 = vpop.f32.mrb[0].mxu0
  %2451 = vmatprep.mubr.bf16.mxu0 0
  %2452 = vmatmul.mubr.bf16.gmra.mrb[0].mxu0 %v1999
  %v2453 = vpop.f32.mrb[0].mxu0
  %v2454 = vadd.f32 0.0, %v2453
  %v2455 = vpop.f32.mrb[0].mxu0
  %v2456 = vpop.f32.mrb[0].mxu0
  %v2457 = vadd.f32 0.0, %v2456
  %v2458 = vpop.f32.mrb[0].mxu0
  %2459 = vmatprep.mubr.bf16.mxu0 0
  %2460 = vmatmul.mubr.bf16.gmra.mrb[0].mxu0 %v2002
  %v2461 = vpop.f32.mrb[0].mxu0
  %v2462 = vadd.f32 0.0, %v2461
  %v2463 = vpop.f32.mrb[0].mxu0
  %v2464 = vpop.f32.mrb[0].mxu0
  %v2465 = vadd.f32 0.0, %v2464
  %v2466 = vpop.f32.mrb[0].mxu0
  %2467 = vmatprep.mubr.bf16.mxu0 0
  %2468 = vmatmul.mubr.bf16.gmra.mrb[0].mxu0 %v2005
  %v2469 = vpop.f32.mrb[0].mxu0
  %v2470 = vadd.f32 0.0, %v2469
  %v2471 = vpop.f32.mrb[0].mxu0
  %v2472 = vpop.f32.mrb[0].mxu0
  %v2473 = vadd.f32 0.0, %v2472
  %v2474 = vpop.f32.mrb[0].mxu0
  %2475 = vmatprep.mubr.bf16.mxu0 0
  %2476 = vmatmul.mubr.bf16.gmra.mrb[0].mxu0 %v2008
  %v2477 = vpop.f32.mrb[0].mxu0
  %v2478 = vadd.f32 0.0, %v2477
  %v2479 = vpop.f32.mrb[0].mxu0
  %v2480 = vpop.f32.mrb[0].mxu0
  %v2481 = vadd.f32 0.0, %v2480
  %v2482 = vpop.f32.mrb[0].mxu0
  %2483 = vmatprep.mubr.bf16.mxu0 0
  %2484 = vmatmul.mubr.bf16.gmra.mrb[0].mxu0 %v2011
  %v2485 = vpop.f32.mrb[0].mxu0
  %v2486 = vadd.f32 0.0, %v2485
  %v2487 = vpop.f32.mrb[0].mxu0
  %v2488 = vpop.f32.mrb[0].mxu0
  %v2489 = vadd.f32 0.0, %v2488
  %v2490 = vpop.f32.mrb[0].mxu0
  %2491 = vmatprep.mubr.bf16.mxu0 0
  %2492 = vmatmul.mubr.bf16.gmra.mrb[0].mxu0 %v2398
  %v2493 = vpop.f32.mrb[0].mxu0
  %v2494 = vadd.f32 0.0, %v2493
  %v2495 = vpop.f32.mrb[0].mxu0
  %v2496 = vpop.f32.mrb[0].mxu0
  %v2497 = vadd.f32 0.0, %v2496
  %v2498 = vpop.f32.mrb[0].mxu0
  %2499 = vdwg.mxu0
  %v2500 = vadd.f32 %v2364, %v2438
  %v2501 = vadd.f32 %v2365, %v2441
  %v2502 = vadd.f32 %v2366, %v2446
  %v2503 = vadd.f32 %v2367, %v2449
  %v2504 = vadd.f32 %v2368, %v2454
  %v2505 = vadd.f32 %v2369, %v2457
  %v2506 = vadd.f32 %v2370, %v2462
  %v2507 = vadd.f32 %v2371, %v2465
  %v2508 = vadd.f32 %v2372, %v2470
  %v2509 = vadd.f32 %v2373, %v2473
  %v2510 = vadd.f32 %v2374, %v2478
  %v2511 = vadd.f32 %v2375, %v2481
  %v2512 = vadd.f32 %v2376, %v2486
  %v2513 = vadd.f32 %v2377, %v2489
  %v2514 = vadd.f32 %v2378, %v2494
  %v2515 = vadd.f32 %v2379, %v2497
  %s2516 = scalar_lea.vmem %s5, 64
  %v2517 = vld [vmem:[%s2516] sm:$0xf]
  %v2518 = vld [vmem:[%s2516 + $0x4] sm:$0xf]
  %v2519 = vld [vmem:[%s2516 + $0x8] sm:$0xf]
  %v2520 = vld [vmem:[%s2516 + $0xc] sm:$0x7]
  %v2525 = vunpack.c.l.b16 %v2517
  %v2526 = vunpack.c.l.b16 %v2518
  %v2527 = vunpack.c.l.b16 %v2519
  %v2528 = vunpack.c.l.b16 %v2520
  %v2529 = vpack.c.b16 %v2526, %v2525
  %v2530 = vpack.c.b16 %v2528, %v2527
  %v2533 = vsel %vm851, %v2530, 0
  %2535 = vmatprep.subr.bf16.mxu0 0
  %2536 = vmatpush1.bf16.msra.mxu0 %v2529
  %2537 = vmatprep.subr.bf16.mxu0 0
  %2538 = vmatpush1.bf16.msra.mxu0 %v2533
  %2539 = vmatprep.subr.bf16.mxu0 0
  %2540 = vmatpush1.bf16.msra.mxu0 0
  %2541 = vmatprep.subr.bf16.mxu0 0
  %2542 = vmatpush1.bf16.msra.mxu0 0
  %2543 = vmatprep.subr.bf16.mxu0 0
  %2544 = vmatpush1.bf16.msra.mxu0 0
  %2545 = vmatprep.subr.bf16.mxu0 0
  %2546 = vmatpush1.bf16.msra.mxu0 0
  %2547 = vmatprep.subr.bf16.mxu0 0
  %2548 = vmatpush1.bf16.msra.mxu0 0
  %2549 = vmatprep.subr.bf16.mxu0 0
  %2550 = vmatpush1.bf16.msra.mxu0 0
  %2551 = vmatprep.subr.bf16.mxu0 0
  %2552 = vmatpush1.bf16.msra.mxu0 0
  %2553 = vmatprep.subr.bf16.mxu0 0
  %2554 = vmatpush1.bf16.msra.mxu0 0
  %2555 = vmatprep.subr.bf16.mxu0 0
  %2556 = vmatpush1.bf16.msra.mxu0 0
  %2557 = vmatprep.subr.bf16.mxu0 0
  %2558 = vmatpush1.bf16.msra.mxu0 0
  %2559 = vmatprep.subr.bf16.mxu0 0
  %2560 = vmatpush1.bf16.msra.mxu0 0
  %2561 = vmatprep.subr.bf16.mxu0 0
  %2562 = vmatpush1.bf16.msra.mxu0 0
  %2563 = vmatprep.subr.bf16.mxu0 0
  %2564 = vmatpush1.bf16.msra.mxu0 0
  %2565 = vmatprep.subr.bf16.mxu0 0
  %2566 = vmatpush1.bf16.msra.mxu0 0
  %2567 = vmatprep.mubr.bf16.mxu0 0
  %2568 = vmatmul.mubr.bf16.gmra.mrb[0].mxu0 %v2128
  %v2569 = vpop.f32.mrb[0].mxu0
  %v2570 = vadd.f32 0.0, %v2569
  %v2571 = vpop.f32.mrb[0].mxu0
  %v2572 = vpop.f32.mrb[0].mxu0
  %v2573 = vadd.f32 0.0, %v2572
  %v2574 = vpop.f32.mrb[0].mxu0
  %2575 = vmatprep.mubr.bf16.mxu0 0
  %2576 = vmatmul.mubr.bf16.gmra.mrb[0].mxu0 %v2131
  %v2577 = vpop.f32.mrb[0].mxu0
  %v2578 = vadd.f32 0.0, %v2577
  %v2579 = vpop.f32.mrb[0].mxu0
  %v2580 = vpop.f32.mrb[0].mxu0
  %v2581 = vadd.f32 0.0, %v2580
  %v2582 = vpop.f32.mrb[0].mxu0
  %2583 = vmatprep.mubr.bf16.mxu0 0
  %2584 = vmatmul.mubr.bf16.gmra.mrb[0].mxu0 %v2134
  %v2585 = vpop.f32.mrb[0].mxu0
  %v2586 = vadd.f32 0.0, %v2585
  %v2587 = vpop.f32.mrb[0].mxu0
  %v2588 = vpop.f32.mrb[0].mxu0
  %v2589 = vadd.f32 0.0, %v2588
  %v2590 = vpop.f32.mrb[0].mxu0
  %2591 = vmatprep.mubr.bf16.mxu0 0
  %2592 = vmatmul.mubr.bf16.gmra.mrb[0].mxu0 %v2137
  %v2593 = vpop.f32.mrb[0].mxu0
  %v2594 = vadd.f32 0.0, %v2593
  %v2595 = vpop.f32.mrb[0].mxu0
  %v2596 = vpop.f32.mrb[0].mxu0
  %v2597 = vadd.f32 0.0, %v2596
  %v2598 = vpop.f32.mrb[0].mxu0
  %2599 = vmatprep.mubr.bf16.mxu0 0
  %2600 = vmatmul.mubr.bf16.gmra.mrb[0].mxu0 %v2140
  %v2601 = vpop.f32.mrb[0].mxu0
  %v2602 = vadd.f32 0.0, %v2601
  %v2603 = vpop.f32.mrb[0].mxu0
  %v2604 = vpop.f32.mrb[0].mxu0
  %v2605 = vadd.f32 0.0, %v2604
  %v2606 = vpop.f32.mrb[0].mxu0
  %2607 = vmatprep.mubr.bf16.mxu0 0
  %2608 = vmatmul.mubr.bf16.gmra.mrb[0].mxu0 %v2143
  %v2609 = vpop.f32.mrb[0].mxu0
  %v2610 = vadd.f32 0.0, %v2609
  %v2611 = vpop.f32.mrb[0].mxu0
  %v2612 = vpop.f32.mrb[0].mxu0
  %v2613 = vadd.f32 0.0, %v2612
  %v2614 = vpop.f32.mrb[0].mxu0
  %2615 = vmatprep.mubr.bf16.mxu0 0
  %2616 = vmatmul.mubr.bf16.gmra.mrb[0].mxu0 %v2262
  %v2617 = vpop.f32.mrb[0].mxu0
  %v2618 = vadd.f32 0.0, %v2617
  %v2619 = vpop.f32.mrb[0].mxu0
  %v2620 = vpop.f32.mrb[0].mxu0
  %v2621 = vadd.f32 0.0, %v2620
  %v2622 = vpop.f32.mrb[0].mxu0
  %2623 = vmatprep.mubr.bf16.mxu0 0
  %2624 = vmatmul.mubr.bf16.gmra.mrb[0].mxu0 %v964
  %v2625 = vpop.f32.mrb[0].mxu0
  %v2626 = vadd.f32 0.0, %v2625
  %v2627 = vpop.f32.mrb[0].mxu0
  %v2628 = vpop.f32.mrb[0].mxu0
  %v2629 = vadd.f32 0.0, %v2628
  %v2630 = vpop.f32.mrb[0].mxu0
  %2631 = vdwg.mxu0
  %v2632 = vadd.f32 %v2500, %v2570
  %v2633 = vadd.f32 %v2501, %v2573
  %v2634 = vadd.f32 %v2502, %v2578
  %v2635 = vadd.f32 %v2503, %v2581
  %v2636 = vadd.f32 %v2504, %v2586
  %v2637 = vadd.f32 %v2505, %v2589
  %v2638 = vadd.f32 %v2506, %v2594
  %v2639 = vadd.f32 %v2507, %v2597
  %v2640 = vadd.f32 %v2508, %v2602
  %v2641 = vadd.f32 %v2509, %v2605
  %v2642 = vadd.f32 %v2510, %v2610
  %v2643 = vadd.f32 %v2511, %v2613
  %v2644 = vadd.f32 %v2512, %v2618
  %v2645 = vadd.f32 %v2513, %v2621
  %v2646 = vadd.f32 %v2514, %v2626
  %v2647 = vadd.f32 %v2515, %v2629
  %s2648 = scalar_lea.vmem %s5, 80
  %v2649 = vld [vmem:[%s2648] sm:$0xf]
  %v2650 = vld [vmem:[%s2648 + $0x4] sm:$0xf]
  %v2651 = vld [vmem:[%s2648 + $0x8] sm:$0xf]
  %v2652 = vld [vmem:[%s2648 + $0xc] sm:$0x7]
  %v2657 = vunpack.c.l.b16 %v2649
  %v2658 = vunpack.c.l.b16 %v2650
  %v2659 = vunpack.c.l.b16 %v2651
  %v2660 = vunpack.c.l.b16 %v2652
  %v2661 = vpack.c.b16 %v2658, %v2657
  %v2662 = vpack.c.b16 %v2660, %v2659
  %v2665 = vsel %vm851, %v2662, 0
  %2667 = vmatprep.subr.bf16.mxu0 0
  %2668 = vmatpush1.bf16.msra.mxu0 %v2661
  %2669 = vmatprep.subr.bf16.mxu0 0
  %2670 = vmatpush1.bf16.msra.mxu0 %v2665
  %2671 = vmatprep.subr.bf16.mxu0 0
  %2672 = vmatpush1.bf16.msra.mxu0 0
  %2673 = vmatprep.subr.bf16.mxu0 0
  %2674 = vmatpush1.bf16.msra.mxu0 0
  %2675 = vmatprep.subr.bf16.mxu0 0
  %2676 = vmatpush1.bf16.msra.mxu0 0
  %2677 = vmatprep.subr.bf16.mxu0 0
  %2678 = vmatpush1.bf16.msra.mxu0 0
  %2679 = vmatprep.subr.bf16.mxu0 0
  %2680 = vmatpush1.bf16.msra.mxu0 0
  %2681 = vmatprep.subr.bf16.mxu0 0
  %2682 = vmatpush1.bf16.msra.mxu0 0
  %2683 = vmatprep.subr.bf16.mxu0 0
  %2684 = vmatpush1.bf16.msra.mxu0 0
  %2685 = vmatprep.subr.bf16.mxu0 0
  %2686 = vmatpush1.bf16.msra.mxu0 0
  %2687 = vmatprep.subr.bf16.mxu0 0
  %2688 = vmatpush1.bf16.msra.mxu0 0
  %2689 = vmatprep.subr.bf16.mxu0 0
  %2690 = vmatpush1.bf16.msra.mxu0 0
  %2691 = vmatprep.subr.bf16.mxu0 0
  %2692 = vmatpush1.bf16.msra.mxu0 0
  %2693 = vmatprep.subr.bf16.mxu0 0
  %2694 = vmatpush1.bf16.msra.mxu0 0
  %2695 = vmatprep.subr.bf16.mxu0 0
  %2696 = vmatpush1.bf16.msra.mxu0 0
  %2697 = vmatprep.subr.bf16.mxu0 0
  %2698 = vmatpush1.bf16.msra.mxu0 0
  %2699 = vmatprep.mubr.bf16.mxu0 0
  %2700 = vmatmul.mubr.bf16.gmra.mrb[0].mxu0 %v1996
  %v2701 = vpop.f32.mrb[0].mxu0
  %v2702 = vadd.f32 0.0, %v2701
  %v2703 = vpop.f32.mrb[0].mxu0
  %v2704 = vpop.f32.mrb[0].mxu0
  %v2705 = vadd.f32 0.0, %v2704
  %v2706 = vpop.f32.mrb[0].mxu0
  %2707 = vmatprep.mubr.bf16.mxu0 0
  %2708 = vmatmul.mubr.bf16.gmra.mrb[0].mxu0 %v1999
  %v2709 = vpop.f32.mrb[0].mxu0
  %v2710 = vadd.f32 0.0, %v2709
  %v2711 = vpop.f32.mrb[0].mxu0
  %v2712 = vpop.f32.mrb[0].mxu0
  %v2713 = vadd.f32 0.0, %v2712
  %v2714 = vpop.f32.mrb[0].mxu0
  %2715 = vmatprep.mubr.bf16.mxu0 0
  %2716 = vmatmul.mubr.bf16.gmra.mrb[0].mxu0 %v2002
  %v2717 = vpop.f32.mrb[0].mxu0
  %v2718 = vadd.f32 0.0, %v2717
  %v2719 = vpop.f32.mrb[0].mxu0
  %v2720 = vpop.f32.mrb[0].mxu0
  %v2721 = vadd.f32 0.0, %v2720
  %v2722 = vpop.f32.mrb[0].mxu0
  %2723 = vmatprep.mubr.bf16.mxu0 0
  %2724 = vmatmul.mubr.bf16.gmra.mrb[0].mxu0 %v2005
  %v2725 = vpop.f32.mrb[0].mxu0
  %v2726 = vadd.f32 0.0, %v2725
  %v2727 = vpop.f32.mrb[0].mxu0
  %v2728 = vpop.f32.mrb[0].mxu0
  %v2729 = vadd.f32 0.0, %v2728
  %v2730 = vpop.f32.mrb[0].mxu0
  %2731 = vmatprep.mubr.bf16.mxu0 0
  %2732 = vmatmul.mubr.bf16.gmra.mrb[0].mxu0 %v2008
  %v2733 = vpop.f32.mrb[0].mxu0
  %v2734 = vadd.f32 0.0, %v2733
  %v2735 = vpop.f32.mrb[0].mxu0
  %v2736 = vpop.f32.mrb[0].mxu0
  %v2737 = vadd.f32 0.0, %v2736
  %v2738 = vpop.f32.mrb[0].mxu0
  %2739 = vmatprep.mubr.bf16.mxu0 0
  %2740 = vmatmul.mubr.bf16.gmra.mrb[0].mxu0 %v2011
  %v2741 = vpop.f32.mrb[0].mxu0
  %v2742 = vadd.f32 0.0, %v2741
  %v2743 = vpop.f32.mrb[0].mxu0
  %v2744 = vpop.f32.mrb[0].mxu0
  %v2745 = vadd.f32 0.0, %v2744
  %v2746 = vpop.f32.mrb[0].mxu0
  %2747 = vmatprep.mubr.bf16.mxu0 0
  %2748 = vmatmul.mubr.bf16.gmra.mrb[0].mxu0 %v2398
  %v2749 = vpop.f32.mrb[0].mxu0
  %v2750 = vadd.f32 0.0, %v2749
  %v2751 = vpop.f32.mrb[0].mxu0
  %v2752 = vpop.f32.mrb[0].mxu0
  %v2753 = vadd.f32 0.0, %v2752
  %v2754 = vpop.f32.mrb[0].mxu0
  %2755 = vmatprep.mubr.bf16.mxu0 0
  %2756 = vmatmul.mubr.bf16.gmra.mrb[0].mxu0 %v1780
  %v2757 = vpop.f32.mrb[0].mxu0
  %v2758 = vadd.f32 0.0, %v2757
  %v2759 = vpop.f32.mrb[0].mxu0
  %v2760 = vpop.f32.mrb[0].mxu0
  %v2761 = vadd.f32 0.0, %v2760
  %v2762 = vpop.f32.mrb[0].mxu0
  %2763 = vdwg.mxu0
  %v2764 = vadd.f32 %v2632, %v2702
  %v2765 = vadd.f32 %v2633, %v2705
  %v2766 = vadd.f32 %v2634, %v2710
  %v2767 = vadd.f32 %v2635, %v2713
  %v2768 = vadd.f32 %v2636, %v2718
  %v2769 = vadd.f32 %v2637, %v2721
  %v2770 = vadd.f32 %v2638, %v2726
  %v2771 = vadd.f32 %v2639, %v2729
  %v2772 = vadd.f32 %v2640, %v2734
  %v2773 = vadd.f32 %v2641, %v2737
  %v2774 = vadd.f32 %v2642, %v2742
  %v2775 = vadd.f32 %v2643, %v2745
  %v2776 = vadd.f32 %v2644, %v2750
  %v2777 = vadd.f32 %v2645, %v2753
  %v2778 = vadd.f32 %v2646, %v2758
  %v2779 = vadd.f32 %v2647, %v2761
  %v2780 = vld [vmem:[%s6] sm:$0x1]
  %v2782 = vlaneseq
  %v2783 = vshrl.u32 %v2782, 7
  %v2784 = vsub.s32 0, %v2783
  %v2785 = vrot.slane %v2780, %v2784
  %v2787 = vadd.f32 %v2764, %v2785
  %v2788 = vadd.f32 %v2765, %v2785
  %v2789 = vadd.f32 %v2766, %v2785
  %v2790 = vadd.f32 %v2767, %v2785
  %v2791 = vadd.f32 %v2768, %v2785
  %v2792 = vadd.f32 %v2769, %v2785
  %v2793 = vadd.f32 %v2770, %v2785
  %v2794 = vadd.f32 %v2771, %v2785
  %v2795 = vadd.f32 %v2772, %v2785
  %v2796 = vadd.f32 %v2773, %v2785
  %v2797 = vadd.f32 %v2774, %v2785
  %v2798 = vadd.f32 %v2775, %v2785
  %v2799 = vadd.f32 %v2776, %v2785
  %v2800 = vadd.f32 %v2777, %v2785
  %v2801 = vadd.f32 %v2778, %v2785
  %v2802 = vadd.f32 %v2779, %v2785
  %v2803 = vmax.f32 %v2787, 0.0
  %v2804 = vmax.f32 %v2788, 0.0
  %v2805 = vmax.f32 %v2789, 0.0
  %v2806 = vmax.f32 %v2790, 0.0
  %v2807 = vmax.f32 %v2791, 0.0
  %v2808 = vmax.f32 %v2792, 0.0
  %v2809 = vmax.f32 %v2793, 0.0
  %v2810 = vmax.f32 %v2794, 0.0
  %v2811 = vmax.f32 %v2795, 0.0
  %v2812 = vmax.f32 %v2796, 0.0
  %v2813 = vmax.f32 %v2797, 0.0
  %v2814 = vmax.f32 %v2798, 0.0
  %v2815 = vmax.f32 %v2799, 0.0
  %v2816 = vmax.f32 %v2800, 0.0
  %v2817 = vmax.f32 %v2801, 0.0
  %v2818 = vmax.f32 %v2802, 0.0
  %v2819 = vpack.c.bf16 %v2804, %v2803
  %v2820 = vpack.c.bf16 %v2806, %v2805
  %v2821 = vpack.c.bf16 %v2808, %v2807
  %v2822 = vpack.c.bf16 %v2810, %v2809
  %v2823 = vpack.c.bf16 %v2812, %v2811
  %v2824 = vpack.c.bf16 %v2814, %v2813
  %v2825 = vpack.c.bf16 %v2816, %v2815
  %v2826 = vpack.c.bf16 %v2818, %v2817
  %v2827 = vld [vmem:[%s7] sm:$0xf]
  %v2828 = vld [vmem:[%s7 + $0x4] sm:$0xf]
  %v2829 = vld [vmem:[%s7 + $0x8] sm:$0xf]
  %v2830 = vld [vmem:[%s7 + $0xc] sm:$0xf]
  %v2831 = vld [vmem:[%s7 + $0x10] sm:$0xf]
  %s2832 = scalar_lea.vmem %s7, 20
  %v2833 = vld [vmem:[%s2832] sm:$0xf]
  %v2834 = vld [vmem:[%s2832 + $0x4] sm:$0xf]
  %v2835 = vld [vmem:[%s2832 + $0x8] sm:$0xf]
  %v2836 = vld [vmem:[%s2832 + $0xc] sm:$0xf]
  %v2837 = vld [vmem:[%s2832 + $0x10] sm:$0xf]
  %v2846 = vrot.slane %v2819, 4
  %v2847 = vsel %vm202, %v203, %v2846
  %v2848 = vrot.slane %v2820, 4
  %v2849 = vsel %vm202, %v2846, %v2848
  %v2850 = vrot.slane %v2821, 4
  %v2851 = vsel %vm202, %v2848, %v2850
  %v2852 = vrot.slane %v2822, 4
  %v2853 = vsel %vm202, %v2850, %v2852
  %v2854 = vrot.slane %v2823, 4
  %v2855 = vsel %vm202, %v2852, %v2854
  %v2856 = vrot.slane %v2824, 4
  %v2857 = vsel %vm202, %v2854, %v2856
  %v2858 = vrot.slane %v2825, 4
  %v2859 = vsel %vm202, %v2856, %v2858
  %v2860 = vrot.slane %v2826, 4
  %v2861 = vsel %vm202, %v2858, %v2860
  %v2867 = vunpack.c.l.b16 %v2833
  %v2868 = vunpack.c.l.b16 %v2834
  %v2869 = vunpack.c.l.b16 %v2835
  %v2870 = vunpack.c.l.b16 %v2836
  %v2871 = vunpack.c.l.b16 %v2837
  %v2872 = vpack.c.b16 %v2868, %v2867
  %v2873 = vpack.c.b16 %v2870, %v2869
  %v2874 = vpack.c.b16 %v2871, %v2871
  %vm2877 = vcmask 326656
  %v2879 = vsel %vm2877, %v2847, 0
  %v2882 = vsel %vm2877, %v2849, 0
  %v2885 = vsel %vm2877, %v2851, 0
  %v2888 = vsel %vm2877, %v2853, 0
  %v2891 = vsel %vm2877, %v2855, 0
  %v2894 = vsel %vm2877, %v2857, 0
  %v2897 = vsel %vm2877, %v2859, 0
  %v2900 = vsel %vm2877, %v2861, 0
  %vm2902 = vcmask 1043456
  %v2904 = vsel %vm2902, %v2874, 0
  %2906 = vmatprep.subr.bf16.mxu0 0
  %2907 = vmatpush1.bf16.msra.mxu0 %v2872
  %2908 = vmatprep.subr.bf16.mxu0 0
  %2909 = vmatpush1.bf16.msra.mxu0 %v2873
  %2910 = vmatprep.subr.bf16.mxu0 0
  %2911 = vmatpush1.bf16.msra.mxu0 %v2904
  %2912 = vmatprep.subr.bf16.mxu0 0
  %2913 = vmatpush1.bf16.msra.mxu0 0
  %2914 = vmatprep.subr.bf16.mxu0 0
  %2915 = vmatpush1.bf16.msra.mxu0 0
  %2916 = vmatprep.subr.bf16.mxu0 0
  %2917 = vmatpush1.bf16.msra.mxu0 0
  %2918 = vmatprep.subr.bf16.mxu0 0
  %2919 = vmatpush1.bf16.msra.mxu0 0
  %2920 = vmatprep.subr.bf16.mxu0 0
  %2921 = vmatpush1.bf16.msra.mxu0 0
  %2922 = vmatprep.subr.bf16.mxu0 0
  %2923 = vmatpush1.bf16.msra.mxu0 0
  %2924 = vmatprep.subr.bf16.mxu0 0
  %2925 = vmatpush1.bf16.msra.mxu0 0
  %2926 = vmatprep.subr.bf16.mxu0 0
  %2927 = vmatpush1.bf16.msra.mxu0 0
  %2928 = vmatprep.subr.bf16.mxu0 0
  %2929 = vmatpush1.bf16.msra.mxu0 0
  %2930 = vmatprep.subr.bf16.mxu0 0
  %2931 = vmatpush1.bf16.msra.mxu0 0
  %2932 = vmatprep.subr.bf16.mxu0 0
  %2933 = vmatpush1.bf16.msra.mxu0 0
  %2934 = vmatprep.subr.bf16.mxu0 0
  %2935 = vmatpush1.bf16.msra.mxu0 0
  %2936 = vmatprep.subr.bf16.mxu0 0
  %2937 = vmatpush1.bf16.msra.mxu0 0
  %2938 = vmatprep.mubr.bf16.mxu0 0
  %2939 = vmatmul.mubr.bf16.gmra.mrb[0].mxu0 %v2879
  %v2940 = vpop.f32.mrb[0].mxu0
  %v2941 = vadd.f32 0.0, %v2940
  %v2942 = vpop.f32.mrb[0].mxu0
  %v2943 = vpop.f32.mrb[0].mxu0
  %v2944 = vadd.f32 0.0, %v2943
  %v2945 = vpop.f32.mrb[0].mxu0
  %2946 = vmatprep.mubr.bf16.mxu0 0
  %2947 = vmatmul.mubr.bf16.gmra.mrb[0].mxu0 %v2882
  %v2948 = vpop.f32.mrb[0].mxu0
  %v2949 = vadd.f32 0.0, %v2948
  %v2950 = vpop.f32.mrb[0].mxu0
  %v2951 = vpop.f32.mrb[0].mxu0
  %v2952 = vadd.f32 0.0, %v2951
  %v2953 = vpop.f32.mrb[0].mxu0
  %2954 = vmatprep.mubr.bf16.mxu0 0
  %2955 = vmatmul.mubr.bf16.gmra.mrb[0].mxu0 %v2885
  %v2956 = vpop.f32.mrb[0].mxu0
  %v2957 = vadd.f32 0.0, %v2956
  %v2958 = vpop.f32.mrb[0].mxu0
  %v2959 = vpop.f32.mrb[0].mxu0
  %v2960 = vadd.f32 0.0, %v2959
  %v2961 = vpop.f32.mrb[0].mxu0
  %2962 = vmatprep.mubr.bf16.mxu0 0
  %2963 = vmatmul.mubr.bf16.gmra.mrb[0].mxu0 %v2888
  %v2964 = vpop.f32.mrb[0].mxu0
  %v2965 = vadd.f32 0.0, %v2964
  %v2966 = vpop.f32.mrb[0].mxu0
  %v2967 = vpop.f32.mrb[0].mxu0
  %v2968 = vadd.f32 0.0, %v2967
  %v2969 = vpop.f32.mrb[0].mxu0
  %2970 = vmatprep.mubr.bf16.mxu0 0
  %2971 = vmatmul.mubr.bf16.gmra.mrb[0].mxu0 %v2891
  %v2972 = vpop.f32.mrb[0].mxu0
  %v2973 = vadd.f32 0.0, %v2972
  %v2974 = vpop.f32.mrb[0].mxu0
  %v2975 = vpop.f32.mrb[0].mxu0
  %v2976 = vadd.f32 0.0, %v2975
  %v2977 = vpop.f32.mrb[0].mxu0
  %2978 = vmatprep.mubr.bf16.mxu0 0
  %2979 = vmatmul.mubr.bf16.gmra.mrb[0].mxu0 %v2894
  %v2980 = vpop.f32.mrb[0].mxu0
  %v2981 = vadd.f32 0.0, %v2980
  %v2982 = vpop.f32.mrb[0].mxu0
  %v2983 = vpop.f32.mrb[0].mxu0
  %v2984 = vadd.f32 0.0, %v2983
  %v2985 = vpop.f32.mrb[0].mxu0
  %2986 = vmatprep.mubr.bf16.mxu0 0
  %2987 = vmatmul.mubr.bf16.gmra.mrb[0].mxu0 %v2897
  %v2988 = vpop.f32.mrb[0].mxu0
  %v2989 = vadd.f32 0.0, %v2988
  %v2990 = vpop.f32.mrb[0].mxu0
  %v2991 = vpop.f32.mrb[0].mxu0
  %v2992 = vadd.f32 0.0, %v2991
  %v2993 = vpop.f32.mrb[0].mxu0
  %2994 = vmatprep.mubr.bf16.mxu0 0
  %2995 = vmatmul.mubr.bf16.gmra.mrb[0].mxu0 %v2900
  %v2996 = vpop.f32.mrb[0].mxu0
  %v2997 = vadd.f32 0.0, %v2996
  %v2998 = vpop.f32.mrb[0].mxu0
  %v2999 = vpop.f32.mrb[0].mxu0
  %v3000 = vadd.f32 0.0, %v2999
  %v3001 = vpop.f32.mrb[0].mxu0
  %3002 = vdwg.mxu0
  %v3008 = vunpack.c.l.b16 %v2827
  %v3009 = vunpack.c.l.b16 %v2828
  %v3010 = vunpack.c.l.b16 %v2829
  %v3011 = vunpack.c.l.b16 %v2830
  %v3012 = vunpack.c.l.b16 %v2831
  %v3013 = vpack.c.b16 %v3009, %v3008
  %v3014 = vpack.c.b16 %v3011, %v3010
  %v3015 = vpack.c.b16 %v3012, %v3012
  %v3018 = vsel %vm2877, %v67, 0
  %v3021 = vsel %vm2877, %v2819, 0
  %v3024 = vsel %vm2877, %v2820, 0
  %v3027 = vsel %vm2877, %v2821, 0
  %v3030 = vsel %vm2877, %v2822, 0
  %v3033 = vsel %vm2877, %v2823, 0
  %v3036 = vsel %vm2877, %v2824, 0
  %v3039 = vsel %vm2877, %v2825, 0
  %v3042 = vsel %vm2902, %v3015, 0
  %3044 = vmatprep.subr.bf16.mxu0 0
  %3045 = vmatpush1.bf16.msra.mxu0 %v3013
  %3046 = vmatprep.subr.bf16.mxu0 0
  %3047 = vmatpush1.bf16.msra.mxu0 %v3014
  %3048 = vmatprep.subr.bf16.mxu0 0
  %3049 = vmatpush1.bf16.msra.mxu0 %v3042
  %3050 = vmatprep.subr.bf16.mxu0 0
  %3051 = vmatpush1.bf16.msra.mxu0 0
  %3052 = vmatprep.subr.bf16.mxu0 0
  %3053 = vmatpush1.bf16.msra.mxu0 0
  %3054 = vmatprep.subr.bf16.mxu0 0
  %3055 = vmatpush1.bf16.msra.mxu0 0
  %3056 = vmatprep.subr.bf16.mxu0 0
  %3057 = vmatpush1.bf16.msra.mxu0 0
  %3058 = vmatprep.subr.bf16.mxu0 0
  %3059 = vmatpush1.bf16.msra.mxu0 0
  %3060 = vmatprep.subr.bf16.mxu0 0
  %3061 = vmatpush1.bf16.msra.mxu0 0
  %3062 = vmatprep.subr.bf16.mxu0 0
  %3063 = vmatpush1.bf16.msra.mxu0 0
  %3064 = vmatprep.subr.bf16.mxu0 0
  %3065 = vmatpush1.bf16.msra.mxu0 0
  %3066 = vmatprep.subr.bf16.mxu0 0
  %3067 = vmatpush1.bf16.msra.mxu0 0
  %3068 = vmatprep.subr.bf16.mxu0 0
  %3069 = vmatpush1.bf16.msra.mxu0 0
  %3070 = vmatprep.subr.bf16.mxu0 0
  %3071 = vmatpush1.bf16.msra.mxu0 0
  %3072 = vmatprep.subr.bf16.mxu0 0
  %3073 = vmatpush1.bf16.msra.mxu0 0
  %3074 = vmatprep.subr.bf16.mxu0 0
  %3075 = vmatpush1.bf16.msra.mxu0 0
  %3076 = vmatprep.mubr.bf16.mxu0 0
  %3077 = vmatmul.mubr.bf16.gmra.mrb[0].mxu0 %v3018
  %v3078 = vpop.f32.mrb[0].mxu0
  %v3079 = vadd.f32 %v2941, %v3078
  %v3080 = vpop.f32.mrb[0].mxu0
  %v3081 = vpop.f32.mrb[0].mxu0
  %v3082 = vadd.f32 %v2944, %v3081
  %v3083 = vpop.f32.mrb[0].mxu0
  %3084 = vmatprep.mubr.bf16.mxu0 0
  %3085 = vmatmul.mubr.bf16.gmra.mrb[0].mxu0 %v3021
  %v3086 = vpop.f32.mrb[0].mxu0
  %v3087 = vadd.f32 %v2949, %v3086
  %v3088 = vpop.f32.mrb[0].mxu0
  %v3089 = vpop.f32.mrb[0].mxu0
  %v3090 = vadd.f32 %v2952, %v3089
  %v3091 = vpop.f32.mrb[0].mxu0
  %3092 = vmatprep.mubr.bf16.mxu0 0
  %3093 = vmatmul.mubr.bf16.gmra.mrb[0].mxu0 %v3024
  %v3094 = vpop.f32.mrb[0].mxu0
  %v3095 = vadd.f32 %v2957, %v3094
  %v3096 = vpop.f32.mrb[0].mxu0
  %v3097 = vpop.f32.mrb[0].mxu0
  %v3098 = vadd.f32 %v2960, %v3097
  %v3099 = vpop.f32.mrb[0].mxu0
  %3100 = vmatprep.mubr.bf16.mxu0 0
  %3101 = vmatmul.mubr.bf16.gmra.mrb[0].mxu0 %v3027
  %v3102 = vpop.f32.mrb[0].mxu0
  %v3103 = vadd.f32 %v2965, %v3102
  %v3104 = vpop.f32.mrb[0].mxu0
  %v3105 = vpop.f32.mrb[0].mxu0
  %v3106 = vadd.f32 %v2968, %v3105
  %v3107 = vpop.f32.mrb[0].mxu0
  %3108 = vmatprep.mubr.bf16.mxu0 0
  %3109 = vmatmul.mubr.bf16.gmra.mrb[0].mxu0 %v3030
  %v3110 = vpop.f32.mrb[0].mxu0
  %v3111 = vadd.f32 %v2973, %v3110
  %v3112 = vpop.f32.mrb[0].mxu0
  %v3113 = vpop.f32.mrb[0].mxu0
  %v3114 = vadd.f32 %v2976, %v3113
  %v3115 = vpop.f32.mrb[0].mxu0
  %3116 = vmatprep.mubr.bf16.mxu0 0
  %3117 = vmatmul.mubr.bf16.gmra.mrb[0].mxu0 %v3033
  %v3118 = vpop.f32.mrb[0].mxu0
  %v3119 = vadd.f32 %v2981, %v3118
  %v3120 = vpop.f32.mrb[0].mxu0
  %v3121 = vpop.f32.mrb[0].mxu0
  %v3122 = vadd.f32 %v2984, %v3121
  %v3123 = vpop.f32.mrb[0].mxu0
  %3124 = vmatprep.mubr.bf16.mxu0 0
  %3125 = vmatmul.mubr.bf16.gmra.mrb[0].mxu0 %v3036
  %v3126 = vpop.f32.mrb[0].mxu0
  %v3127 = vadd.f32 %v2989, %v3126
  %v3128 = vpop.f32.mrb[0].mxu0
  %v3129 = vpop.f32.mrb[0].mxu0
  %v3130 = vadd.f32 %v2992, %v3129
  %v3131 = vpop.f32.mrb[0].mxu0
  %3132 = vmatprep.mubr.bf16.mxu0 0
  %3133 = vmatmul.mubr.bf16.gmra.mrb[0].mxu0 %v3039
  %v3134 = vpop.f32.mrb[0].mxu0
  %v3135 = vadd.f32 %v2997, %v3134
  %v3136 = vpop.f32.mrb[0].mxu0
  %v3137 = vpop.f32.mrb[0].mxu0
  %v3138 = vadd.f32 %v3000, %v3137
  %v3139 = vpop.f32.mrb[0].mxu0
  %3140 = vdwg.mxu0
  %s3141 = scalar_lea.vmem %s7, 40
  %v3142 = vld [vmem:[%s3141] sm:$0xf]
  %v3143 = vld [vmem:[%s3141 + $0x4] sm:$0xf]
  %v3144 = vld [vmem:[%s3141 + $0x8] sm:$0xf]
  %v3145 = vld [vmem:[%s3141 + $0xc] sm:$0xf]
  %v3146 = vld [vmem:[%s3141 + $0x10] sm:$0xf]
  %v3152 = vunpack.c.l.b16 %v3142
  %v3153 = vunpack.c.l.b16 %v3143
  %v3154 = vunpack.c.l.b16 %v3144
  %v3155 = vunpack.c.l.b16 %v3145
  %v3156 = vunpack.c.l.b16 %v3146
  %v3157 = vpack.c.b16 %v3153, %v3152
  %v3158 = vpack.c.b16 %v3155, %v3154
  %v3159 = vpack.c.b16 %v3156, %v3156
  %v3163 = vsel %vm2877, %v2826, 0
  %v3166 = vsel %vm2902, %v3159, 0
  %3168 = vmatprep.subr.bf16.mxu0 0
  %3169 = vmatpush1.bf16.msra.mxu0 %v3157
  %3170 = vmatprep.subr.bf16.mxu0 0
  %3171 = vmatpush1.bf16.msra.mxu0 %v3158
  %3172 = vmatprep.subr.bf16.mxu0 0
  %3173 = vmatpush1.bf16.msra.mxu0 %v3166
  %3174 = vmatprep.subr.bf16.mxu0 0
  %3175 = vmatpush1.bf16.msra.mxu0 0
  %3176 = vmatprep.subr.bf16.mxu0 0
  %3177 = vmatpush1.bf16.msra.mxu0 0
  %3178 = vmatprep.subr.bf16.mxu0 0
  %3179 = vmatpush1.bf16.msra.mxu0 0
  %3180 = vmatprep.subr.bf16.mxu0 0
  %3181 = vmatpush1.bf16.msra.mxu0 0
  %3182 = vmatprep.subr.bf16.mxu0 0
  %3183 = vmatpush1.bf16.msra.mxu0 0
  %3184 = vmatprep.subr.bf16.mxu0 0
  %3185 = vmatpush1.bf16.msra.mxu0 0
  %3186 = vmatprep.subr.bf16.mxu0 0
  %3187 = vmatpush1.bf16.msra.mxu0 0
  %3188 = vmatprep.subr.bf16.mxu0 0
  %3189 = vmatpush1.bf16.msra.mxu0 0
  %3190 = vmatprep.subr.bf16.mxu0 0
  %3191 = vmatpush1.bf16.msra.mxu0 0
  %3192 = vmatprep.subr.bf16.mxu0 0
  %3193 = vmatpush1.bf16.msra.mxu0 0
  %3194 = vmatprep.subr.bf16.mxu0 0
  %3195 = vmatpush1.bf16.msra.mxu0 0
  %3196 = vmatprep.subr.bf16.mxu0 0
  %3197 = vmatpush1.bf16.msra.mxu0 0
  %3198 = vmatprep.subr.bf16.mxu0 0
  %3199 = vmatpush1.bf16.msra.mxu0 0
  %3200 = vmatprep.mubr.bf16.mxu0 0
  %3201 = vmatmul.mubr.bf16.gmra.mrb[0].mxu0 %v3021
  %v3202 = vpop.f32.mrb[0].mxu0
  %v3203 = vadd.f32 0.0, %v3202
  %v3204 = vpop.f32.mrb[0].mxu0
  %v3205 = vpop.f32.mrb[0].mxu0
  %v3206 = vadd.f32 0.0, %v3205
  %v3207 = vpop.f32.mrb[0].mxu0
  %3208 = vmatprep.mubr.bf16.mxu0 0
  %3209 = vmatmul.mubr.bf16.gmra.mrb[0].mxu0 %v3024
  %v3210 = vpop.f32.mrb[0].mxu0
  %v3211 = vadd.f32 0.0, %v3210
  %v3212 = vpop.f32.mrb[0].mxu0
  %v3213 = vpop.f32.mrb[0].mxu0
  %v3214 = vadd.f32 0.0, %v3213
  %v3215 = vpop.f32.mrb[0].mxu0
  %3216 = vmatprep.mubr.bf16.mxu0 0
  %3217 = vmatmul.mubr.bf16.gmra.mrb[0].mxu0 %v3027
  %v3218 = vpop.f32.mrb[0].mxu0
  %v3219 = vadd.f32 0.0, %v3218
  %v3220 = vpop.f32.mrb[0].mxu0
  %v3221 = vpop.f32.mrb[0].mxu0
  %v3222 = vadd.f32 0.0, %v3221
  %v3223 = vpop.f32.mrb[0].mxu0
  %3224 = vmatprep.mubr.bf16.mxu0 0
  %3225 = vmatmul.mubr.bf16.gmra.mrb[0].mxu0 %v3030
  %v3226 = vpop.f32.mrb[0].mxu0
  %v3227 = vadd.f32 0.0, %v3226
  %v3228 = vpop.f32.mrb[0].mxu0
  %v3229 = vpop.f32.mrb[0].mxu0
  %v3230 = vadd.f32 0.0, %v3229
  %v3231 = vpop.f32.mrb[0].mxu0
  %3232 = vmatprep.mubr.bf16.mxu0 0
  %3233 = vmatmul.mubr.bf16.gmra.mrb[0].mxu0 %v3033
  %v3234 = vpop.f32.mrb[0].mxu0
  %v3235 = vadd.f32 0.0, %v3234
  %v3236 = vpop.f32.mrb[0].mxu0
  %v3237 = vpop.f32.mrb[0].mxu0
  %v3238 = vadd.f32 0.0, %v3237
  %v3239 = vpop.f32.mrb[0].mxu0
  %3240 = vmatprep.mubr.bf16.mxu0 0
  %3241 = vmatmul.mubr.bf16.gmra.mrb[0].mxu0 %v3036
  %v3242 = vpop.f32.mrb[0].mxu0
  %v3243 = vadd.f32 0.0, %v3242
  %v3244 = vpop.f32.mrb[0].mxu0
  %v3245 = vpop.f32.mrb[0].mxu0
  %v3246 = vadd.f32 0.0, %v3245
  %v3247 = vpop.f32.mrb[0].mxu0
  %3248 = vmatprep.mubr.bf16.mxu0 0
  %3249 = vmatmul.mubr.bf16.gmra.mrb[0].mxu0 %v3039
  %v3250 = vpop.f32.mrb[0].mxu0
  %v3251 = vadd.f32 0.0, %v3250
  %v3252 = vpop.f32.mrb[0].mxu0
  %v3253 = vpop.f32.mrb[0].mxu0
  %v3254 = vadd.f32 0.0, %v3253
  %v3255 = vpop.f32.mrb[0].mxu0
  %3256 = vmatprep.mubr.bf16.mxu0 0
  %3257 = vmatmul.mubr.bf16.gmra.mrb[0].mxu0 %v3163
  %v3258 = vpop.f32.mrb[0].mxu0
  %v3259 = vadd.f32 0.0, %v3258
  %v3260 = vpop.f32.mrb[0].mxu0
  %v3261 = vpop.f32.mrb[0].mxu0
  %v3262 = vadd.f32 0.0, %v3261
  %v3263 = vpop.f32.mrb[0].mxu0
  %3264 = vdwg.mxu0
  %v3265 = vadd.f32 %v3079, %v3203
  %v3266 = vadd.f32 %v3082, %v3206
  %v3267 = vadd.f32 %v3087, %v3211
  %v3268 = vadd.f32 %v3090, %v3214
  %v3269 = vadd.f32 %v3095, %v3219
  %v3270 = vadd.f32 %v3098, %v3222
  %v3271 = vadd.f32 %v3103, %v3227
  %v3272 = vadd.f32 %v3106, %v3230
  %v3273 = vadd.f32 %v3111, %v3235
  %v3274 = vadd.f32 %v3114, %v3238
  %v3275 = vadd.f32 %v3119, %v3243
  %v3276 = vadd.f32 %v3122, %v3246
  %v3277 = vadd.f32 %v3127, %v3251
  %v3278 = vadd.f32 %v3130, %v3254
  %v3279 = vadd.f32 %v3135, %v3259
  %v3280 = vadd.f32 %v3138, %v3262
  %s3281 = scalar_lea.vmem %s7, 60
  %v3282 = vld [vmem:[%s3281] sm:$0xf]
  %v3283 = vld [vmem:[%s3281 + $0x4] sm:$0xf]
  %v3284 = vld [vmem:[%s3281 + $0x8] sm:$0xf]
  %v3285 = vld [vmem:[%s3281 + $0xc] sm:$0xf]
  %v3286 = vld [vmem:[%s3281 + $0x10] sm:$0xf]
  %v3287 = vsel %vm202, %v2860, %v203
  %v3293 = vunpack.c.l.b16 %v3282
  %v3294 = vunpack.c.l.b16 %v3283
  %v3295 = vunpack.c.l.b16 %v3284
  %v3296 = vunpack.c.l.b16 %v3285
  %v3297 = vunpack.c.l.b16 %v3286
  %v3298 = vpack.c.b16 %v3294, %v3293
  %v3299 = vpack.c.b16 %v3296, %v3295
  %v3300 = vpack.c.b16 %v3297, %v3297
  %v3304 = vsel %vm2877, %v3287, 0
  %v3307 = vsel %vm2902, %v3300, 0
  %3309 = vmatprep.subr.bf16.mxu0 0
  %3310 = vmatpush1.bf16.msra.mxu0 %v3298
  %3311 = vmatprep.subr.bf16.mxu0 0
  %3312 = vmatpush1.bf16.msra.mxu0 %v3299
  %3313 = vmatprep.subr.bf16.mxu0 0
  %3314 = vmatpush1.bf16.msra.mxu0 %v3307
  %3315 = vmatprep.subr.bf16.mxu0 0
  %3316 = vmatpush1.bf16.msra.mxu0 0
  %3317 = vmatprep.subr.bf16.mxu0 0
  %3318 = vmatpush1.bf16.msra.mxu0 0
  %3319 = vmatprep.subr.bf16.mxu0 0
  %3320 = vmatpush1.bf16.msra.mxu0 0
  %3321 = vmatprep.subr.bf16.mxu0 0
  %3322 = vmatpush1.bf16.msra.mxu0 0
  %3323 = vmatprep.subr.bf16.mxu0 0
  %3324 = vmatpush1.bf16.msra.mxu0 0
  %3325 = vmatprep.subr.bf16.mxu0 0
  %3326 = vmatpush1.bf16.msra.mxu0 0
  %3327 = vmatprep.subr.bf16.mxu0 0
  %3328 = vmatpush1.bf16.msra.mxu0 0
  %3329 = vmatprep.subr.bf16.mxu0 0
  %3330 = vmatpush1.bf16.msra.mxu0 0
  %3331 = vmatprep.subr.bf16.mxu0 0
  %3332 = vmatpush1.bf16.msra.mxu0 0
  %3333 = vmatprep.subr.bf16.mxu0 0
  %3334 = vmatpush1.bf16.msra.mxu0 0
  %3335 = vmatprep.subr.bf16.mxu0 0
  %3336 = vmatpush1.bf16.msra.mxu0 0
  %3337 = vmatprep.subr.bf16.mxu0 0
  %3338 = vmatpush1.bf16.msra.mxu0 0
  %3339 = vmatprep.subr.bf16.mxu0 0
  %3340 = vmatpush1.bf16.msra.mxu0 0
  %3341 = vmatprep.mubr.bf16.mxu0 0
  %3342 = vmatmul.mubr.bf16.gmra.mrb[0].mxu0 %v2882
  %v3343 = vpop.f32.mrb[0].mxu0
  %v3344 = vadd.f32 0.0, %v3343
  %v3345 = vpop.f32.mrb[0].mxu0
  %v3346 = vpop.f32.mrb[0].mxu0
  %v3347 = vadd.f32 0.0, %v3346
  %v3348 = vpop.f32.mrb[0].mxu0
  %3349 = vmatprep.mubr.bf16.mxu0 0
  %3350 = vmatmul.mubr.bf16.gmra.mrb[0].mxu0 %v2885
  %v3351 = vpop.f32.mrb[0].mxu0
  %v3352 = vadd.f32 0.0, %v3351
  %v3353 = vpop.f32.mrb[0].mxu0
  %v3354 = vpop.f32.mrb[0].mxu0
  %v3355 = vadd.f32 0.0, %v3354
  %v3356 = vpop.f32.mrb[0].mxu0
  %3357 = vmatprep.mubr.bf16.mxu0 0
  %3358 = vmatmul.mubr.bf16.gmra.mrb[0].mxu0 %v2888
  %v3359 = vpop.f32.mrb[0].mxu0
  %v3360 = vadd.f32 0.0, %v3359
  %v3361 = vpop.f32.mrb[0].mxu0
  %v3362 = vpop.f32.mrb[0].mxu0
  %v3363 = vadd.f32 0.0, %v3362
  %v3364 = vpop.f32.mrb[0].mxu0
  %3365 = vmatprep.mubr.bf16.mxu0 0
  %3366 = vmatmul.mubr.bf16.gmra.mrb[0].mxu0 %v2891
  %v3367 = vpop.f32.mrb[0].mxu0
  %v3368 = vadd.f32 0.0, %v3367
  %v3369 = vpop.f32.mrb[0].mxu0
  %v3370 = vpop.f32.mrb[0].mxu0
  %v3371 = vadd.f32 0.0, %v3370
  %v3372 = vpop.f32.mrb[0].mxu0
  %3373 = vmatprep.mubr.bf16.mxu0 0
  %3374 = vmatmul.mubr.bf16.gmra.mrb[0].mxu0 %v2894
  %v3375 = vpop.f32.mrb[0].mxu0
  %v3376 = vadd.f32 0.0, %v3375
  %v3377 = vpop.f32.mrb[0].mxu0
  %v3378 = vpop.f32.mrb[0].mxu0
  %v3379 = vadd.f32 0.0, %v3378
  %v3380 = vpop.f32.mrb[0].mxu0
  %3381 = vmatprep.mubr.bf16.mxu0 0
  %3382 = vmatmul.mubr.bf16.gmra.mrb[0].mxu0 %v2897
  %v3383 = vpop.f32.mrb[0].mxu0
  %v3384 = vadd.f32 0.0, %v3383
  %v3385 = vpop.f32.mrb[0].mxu0
  %v3386 = vpop.f32.mrb[0].mxu0
  %v3387 = vadd.f32 0.0, %v3386
  %v3388 = vpop.f32.mrb[0].mxu0
  %3389 = vmatprep.mubr.bf16.mxu0 0
  %3390 = vmatmul.mubr.bf16.gmra.mrb[0].mxu0 %v2900
  %v3391 = vpop.f32.mrb[0].mxu0
  %v3392 = vadd.f32 0.0, %v3391
  %v3393 = vpop.f32.mrb[0].mxu0
  %v3394 = vpop.f32.mrb[0].mxu0
  %v3395 = vadd.f32 0.0, %v3394
  %v3396 = vpop.f32.mrb[0].mxu0
  %3397 = vmatprep.mubr.bf16.mxu0 0
  %3398 = vmatmul.mubr.bf16.gmra.mrb[0].mxu0 %v3304
  %v3399 = vpop.f32.mrb[0].mxu0
  %v3400 = vadd.f32 0.0, %v3399
  %v3401 = vpop.f32.mrb[0].mxu0
  %v3402 = vpop.f32.mrb[0].mxu0
  %v3403 = vadd.f32 0.0, %v3402
  %v3404 = vpop.f32.mrb[0].mxu0
  %3405 = vdwg.mxu0
  %v3406 = vadd.f32 %v3265, %v3344
  %v3407 = vadd.f32 %v3266, %v3347
  %v3408 = vadd.f32 %v3267, %v3352
  %v3409 = vadd.f32 %v3268, %v3355
  %v3410 = vadd.f32 %v3269, %v3360
  %v3411 = vadd.f32 %v3270, %v3363
  %v3412 = vadd.f32 %v3271, %v3368
  %v3413 = vadd.f32 %v3272, %v3371
  %v3414 = vadd.f32 %v3273, %v3376
  %v3415 = vadd.f32 %v3274, %v3379
  %v3416 = vadd.f32 %v3275, %v3384
  %v3417 = vadd.f32 %v3276, %v3387
  %v3418 = vadd.f32 %v3277, %v3392
  %v3419 = vadd.f32 %v3278, %v3395
  %v3420 = vadd.f32 %v3279, %v3400
  %v3421 = vadd.f32 %v3280, %v3403
  %s3422 = scalar_lea.vmem %s7, 80
  %v3423 = vld [vmem:[%s3422] sm:$0xf]
  %v3424 = vld [vmem:[%s3422 + $0x4] sm:$0xf]
  %v3425 = vld [vmem:[%s3422 + $0x8] sm:$0xf]
  %v3426 = vld [vmem:[%s3422 + $0xc] sm:$0xf]
  %v3427 = vld [vmem:[%s3422 + $0x10] sm:$0xf]
  %v3433 = vunpack.c.l.b16 %v3423
  %v3434 = vunpack.c.l.b16 %v3424
  %v3435 = vunpack.c.l.b16 %v3425
  %v3436 = vunpack.c.l.b16 %v3426
  %v3437 = vunpack.c.l.b16 %v3427
  %v3438 = vpack.c.b16 %v3434, %v3433
  %v3439 = vpack.c.b16 %v3436, %v3435
  %v3440 = vpack.c.b16 %v3437, %v3437
  %v3444 = vsel %vm2902, %v3440, 0
  %3446 = vmatprep.subr.bf16.mxu0 0
  %3447 = vmatpush1.bf16.msra.mxu0 %v3438
  %3448 = vmatprep.subr.bf16.mxu0 0
  %3449 = vmatpush1.bf16.msra.mxu0 %v3439
  %3450 = vmatprep.subr.bf16.mxu0 0
  %3451 = vmatpush1.bf16.msra.mxu0 %v3444
  %3452 = vmatprep.subr.bf16.mxu0 0
  %3453 = vmatpush1.bf16.msra.mxu0 0
  %3454 = vmatprep.subr.bf16.mxu0 0
  %3455 = vmatpush1.bf16.msra.mxu0 0
  %3456 = vmatprep.subr.bf16.mxu0 0
  %3457 = vmatpush1.bf16.msra.mxu0 0
  %3458 = vmatprep.subr.bf16.mxu0 0
  %3459 = vmatpush1.bf16.msra.mxu0 0
  %3460 = vmatprep.subr.bf16.mxu0 0
  %3461 = vmatpush1.bf16.msra.mxu0 0
  %3462 = vmatprep.subr.bf16.mxu0 0
  %3463 = vmatpush1.bf16.msra.mxu0 0
  %3464 = vmatprep.subr.bf16.mxu0 0
  %3465 = vmatpush1.bf16.msra.mxu0 0
  %3466 = vmatprep.subr.bf16.mxu0 0
  %3467 = vmatpush1.bf16.msra.mxu0 0
  %3468 = vmatprep.subr.bf16.mxu0 0
  %3469 = vmatpush1.bf16.msra.mxu0 0
  %3470 = vmatprep.subr.bf16.mxu0 0
  %3471 = vmatpush1.bf16.msra.mxu0 0
  %3472 = vmatprep.subr.bf16.mxu0 0
  %3473 = vmatpush1.bf16.msra.mxu0 0
  %3474 = vmatprep.subr.bf16.mxu0 0
  %3475 = vmatpush1.bf16.msra.mxu0 0
  %3476 = vmatprep.subr.bf16.mxu0 0
  %3477 = vmatpush1.bf16.msra.mxu0 0
  %3478 = vmatprep.mubr.bf16.mxu0 0
  %3479 = vmatmul.mubr.bf16.gmra.mrb[0].mxu0 %v3024
  %v3480 = vpop.f32.mrb[0].mxu0
  %v3481 = vadd.f32 0.0, %v3480
  %v3482 = vpop.f32.mrb[0].mxu0
  %v3483 = vpop.f32.mrb[0].mxu0
  %v3484 = vadd.f32 0.0, %v3483
  %v3485 = vpop.f32.mrb[0].mxu0
  %3486 = vmatprep.mubr.bf16.mxu0 0
  %3487 = vmatmul.mubr.bf16.gmra.mrb[0].mxu0 %v3027
  %v3488 = vpop.f32.mrb[0].mxu0
  %v3489 = vadd.f32 0.0, %v3488
  %v3490 = vpop.f32.mrb[0].mxu0
  %v3491 = vpop.f32.mrb[0].mxu0
  %v3492 = vadd.f32 0.0, %v3491
  %v3493 = vpop.f32.mrb[0].mxu0
  %3494 = vmatprep.mubr.bf16.mxu0 0
  %3495 = vmatmul.mubr.bf16.gmra.mrb[0].mxu0 %v3030
  %v3496 = vpop.f32.mrb[0].mxu0
  %v3497 = vadd.f32 0.0, %v3496
  %v3498 = vpop.f32.mrb[0].mxu0
  %v3499 = vpop.f32.mrb[0].mxu0
  %v3500 = vadd.f32 0.0, %v3499
  %v3501 = vpop.f32.mrb[0].mxu0
  %3502 = vmatprep.mubr.bf16.mxu0 0
  %3503 = vmatmul.mubr.bf16.gmra.mrb[0].mxu0 %v3033
  %v3504 = vpop.f32.mrb[0].mxu0
  %v3505 = vadd.f32 0.0, %v3504
  %v3506 = vpop.f32.mrb[0].mxu0
  %v3507 = vpop.f32.mrb[0].mxu0
  %v3508 = vadd.f32 0.0, %v3507
  %v3509 = vpop.f32.mrb[0].mxu0
  %3510 = vmatprep.mubr.bf16.mxu0 0
  %3511 = vmatmul.mubr.bf16.gmra.mrb[0].mxu0 %v3036
  %v3512 = vpop.f32.mrb[0].mxu0
  %v3513 = vadd.f32 0.0, %v3512
  %v3514 = vpop.f32.mrb[0].mxu0
  %v3515 = vpop.f32.mrb[0].mxu0
  %v3516 = vadd.f32 0.0, %v3515
  %v3517 = vpop.f32.mrb[0].mxu0
  %3518 = vmatprep.mubr.bf16.mxu0 0
  %3519 = vmatmul.mubr.bf16.gmra.mrb[0].mxu0 %v3039
  %v3520 = vpop.f32.mrb[0].mxu0
  %v3521 = vadd.f32 0.0, %v3520
  %v3522 = vpop.f32.mrb[0].mxu0
  %v3523 = vpop.f32.mrb[0].mxu0
  %v3524 = vadd.f32 0.0, %v3523
  %v3525 = vpop.f32.mrb[0].mxu0
  %3526 = vmatprep.mubr.bf16.mxu0 0
  %3527 = vmatmul.mubr.bf16.gmra.mrb[0].mxu0 %v3163
  %v3528 = vpop.f32.mrb[0].mxu0
  %v3529 = vadd.f32 0.0, %v3528
  %v3530 = vpop.f32.mrb[0].mxu0
  %v3531 = vpop.f32.mrb[0].mxu0
  %v3532 = vadd.f32 0.0, %v3531
  %v3533 = vpop.f32.mrb[0].mxu0
  %3534 = vmatprep.mubr.bf16.mxu0 0
  %3535 = vmatmul.mubr.bf16.gmra.mrb[0].mxu0 %v3018
  %v3536 = vpop.f32.mrb[0].mxu0
  %v3537 = vadd.f32 0.0, %v3536
  %v3538 = vpop.f32.mrb[0].mxu0
  %v3539 = vpop.f32.mrb[0].mxu0
  %v3540 = vadd.f32 0.0, %v3539
  %v3541 = vpop.f32.mrb[0].mxu0
  %3542 = vdwg.mxu0
  %v3543 = vadd.f32 %v3406, %v3481
  %v3544 = vadd.f32 %v3407, %v3484
  %v3545 = vadd.f32 %v3408, %v3489
  %v3546 = vadd.f32 %v3409, %v3492
  %v3547 = vadd.f32 %v3410, %v3497
  %v3548 = vadd.f32 %v3411, %v3500
  %v3549 = vadd.f32 %v3412, %v3505
  %v3550 = vadd.f32 %v3413, %v3508
  %v3551 = vadd.f32 %v3414, %v3513
  %v3552 = vadd.f32 %v3415, %v3516
  %v3553 = vadd.f32 %v3416, %v3521
  %v3554 = vadd.f32 %v3417, %v3524
  %v3555 = vadd.f32 %v3418, %v3529
  %v3556 = vadd.f32 %v3419, %v3532
  %v3557 = vadd.f32 %v3420, %v3537
  %v3558 = vadd.f32 %v3421, %v3540
  %v3559 = vld [vmem:[%s8] sm:$0x1]
  %v3561 = vlaneseq
  %v3562 = vshrl.u32 %v3561, 7
  %v3563 = vsub.s32 0, %v3562
  %v3564 = vrot.slane %v3559, %v3563
  %v3566 = vadd.f32 %v3543, %v3564
  %v3567 = vadd.f32 %v3544, %v3564
  %v3568 = vadd.f32 %v3545, %v3564
  %v3569 = vadd.f32 %v3546, %v3564
  %v3570 = vadd.f32 %v3547, %v3564
  %v3571 = vadd.f32 %v3548, %v3564
  %v3572 = vadd.f32 %v3549, %v3564
  %v3573 = vadd.f32 %v3550, %v3564
  %v3574 = vadd.f32 %v3551, %v3564
  %v3575 = vadd.f32 %v3552, %v3564
  %v3576 = vadd.f32 %v3553, %v3564
  %v3577 = vadd.f32 %v3554, %v3564
  %v3578 = vadd.f32 %v3555, %v3564
  %v3579 = vadd.f32 %v3556, %v3564
  %v3580 = vadd.f32 %v3557, %v3564
  %v3581 = vadd.f32 %v3558, %v3564
  %v3582 = vmax.f32 %v3566, 0.0
  %v3583 = vmax.f32 %v3567, 0.0
  %v3584 = vmax.f32 %v3568, 0.0
  %v3585 = vmax.f32 %v3569, 0.0
  %v3586 = vmax.f32 %v3570, 0.0
  %v3587 = vmax.f32 %v3571, 0.0
  %v3588 = vmax.f32 %v3572, 0.0
  %v3589 = vmax.f32 %v3573, 0.0
  %v3590 = vmax.f32 %v3574, 0.0
  %v3591 = vmax.f32 %v3575, 0.0
  %v3592 = vmax.f32 %v3576, 0.0
  %v3593 = vmax.f32 %v3577, 0.0
  %v3594 = vmax.f32 %v3578, 0.0
  %v3595 = vmax.f32 %v3579, 0.0
  %v3596 = vmax.f32 %v3580, 0.0
  %v3597 = vmax.f32 %v3581, 0.0
  %v3598 = vpack.c.bf16 %v3583, %v3582
  %v3599 = vpack.c.bf16 %v3585, %v3584
  %v3600 = vpack.c.bf16 %v3587, %v3586
  %v3601 = vpack.c.bf16 %v3589, %v3588
  %v3602 = vpack.c.bf16 %v3591, %v3590
  %v3603 = vpack.c.bf16 %v3593, %v3592
  %v3604 = vpack.c.bf16 %v3595, %v3594
  %v3605 = vpack.c.bf16 %v3597, %v3596
  %v3606 = vld [vmem:[%s9] sm:$0xf]
  %v3607 = vld [vmem:[%s9 + $0x4] sm:$0xf]
  %v3608 = vld [vmem:[%s9 + $0x8] sm:$0xf]
  %v3609 = vld [vmem:[%s9 + $0xc] sm:$0xf]
  %v3610 = vld [vmem:[%s9 + $0x10] sm:$0xf]
  %v3611 = vld [vmem:[%s9 + $0x14] sm:$0xf]
  %v3612 = vld [vmem:[%s9 + $0x18] sm:$0x1]
  %s3613 = scalar_lea.vmem %s9, 28
  %v3614 = vld [vmem:[%s3613] sm:$0xf]
  %v3615 = vld [vmem:[%s3613 + $0x4] sm:$0xf]
  %v3616 = vld [vmem:[%s3613 + $0x8] sm:$0xf]
  %v3617 = vld [vmem:[%s3613 + $0xc] sm:$0xf]
  %v3618 = vld [vmem:[%s3613 + $0x10] sm:$0xf]
  %v3619 = vld [vmem:[%s3613 + $0x14] sm:$0xf]
  %v3620 = vld [vmem:[%s3613 + $0x18] sm:$0x1]
  %v3629 = vrot.slane %v3598, 4
  %v3630 = vsel %vm202, %v203, %v3629
  %v3631 = vrot.slane %v3599, 4
  %v3632 = vsel %vm202, %v3629, %v3631
  %v3633 = vrot.slane %v3600, 4
  %v3634 = vsel %vm202, %v3631, %v3633
  %v3635 = vrot.slane %v3601, 4
  %v3636 = vsel %vm202, %v3633, %v3635
  %v3637 = vrot.slane %v3602, 4
  %v3638 = vsel %vm202, %v3635, %v3637
  %v3639 = vrot.slane %v3603, 4
  %v3640 = vsel %vm202, %v3637, %v3639
  %v3641 = vrot.slane %v3604, 4
  %v3642 = vsel %vm202, %v3639, %v3641
  %v3643 = vrot.slane %v3605, 4
  %v3644 = vsel %vm202, %v3641, %v3643
  %v3652 = vunpack.c.l.b16 %v3614
  %v3653 = vunpack.c.l.b16 %v3615
  %v3654 = vunpack.c.l.b16 %v3616
  %v3655 = vunpack.c.l.b16 %v3617
  %v3656 = vunpack.c.l.b16 %v3618
  %v3657 = vunpack.c.l.b16 %v3619
  %v3658 = vunpack.c.l.b16 %v3620
  %v3659 = vpack.c.b16 %v3653, %v3652
  %v3660 = vpack.c.b16 %v3655, %v3654
  %v3661 = vpack.c.b16 %v3657, %v3656
  %v3662 = vpack.c.b16 %v3658, %v3658
  %vm3666 = vcmask 408576
  %v3668 = vsel %vm3666, %v3630, 0
  %v3671 = vsel %vm3666, %v3632, 0
  %v3674 = vsel %vm3666, %v3634, 0
  %v3677 = vsel %vm3666, %v3636, 0
  %v3680 = vsel %vm3666, %v3638, 0
  %v3683 = vsel %vm3666, %v3640, 0
  %v3686 = vsel %vm3666, %v3642, 0
  %v3689 = vsel %vm3666, %v3644, 0
  %vm3691 = vcmask 1040384
  %v3693 = vsel %vm3691, %v3662, 0
  %3695 = vmatprep.subr.bf16.mxu0 0
  %3696 = vmatpush1.bf16.msra.mxu0 %v3659
  %3697 = vmatprep.subr.bf16.mxu0 0
  %3698 = vmatpush1.bf16.msra.mxu0 %v3660
  %3699 = vmatprep.subr.bf16.mxu0 0
  %3700 = vmatpush1.bf16.msra.mxu0 %v3661
  %3701 = vmatprep.subr.bf16.mxu0 0
  %3702 = vmatpush1.bf16.msra.mxu0 %v3693
  %3703 = vmatprep.subr.bf16.mxu0 0
  %3704 = vmatpush1.bf16.msra.mxu0 0
  %3705 = vmatprep.subr.bf16.mxu0 0
  %3706 = vmatpush1.bf16.msra.mxu0 0
  %3707 = vmatprep.subr.bf16.mxu0 0
  %3708 = vmatpush1.bf16.msra.mxu0 0
  %3709 = vmatprep.subr.bf16.mxu0 0
  %3710 = vmatpush1.bf16.msra.mxu0 0
  %3711 = vmatprep.subr.bf16.mxu0 0
  %3712 = vmatpush1.bf16.msra.mxu0 0
  %3713 = vmatprep.subr.bf16.mxu0 0
  %3714 = vmatpush1.bf16.msra.mxu0 0
  %3715 = vmatprep.subr.bf16.mxu0 0
  %3716 = vmatpush1.bf16.msra.mxu0 0
  %3717 = vmatprep.subr.bf16.mxu0 0
  %3718 = vmatpush1.bf16.msra.mxu0 0
  %3719 = vmatprep.subr.bf16.mxu0 0
  %3720 = vmatpush1.bf16.msra.mxu0 0
  %3721 = vmatprep.subr.bf16.mxu0 0
  %3722 = vmatpush1.bf16.msra.mxu0 0
  %3723 = vmatprep.subr.bf16.mxu0 0
  %3724 = vmatpush1.bf16.msra.mxu0 0
  %3725 = vmatprep.subr.bf16.mxu0 0
  %3726 = vmatpush1.bf16.msra.mxu0 0
  %3727 = vmatprep.mubr.bf16.mxu0 0
  %3728 = vmatmul.mubr.bf16.gmra.mrb[0].mxu0 %v3668
  %v3729 = vpop.f32.mrb[0].mxu0
  %v3730 = vadd.f32 0.0, %v3729
  %v3731 = vpop.f32.mrb[0].mxu0
  %v3732 = vpop.f32.mrb[0].mxu0
  %v3733 = vadd.f32 0.0, %v3732
  %v3734 = vpop.f32.mrb[0].mxu0
  %3735 = vmatprep.mubr.bf16.mxu0 0
  %3736 = vmatmul.mubr.bf16.gmra.mrb[0].mxu0 %v3671
  %v3737 = vpop.f32.mrb[0].mxu0
  %v3738 = vadd.f32 0.0, %v3737
  %v3739 = vpop.f32.mrb[0].mxu0
  %v3740 = vpop.f32.mrb[0].mxu0
  %v3741 = vadd.f32 0.0, %v3740
  %v3742 = vpop.f32.mrb[0].mxu0
  %3743 = vmatprep.mubr.bf16.mxu0 0
  %3744 = vmatmul.mubr.bf16.gmra.mrb[0].mxu0 %v3674
  %v3745 = vpop.f32.mrb[0].mxu0
  %v3746 = vadd.f32 0.0, %v3745
  %v3747 = vpop.f32.mrb[0].mxu0
  %v3748 = vpop.f32.mrb[0].mxu0
  %v3749 = vadd.f32 0.0, %v3748
  %v3750 = vpop.f32.mrb[0].mxu0
  %3751 = vmatprep.mubr.bf16.mxu0 0
  %3752 = vmatmul.mubr.bf16.gmra.mrb[0].mxu0 %v3677
  %v3753 = vpop.f32.mrb[0].mxu0
  %v3754 = vadd.f32 0.0, %v3753
  %v3755 = vpop.f32.mrb[0].mxu0
  %v3756 = vpop.f32.mrb[0].mxu0
  %v3757 = vadd.f32 0.0, %v3756
  %v3758 = vpop.f32.mrb[0].mxu0
  %3759 = vmatprep.mubr.bf16.mxu0 0
  %3760 = vmatmul.mubr.bf16.gmra.mrb[0].mxu0 %v3680
  %v3761 = vpop.f32.mrb[0].mxu0
  %v3762 = vadd.f32 0.0, %v3761
  %v3763 = vpop.f32.mrb[0].mxu0
  %v3764 = vpop.f32.mrb[0].mxu0
  %v3765 = vadd.f32 0.0, %v3764
  %v3766 = vpop.f32.mrb[0].mxu0
  %3767 = vmatprep.mubr.bf16.mxu0 0
  %3768 = vmatmul.mubr.bf16.gmra.mrb[0].mxu0 %v3683
  %v3769 = vpop.f32.mrb[0].mxu0
  %v3770 = vadd.f32 0.0, %v3769
  %v3771 = vpop.f32.mrb[0].mxu0
  %v3772 = vpop.f32.mrb[0].mxu0
  %v3773 = vadd.f32 0.0, %v3772
  %v3774 = vpop.f32.mrb[0].mxu0
  %3775 = vmatprep.mubr.bf16.mxu0 0
  %3776 = vmatmul.mubr.bf16.gmra.mrb[0].mxu0 %v3686
  %v3777 = vpop.f32.mrb[0].mxu0
  %v3778 = vadd.f32 0.0, %v3777
  %v3779 = vpop.f32.mrb[0].mxu0
  %v3780 = vpop.f32.mrb[0].mxu0
  %v3781 = vadd.f32 0.0, %v3780
  %v3782 = vpop.f32.mrb[0].mxu0
  %3783 = vmatprep.mubr.bf16.mxu0 0
  %3784 = vmatmul.mubr.bf16.gmra.mrb[0].mxu0 %v3689
  %v3785 = vpop.f32.mrb[0].mxu0
  %v3786 = vadd.f32 0.0, %v3785
  %v3787 = vpop.f32.mrb[0].mxu0
  %v3788 = vpop.f32.mrb[0].mxu0
  %v3789 = vadd.f32 0.0, %v3788
  %v3790 = vpop.f32.mrb[0].mxu0
  %3791 = vdwg.mxu0
  %v3799 = vunpack.c.l.b16 %v3606
  %v3800 = vunpack.c.l.b16 %v3607
  %v3801 = vunpack.c.l.b16 %v3608
  %v3802 = vunpack.c.l.b16 %v3609
  %v3803 = vunpack.c.l.b16 %v3610
  %v3804 = vunpack.c.l.b16 %v3611
  %v3805 = vunpack.c.l.b16 %v3612
  %v3806 = vpack.c.b16 %v3800, %v3799
  %v3807 = vpack.c.b16 %v3802, %v3801
  %v3808 = vpack.c.b16 %v3804, %v3803
  %v3809 = vpack.c.b16 %v3805, %v3805
  %v3813 = vsel %vm3666, %v67, 0
  %v3816 = vsel %vm3666, %v3598, 0
  %v3819 = vsel %vm3666, %v3599, 0
  %v3822 = vsel %vm3666, %v3600, 0
  %v3825 = vsel %vm3666, %v3601, 0
  %v3828 = vsel %vm3666, %v3602, 0
  %v3831 = vsel %vm3666, %v3603, 0
  %v3834 = vsel %vm3666, %v3604, 0
  %v3837 = vsel %vm3691, %v3809, 0
  %3839 = vmatprep.subr.bf16.mxu0 0
  %3840 = vmatpush1.bf16.msra.mxu0 %v3806
  %3841 = vmatprep.subr.bf16.mxu0 0
  %3842 = vmatpush1.bf16.msra.mxu0 %v3807
  %3843 = vmatprep.subr.bf16.mxu0 0
  %3844 = vmatpush1.bf16.msra.mxu0 %v3808
  %3845 = vmatprep.subr.bf16.mxu0 0
  %3846 = vmatpush1.bf16.msra.mxu0 %v3837
  %3847 = vmatprep.subr.bf16.mxu0 0
  %3848 = vmatpush1.bf16.msra.mxu0 0
  %3849 = vmatprep.subr.bf16.mxu0 0
  %3850 = vmatpush1.bf16.msra.mxu0 0
  %3851 = vmatprep.subr.bf16.mxu0 0
  %3852 = vmatpush1.bf16.msra.mxu0 0
  %3853 = vmatprep.subr.bf16.mxu0 0
  %3854 = vmatpush1.bf16.msra.mxu0 0
  %3855 = vmatprep.subr.bf16.mxu0 0
  %3856 = vmatpush1.bf16.msra.mxu0 0
  %3857 = vmatprep.subr.bf16.mxu0 0
  %3858 = vmatpush1.bf16.msra.mxu0 0
  %3859 = vmatprep.subr.bf16.mxu0 0
  %3860 = vmatpush1.bf16.msra.mxu0 0
  %3861 = vmatprep.subr.bf16.mxu0 0
  %3862 = vmatpush1.bf16.msra.mxu0 0
  %3863 = vmatprep.subr.bf16.mxu0 0
  %3864 = vmatpush1.bf16.msra.mxu0 0
  %3865 = vmatprep.subr.bf16.mxu0 0
  %3866 = vmatpush1.bf16.msra.mxu0 0
  %3867 = vmatprep.subr.bf16.mxu0 0
  %3868 = vmatpush1.bf16.msra.mxu0 0
  %3869 = vmatprep.subr.bf16.mxu0 0
  %3870 = vmatpush1.bf16.msra.mxu0 0
  %3871 = vmatprep.mubr.bf16.mxu0 0
  %3872 = vmatmul.mubr.bf16.gmra.mrb[0].mxu0 %v3813
  %v3873 = vpop.f32.mrb[0].mxu0
  %v3874 = vadd.f32 %v3730, %v3873
  %v3875 = vpop.f32.mrb[0].mxu0
  %v3876 = vpop.f32.mrb[0].mxu0
  %v3877 = vadd.f32 %v3733, %v3876
  %v3878 = vpop.f32.mrb[0].mxu0
  %3879 = vmatprep.mubr.bf16.mxu0 0
  %3880 = vmatmul.mubr.bf16.gmra.mrb[0].mxu0 %v3816
  %v3881 = vpop.f32.mrb[0].mxu0
  %v3882 = vadd.f32 %v3738, %v3881
  %v3883 = vpop.f32.mrb[0].mxu0
  %v3884 = vpop.f32.mrb[0].mxu0
  %v3885 = vadd.f32 %v3741, %v3884
  %v3886 = vpop.f32.mrb[0].mxu0
  %3887 = vmatprep.mubr.bf16.mxu0 0
  %3888 = vmatmul.mubr.bf16.gmra.mrb[0].mxu0 %v3819
  %v3889 = vpop.f32.mrb[0].mxu0
  %v3890 = vadd.f32 %v3746, %v3889
  %v3891 = vpop.f32.mrb[0].mxu0
  %v3892 = vpop.f32.mrb[0].mxu0
  %v3893 = vadd.f32 %v3749, %v3892
  %v3894 = vpop.f32.mrb[0].mxu0
  %3895 = vmatprep.mubr.bf16.mxu0 0
  %3896 = vmatmul.mubr.bf16.gmra.mrb[0].mxu0 %v3822
  %v3897 = vpop.f32.mrb[0].mxu0
  %v3898 = vadd.f32 %v3754, %v3897
  %v3899 = vpop.f32.mrb[0].mxu0
  %v3900 = vpop.f32.mrb[0].mxu0
  %v3901 = vadd.f32 %v3757, %v3900
  %v3902 = vpop.f32.mrb[0].mxu0
  %3903 = vmatprep.mubr.bf16.mxu0 0
  %3904 = vmatmul.mubr.bf16.gmra.mrb[0].mxu0 %v3825
  %v3905 = vpop.f32.mrb[0].mxu0
  %v3906 = vadd.f32 %v3762, %v3905
  %v3907 = vpop.f32.mrb[0].mxu0
  %v3908 = vpop.f32.mrb[0].mxu0
  %v3909 = vadd.f32 %v3765, %v3908
  %v3910 = vpop.f32.mrb[0].mxu0
  %3911 = vmatprep.mubr.bf16.mxu0 0
  %3912 = vmatmul.mubr.bf16.gmra.mrb[0].mxu0 %v3828
  %v3913 = vpop.f32.mrb[0].mxu0
  %v3914 = vadd.f32 %v3770, %v3913
  %v3915 = vpop.f32.mrb[0].mxu0
  %v3916 = vpop.f32.mrb[0].mxu0
  %v3917 = vadd.f32 %v3773, %v3916
  %v3918 = vpop.f32.mrb[0].mxu0
  %3919 = vmatprep.mubr.bf16.mxu0 0
  %3920 = vmatmul.mubr.bf16.gmra.mrb[0].mxu0 %v3831
  %v3921 = vpop.f32.mrb[0].mxu0
  %v3922 = vadd.f32 %v3778, %v3921
  %v3923 = vpop.f32.mrb[0].mxu0
  %v3924 = vpop.f32.mrb[0].mxu0
  %v3925 = vadd.f32 %v3781, %v3924
  %v3926 = vpop.f32.mrb[0].mxu0
  %3927 = vmatprep.mubr.bf16.mxu0 0
  %3928 = vmatmul.mubr.bf16.gmra.mrb[0].mxu0 %v3834
  %v3929 = vpop.f32.mrb[0].mxu0
  %v3930 = vadd.f32 %v3786, %v3929
  %v3931 = vpop.f32.mrb[0].mxu0
  %v3932 = vpop.f32.mrb[0].mxu0
  %v3933 = vadd.f32 %v3789, %v3932
  %v3934 = vpop.f32.mrb[0].mxu0
  %3935 = vdwg.mxu0
  %s3936 = scalar_lea.vmem %s9, 56
  %v3937 = vld [vmem:[%s3936] sm:$0xf]
  %v3938 = vld [vmem:[%s3936 + $0x4] sm:$0xf]
  %v3939 = vld [vmem:[%s3936 + $0x8] sm:$0xf]
  %v3940 = vld [vmem:[%s3936 + $0xc] sm:$0xf]
  %v3941 = vld [vmem:[%s3936 + $0x10] sm:$0xf]
  %v3942 = vld [vmem:[%s3936 + $0x14] sm:$0xf]
  %v3943 = vld [vmem:[%s3936 + $0x18] sm:$0x1]
  %v3951 = vunpack.c.l.b16 %v3937
  %v3952 = vunpack.c.l.b16 %v3938
  %v3953 = vunpack.c.l.b16 %v3939
  %v3954 = vunpack.c.l.b16 %v3940
  %v3955 = vunpack.c.l.b16 %v3941
  %v3956 = vunpack.c.l.b16 %v3942
  %v3957 = vunpack.c.l.b16 %v3943
  %v3958 = vpack.c.b16 %v3952, %v3951
  %v3959 = vpack.c.b16 %v3954, %v3953
  %v3960 = vpack.c.b16 %v3956, %v3955
  %v3961 = vpack.c.b16 %v3957, %v3957
  %v3966 = vsel %vm3666, %v3605, 0
  %v3969 = vsel %vm3691, %v3961, 0
  %3971 = vmatprep.subr.bf16.mxu0 0
  %3972 = vmatpush1.bf16.msra.mxu0 %v3958
  %3973 = vmatprep.subr.bf16.mxu0 0
  %3974 = vmatpush1.bf16.msra.mxu0 %v3959
  %3975 = vmatprep.subr.bf16.mxu0 0
  %3976 = vmatpush1.bf16.msra.mxu0 %v3960
  %3977 = vmatprep.subr.bf16.mxu0 0
  %3978 = vmatpush1.bf16.msra.mxu0 %v3969
  %3979 = vmatprep.subr.bf16.mxu0 0
  %3980 = vmatpush1.bf16.msra.mxu0 0
  %3981 = vmatprep.subr.bf16.mxu0 0
  %3982 = vmatpush1.bf16.msra.mxu0 0
  %3983 = vmatprep.subr.bf16.mxu0 0
  %3984 = vmatpush1.bf16.msra.mxu0 0
  %3985 = vmatprep.subr.bf16.mxu0 0
  %3986 = vmatpush1.bf16.msra.mxu0 0
  %3987 = vmatprep.subr.bf16.mxu0 0
  %3988 = vmatpush1.bf16.msra.mxu0 0
  %3989 = vmatprep.subr.bf16.mxu0 0
  %3990 = vmatpush1.bf16.msra.mxu0 0
  %3991 = vmatprep.subr.bf16.mxu0 0
  %3992 = vmatpush1.bf16.msra.mxu0 0
  %3993 = vmatprep.subr.bf16.mxu0 0
  %3994 = vmatpush1.bf16.msra.mxu0 0
  %3995 = vmatprep.subr.bf16.mxu0 0
  %3996 = vmatpush1.bf16.msra.mxu0 0
  %3997 = vmatprep.subr.bf16.mxu0 0
  %3998 = vmatpush1.bf16.msra.mxu0 0
  %3999 = vmatprep.subr.bf16.mxu0 0
  %4000 = vmatpush1.bf16.msra.mxu0 0
  %4001 = vmatprep.subr.bf16.mxu0 0
  %4002 = vmatpush1.bf16.msra.mxu0 0
  %4003 = vmatprep.mubr.bf16.mxu0 0
  %4004 = vmatmul.mubr.bf16.gmra.mrb[0].mxu0 %v3816
  %v4005 = vpop.f32.mrb[0].mxu0
  %v4006 = vadd.f32 0.0, %v4005
  %v4007 = vpop.f32.mrb[0].mxu0
  %v4008 = vpop.f32.mrb[0].mxu0
  %v4009 = vadd.f32 0.0, %v4008
  %v4010 = vpop.f32.mrb[0].mxu0
  %4011 = vmatprep.mubr.bf16.mxu0 0
  %4012 = vmatmul.mubr.bf16.gmra.mrb[0].mxu0 %v3819
  %v4013 = vpop.f32.mrb[0].mxu0
  %v4014 = vadd.f32 0.0, %v4013
  %v4015 = vpop.f32.mrb[0].mxu0
  %v4016 = vpop.f32.mrb[0].mxu0
  %v4017 = vadd.f32 0.0, %v4016
  %v4018 = vpop.f32.mrb[0].mxu0
  %4019 = vmatprep.mubr.bf16.mxu0 0
  %4020 = vmatmul.mubr.bf16.gmra.mrb[0].mxu0 %v3822
  %v4021 = vpop.f32.mrb[0].mxu0
  %v4022 = vadd.f32 0.0, %v4021
  %v4023 = vpop.f32.mrb[0].mxu0
  %v4024 = vpop.f32.mrb[0].mxu0
  %v4025 = vadd.f32 0.0, %v4024
  %v4026 = vpop.f32.mrb[0].mxu0
  %4027 = vmatprep.mubr.bf16.mxu0 0
  %4028 = vmatmul.mubr.bf16.gmra.mrb[0].mxu0 %v3825
  %v4029 = vpop.f32.mrb[0].mxu0
  %v4030 = vadd.f32 0.0, %v4029
  %v4031 = vpop.f32.mrb[0].mxu0
  %v4032 = vpop.f32.mrb[0].mxu0
  %v4033 = vadd.f32 0.0, %v4032
  %v4034 = vpop.f32.mrb[0].mxu0
  %4035 = vmatprep.mubr.bf16.mxu0 0
  %4036 = vmatmul.mubr.bf16.gmra.mrb[0].mxu0 %v3828
  %v4037 = vpop.f32.mrb[0].mxu0
  %v4038 = vadd.f32 0.0, %v4037
  %v4039 = vpop.f32.mrb[0].mxu0
  %v4040 = vpop.f32.mrb[0].mxu0
  %v4041 = vadd.f32 0.0, %v4040
  %v4042 = vpop.f32.mrb[0].mxu0
  %4043 = vmatprep.mubr.bf16.mxu0 0
  %4044 = vmatmul.mubr.bf16.gmra.mrb[0].mxu0 %v3831
  %v4045 = vpop.f32.mrb[0].mxu0
  %v4046 = vadd.f32 0.0, %v4045
  %v4047 = vpop.f32.mrb[0].mxu0
  %v4048 = vpop.f32.mrb[0].mxu0
  %v4049 = vadd.f32 0.0, %v4048
  %v4050 = vpop.f32.mrb[0].mxu0
  %4051 = vmatprep.mubr.bf16.mxu0 0
  %4052 = vmatmul.mubr.bf16.gmra.mrb[0].mxu0 %v3834
  %v4053 = vpop.f32.mrb[0].mxu0
  %v4054 = vadd.f32 0.0, %v4053
  %v4055 = vpop.f32.mrb[0].mxu0
  %v4056 = vpop.f32.mrb[0].mxu0
  %v4057 = vadd.f32 0.0, %v4056
  %v4058 = vpop.f32.mrb[0].mxu0
  %4059 = vmatprep.mubr.bf16.mxu0 0
  %4060 = vmatmul.mubr.bf16.gmra.mrb[0].mxu0 %v3966
  %v4061 = vpop.f32.mrb[0].mxu0
  %v4062 = vadd.f32 0.0, %v4061
  %v4063 = vpop.f32.mrb[0].mxu0
  %v4064 = vpop.f32.mrb[0].mxu0
  %v4065 = vadd.f32 0.0, %v4064
  %v4066 = vpop.f32.mrb[0].mxu0
  %4067 = vdwg.mxu0
  %v4068 = vadd.f32 %v3874, %v4006
  %v4069 = vadd.f32 %v3877, %v4009
  %v4070 = vadd.f32 %v3882, %v4014
  %v4071 = vadd.f32 %v3885, %v4017
  %v4072 = vadd.f32 %v3890, %v4022
  %v4073 = vadd.f32 %v3893, %v4025
  %v4074 = vadd.f32 %v3898, %v4030
  %v4075 = vadd.f32 %v3901, %v4033
  %v4076 = vadd.f32 %v3906, %v4038
  %v4077 = vadd.f32 %v3909, %v4041
  %v4078 = vadd.f32 %v3914, %v4046
  %v4079 = vadd.f32 %v3917, %v4049
  %v4080 = vadd.f32 %v3922, %v4054
  %v4081 = vadd.f32 %v3925, %v4057
  %v4082 = vadd.f32 %v3930, %v4062
  %v4083 = vadd.f32 %v3933, %v4065
  %s4084 = scalar_lea.vmem %s9, 84
  %v4085 = vld [vmem:[%s4084] sm:$0xf]
  %v4086 = vld [vmem:[%s4084 + $0x4] sm:$0xf]
  %v4087 = vld [vmem:[%s4084 + $0x8] sm:$0xf]
  %v4088 = vld [vmem:[%s4084 + $0xc] sm:$0xf]
  %v4089 = vld [vmem:[%s4084 + $0x10] sm:$0xf]
  %v4090 = vld [vmem:[%s4084 + $0x14] sm:$0xf]
  %v4091 = vld [vmem:[%s4084 + $0x18] sm:$0x1]
  %v4092 = vsel %vm202, %v3643, %v203
  %v4100 = vunpack.c.l.b16 %v4085
  %v4101 = vunpack.c.l.b16 %v4086
  %v4102 = vunpack.c.l.b16 %v4087
  %v4103 = vunpack.c.l.b16 %v4088
  %v4104 = vunpack.c.l.b16 %v4089
  %v4105 = vunpack.c.l.b16 %v4090
  %v4106 = vunpack.c.l.b16 %v4091
  %v4107 = vpack.c.b16 %v4101, %v4100
  %v4108 = vpack.c.b16 %v4103, %v4102
  %v4109 = vpack.c.b16 %v4105, %v4104
  %v4110 = vpack.c.b16 %v4106, %v4106
  %v4115 = vsel %vm3666, %v4092, 0
  %v4118 = vsel %vm3691, %v4110, 0
  %4120 = vmatprep.subr.bf16.mxu0 0
  %4121 = vmatpush1.bf16.msra.mxu0 %v4107
  %4122 = vmatprep.subr.bf16.mxu0 0
  %4123 = vmatpush1.bf16.msra.mxu0 %v4108
  %4124 = vmatprep.subr.bf16.mxu0 0
  %4125 = vmatpush1.bf16.msra.mxu0 %v4109
  %4126 = vmatprep.subr.bf16.mxu0 0
  %4127 = vmatpush1.bf16.msra.mxu0 %v4118
  %4128 = vmatprep.subr.bf16.mxu0 0
  %4129 = vmatpush1.bf16.msra.mxu0 0
  %4130 = vmatprep.subr.bf16.mxu0 0
  %4131 = vmatpush1.bf16.msra.mxu0 0
  %4132 = vmatprep.subr.bf16.mxu0 0
  %4133 = vmatpush1.bf16.msra.mxu0 0
  %4134 = vmatprep.subr.bf16.mxu0 0
  %4135 = vmatpush1.bf16.msra.mxu0 0
  %4136 = vmatprep.subr.bf16.mxu0 0
  %4137 = vmatpush1.bf16.msra.mxu0 0
  %4138 = vmatprep.subr.bf16.mxu0 0
  %4139 = vmatpush1.bf16.msra.mxu0 0
  %4140 = vmatprep.subr.bf16.mxu0 0
  %4141 = vmatpush1.bf16.msra.mxu0 0
  %4142 = vmatprep.subr.bf16.mxu0 0
  %4143 = vmatpush1.bf16.msra.mxu0 0
  %4144 = vmatprep.subr.bf16.mxu0 0
  %4145 = vmatpush1.bf16.msra.mxu0 0
  %4146 = vmatprep.subr.bf16.mxu0 0
  %4147 = vmatpush1.bf16.msra.mxu0 0
  %4148 = vmatprep.subr.bf16.mxu0 0
  %4149 = vmatpush1.bf16.msra.mxu0 0
  %4150 = vmatprep.subr.bf16.mxu0 0
  %4151 = vmatpush1.bf16.msra.mxu0 0
  %4152 = vmatprep.mubr.bf16.mxu0 0
  %4153 = vmatmul.mubr.bf16.gmra.mrb[0].mxu0 %v3671
  %v4154 = vpop.f32.mrb[0].mxu0
  %v4155 = vadd.f32 0.0, %v4154
  %v4156 = vpop.f32.mrb[0].mxu0
  %v4157 = vpop.f32.mrb[0].mxu0
  %v4158 = vadd.f32 0.0, %v4157
  %v4159 = vpop.f32.mrb[0].mxu0
  %4160 = vmatprep.mubr.bf16.mxu0 0
  %4161 = vmatmul.mubr.bf16.gmra.mrb[0].mxu0 %v3674
  %v4162 = vpop.f32.mrb[0].mxu0
  %v4163 = vadd.f32 0.0, %v4162
  %v4164 = vpop.f32.mrb[0].mxu0
  %v4165 = vpop.f32.mrb[0].mxu0
  %v4166 = vadd.f32 0.0, %v4165
  %v4167 = vpop.f32.mrb[0].mxu0
  %4168 = vmatprep.mubr.bf16.mxu0 0
  %4169 = vmatmul.mubr.bf16.gmra.mrb[0].mxu0 %v3677
  %v4170 = vpop.f32.mrb[0].mxu0
  %v4171 = vadd.f32 0.0, %v4170
  %v4172 = vpop.f32.mrb[0].mxu0
  %v4173 = vpop.f32.mrb[0].mxu0
  %v4174 = vadd.f32 0.0, %v4173
  %v4175 = vpop.f32.mrb[0].mxu0
  %4176 = vmatprep.mubr.bf16.mxu0 0
  %4177 = vmatmul.mubr.bf16.gmra.mrb[0].mxu0 %v3680
  %v4178 = vpop.f32.mrb[0].mxu0
  %v4179 = vadd.f32 0.0, %v4178
  %v4180 = vpop.f32.mrb[0].mxu0
  %v4181 = vpop.f32.mrb[0].mxu0
  %v4182 = vadd.f32 0.0, %v4181
  %v4183 = vpop.f32.mrb[0].mxu0
  %4184 = vmatprep.mubr.bf16.mxu0 0
  %4185 = vmatmul.mubr.bf16.gmra.mrb[0].mxu0 %v3683
  %v4186 = vpop.f32.mrb[0].mxu0
  %v4187 = vadd.f32 0.0, %v4186
  %v4188 = vpop.f32.mrb[0].mxu0
  %v4189 = vpop.f32.mrb[0].mxu0
  %v4190 = vadd.f32 0.0, %v4189
  %v4191 = vpop.f32.mrb[0].mxu0
  %4192 = vmatprep.mubr.bf16.mxu0 0
  %4193 = vmatmul.mubr.bf16.gmra.mrb[0].mxu0 %v3686
  %v4194 = vpop.f32.mrb[0].mxu0
  %v4195 = vadd.f32 0.0, %v4194
  %v4196 = vpop.f32.mrb[0].mxu0
  %v4197 = vpop.f32.mrb[0].mxu0
  %v4198 = vadd.f32 0.0, %v4197
  %v4199 = vpop.f32.mrb[0].mxu0
  %4200 = vmatprep.mubr.bf16.mxu0 0
  %4201 = vmatmul.mubr.bf16.gmra.mrb[0].mxu0 %v3689
  %v4202 = vpop.f32.mrb[0].mxu0
  %v4203 = vadd.f32 0.0, %v4202
  %v4204 = vpop.f32.mrb[0].mxu0
  %v4205 = vpop.f32.mrb[0].mxu0
  %v4206 = vadd.f32 0.0, %v4205
  %v4207 = vpop.f32.mrb[0].mxu0
  %4208 = vmatprep.mubr.bf16.mxu0 0
  %4209 = vmatmul.mubr.bf16.gmra.mrb[0].mxu0 %v4115
  %v4210 = vpop.f32.mrb[0].mxu0
  %v4211 = vadd.f32 0.0, %v4210
  %v4212 = vpop.f32.mrb[0].mxu0
  %v4213 = vpop.f32.mrb[0].mxu0
  %v4214 = vadd.f32 0.0, %v4213
  %v4215 = vpop.f32.mrb[0].mxu0
  %4216 = vdwg.mxu0
  %v4217 = vadd.f32 %v4068, %v4155
  %v4218 = vadd.f32 %v4069, %v4158
  %v4219 = vadd.f32 %v4070, %v4163
  %v4220 = vadd.f32 %v4071, %v4166
  %v4221 = vadd.f32 %v4072, %v4171
  %v4222 = vadd.f32 %v4073, %v4174
  %v4223 = vadd.f32 %v4074, %v4179
  %v4224 = vadd.f32 %v4075, %v4182
  %v4225 = vadd.f32 %v4076, %v4187
  %v4226 = vadd.f32 %v4077, %v4190
  %v4227 = vadd.f32 %v4078, %v4195
  %v4228 = vadd.f32 %v4079, %v4198
  %v4229 = vadd.f32 %v4080, %v4203
  %v4230 = vadd.f32 %v4081, %v4206
  %v4231 = vadd.f32 %v4082, %v4211
  %v4232 = vadd.f32 %v4083, %v4214
  %s4233 = scalar_lea.vmem %s9, 112
  %v4234 = vld [vmem:[%s4233] sm:$0xf]
  %v4235 = vld [vmem:[%s4233 + $0x4] sm:$0xf]
  %v4236 = vld [vmem:[%s4233 + $0x8] sm:$0xf]
  %v4237 = vld [vmem:[%s4233 + $0xc] sm:$0xf]
  %v4238 = vld [vmem:[%s4233 + $0x10] sm:$0xf]
  %v4239 = vld [vmem:[%s4233 + $0x14] sm:$0xf]
  %v4240 = vld [vmem:[%s4233 + $0x18] sm:$0x1]
  %v4248 = vunpack.c.l.b16 %v4234
  %v4249 = vunpack.c.l.b16 %v4235
  %v4250 = vunpack.c.l.b16 %v4236
  %v4251 = vunpack.c.l.b16 %v4237
  %v4252 = vunpack.c.l.b16 %v4238
  %v4253 = vunpack.c.l.b16 %v4239
  %v4254 = vunpack.c.l.b16 %v4240
  %v4255 = vpack.c.b16 %v4249, %v4248
  %v4256 = vpack.c.b16 %v4251, %v4250
  %v4257 = vpack.c.b16 %v4253, %v4252
  %v4258 = vpack.c.b16 %v4254, %v4254
  %v4263 = vsel %vm3691, %v4258, 0
  %4265 = vmatprep.subr.bf16.mxu0 0
  %4266 = vmatpush1.bf16.msra.mxu0 %v4255
  %4267 = vmatprep.subr.bf16.mxu0 0
  %4268 = vmatpush1.bf16.msra.mxu0 %v4256
  %4269 = vmatprep.subr.bf16.mxu0 0
  %4270 = vmatpush1.bf16.msra.mxu0 %v4257
  %4271 = vmatprep.subr.bf16.mxu0 0
  %4272 = vmatpush1.bf16.msra.mxu0 %v4263
  %4273 = vmatprep.subr.bf16.mxu0 0
  %4274 = vmatpush1.bf16.msra.mxu0 0
  %4275 = vmatprep.subr.bf16.mxu0 0
  %4276 = vmatpush1.bf16.msra.mxu0 0
  %4277 = vmatprep.subr.bf16.mxu0 0
  %4278 = vmatpush1.bf16.msra.mxu0 0
  %4279 = vmatprep.subr.bf16.mxu0 0
  %4280 = vmatpush1.bf16.msra.mxu0 0
  %4281 = vmatprep.subr.bf16.mxu0 0
  %4282 = vmatpush1.bf16.msra.mxu0 0
  %4283 = vmatprep.subr.bf16.mxu0 0
  %4284 = vmatpush1.bf16.msra.mxu0 0
  %4285 = vmatprep.subr.bf16.mxu0 0
  %4286 = vmatpush1.bf16.msra.mxu0 0
  %4287 = vmatprep.subr.bf16.mxu0 0
  %4288 = vmatpush1.bf16.msra.mxu0 0
  %4289 = vmatprep.subr.bf16.mxu0 0
  %4290 = vmatpush1.bf16.msra.mxu0 0
  %4291 = vmatprep.subr.bf16.mxu0 0
  %4292 = vmatpush1.bf16.msra.mxu0 0
  %4293 = vmatprep.subr.bf16.mxu0 0
  %4294 = vmatpush1.bf16.msra.mxu0 0
  %4295 = vmatprep.subr.bf16.mxu0 0
  %4296 = vmatpush1.bf16.msra.mxu0 0
  %4297 = vmatprep.mubr.bf16.mxu0 0
  %4298 = vmatmul.mubr.bf16.gmra.mrb[0].mxu0 %v3819
  %v4299 = vpop.f32.mrb[0].mxu0
  %v4300 = vadd.f32 0.0, %v4299
  %v4301 = vpop.f32.mrb[0].mxu0
  %v4302 = vpop.f32.mrb[0].mxu0
  %v4303 = vadd.f32 0.0, %v4302
  %v4304 = vpop.f32.mrb[0].mxu0
  %4305 = vmatprep.mubr.bf16.mxu0 0
  %4306 = vmatmul.mubr.bf16.gmra.mrb[0].mxu0 %v3822
  %v4307 = vpop.f32.mrb[0].mxu0
  %v4308 = vadd.f32 0.0, %v4307
  %v4309 = vpop.f32.mrb[0].mxu0
  %v4310 = vpop.f32.mrb[0].mxu0
  %v4311 = vadd.f32 0.0, %v4310
  %v4312 = vpop.f32.mrb[0].mxu0
  %4313 = vmatprep.mubr.bf16.mxu0 0
  %4314 = vmatmul.mubr.bf16.gmra.mrb[0].mxu0 %v3825
  %v4315 = vpop.f32.mrb[0].mxu0
  %v4316 = vadd.f32 0.0, %v4315
  %v4317 = vpop.f32.mrb[0].mxu0
  %v4318 = vpop.f32.mrb[0].mxu0
  %v4319 = vadd.f32 0.0, %v4318
  %v4320 = vpop.f32.mrb[0].mxu0
  %4321 = vmatprep.mubr.bf16.mxu0 0
  %4322 = vmatmul.mubr.bf16.gmra.mrb[0].mxu0 %v3828
  %v4323 = vpop.f32.mrb[0].mxu0
  %v4324 = vadd.f32 0.0, %v4323
  %v4325 = vpop.f32.mrb[0].mxu0
  %v4326 = vpop.f32.mrb[0].mxu0
  %v4327 = vadd.f32 0.0, %v4326
  %v4328 = vpop.f32.mrb[0].mxu0
  %4329 = vmatprep.mubr.bf16.mxu0 0
  %4330 = vmatmul.mubr.bf16.gmra.mrb[0].mxu0 %v3831
  %v4331 = vpop.f32.mrb[0].mxu0
  %v4332 = vadd.f32 0.0, %v4331
  %v4333 = vpop.f32.mrb[0].mxu0
  %v4334 = vpop.f32.mrb[0].mxu0
  %v4335 = vadd.f32 0.0, %v4334
  %v4336 = vpop.f32.mrb[0].mxu0
  %4337 = vmatprep.mubr.bf16.mxu0 0
  %4338 = vmatmul.mubr.bf16.gmra.mrb[0].mxu0 %v3834
  %v4339 = vpop.f32.mrb[0].mxu0
  %v4340 = vadd.f32 0.0, %v4339
  %v4341 = vpop.f32.mrb[0].mxu0
  %v4342 = vpop.f32.mrb[0].mxu0
  %v4343 = vadd.f32 0.0, %v4342
  %v4344 = vpop.f32.mrb[0].mxu0
  %4345 = vmatprep.mubr.bf16.mxu0 0
  %4346 = vmatmul.mubr.bf16.gmra.mrb[0].mxu0 %v3966
  %v4347 = vpop.f32.mrb[0].mxu0
  %v4348 = vadd.f32 0.0, %v4347
  %v4349 = vpop.f32.mrb[0].mxu0
  %v4350 = vpop.f32.mrb[0].mxu0
  %v4351 = vadd.f32 0.0, %v4350
  %v4352 = vpop.f32.mrb[0].mxu0
  %4353 = vmatprep.mubr.bf16.mxu0 0
  %4354 = vmatmul.mubr.bf16.gmra.mrb[0].mxu0 %v3813
  %v4355 = vpop.f32.mrb[0].mxu0
  %v4356 = vadd.f32 0.0, %v4355
  %v4357 = vpop.f32.mrb[0].mxu0
  %v4358 = vpop.f32.mrb[0].mxu0
  %v4359 = vadd.f32 0.0, %v4358
  %v4360 = vpop.f32.mrb[0].mxu0
  %4361 = vdwg.mxu0
  %v4362 = vadd.f32 %v4217, %v4300
  %v4363 = vadd.f32 %v4218, %v4303
  %v4364 = vadd.f32 %v4219, %v4308
  %v4365 = vadd.f32 %v4220, %v4311
  %v4366 = vadd.f32 %v4221, %v4316
  %v4367 = vadd.f32 %v4222, %v4319
  %v4368 = vadd.f32 %v4223, %v4324
  %v4369 = vadd.f32 %v4224, %v4327
  %v4370 = vadd.f32 %v4225, %v4332
  %v4371 = vadd.f32 %v4226, %v4335
  %v4372 = vadd.f32 %v4227, %v4340
  %v4373 = vadd.f32 %v4228, %v4343
  %v4374 = vadd.f32 %v4229, %v4348
  %v4375 = vadd.f32 %v4230, %v4351
  %v4376 = vadd.f32 %v4231, %v4356
  %v4377 = vadd.f32 %v4232, %v4359
  %v4378 = vld [vmem:[%s10] sm:$0x1]
  %v4380 = vlaneseq
  %v4381 = vshrl.u32 %v4380, 7
  %v4382 = vsub.s32 0, %v4381
  %v4383 = vrot.slane %v4378, %v4382
  %v4385 = vadd.f32 %v4362, %v4383
  %v4386 = vadd.f32 %v4363, %v4383
  %v4387 = vadd.f32 %v4364, %v4383
  %v4388 = vadd.f32 %v4365, %v4383
  %v4389 = vadd.f32 %v4366, %v4383
  %v4390 = vadd.f32 %v4367, %v4383
  %v4391 = vadd.f32 %v4368, %v4383
  %v4392 = vadd.f32 %v4369, %v4383
  %v4393 = vadd.f32 %v4370, %v4383
  %v4394 = vadd.f32 %v4371, %v4383
  %v4395 = vadd.f32 %v4372, %v4383
  %v4396 = vadd.f32 %v4373, %v4383
  %v4397 = vadd.f32 %v4374, %v4383
  %v4398 = vadd.f32 %v4375, %v4383
  %v4399 = vadd.f32 %v4376, %v4383
  %v4400 = vadd.f32 %v4377, %v4383
  %v4401 = vmax.f32 %v4385, 0.0
  %v4402 = vmax.f32 %v4386, 0.0
  %v4403 = vmax.f32 %v4387, 0.0
  %v4404 = vmax.f32 %v4388, 0.0
  %v4405 = vmax.f32 %v4389, 0.0
  %v4406 = vmax.f32 %v4390, 0.0
  %v4407 = vmax.f32 %v4391, 0.0
  %v4408 = vmax.f32 %v4392, 0.0
  %v4409 = vmax.f32 %v4393, 0.0
  %v4410 = vmax.f32 %v4394, 0.0
  %v4411 = vmax.f32 %v4395, 0.0
  %v4412 = vmax.f32 %v4396, 0.0
  %v4413 = vmax.f32 %v4397, 0.0
  %v4414 = vmax.f32 %v4398, 0.0
  %v4415 = vmax.f32 %v4399, 0.0
  %v4416 = vmax.f32 %v4400, 0.0
  %v4417 = vpack.c.bf16 %v4401, %v4401
  %v4418 = vld [vmem:[%s11] sm:$0xff]
  %v4419 = vld [vmem:[%s11 + $0x8] sm:$0xff]
  %v4420 = vld [vmem:[%s11 + $0x10] sm:$0xff]
  %v4421 = vld [vmem:[%s11 + $0x18] sm:$0xff]
  %v4422 = vld [vmem:[%s11 + $0x20] sm:$0xff]
  %v4423 = vld [vmem:[%s11 + $0x28] sm:$0xff]
  %v4424 = vld [vmem:[%s11 + $0x30] sm:$0xff]
  %v4425 = vld [vmem:[%s11 + $0x38] sm:$0xff]
  %v4426 = vld [vmem:[%s11 + $0x40] sm:$0xff]
  %v4427 = vld [vmem:[%s11 + $0x48] sm:$0xff]
  %v4428 = vld [vmem:[%s11 + $0x50] sm:$0xff]
  %v4429 = vld [vmem:[%s11 + $0x58] sm:$0xff]
  %v4430 = vld [vmem:[%s11 + $0x60] sm:$0xff]
  %v4431 = vld [vmem:[%s11 + $0x68] sm:$0xff]
  %v4432 = vld [vmem:[%s11 + $0x70] sm:$0xff]
  %v4433 = vld [vmem:[%s11 + $0x78] sm:$0xff]
  %v4434 = vld [vmem:[%s11 + $0x80] sm:$0xff]
  %v4435 = vld [vmem:[%s11 + $0x88] sm:$0xff]
  %v4436 = vld [vmem:[%s11 + $0x90] sm:$0xff]
  %v4437 = vld [vmem:[%s11 + $0x98] sm:$0xff]
  %v4438 = vld [vmem:[%s11 + $0xa0] sm:$0xff]
  %v4439 = vld [vmem:[%s11 + $0xa8] sm:$0xff]
  %v4440 = vld [vmem:[%s11 + $0xb0] sm:$0xff]
  %v4441 = vld [vmem:[%s11 + $0xb8] sm:$0xff]
  %v4442 = vld [vmem:[%s11 + $0xc0] sm:$0x11]
  %v4443 = vld [vmem:[%s11 + $0xc8] sm:$0x11]
  %v4444 = vld [vmem:[%s11 + $0xd0] sm:$0x11]
  %v4445 = vld [vmem:[%s11 + $0xd8] sm:$0x11]
  %v4446 = vpack.c.bf16 %v4402, %v4402
  %s4447 = scalar_lea.vmem %s11, 224
  %v4448 = vld [vmem:[%s4447] sm:$0xff]
  %v4449 = vld [vmem:[%s4447 + $0x8] sm:$0xff]
  %v4450 = vld [vmem:[%s4447 + $0x10] sm:$0xff]
  %v4451 = vld [vmem:[%s4447 + $0x18] sm:$0xff]
  %v4452 = vld [vmem:[%s4447 + $0x20] sm:$0xff]
  %v4453 = vld [vmem:[%s4447 + $0x28] sm:$0xff]
  %v4454 = vld [vmem:[%s4447 + $0x30] sm:$0xff]
  %v4455 = vld [vmem:[%s4447 + $0x38] sm:$0xff]
  %v4456 = vld [vmem:[%s4447 + $0x40] sm:$0xff]
  %v4457 = vld [vmem:[%s4447 + $0x48] sm:$0xff]
  %v4458 = vld [vmem:[%s4447 + $0x50] sm:$0xff]
  %v4459 = vld [vmem:[%s4447 + $0x58] sm:$0xff]
  %v4460 = vld [vmem:[%s4447 + $0x60] sm:$0xff]
  %v4461 = vld [vmem:[%s4447 + $0x68] sm:$0xff]
  %v4462 = vld [vmem:[%s4447 + $0x70] sm:$0xff]
  %v4463 = vld [vmem:[%s4447 + $0x78] sm:$0xff]
  %v4464 = vld [vmem:[%s4447 + $0x80] sm:$0xff]
  %v4465 = vld [vmem:[%s4447 + $0x88] sm:$0xff]
  %v4466 = vld [vmem:[%s4447 + $0x90] sm:$0xff]
  %v4467 = vld [vmem:[%s4447 + $0x98] sm:$0xff]
  %v4468 = vld [vmem:[%s4447 + $0xa0] sm:$0xff]
  %v4469 = vld [vmem:[%s4447 + $0xa8] sm:$0xff]
  %v4470 = vld [vmem:[%s4447 + $0xb0] sm:$0xff]
  %v4471 = vld [vmem:[%s4447 + $0xb8] sm:$0xff]
  %v4472 = vld [vmem:[%s4447 + $0xc0] sm:$0x11]
  %v4473 = vld [vmem:[%s4447 + $0xc8] sm:$0x11]
  %v4474 = vld [vmem:[%s4447 + $0xd0] sm:$0x11]
  %v4475 = vld [vmem:[%s4447 + $0xd8] sm:$0x11]
  %v4504 = vunpack.c.l.b16 %v4448
  %v4505 = vunpack.c.h.b16 %v4448
  %v4506 = vunpack.c.l.b16 %v4449
  %v4507 = vunpack.c.h.b16 %v4449
  %v4508 = vunpack.c.l.b16 %v4450
  %v4509 = vunpack.c.h.b16 %v4450
  %v4510 = vunpack.c.l.b16 %v4451
  %v4511 = vunpack.c.h.b16 %v4451
  %v4512 = vunpack.c.l.b16 %v4452
  %v4513 = vunpack.c.h.b16 %v4452
  %v4514 = vunpack.c.l.b16 %v4453
  %v4515 = vunpack.c.h.b16 %v4453
  %v4516 = vunpack.c.l.b16 %v4454
  %v4517 = vunpack.c.h.b16 %v4454
  %v4518 = vunpack.c.l.b16 %v4455
  %v4519 = vunpack.c.h.b16 %v4455
  %v4520 = vunpack.c.l.b16 %v4456
  %v4521 = vunpack.c.h.b16 %v4456
  %v4522 = vunpack.c.l.b16 %v4457
  %v4523 = vunpack.c.h.b16 %v4457
  %v4524 = vunpack.c.l.b16 %v4458
  %v4525 = vunpack.c.h.b16 %v4458
  %v4526 = vunpack.c.l.b16 %v4459
  %v4527 = vunpack.c.h.b16 %v4459
  %v4528 = vunpack.c.l.b16 %v4460
  %v4529 = vunpack.c.h.b16 %v4460
  %v4530 = vunpack.c.l.b16 %v4461
  %v4531 = vunpack.c.h.b16 %v4461
  %v4532 = vunpack.c.l.b16 %v4462
  %v4533 = vunpack.c.h.b16 %v4462
  %v4534 = vunpack.c.l.b16 %v4463
  %v4535 = vunpack.c.h.b16 %v4463
  %v4536 = vunpack.c.l.b16 %v4464
  %v4537 = vunpack.c.h.b16 %v4464
  %v4538 = vunpack.c.l.b16 %v4465
  %v4539 = vunpack.c.h.b16 %v4465
  %v4540 = vunpack.c.l.b16 %v4466
  %v4541 = vunpack.c.h.b16 %v4466
  %v4542 = vunpack.c.l.b16 %v4467
  %v4543 = vunpack.c.h.b16 %v4467
  %v4544 = vunpack.c.l.b16 %v4468
  %v4545 = vunpack.c.h.b16 %v4468
  %v4546 = vunpack.c.l.b16 %v4469
  %v4547 = vunpack.c.h.b16 %v4469
  %v4548 = vunpack.c.l.b16 %v4470
  %v4549 = vunpack.c.h.b16 %v4470
  %v4550 = vunpack.c.l.b16 %v4471
  %v4551 = vunpack.c.h.b16 %v4471
  %v4552 = vunpack.c.l.b16 %v4472
  %v4553 = vunpack.c.h.b16 %v4472
  %v4554 = vunpack.c.l.b16 %v4473
  %v4555 = vunpack.c.h.b16 %v4473
  %v4556 = vunpack.c.l.b16 %v4474
  %v4557 = vunpack.c.h.b16 %v4474
  %v4558 = vunpack.c.l.b16 %v4475
  %v4559 = vunpack.c.h.b16 %v4475
  %v4560 = vpack.c.b16 %v4512, %v4504
  %v4561 = vpack.c.b16 %v4513, %v4505
  %v4562 = vpack.c.b16 %v4514, %v4506
  %v4563 = vpack.c.b16 %v4515, %v4507
  %v4564 = vpack.c.b16 %v4516, %v4508
  %v4565 = vpack.c.b16 %v4517, %v4509
  %v4566 = vpack.c.b16 %v4518, %v4510
  %v4567 = vpack.c.b16 %v4519, %v4511
  %v4568 = vpack.c.b16 %v4528, %v4520
  %v4569 = vpack.c.b16 %v4529, %v4521
  %v4570 = vpack.c.b16 %v4530, %v4522
  %v4571 = vpack.c.b16 %v4531, %v4523
  %v4572 = vpack.c.b16 %v4532, %v4524
  %v4573 = vpack.c.b16 %v4533, %v4525
  %v4574 = vpack.c.b16 %v4534, %v4526
  %v4575 = vpack.c.b16 %v4535, %v4527
  %v4576 = vpack.c.b16 %v4544, %v4536
  %v4577 = vpack.c.b16 %v4545, %v4537
  %v4578 = vpack.c.b16 %v4546, %v4538
  %v4579 = vpack.c.b16 %v4547, %v4539
  %v4580 = vpack.c.b16 %v4548, %v4540
  %v4581 = vpack.c.b16 %v4549, %v4541
  %v4582 = vpack.c.b16 %v4550, %v4542
  %v4583 = vpack.c.b16 %v4551, %v4543
  %v4584 = vpack.c.b16 %v4552, %v4552
  %v4585 = vpack.c.b16 %v4553, %v4553
  %v4586 = vpack.c.b16 %v4554, %v4554
  %v4587 = vpack.c.b16 %v4555, %v4555
  %v4588 = vpack.c.b16 %v4556, %v4556
  %v4589 = vpack.c.b16 %v4557, %v4557
  %v4590 = vpack.c.b16 %v4558, %v4558
  %v4591 = vpack.c.b16 %v4559, %v4559
  %v4617 = vsel %vm3666, %v4446, 0
  %v4620 = vsel %vm3691, %v4584, 0
  %v4623 = vsel %vm3691, %v4585, 0
  %v4626 = vsel %vm3691, %v4586, 0
  %v4629 = vsel %vm3691, %v4587, 0
  %v4632 = vsel %vm3691, %v4588, 0
  %v4635 = vsel %vm3691, %v4589, 0
  %v4638 = vsel %vm3691, %v4590, 0
  %v4641 = vsel %vm3691, %v4591, 0
  %4643 = vmatprep.subr.bf16.mxu0 %v4561
  %4644 = vmatpush1.bf16.msra.mxu0 %v4560
  %4645 = vmatprep.subr.bf16.mxu0 %v4569
  %4646 = vmatpush1.bf16.msra.mxu0 %v4568
  %4647 = vmatprep.subr.bf16.mxu0 %v4577
  %4648 = vmatpush1.bf16.msra.mxu0 %v4576
  %4649 = vmatprep.subr.bf16.mxu0 %v4623
  %4650 = vmatpush1.bf16.msra.mxu0 %v4620
  %4651 = vmatprep.subr.bf16.mxu0 0
  %4652 = vmatpush1.bf16.msra.mxu0 0
  %4653 = vmatprep.subr.bf16.mxu0 0
  %4654 = vmatpush1.bf16.msra.mxu0 0
  %4655 = vmatprep.subr.bf16.mxu0 0
  %4656 = vmatpush1.bf16.msra.mxu0 0
  %4657 = vmatprep.subr.bf16.mxu0 0
  %4658 = vmatpush1.bf16.msra.mxu0 0
  %4659 = vmatprep.subr.bf16.mxu0 0
  %4660 = vmatpush1.bf16.msra.mxu0 0
  %4661 = vmatprep.subr.bf16.mxu0 0
  %4662 = vmatpush1.bf16.msra.mxu0 0
  %4663 = vmatprep.subr.bf16.mxu0 0
  %4664 = vmatpush1.bf16.msra.mxu0 0
  %4665 = vmatprep.subr.bf16.mxu0 0
  %4666 = vmatpush1.bf16.msra.mxu0 0
  %4667 = vmatprep.subr.bf16.mxu0 0
  %4668 = vmatpush1.bf16.msra.mxu0 0
  %4669 = vmatprep.subr.bf16.mxu0 0
  %4670 = vmatpush1.bf16.msra.mxu0 0
  %4671 = vmatprep.subr.bf16.mxu0 0
  %4672 = vmatpush1.bf16.msra.mxu0 0
  %4673 = vmatprep.subr.bf16.mxu0 0
  %4674 = vmatpush1.bf16.msra.mxu0 0
  %4675 = vmatprep.mubr.bf16.mxu0 0
  %4676 = vmatmul.mubr.bf16.gmra.mrb[0].mxu0 %v4617
  %v4677 = vpop.f32.mrb[0].mxu0
  %v4678 = vadd.f32 0.0, %v4677
  %v4679 = vpop.f32.mrb[0].mxu0
  %v4680 = vadd.f32 0.0, %v4679
  %v4681 = vpop.f32.mrb[0].mxu0
  %v4682 = vpop.f32.mrb[0].mxu0
  %4683 = vdwg.mxu0
  %4684 = vmatprep.subr.bf16.mxu0 %v4563
  %4685 = vmatpush1.bf16.msra.mxu0 %v4562
  %4686 = vmatprep.subr.bf16.mxu0 %v4571
  %4687 = vmatpush1.bf16.msra.mxu0 %v4570
  %4688 = vmatprep.subr.bf16.mxu0 %v4579
  %4689 = vmatpush1.bf16.msra.mxu0 %v4578
  %4690 = vmatprep.subr.bf16.mxu0 %v4629
  %4691 = vmatpush1.bf16.msra.mxu0 %v4626
  %4692 = vmatprep.subr.bf16.mxu0 0
  %4693 = vmatpush1.bf16.msra.mxu0 0
  %4694 = vmatprep.subr.bf16.mxu0 0
  %4695 = vmatpush1.bf16.msra.mxu0 0
  %4696 = vmatprep.subr.bf16.mxu0 0
  %4697 = vmatpush1.bf16.msra.mxu0 0
  %4698 = vmatprep.subr.bf16.mxu0 0
  %4699 = vmatpush1.bf16.msra.mxu0 0
  %4700 = vmatprep.subr.bf16.mxu0 0
  %4701 = vmatpush1.bf16.msra.mxu0 0
  %4702 = vmatprep.subr.bf16.mxu0 0
  %4703 = vmatpush1.bf16.msra.mxu0 0
  %4704 = vmatprep.subr.bf16.mxu0 0
  %4705 = vmatpush1.bf16.msra.mxu0 0
  %4706 = vmatprep.subr.bf16.mxu0 0
  %4707 = vmatpush1.bf16.msra.mxu0 0
  %4708 = vmatprep.subr.bf16.mxu0 0
  %4709 = vmatpush1.bf16.msra.mxu0 0
  %4710 = vmatprep.subr.bf16.mxu0 0
  %4711 = vmatpush1.bf16.msra.mxu0 0
  %4712 = vmatprep.subr.bf16.mxu0 0
  %4713 = vmatpush1.bf16.msra.mxu0 0
  %4714 = vmatprep.subr.bf16.mxu0 0
  %4715 = vmatpush1.bf16.msra.mxu0 0
  %4716 = vmatprep.mubr.bf16.mxu0 0
  %4717 = vmatmul.mubr.bf16.gmra.mrb[0].mxu0 %v4617
  %v4718 = vpop.f32.mrb[0].mxu0
  %v4719 = vadd.f32 0.0, %v4718
  %v4720 = vpop.f32.mrb[0].mxu0
  %v4721 = vadd.f32 0.0, %v4720
  %v4722 = vpop.f32.mrb[0].mxu0
  %v4723 = vpop.f32.mrb[0].mxu0
  %4724 = vdwg.mxu0
  %4725 = vmatprep.subr.bf16.mxu0 %v4565
  %4726 = vmatpush1.bf16.msra.mxu0 %v4564
  %4727 = vmatprep.subr.bf16.mxu0 %v4573
  %4728 = vmatpush1.bf16.msra.mxu0 %v4572
  %4729 = vmatprep.subr.bf16.mxu0 %v4581
  %4730 = vmatpush1.bf16.msra.mxu0 %v4580
  %4731 = vmatprep.subr.bf16.mxu0 %v4635
  %4732 = vmatpush1.bf16.msra.mxu0 %v4632
  %4733 = vmatprep.subr.bf16.mxu0 0
  %4734 = vmatpush1.bf16.msra.mxu0 0
  %4735 = vmatprep.subr.bf16.mxu0 0
  %4736 = vmatpush1.bf16.msra.mxu0 0
  %4737 = vmatprep.subr.bf16.mxu0 0
  %4738 = vmatpush1.bf16.msra.mxu0 0
  %4739 = vmatprep.subr.bf16.mxu0 0
  %4740 = vmatpush1.bf16.msra.mxu0 0
  %4741 = vmatprep.subr.bf16.mxu0 0
  %4742 = vmatpush1.bf16.msra.mxu0 0
  %4743 = vmatprep.subr.bf16.mxu0 0
  %4744 = vmatpush1.bf16.msra.mxu0 0
  %4745 = vmatprep.subr.bf16.mxu0 0
  %4746 = vmatpush1.bf16.msra.mxu0 0
  %4747 = vmatprep.subr.bf16.mxu0 0
  %4748 = vmatpush1.bf16.msra.mxu0 0
  %4749 = vmatprep.subr.bf16.mxu0 0
  %4750 = vmatpush1.bf16.msra.mxu0 0
  %4751 = vmatprep.subr.bf16.mxu0 0
  %4752 = vmatpush1.bf16.msra.mxu0 0
  %4753 = vmatprep.subr.bf16.mxu0 0
  %4754 = vmatpush1.bf16.msra.mxu0 0
  %4755 = vmatprep.subr.bf16.mxu0 0
  %4756 = vmatpush1.bf16.msra.mxu0 0
  %4757 = vmatprep.mubr.bf16.mxu0 0
  %4758 = vmatmul.mubr.bf16.gmra.mrb[0].mxu0 %v4617
  %v4759 = vpop.f32.mrb[0].mxu0
  %v4760 = vadd.f32 0.0, %v4759
  %v4761 = vpop.f32.mrb[0].mxu0
  %v4762 = vadd.f32 0.0, %v4761
  %v4763 = vpop.f32.mrb[0].mxu0
  %v4764 = vpop.f32.mrb[0].mxu0
  %4765 = vdwg.mxu0
  %4766 = vmatprep.subr.bf16.mxu0 %v4567
  %4767 = vmatpush1.bf16.msra.mxu0 %v4566
  %4768 = vmatprep.subr.bf16.mxu0 %v4575
  %4769 = vmatpush1.bf16.msra.mxu0 %v4574
  %4770 = vmatprep.subr.bf16.mxu0 %v4583
  %4771 = vmatpush1.bf16.msra.mxu0 %v4582
  %4772 = vmatprep.subr.bf16.mxu0 %v4641
  %4773 = vmatpush1.bf16.msra.mxu0 %v4638
  %4774 = vmatprep.subr.bf16.mxu0 0
  %4775 = vmatpush1.bf16.msra.mxu0 0
  %4776 = vmatprep.subr.bf16.mxu0 0
  %4777 = vmatpush1.bf16.msra.mxu0 0
  %4778 = vmatprep.subr.bf16.mxu0 0
  %4779 = vmatpush1.bf16.msra.mxu0 0
  %4780 = vmatprep.subr.bf16.mxu0 0
  %4781 = vmatpush1.bf16.msra.mxu0 0
  %4782 = vmatprep.subr.bf16.mxu0 0
  %4783 = vmatpush1.bf16.msra.mxu0 0
  %4784 = vmatprep.subr.bf16.mxu0 0
  %4785 = vmatpush1.bf16.msra.mxu0 0
  %4786 = vmatprep.subr.bf16.mxu0 0
  %4787 = vmatpush1.bf16.msra.mxu0 0
  %4788 = vmatprep.subr.bf16.mxu0 0
  %4789 = vmatpush1.bf16.msra.mxu0 0
  %4790 = vmatprep.subr.bf16.mxu0 0
  %4791 = vmatpush1.bf16.msra.mxu0 0
  %4792 = vmatprep.subr.bf16.mxu0 0
  %4793 = vmatpush1.bf16.msra.mxu0 0
  %4794 = vmatprep.subr.bf16.mxu0 0
  %4795 = vmatpush1.bf16.msra.mxu0 0
  %4796 = vmatprep.subr.bf16.mxu0 0
  %4797 = vmatpush1.bf16.msra.mxu0 0
  %4798 = vmatprep.mubr.bf16.mxu0 0
  %4799 = vmatmul.mubr.bf16.gmra.mrb[0].mxu0 %v4617
  %v4800 = vpop.f32.mrb[0].mxu0
  %v4801 = vadd.f32 0.0, %v4800
  %v4802 = vpop.f32.mrb[0].mxu0
  %v4803 = vadd.f32 0.0, %v4802
  %v4804 = vpop.f32.mrb[0].mxu0
  %v4805 = vpop.f32.mrb[0].mxu0
  %4806 = vdwg.mxu0
  %v4835 = vunpack.c.l.b16 %v4418
  %v4836 = vunpack.c.h.b16 %v4418
  %v4837 = vunpack.c.l.b16 %v4419
  %v4838 = vunpack.c.h.b16 %v4419
  %v4839 = vunpack.c.l.b16 %v4420
  %v4840 = vunpack.c.h.b16 %v4420
  %v4841 = vunpack.c.l.b16 %v4421
  %v4842 = vunpack.c.h.b16 %v4421
  %v4843 = vunpack.c.l.b16 %v4422
  %v4844 = vunpack.c.h.b16 %v4422
  %v4845 = vunpack.c.l.b16 %v4423
  %v4846 = vunpack.c.h.b16 %v4423
  %v4847 = vunpack.c.l.b16 %v4424
  %v4848 = vunpack.c.h.b16 %v4424
  %v4849 = vunpack.c.l.b16 %v4425
  %v4850 = vunpack.c.h.b16 %v4425
  %v4851 = vunpack.c.l.b16 %v4426
  %v4852 = vunpack.c.h.b16 %v4426
  %v4853 = vunpack.c.l.b16 %v4427
  %v4854 = vunpack.c.h.b16 %v4427
  %v4855 = vunpack.c.l.b16 %v4428
  %v4856 = vunpack.c.h.b16 %v4428
  %v4857 = vunpack.c.l.b16 %v4429
  %v4858 = vunpack.c.h.b16 %v4429
  %v4859 = vunpack.c.l.b16 %v4430
  %v4860 = vunpack.c.h.b16 %v4430
  %v4861 = vunpack.c.l.b16 %v4431
  %v4862 = vunpack.c.h.b16 %v4431
  %v4863 = vunpack.c.l.b16 %v4432
  %v4864 = vunpack.c.h.b16 %v4432
  %v4865 = vunpack.c.l.b16 %v4433
  %v4866 = vunpack.c.h.b16 %v4433
  %v4867 = vunpack.c.l.b16 %v4434
  %v4868 = vunpack.c.h.b16 %v4434
  %v4869 = vunpack.c.l.b16 %v4435
  %v4870 = vunpack.c.h.b16 %v4435
  %v4871 = vunpack.c.l.b16 %v4436
  %v4872 = vunpack.c.h.b16 %v4436
  %v4873 = vunpack.c.l.b16 %v4437
  %v4874 = vunpack.c.h.b16 %v4437
  %v4875 = vunpack.c.l.b16 %v4438
  %v4876 = vunpack.c.h.b16 %v4438
  %v4877 = vunpack.c.l.b16 %v4439
  %v4878 = vunpack.c.h.b16 %v4439
  %v4879 = vunpack.c.l.b16 %v4440
  %v4880 = vunpack.c.h.b16 %v4440
  %v4881 = vunpack.c.l.b16 %v4441
  %v4882 = vunpack.c.h.b16 %v4441
  %v4883 = vunpack.c.l.b16 %v4442
  %v4884 = vunpack.c.h.b16 %v4442
  %v4885 = vunpack.c.l.b16 %v4443
  %v4886 = vunpack.c.h.b16 %v4443
  %v4887 = vunpack.c.l.b16 %v4444
  %v4888 = vunpack.c.h.b16 %v4444
  %v4889 = vunpack.c.l.b16 %v4445
  %v4890 = vunpack.c.h.b16 %v4445
  %v4891 = vpack.c.b16 %v4843, %v4835
  %v4892 = vpack.c.b16 %v4844, %v4836
  %v4893 = vpack.c.b16 %v4845, %v4837
  %v4894 = vpack.c.b16 %v4846, %v4838
  %v4895 = vpack.c.b16 %v4847, %v4839
  %v4896 = vpack.c.b16 %v4848, %v4840
  %v4897 = vpack.c.b16 %v4849, %v4841
  %v4898 = vpack.c.b16 %v4850, %v4842
  %v4899 = vpack.c.b16 %v4859, %v4851
  %v4900 = vpack.c.b16 %v4860, %v4852
  %v4901 = vpack.c.b16 %v4861, %v4853
  %v4902 = vpack.c.b16 %v4862, %v4854
  %v4903 = vpack.c.b16 %v4863, %v4855
  %v4904 = vpack.c.b16 %v4864, %v4856
  %v4905 = vpack.c.b16 %v4865, %v4857
  %v4906 = vpack.c.b16 %v4866, %v4858
  %v4907 = vpack.c.b16 %v4875, %v4867
  %v4908 = vpack.c.b16 %v4876, %v4868
  %v4909 = vpack.c.b16 %v4877, %v4869
  %v4910 = vpack.c.b16 %v4878, %v4870
  %v4911 = vpack.c.b16 %v4879, %v4871
  %v4912 = vpack.c.b16 %v4880, %v4872
  %v4913 = vpack.c.b16 %v4881, %v4873
  %v4914 = vpack.c.b16 %v4882, %v4874
  %v4915 = vpack.c.b16 %v4883, %v4883
  %v4916 = vpack.c.b16 %v4884, %v4884
  %v4917 = vpack.c.b16 %v4885, %v4885
  %v4918 = vpack.c.b16 %v4886, %v4886
  %v4919 = vpack.c.b16 %v4887, %v4887
  %v4920 = vpack.c.b16 %v4888, %v4888
  %v4921 = vpack.c.b16 %v4889, %v4889
  %v4922 = vpack.c.b16 %v4890, %v4890
  %v4948 = vsel %vm3666, %v4417, 0
  %v4951 = vsel %vm3691, %v4915, 0
  %v4954 = vsel %vm3691, %v4916, 0
  %v4957 = vsel %vm3691, %v4917, 0
  %v4960 = vsel %vm3691, %v4918, 0
  %v4963 = vsel %vm3691, %v4919, 0
  %v4966 = vsel %vm3691, %v4920, 0
  %v4969 = vsel %vm3691, %v4921, 0
  %v4972 = vsel %vm3691, %v4922, 0
  %4974 = vmatprep.subr.bf16.mxu0 %v4892
  %4975 = vmatpush1.bf16.msra.mxu0 %v4891
  %4976 = vmatprep.subr.bf16.mxu0 %v4900
  %4977 = vmatpush1.bf16.msra.mxu0 %v4899
  %4978 = vmatprep.subr.bf16.mxu0 %v4908
  %4979 = vmatpush1.bf16.msra.mxu0 %v4907
  %4980 = vmatprep.subr.bf16.mxu0 %v4954
  %4981 = vmatpush1.bf16.msra.mxu0 %v4951
  %4982 = vmatprep.subr.bf16.mxu0 0
  %4983 = vmatpush1.bf16.msra.mxu0 0
  %4984 = vmatprep.subr.bf16.mxu0 0
  %4985 = vmatpush1.bf16.msra.mxu0 0
  %4986 = vmatprep.subr.bf16.mxu0 0
  %4987 = vmatpush1.bf16.msra.mxu0 0
  %4988 = vmatprep.subr.bf16.mxu0 0
  %4989 = vmatpush1.bf16.msra.mxu0 0
  %4990 = vmatprep.subr.bf16.mxu0 0
  %4991 = vmatpush1.bf16.msra.mxu0 0
  %4992 = vmatprep.subr.bf16.mxu0 0
  %4993 = vmatpush1.bf16.msra.mxu0 0
  %4994 = vmatprep.subr.bf16.mxu0 0
  %4995 = vmatpush1.bf16.msra.mxu0 0
  %4996 = vmatprep.subr.bf16.mxu0 0
  %4997 = vmatpush1.bf16.msra.mxu0 0
  %4998 = vmatprep.subr.bf16.mxu0 0
  %4999 = vmatpush1.bf16.msra.mxu0 0
  %5000 = vmatprep.subr.bf16.mxu0 0
  %5001 = vmatpush1.bf16.msra.mxu0 0
  %5002 = vmatprep.subr.bf16.mxu0 0
  %5003 = vmatpush1.bf16.msra.mxu0 0
  %5004 = vmatprep.subr.bf16.mxu0 0
  %5005 = vmatpush1.bf16.msra.mxu0 0
  %5006 = vmatprep.mubr.bf16.mxu0 0
  %5007 = vmatmul.mubr.bf16.gmra.mrb[0].mxu0 %v4948
  %v5008 = vpop.f32.mrb[0].mxu0
  %v5009 = vadd.f32 %v4678, %v5008
  %v5010 = vpop.f32.mrb[0].mxu0
  %v5011 = vadd.f32 %v4680, %v5010
  %v5012 = vpop.f32.mrb[0].mxu0
  %v5013 = vpop.f32.mrb[0].mxu0
  %5014 = vdwg.mxu0
  %5015 = vmatprep.subr.bf16.mxu0 %v4894
  %5016 = vmatpush1.bf16.msra.mxu0 %v4893
  %5017 = vmatprep.subr.bf16.mxu0 %v4902
  %5018 = vmatpush1.bf16.msra.mxu0 %v4901
  %5019 = vmatprep.subr.bf16.mxu0 %v4910
  %5020 = vmatpush1.bf16.msra.mxu0 %v4909
  %5021 = vmatprep.subr.bf16.mxu0 %v4960
  %5022 = vmatpush1.bf16.msra.mxu0 %v4957
  %5023 = vmatprep.subr.bf16.mxu0 0
  %5024 = vmatpush1.bf16.msra.mxu0 0
  %5025 = vmatprep.subr.bf16.mxu0 0
  %5026 = vmatpush1.bf16.msra.mxu0 0
  %5027 = vmatprep.subr.bf16.mxu0 0
  %5028 = vmatpush1.bf16.msra.mxu0 0
  %5029 = vmatprep.subr.bf16.mxu0 0
  %5030 = vmatpush1.bf16.msra.mxu0 0
  %5031 = vmatprep.subr.bf16.mxu0 0
  %5032 = vmatpush1.bf16.msra.mxu0 0
  %5033 = vmatprep.subr.bf16.mxu0 0
  %5034 = vmatpush1.bf16.msra.mxu0 0
  %5035 = vmatprep.subr.bf16.mxu0 0
  %5036 = vmatpush1.bf16.msra.mxu0 0
  %5037 = vmatprep.subr.bf16.mxu0 0
  %5038 = vmatpush1.bf16.msra.mxu0 0
  %5039 = vmatprep.subr.bf16.mxu0 0
  %5040 = vmatpush1.bf16.msra.mxu0 0
  %5041 = vmatprep.subr.bf16.mxu0 0
  %5042 = vmatpush1.bf16.msra.mxu0 0
  %5043 = vmatprep.subr.bf16.mxu0 0
  %5044 = vmatpush1.bf16.msra.mxu0 0
  %5045 = vmatprep.subr.bf16.mxu0 0
  %5046 = vmatpush1.bf16.msra.mxu0 0
  %5047 = vmatprep.mubr.bf16.mxu0 0
  %5048 = vmatmul.mubr.bf16.gmra.mrb[0].mxu0 %v4948
  %v5049 = vpop.f32.mrb[0].mxu0
  %v5050 = vadd.f32 %v4719, %v5049
  %v5051 = vpop.f32.mrb[0].mxu0
  %v5052 = vadd.f32 %v4721, %v5051
  %v5053 = vpop.f32.mrb[0].mxu0
  %v5054 = vpop.f32.mrb[0].mxu0
  %5055 = vdwg.mxu0
  %5056 = vmatprep.subr.bf16.mxu0 %v4896
  %5057 = vmatpush1.bf16.msra.mxu0 %v4895
  %5058 = vmatprep.subr.bf16.mxu0 %v4904
  %5059 = vmatpush1.bf16.msra.mxu0 %v4903
  %5060 = vmatprep.subr.bf16.mxu0 %v4912
  %5061 = vmatpush1.bf16.msra.mxu0 %v4911
  %5062 = vmatprep.subr.bf16.mxu0 %v4966
  %5063 = vmatpush1.bf16.msra.mxu0 %v4963
  %5064 = vmatprep.subr.bf16.mxu0 0
  %5065 = vmatpush1.bf16.msra.mxu0 0
  %5066 = vmatprep.subr.bf16.mxu0 0
  %5067 = vmatpush1.bf16.msra.mxu0 0
  %5068 = vmatprep.subr.bf16.mxu0 0
  %5069 = vmatpush1.bf16.msra.mxu0 0
  %5070 = vmatprep.subr.bf16.mxu0 0
  %5071 = vmatpush1.bf16.msra.mxu0 0
  %5072 = vmatprep.subr.bf16.mxu0 0
  %5073 = vmatpush1.bf16.msra.mxu0 0
  %5074 = vmatprep.subr.bf16.mxu0 0
  %5075 = vmatpush1.bf16.msra.mxu0 0
  %5076 = vmatprep.subr.bf16.mxu0 0
  %5077 = vmatpush1.bf16.msra.mxu0 0
  %5078 = vmatprep.subr.bf16.mxu0 0
  %5079 = vmatpush1.bf16.msra.mxu0 0
  %5080 = vmatprep.subr.bf16.mxu0 0
  %5081 = vmatpush1.bf16.msra.mxu0 0
  %5082 = vmatprep.subr.bf16.mxu0 0
  %5083 = vmatpush1.bf16.msra.mxu0 0
  %5084 = vmatprep.subr.bf16.mxu0 0
  %5085 = vmatpush1.bf16.msra.mxu0 0
  %5086 = vmatprep.subr.bf16.mxu0 0
  %5087 = vmatpush1.bf16.msra.mxu0 0
  %5088 = vmatprep.mubr.bf16.mxu0 0
  %5089 = vmatmul.mubr.bf16.gmra.mrb[0].mxu0 %v4948
  %v5090 = vpop.f32.mrb[0].mxu0
  %v5091 = vadd.f32 %v4760, %v5090
  %v5092 = vpop.f32.mrb[0].mxu0
  %v5093 = vadd.f32 %v4762, %v5092
  %v5094 = vpop.f32.mrb[0].mxu0
  %v5095 = vpop.f32.mrb[0].mxu0
  %5096 = vdwg.mxu0
  %5097 = vmatprep.subr.bf16.mxu0 %v4898
  %5098 = vmatpush1.bf16.msra.mxu0 %v4897
  %5099 = vmatprep.subr.bf16.mxu0 %v4906
  %5100 = vmatpush1.bf16.msra.mxu0 %v4905
  %5101 = vmatprep.subr.bf16.mxu0 %v4914
  %5102 = vmatpush1.bf16.msra.mxu0 %v4913
  %5103 = vmatprep.subr.bf16.mxu0 %v4972
  %5104 = vmatpush1.bf16.msra.mxu0 %v4969
  %5105 = vmatprep.subr.bf16.mxu0 0
  %5106 = vmatpush1.bf16.msra.mxu0 0
  %5107 = vmatprep.subr.bf16.mxu0 0
  %5108 = vmatpush1.bf16.msra.mxu0 0
  %5109 = vmatprep.subr.bf16.mxu0 0
  %5110 = vmatpush1.bf16.msra.mxu0 0
  %5111 = vmatprep.subr.bf16.mxu0 0
  %5112 = vmatpush1.bf16.msra.mxu0 0
  %5113 = vmatprep.subr.bf16.mxu0 0
  %5114 = vmatpush1.bf16.msra.mxu0 0
  %5115 = vmatprep.subr.bf16.mxu0 0
  %5116 = vmatpush1.bf16.msra.mxu0 0
  %5117 = vmatprep.subr.bf16.mxu0 0
  %5118 = vmatpush1.bf16.msra.mxu0 0
  %5119 = vmatprep.subr.bf16.mxu0 0
  %5120 = vmatpush1.bf16.msra.mxu0 0
  %5121 = vmatprep.subr.bf16.mxu0 0
  %5122 = vmatpush1.bf16.msra.mxu0 0
  %5123 = vmatprep.subr.bf16.mxu0 0
  %5124 = vmatpush1.bf16.msra.mxu0 0
  %5125 = vmatprep.subr.bf16.mxu0 0
  %5126 = vmatpush1.bf16.msra.mxu0 0
  %5127 = vmatprep.subr.bf16.mxu0 0
  %5128 = vmatpush1.bf16.msra.mxu0 0
  %5129 = vmatprep.mubr.bf16.mxu0 0
  %5130 = vmatmul.mubr.bf16.gmra.mrb[0].mxu0 %v4948
  %v5131 = vpop.f32.mrb[0].mxu0
  %v5132 = vadd.f32 %v4801, %v5131
  %v5133 = vpop.f32.mrb[0].mxu0
  %v5134 = vadd.f32 %v4803, %v5133
  %v5135 = vpop.f32.mrb[0].mxu0
  %v5136 = vpop.f32.mrb[0].mxu0
  %5137 = vdwg.mxu0
  %v5138 = vpack.c.bf16 %v4403, %v4403
  %s5139 = scalar_lea.vmem %s11, 448
  %v5140 = vld [vmem:[%s5139] sm:$0xff]
  %v5141 = vld [vmem:[%s5139 + $0x8] sm:$0xff]
  %v5142 = vld [vmem:[%s5139 + $0x10] sm:$0xff]
  %v5143 = vld [vmem:[%s5139 + $0x18] sm:$0xff]
  %v5144 = vld [vmem:[%s5139 + $0x20] sm:$0xff]
  %v5145 = vld [vmem:[%s5139 + $0x28] sm:$0xff]
  %v5146 = vld [vmem:[%s5139 + $0x30] sm:$0xff]
  %v5147 = vld [vmem:[%s5139 + $0x38] sm:$0xff]
  %v5148 = vld [vmem:[%s5139 + $0x40] sm:$0xff]
  %v5149 = vld [vmem:[%s5139 + $0x48] sm:$0xff]
  %v5150 = vld [vmem:[%s5139 + $0x50] sm:$0xff]
  %v5151 = vld [vmem:[%s5139 + $0x58] sm:$0xff]
  %v5152 = vld [vmem:[%s5139 + $0x60] sm:$0xff]
  %v5153 = vld [vmem:[%s5139 + $0x68] sm:$0xff]
  %v5154 = vld [vmem:[%s5139 + $0x70] sm:$0xff]
  %v5155 = vld [vmem:[%s5139 + $0x78] sm:$0xff]
  %v5156 = vld [vmem:[%s5139 + $0x80] sm:$0xff]
  %v5157 = vld [vmem:[%s5139 + $0x88] sm:$0xff]
  %v5158 = vld [vmem:[%s5139 + $0x90] sm:$0xff]
  %v5159 = vld [vmem:[%s5139 + $0x98] sm:$0xff]
  %v5160 = vld [vmem:[%s5139 + $0xa0] sm:$0xff]
  %v5161 = vld [vmem:[%s5139 + $0xa8] sm:$0xff]
  %v5162 = vld [vmem:[%s5139 + $0xb0] sm:$0xff]
  %v5163 = vld [vmem:[%s5139 + $0xb8] sm:$0xff]
  %v5164 = vld [vmem:[%s5139 + $0xc0] sm:$0x11]
  %v5165 = vld [vmem:[%s5139 + $0xc8] sm:$0x11]
  %v5166 = vld [vmem:[%s5139 + $0xd0] sm:$0x11]
  %v5167 = vld [vmem:[%s5139 + $0xd8] sm:$0x11]
  %v5196 = vunpack.c.l.b16 %v5140
  %v5197 = vunpack.c.h.b16 %v5140
  %v5198 = vunpack.c.l.b16 %v5141
  %v5199 = vunpack.c.h.b16 %v5141
  %v5200 = vunpack.c.l.b16 %v5142
  %v5201 = vunpack.c.h.b16 %v5142
  %v5202 = vunpack.c.l.b16 %v5143
  %v5203 = vunpack.c.h.b16 %v5143
  %v5204 = vunpack.c.l.b16 %v5144
  %v5205 = vunpack.c.h.b16 %v5144
  %v5206 = vunpack.c.l.b16 %v5145
  %v5207 = vunpack.c.h.b16 %v5145
  %v5208 = vunpack.c.l.b16 %v5146
  %v5209 = vunpack.c.h.b16 %v5146
  %v5210 = vunpack.c.l.b16 %v5147
  %v5211 = vunpack.c.h.b16 %v5147
  %v5212 = vunpack.c.l.b16 %v5148
  %v5213 = vunpack.c.h.b16 %v5148
  %v5214 = vunpack.c.l.b16 %v5149
  %v5215 = vunpack.c.h.b16 %v5149
  %v5216 = vunpack.c.l.b16 %v5150
  %v5217 = vunpack.c.h.b16 %v5150
  %v5218 = vunpack.c.l.b16 %v5151
  %v5219 = vunpack.c.h.b16 %v5151
  %v5220 = vunpack.c.l.b16 %v5152
  %v5221 = vunpack.c.h.b16 %v5152
  %v5222 = vunpack.c.l.b16 %v5153
  %v5223 = vunpack.c.h.b16 %v5153
  %v5224 = vunpack.c.l.b16 %v5154
  %v5225 = vunpack.c.h.b16 %v5154
  %v5226 = vunpack.c.l.b16 %v5155
  %v5227 = vunpack.c.h.b16 %v5155
  %v5228 = vunpack.c.l.b16 %v5156
  %v5229 = vunpack.c.h.b16 %v5156
  %v5230 = vunpack.c.l.b16 %v5157
  %v5231 = vunpack.c.h.b16 %v5157
  %v5232 = vunpack.c.l.b16 %v5158
  %v5233 = vunpack.c.h.b16 %v5158
  %v5234 = vunpack.c.l.b16 %v5159
  %v5235 = vunpack.c.h.b16 %v5159
  %v5236 = vunpack.c.l.b16 %v5160
  %v5237 = vunpack.c.h.b16 %v5160
  %v5238 = vunpack.c.l.b16 %v5161
  %v5239 = vunpack.c.h.b16 %v5161
  %v5240 = vunpack.c.l.b16 %v5162
  %v5241 = vunpack.c.h.b16 %v5162
  %v5242 = vunpack.c.l.b16 %v5163
  %v5243 = vunpack.c.h.b16 %v5163
  %v5244 = vunpack.c.l.b16 %v5164
  %v5245 = vunpack.c.h.b16 %v5164
  %v5246 = vunpack.c.l.b16 %v5165
  %v5247 = vunpack.c.h.b16 %v5165
  %v5248 = vunpack.c.l.b16 %v5166
  %v5249 = vunpack.c.h.b16 %v5166
  %v5250 = vunpack.c.l.b16 %v5167
  %v5251 = vunpack.c.h.b16 %v5167
  %v5252 = vpack.c.b16 %v5204, %v5196
  %v5253 = vpack.c.b16 %v5205, %v5197
  %v5254 = vpack.c.b16 %v5206, %v5198
  %v5255 = vpack.c.b16 %v5207, %v5199
  %v5256 = vpack.c.b16 %v5208, %v5200
  %v5257 = vpack.c.b16 %v5209, %v5201
  %v5258 = vpack.c.b16 %v5210, %v5202
  %v5259 = vpack.c.b16 %v5211, %v5203
  %v5260 = vpack.c.b16 %v5220, %v5212
  %v5261 = vpack.c.b16 %v5221, %v5213
  %v5262 = vpack.c.b16 %v5222, %v5214
  %v5263 = vpack.c.b16 %v5223, %v5215
  %v5264 = vpack.c.b16 %v5224, %v5216
  %v5265 = vpack.c.b16 %v5225, %v5217
  %v5266 = vpack.c.b16 %v5226, %v5218
  %v5267 = vpack.c.b16 %v5227, %v5219
  %v5268 = vpack.c.b16 %v5236, %v5228
  %v5269 = vpack.c.b16 %v5237, %v5229
  %v5270 = vpack.c.b16 %v5238, %v5230
  %v5271 = vpack.c.b16 %v5239, %v5231
  %v5272 = vpack.c.b16 %v5240, %v5232
  %v5273 = vpack.c.b16 %v5241, %v5233
  %v5274 = vpack.c.b16 %v5242, %v5234
  %v5275 = vpack.c.b16 %v5243, %v5235
  %v5276 = vpack.c.b16 %v5244, %v5244
  %v5277 = vpack.c.b16 %v5245, %v5245
  %v5278 = vpack.c.b16 %v5246, %v5246
  %v5279 = vpack.c.b16 %v5247, %v5247
  %v5280 = vpack.c.b16 %v5248, %v5248
  %v5281 = vpack.c.b16 %v5249, %v5249
  %v5282 = vpack.c.b16 %v5250, %v5250
  %v5283 = vpack.c.b16 %v5251, %v5251
  %v5309 = vsel %vm3666, %v5138, 0
  %v5312 = vsel %vm3691, %v5276, 0
  %v5315 = vsel %vm3691, %v5277, 0
  %v5318 = vsel %vm3691, %v5278, 0
  %v5321 = vsel %vm3691, %v5279, 0
  %v5324 = vsel %vm3691, %v5280, 0
  %v5327 = vsel %vm3691, %v5281, 0
  %v5330 = vsel %vm3691, %v5282, 0
  %v5333 = vsel %vm3691, %v5283, 0
  %5335 = vmatprep.subr.bf16.mxu0 %v5253
  %5336 = vmatpush1.bf16.msra.mxu0 %v5252
  %5337 = vmatprep.subr.bf16.mxu0 %v5261
  %5338 = vmatpush1.bf16.msra.mxu0 %v5260
  %5339 = vmatprep.subr.bf16.mxu0 %v5269
  %5340 = vmatpush1.bf16.msra.mxu0 %v5268
  %5341 = vmatprep.subr.bf16.mxu0 %v5315
  %5342 = vmatpush1.bf16.msra.mxu0 %v5312
  %5343 = vmatprep.subr.bf16.mxu0 0
  %5344 = vmatpush1.bf16.msra.mxu0 0
  %5345 = vmatprep.subr.bf16.mxu0 0
  %5346 = vmatpush1.bf16.msra.mxu0 0
  %5347 = vmatprep.subr.bf16.mxu0 0
  %5348 = vmatpush1.bf16.msra.mxu0 0
  %5349 = vmatprep.subr.bf16.mxu0 0
  %5350 = vmatpush1.bf16.msra.mxu0 0
  %5351 = vmatprep.subr.bf16.mxu0 0
  %5352 = vmatpush1.bf16.msra.mxu0 0
  %5353 = vmatprep.subr.bf16.mxu0 0
  %5354 = vmatpush1.bf16.msra.mxu0 0
  %5355 = vmatprep.subr.bf16.mxu0 0
  %5356 = vmatpush1.bf16.msra.mxu0 0
  %5357 = vmatprep.subr.bf16.mxu0 0
  %5358 = vmatpush1.bf16.msra.mxu0 0
  %5359 = vmatprep.subr.bf16.mxu0 0
  %5360 = vmatpush1.bf16.msra.mxu0 0
  %5361 = vmatprep.subr.bf16.mxu0 0
  %5362 = vmatpush1.bf16.msra.mxu0 0
  %5363 = vmatprep.subr.bf16.mxu0 0
  %5364 = vmatpush1.bf16.msra.mxu0 0
  %5365 = vmatprep.subr.bf16.mxu0 0
  %5366 = vmatpush1.bf16.msra.mxu0 0
  %5367 = vmatprep.mubr.bf16.mxu0 0
  %5368 = vmatmul.mubr.bf16.gmra.mrb[0].mxu0 %v5309
  %v5369 = vpop.f32.mrb[0].mxu0
  %v5370 = vadd.f32 0.0, %v5369
  %v5371 = vpop.f32.mrb[0].mxu0
  %v5372 = vadd.f32 0.0, %v5371
  %v5373 = vpop.f32.mrb[0].mxu0
  %v5374 = vpop.f32.mrb[0].mxu0
  %5375 = vdwg.mxu0
  %5376 = vmatprep.subr.bf16.mxu0 %v5255
  %5377 = vmatpush1.bf16.msra.mxu0 %v5254
  %5378 = vmatprep.subr.bf16.mxu0 %v5263
  %5379 = vmatpush1.bf16.msra.mxu0 %v5262
  %5380 = vmatprep.subr.bf16.mxu0 %v5271
  %5381 = vmatpush1.bf16.msra.mxu0 %v5270
  %5382 = vmatprep.subr.bf16.mxu0 %v5321
  %5383 = vmatpush1.bf16.msra.mxu0 %v5318
  %5384 = vmatprep.subr.bf16.mxu0 0
  %5385 = vmatpush1.bf16.msra.mxu0 0
  %5386 = vmatprep.subr.bf16.mxu0 0
  %5387 = vmatpush1.bf16.msra.mxu0 0
  %5388 = vmatprep.subr.bf16.mxu0 0
  %5389 = vmatpush1.bf16.msra.mxu0 0
  %5390 = vmatprep.subr.bf16.mxu0 0
  %5391 = vmatpush1.bf16.msra.mxu0 0
  %5392 = vmatprep.subr.bf16.mxu0 0
  %5393 = vmatpush1.bf16.msra.mxu0 0
  %5394 = vmatprep.subr.bf16.mxu0 0
  %5395 = vmatpush1.bf16.msra.mxu0 0
  %5396 = vmatprep.subr.bf16.mxu0 0
  %5397 = vmatpush1.bf16.msra.mxu0 0
  %5398 = vmatprep.subr.bf16.mxu0 0
  %5399 = vmatpush1.bf16.msra.mxu0 0
  %5400 = vmatprep.subr.bf16.mxu0 0
  %5401 = vmatpush1.bf16.msra.mxu0 0
  %5402 = vmatprep.subr.bf16.mxu0 0
  %5403 = vmatpush1.bf16.msra.mxu0 0
  %5404 = vmatprep.subr.bf16.mxu0 0
  %5405 = vmatpush1.bf16.msra.mxu0 0
  %5406 = vmatprep.subr.bf16.mxu0 0
  %5407 = vmatpush1.bf16.msra.mxu0 0
  %5408 = vmatprep.mubr.bf16.mxu0 0
  %5409 = vmatmul.mubr.bf16.gmra.mrb[0].mxu0 %v5309
  %v5410 = vpop.f32.mrb[0].mxu0
  %v5411 = vadd.f32 0.0, %v5410
  %v5412 = vpop.f32.mrb[0].mxu0
  %v5413 = vadd.f32 0.0, %v5412
  %v5414 = vpop.f32.mrb[0].mxu0
  %v5415 = vpop.f32.mrb[0].mxu0
  %5416 = vdwg.mxu0
  %5417 = vmatprep.subr.bf16.mxu0 %v5257
  %5418 = vmatpush1.bf16.msra.mxu0 %v5256
  %5419 = vmatprep.subr.bf16.mxu0 %v5265
  %5420 = vmatpush1.bf16.msra.mxu0 %v5264
  %5421 = vmatprep.subr.bf16.mxu0 %v5273
  %5422 = vmatpush1.bf16.msra.mxu0 %v5272
  %5423 = vmatprep.subr.bf16.mxu0 %v5327
  %5424 = vmatpush1.bf16.msra.mxu0 %v5324
  %5425 = vmatprep.subr.bf16.mxu0 0
  %5426 = vmatpush1.bf16.msra.mxu0 0
  %5427 = vmatprep.subr.bf16.mxu0 0
  %5428 = vmatpush1.bf16.msra.mxu0 0
  %5429 = vmatprep.subr.bf16.mxu0 0
  %5430 = vmatpush1.bf16.msra.mxu0 0
  %5431 = vmatprep.subr.bf16.mxu0 0
  %5432 = vmatpush1.bf16.msra.mxu0 0
  %5433 = vmatprep.subr.bf16.mxu0 0
  %5434 = vmatpush1.bf16.msra.mxu0 0
  %5435 = vmatprep.subr.bf16.mxu0 0
  %5436 = vmatpush1.bf16.msra.mxu0 0
  %5437 = vmatprep.subr.bf16.mxu0 0
  %5438 = vmatpush1.bf16.msra.mxu0 0
  %5439 = vmatprep.subr.bf16.mxu0 0
  %5440 = vmatpush1.bf16.msra.mxu0 0
  %5441 = vmatprep.subr.bf16.mxu0 0
  %5442 = vmatpush1.bf16.msra.mxu0 0
  %5443 = vmatprep.subr.bf16.mxu0 0
  %5444 = vmatpush1.bf16.msra.mxu0 0
  %5445 = vmatprep.subr.bf16.mxu0 0
  %5446 = vmatpush1.bf16.msra.mxu0 0
  %5447 = vmatprep.subr.bf16.mxu0 0
  %5448 = vmatpush1.bf16.msra.mxu0 0
  %5449 = vmatprep.mubr.bf16.mxu0 0
  %5450 = vmatmul.mubr.bf16.gmra.mrb[0].mxu0 %v5309
  %v5451 = vpop.f32.mrb[0].mxu0
  %v5452 = vadd.f32 0.0, %v5451
  %v5453 = vpop.f32.mrb[0].mxu0
  %v5454 = vadd.f32 0.0, %v5453
  %v5455 = vpop.f32.mrb[0].mxu0
  %v5456 = vpop.f32.mrb[0].mxu0
  %5457 = vdwg.mxu0
  %5458 = vmatprep.subr.bf16.mxu0 %v5259
  %5459 = vmatpush1.bf16.msra.mxu0 %v5258
  %5460 = vmatprep.subr.bf16.mxu0 %v5267
  %5461 = vmatpush1.bf16.msra.mxu0 %v5266
  %5462 = vmatprep.subr.bf16.mxu0 %v5275
  %5463 = vmatpush1.bf16.msra.mxu0 %v5274
  %5464 = vmatprep.subr.bf16.mxu0 %v5333
  %5465 = vmatpush1.bf16.msra.mxu0 %v5330
  %5466 = vmatprep.subr.bf16.mxu0 0
  %5467 = vmatpush1.bf16.msra.mxu0 0
  %5468 = vmatprep.subr.bf16.mxu0 0
  %5469 = vmatpush1.bf16.msra.mxu0 0
  %5470 = vmatprep.subr.bf16.mxu0 0
  %5471 = vmatpush1.bf16.msra.mxu0 0
  %5472 = vmatprep.subr.bf16.mxu0 0
  %5473 = vmatpush1.bf16.msra.mxu0 0
  %5474 = vmatprep.subr.bf16.mxu0 0
  %5475 = vmatpush1.bf16.msra.mxu0 0
  %5476 = vmatprep.subr.bf16.mxu0 0
  %5477 = vmatpush1.bf16.msra.mxu0 0
  %5478 = vmatprep.subr.bf16.mxu0 0
  %5479 = vmatpush1.bf16.msra.mxu0 0
  %5480 = vmatprep.subr.bf16.mxu0 0
  %5481 = vmatpush1.bf16.msra.mxu0 0
  %5482 = vmatprep.subr.bf16.mxu0 0
  %5483 = vmatpush1.bf16.msra.mxu0 0
  %5484 = vmatprep.subr.bf16.mxu0 0
  %5485 = vmatpush1.bf16.msra.mxu0 0
  %5486 = vmatprep.subr.bf16.mxu0 0
  %5487 = vmatpush1.bf16.msra.mxu0 0
  %5488 = vmatprep.subr.bf16.mxu0 0
  %5489 = vmatpush1.bf16.msra.mxu0 0
  %5490 = vmatprep.mubr.bf16.mxu0 0
  %5491 = vmatmul.mubr.bf16.gmra.mrb[0].mxu0 %v5309
  %v5492 = vpop.f32.mrb[0].mxu0
  %v5493 = vadd.f32 0.0, %v5492
  %v5494 = vpop.f32.mrb[0].mxu0
  %v5495 = vadd.f32 0.0, %v5494
  %v5496 = vpop.f32.mrb[0].mxu0
  %v5497 = vpop.f32.mrb[0].mxu0
  %5498 = vdwg.mxu0
  %v5499 = vadd.f32 %v5009, %v5370
  %v5500 = vadd.f32 %v5011, %v5372
  %v5501 = vadd.f32 %v5050, %v5411
  %v5502 = vadd.f32 %v5052, %v5413
  %v5503 = vadd.f32 %v5091, %v5452
  %v5504 = vadd.f32 %v5093, %v5454
  %v5505 = vadd.f32 %v5132, %v5493
  %v5506 = vadd.f32 %v5134, %v5495
  %v5507 = vpack.c.bf16 %v4404, %v4404
  %s5508 = scalar_lea.vmem %s11, 672
  %v5509 = vld [vmem:[%s5508] sm:$0xff]
  %v5510 = vld [vmem:[%s5508 + $0x8] sm:$0xff]
  %v5511 = vld [vmem:[%s5508 + $0x10] sm:$0xff]
  %v5512 = vld [vmem:[%s5508 + $0x18] sm:$0xff]
  %v5513 = vld [vmem:[%s5508 + $0x20] sm:$0xff]
  %v5514 = vld [vmem:[%s5508 + $0x28] sm:$0xff]
  %v5515 = vld [vmem:[%s5508 + $0x30] sm:$0xff]
  %v5516 = vld [vmem:[%s5508 + $0x38] sm:$0xff]
  %v5517 = vld [vmem:[%s5508 + $0x40] sm:$0xff]
  %v5518 = vld [vmem:[%s5508 + $0x48] sm:$0xff]
  %v5519 = vld [vmem:[%s5508 + $0x50] sm:$0xff]
  %v5520 = vld [vmem:[%s5508 + $0x58] sm:$0xff]
  %v5521 = vld [vmem:[%s5508 + $0x60] sm:$0xff]
  %v5522 = vld [vmem:[%s5508 + $0x68] sm:$0xff]
  %v5523 = vld [vmem:[%s5508 + $0x70] sm:$0xff]
  %v5524 = vld [vmem:[%s5508 + $0x78] sm:$0xff]
  %v5525 = vld [vmem:[%s5508 + $0x80] sm:$0xff]
  %v5526 = vld [vmem:[%s5508 + $0x88] sm:$0xff]
  %v5527 = vld [vmem:[%s5508 + $0x90] sm:$0xff]
  %v5528 = vld [vmem:[%s5508 + $0x98] sm:$0xff]
  %v5529 = vld [vmem:[%s5508 + $0xa0] sm:$0xff]
  %v5530 = vld [vmem:[%s5508 + $0xa8] sm:$0xff]
  %v5531 = vld [vmem:[%s5508 + $0xb0] sm:$0xff]
  %v5532 = vld [vmem:[%s5508 + $0xb8] sm:$0xff]
  %v5533 = vld [vmem:[%s5508 + $0xc0] sm:$0x11]
  %v5534 = vld [vmem:[%s5508 + $0xc8] sm:$0x11]
  %v5535 = vld [vmem:[%s5508 + $0xd0] sm:$0x11]
  %v5536 = vld [vmem:[%s5508 + $0xd8] sm:$0x11]
  %v5565 = vunpack.c.l.b16 %v5509
  %v5566 = vunpack.c.h.b16 %v5509
  %v5567 = vunpack.c.l.b16 %v5510
  %v5568 = vunpack.c.h.b16 %v5510
  %v5569 = vunpack.c.l.b16 %v5511
  %v5570 = vunpack.c.h.b16 %v5511
  %v5571 = vunpack.c.l.b16 %v5512
  %v5572 = vunpack.c.h.b16 %v5512
  %v5573 = vunpack.c.l.b16 %v5513
  %v5574 = vunpack.c.h.b16 %v5513
  %v5575 = vunpack.c.l.b16 %v5514
  %v5576 = vunpack.c.h.b16 %v5514
  %v5577 = vunpack.c.l.b16 %v5515
  %v5578 = vunpack.c.h.b16 %v5515
  %v5579 = vunpack.c.l.b16 %v5516
  %v5580 = vunpack.c.h.b16 %v5516
  %v5581 = vunpack.c.l.b16 %v5517
  %v5582 = vunpack.c.h.b16 %v5517
  %v5583 = vunpack.c.l.b16 %v5518
  %v5584 = vunpack.c.h.b16 %v5518
  %v5585 = vunpack.c.l.b16 %v5519
  %v5586 = vunpack.c.h.b16 %v5519
  %v5587 = vunpack.c.l.b16 %v5520
  %v5588 = vunpack.c.h.b16 %v5520
  %v5589 = vunpack.c.l.b16 %v5521
  %v5590 = vunpack.c.h.b16 %v5521
  %v5591 = vunpack.c.l.b16 %v5522
  %v5592 = vunpack.c.h.b16 %v5522
  %v5593 = vunpack.c.l.b16 %v5523
  %v5594 = vunpack.c.h.b16 %v5523
  %v5595 = vunpack.c.l.b16 %v5524
  %v5596 = vunpack.c.h.b16 %v5524
  %v5597 = vunpack.c.l.b16 %v5525
  %v5598 = vunpack.c.h.b16 %v5525
  %v5599 = vunpack.c.l.b16 %v5526
  %v5600 = vunpack.c.h.b16 %v5526
  %v5601 = vunpack.c.l.b16 %v5527
  %v5602 = vunpack.c.h.b16 %v5527
  %v5603 = vunpack.c.l.b16 %v5528
  %v5604 = vunpack.c.h.b16 %v5528
  %v5605 = vunpack.c.l.b16 %v5529
  %v5606 = vunpack.c.h.b16 %v5529
  %v5607 = vunpack.c.l.b16 %v5530
  %v5608 = vunpack.c.h.b16 %v5530
  %v5609 = vunpack.c.l.b16 %v5531
  %v5610 = vunpack.c.h.b16 %v5531
  %v5611 = vunpack.c.l.b16 %v5532
  %v5612 = vunpack.c.h.b16 %v5532
  %v5613 = vunpack.c.l.b16 %v5533
  %v5614 = vunpack.c.h.b16 %v5533
  %v5615 = vunpack.c.l.b16 %v5534
  %v5616 = vunpack.c.h.b16 %v5534
  %v5617 = vunpack.c.l.b16 %v5535
  %v5618 = vunpack.c.h.b16 %v5535
  %v5619 = vunpack.c.l.b16 %v5536
  %v5620 = vunpack.c.h.b16 %v5536
  %v5621 = vpack.c.b16 %v5573, %v5565
  %v5622 = vpack.c.b16 %v5574, %v5566
  %v5623 = vpack.c.b16 %v5575, %v5567
  %v5624 = vpack.c.b16 %v5576, %v5568
  %v5625 = vpack.c.b16 %v5577, %v5569
  %v5626 = vpack.c.b16 %v5578, %v5570
  %v5627 = vpack.c.b16 %v5579, %v5571
  %v5628 = vpack.c.b16 %v5580, %v5572
  %v5629 = vpack.c.b16 %v5589, %v5581
  %v5630 = vpack.c.b16 %v5590, %v5582
  %v5631 = vpack.c.b16 %v5591, %v5583
  %v5632 = vpack.c.b16 %v5592, %v5584
  %v5633 = vpack.c.b16 %v5593, %v5585
  %v5634 = vpack.c.b16 %v5594, %v5586
  %v5635 = vpack.c.b16 %v5595, %v5587
  %v5636 = vpack.c.b16 %v5596, %v5588
  %v5637 = vpack.c.b16 %v5605, %v5597
  %v5638 = vpack.c.b16 %v5606, %v5598
  %v5639 = vpack.c.b16 %v5607, %v5599
  %v5640 = vpack.c.b16 %v5608, %v5600
  %v5641 = vpack.c.b16 %v5609, %v5601
  %v5642 = vpack.c.b16 %v5610, %v5602
  %v5643 = vpack.c.b16 %v5611, %v5603
  %v5644 = vpack.c.b16 %v5612, %v5604
  %v5645 = vpack.c.b16 %v5613, %v5613
  %v5646 = vpack.c.b16 %v5614, %v5614
  %v5647 = vpack.c.b16 %v5615, %v5615
  %v5648 = vpack.c.b16 %v5616, %v5616
  %v5649 = vpack.c.b16 %v5617, %v5617
  %v5650 = vpack.c.b16 %v5618, %v5618
  %v5651 = vpack.c.b16 %v5619, %v5619
  %v5652 = vpack.c.b16 %v5620, %v5620
  %v5678 = vsel %vm3666, %v5507, 0
  %v5681 = vsel %vm3691, %v5645, 0
  %v5684 = vsel %vm3691, %v5646, 0
  %v5687 = vsel %vm3691, %v5647, 0
  %v5690 = vsel %vm3691, %v5648, 0
  %v5693 = vsel %vm3691, %v5649, 0
  %v5696 = vsel %vm3691, %v5650, 0
  %v5699 = vsel %vm3691, %v5651, 0
  %v5702 = vsel %vm3691, %v5652, 0
  %5704 = vmatprep.subr.bf16.mxu0 %v5622
  %5705 = vmatpush1.bf16.msra.mxu0 %v5621
  %5706 = vmatprep.subr.bf16.mxu0 %v5630
  %5707 = vmatpush1.bf16.msra.mxu0 %v5629
  %5708 = vmatprep.subr.bf16.mxu0 %v5638
  %5709 = vmatpush1.bf16.msra.mxu0 %v5637
  %5710 = vmatprep.subr.bf16.mxu0 %v5684
  %5711 = vmatpush1.bf16.msra.mxu0 %v5681
  %5712 = vmatprep.subr.bf16.mxu0 0
  %5713 = vmatpush1.bf16.msra.mxu0 0
  %5714 = vmatprep.subr.bf16.mxu0 0
  %5715 = vmatpush1.bf16.msra.mxu0 0
  %5716 = vmatprep.subr.bf16.mxu0 0
  %5717 = vmatpush1.bf16.msra.mxu0 0
  %5718 = vmatprep.subr.bf16.mxu0 0
  %5719 = vmatpush1.bf16.msra.mxu0 0
  %5720 = vmatprep.subr.bf16.mxu0 0
  %5721 = vmatpush1.bf16.msra.mxu0 0
  %5722 = vmatprep.subr.bf16.mxu0 0
  %5723 = vmatpush1.bf16.msra.mxu0 0
  %5724 = vmatprep.subr.bf16.mxu0 0
  %5725 = vmatpush1.bf16.msra.mxu0 0
  %5726 = vmatprep.subr.bf16.mxu0 0
  %5727 = vmatpush1.bf16.msra.mxu0 0
  %5728 = vmatprep.subr.bf16.mxu0 0
  %5729 = vmatpush1.bf16.msra.mxu0 0
  %5730 = vmatprep.subr.bf16.mxu0 0
  %5731 = vmatpush1.bf16.msra.mxu0 0
  %5732 = vmatprep.subr.bf16.mxu0 0
  %5733 = vmatpush1.bf16.msra.mxu0 0
  %5734 = vmatprep.subr.bf16.mxu0 0
  %5735 = vmatpush1.bf16.msra.mxu0 0
  %5736 = vmatprep.mubr.bf16.mxu0 0
  %5737 = vmatmul.mubr.bf16.gmra.mrb[0].mxu0 %v5678
  %v5738 = vpop.f32.mrb[0].mxu0
  %v5739 = vadd.f32 0.0, %v5738
  %v5740 = vpop.f32.mrb[0].mxu0
  %v5741 = vadd.f32 0.0, %v5740
  %v5742 = vpop.f32.mrb[0].mxu0
  %v5743 = vpop.f32.mrb[0].mxu0
  %5744 = vdwg.mxu0
  %5745 = vmatprep.subr.bf16.mxu0 %v5624
  %5746 = vmatpush1.bf16.msra.mxu0 %v5623
  %5747 = vmatprep.subr.bf16.mxu0 %v5632
  %5748 = vmatpush1.bf16.msra.mxu0 %v5631
  %5749 = vmatprep.subr.bf16.mxu0 %v5640
  %5750 = vmatpush1.bf16.msra.mxu0 %v5639
  %5751 = vmatprep.subr.bf16.mxu0 %v5690
  %5752 = vmatpush1.bf16.msra.mxu0 %v5687
  %5753 = vmatprep.subr.bf16.mxu0 0
  %5754 = vmatpush1.bf16.msra.mxu0 0
  %5755 = vmatprep.subr.bf16.mxu0 0
  %5756 = vmatpush1.bf16.msra.mxu0 0
  %5757 = vmatprep.subr.bf16.mxu0 0
  %5758 = vmatpush1.bf16.msra.mxu0 0
  %5759 = vmatprep.subr.bf16.mxu0 0
  %5760 = vmatpush1.bf16.msra.mxu0 0
  %5761 = vmatprep.subr.bf16.mxu0 0
  %5762 = vmatpush1.bf16.msra.mxu0 0
  %5763 = vmatprep.subr.bf16.mxu0 0
  %5764 = vmatpush1.bf16.msra.mxu0 0
  %5765 = vmatprep.subr.bf16.mxu0 0
  %5766 = vmatpush1.bf16.msra.mxu0 0
  %5767 = vmatprep.subr.bf16.mxu0 0
  %5768 = vmatpush1.bf16.msra.mxu0 0
  %5769 = vmatprep.subr.bf16.mxu0 0
  %5770 = vmatpush1.bf16.msra.mxu0 0
  %5771 = vmatprep.subr.bf16.mxu0 0
  %5772 = vmatpush1.bf16.msra.mxu0 0
  %5773 = vmatprep.subr.bf16.mxu0 0
  %5774 = vmatpush1.bf16.msra.mxu0 0
  %5775 = vmatprep.subr.bf16.mxu0 0
  %5776 = vmatpush1.bf16.msra.mxu0 0
  %5777 = vmatprep.mubr.bf16.mxu0 0
  %5778 = vmatmul.mubr.bf16.gmra.mrb[0].mxu0 %v5678
  %v5779 = vpop.f32.mrb[0].mxu0
  %v5780 = vadd.f32 0.0, %v5779
  %v5781 = vpop.f32.mrb[0].mxu0
  %v5782 = vadd.f32 0.0, %v5781
  %v5783 = vpop.f32.mrb[0].mxu0
  %v5784 = vpop.f32.mrb[0].mxu0
  %5785 = vdwg.mxu0
  %5786 = vmatprep.subr.bf16.mxu0 %v5626
  %5787 = vmatpush1.bf16.msra.mxu0 %v5625
  %5788 = vmatprep.subr.bf16.mxu0 %v5634
  %5789 = vmatpush1.bf16.msra.mxu0 %v5633
  %5790 = vmatprep.subr.bf16.mxu0 %v5642
  %5791 = vmatpush1.bf16.msra.mxu0 %v5641
  %5792 = vmatprep.subr.bf16.mxu0 %v5696
  %5793 = vmatpush1.bf16.msra.mxu0 %v5693
  %5794 = vmatprep.subr.bf16.mxu0 0
  %5795 = vmatpush1.bf16.msra.mxu0 0
  %5796 = vmatprep.subr.bf16.mxu0 0
  %5797 = vmatpush1.bf16.msra.mxu0 0
  %5798 = vmatprep.subr.bf16.mxu0 0
  %5799 = vmatpush1.bf16.msra.mxu0 0
  %5800 = vmatprep.subr.bf16.mxu0 0
  %5801 = vmatpush1.bf16.msra.mxu0 0
  %5802 = vmatprep.subr.bf16.mxu0 0
  %5803 = vmatpush1.bf16.msra.mxu0 0
  %5804 = vmatprep.subr.bf16.mxu0 0
  %5805 = vmatpush1.bf16.msra.mxu0 0
  %5806 = vmatprep.subr.bf16.mxu0 0
  %5807 = vmatpush1.bf16.msra.mxu0 0
  %5808 = vmatprep.subr.bf16.mxu0 0
  %5809 = vmatpush1.bf16.msra.mxu0 0
  %5810 = vmatprep.subr.bf16.mxu0 0
  %5811 = vmatpush1.bf16.msra.mxu0 0
  %5812 = vmatprep.subr.bf16.mxu0 0
  %5813 = vmatpush1.bf16.msra.mxu0 0
  %5814 = vmatprep.subr.bf16.mxu0 0
  %5815 = vmatpush1.bf16.msra.mxu0 0
  %5816 = vmatprep.subr.bf16.mxu0 0
  %5817 = vmatpush1.bf16.msra.mxu0 0
  %5818 = vmatprep.mubr.bf16.mxu0 0
  %5819 = vmatmul.mubr.bf16.gmra.mrb[0].mxu0 %v5678
  %v5820 = vpop.f32.mrb[0].mxu0
  %v5821 = vadd.f32 0.0, %v5820
  %v5822 = vpop.f32.mrb[0].mxu0
  %v5823 = vadd.f32 0.0, %v5822
  %v5824 = vpop.f32.mrb[0].mxu0
  %v5825 = vpop.f32.mrb[0].mxu0
  %5826 = vdwg.mxu0
  %5827 = vmatprep.subr.bf16.mxu0 %v5628
  %5828 = vmatpush1.bf16.msra.mxu0 %v5627
  %5829 = vmatprep.subr.bf16.mxu0 %v5636
  %5830 = vmatpush1.bf16.msra.mxu0 %v5635
  %5831 = vmatprep.subr.bf16.mxu0 %v5644
  %5832 = vmatpush1.bf16.msra.mxu0 %v5643
  %5833 = vmatprep.subr.bf16.mxu0 %v5702
  %5834 = vmatpush1.bf16.msra.mxu0 %v5699
  %5835 = vmatprep.subr.bf16.mxu0 0
  %5836 = vmatpush1.bf16.msra.mxu0 0
  %5837 = vmatprep.subr.bf16.mxu0 0
  %5838 = vmatpush1.bf16.msra.mxu0 0
  %5839 = vmatprep.subr.bf16.mxu0 0
  %5840 = vmatpush1.bf16.msra.mxu0 0
  %5841 = vmatprep.subr.bf16.mxu0 0
  %5842 = vmatpush1.bf16.msra.mxu0 0
  %5843 = vmatprep.subr.bf16.mxu0 0
  %5844 = vmatpush1.bf16.msra.mxu0 0
  %5845 = vmatprep.subr.bf16.mxu0 0
  %5846 = vmatpush1.bf16.msra.mxu0 0
  %5847 = vmatprep.subr.bf16.mxu0 0
  %5848 = vmatpush1.bf16.msra.mxu0 0
  %5849 = vmatprep.subr.bf16.mxu0 0
  %5850 = vmatpush1.bf16.msra.mxu0 0
  %5851 = vmatprep.subr.bf16.mxu0 0
  %5852 = vmatpush1.bf16.msra.mxu0 0
  %5853 = vmatprep.subr.bf16.mxu0 0
  %5854 = vmatpush1.bf16.msra.mxu0 0
  %5855 = vmatprep.subr.bf16.mxu0 0
  %5856 = vmatpush1.bf16.msra.mxu0 0
  %5857 = vmatprep.subr.bf16.mxu0 0
  %5858 = vmatpush1.bf16.msra.mxu0 0
  %5859 = vmatprep.mubr.bf16.mxu0 0
  %5860 = vmatmul.mubr.bf16.gmra.mrb[0].mxu0 %v5678
  %v5861 = vpop.f32.mrb[0].mxu0
  %v5862 = vadd.f32 0.0, %v5861
  %v5863 = vpop.f32.mrb[0].mxu0
  %v5864 = vadd.f32 0.0, %v5863
  %v5865 = vpop.f32.mrb[0].mxu0
  %v5866 = vpop.f32.mrb[0].mxu0
  %5867 = vdwg.mxu0
  %v5868 = vadd.f32 %v5499, %v5739
  %v5869 = vadd.f32 %v5500, %v5741
  %v5870 = vadd.f32 %v5501, %v5780
  %v5871 = vadd.f32 %v5502, %v5782
  %v5872 = vadd.f32 %v5503, %v5821
  %v5873 = vadd.f32 %v5504, %v5823
  %v5874 = vadd.f32 %v5505, %v5862
  %v5875 = vadd.f32 %v5506, %v5864
  %v5876 = vpack.c.bf16 %v4405, %v4405
  %s5877 = scalar_lea.vmem %s11, 896
  %v5878 = vld [vmem:[%s5877] sm:$0xff]
  %v5879 = vld [vmem:[%s5877 + $0x8] sm:$0xff]
  %v5880 = vld [vmem:[%s5877 + $0x10] sm:$0xff]
  %v5881 = vld [vmem:[%s5877 + $0x18] sm:$0xff]
  %v5882 = vld [vmem:[%s5877 + $0x20] sm:$0xff]
  %v5883 = vld [vmem:[%s5877 + $0x28] sm:$0xff]
  %v5884 = vld [vmem:[%s5877 + $0x30] sm:$0xff]
  %v5885 = vld [vmem:[%s5877 + $0x38] sm:$0xff]
  %v5886 = vld [vmem:[%s5877 + $0x40] sm:$0xff]
  %v5887 = vld [vmem:[%s5877 + $0x48] sm:$0xff]
  %v5888 = vld [vmem:[%s5877 + $0x50] sm:$0xff]
  %v5889 = vld [vmem:[%s5877 + $0x58] sm:$0xff]
  %v5890 = vld [vmem:[%s5877 + $0x60] sm:$0xff]
  %v5891 = vld [vmem:[%s5877 + $0x68] sm:$0xff]
  %v5892 = vld [vmem:[%s5877 + $0x70] sm:$0xff]
  %v5893 = vld [vmem:[%s5877 + $0x78] sm:$0xff]
  %v5894 = vld [vmem:[%s5877 + $0x80] sm:$0xff]
  %v5895 = vld [vmem:[%s5877 + $0x88] sm:$0xff]
  %v5896 = vld [vmem:[%s5877 + $0x90] sm:$0xff]
  %v5897 = vld [vmem:[%s5877 + $0x98] sm:$0xff]
  %v5898 = vld [vmem:[%s5877 + $0xa0] sm:$0xff]
  %v5899 = vld [vmem:[%s5877 + $0xa8] sm:$0xff]
  %v5900 = vld [vmem:[%s5877 + $0xb0] sm:$0xff]
  %v5901 = vld [vmem:[%s5877 + $0xb8] sm:$0xff]
  %v5902 = vld [vmem:[%s5877 + $0xc0] sm:$0x11]
  %v5903 = vld [vmem:[%s5877 + $0xc8] sm:$0x11]
  %v5904 = vld [vmem:[%s5877 + $0xd0] sm:$0x11]
  %v5905 = vld [vmem:[%s5877 + $0xd8] sm:$0x11]
  %v5934 = vunpack.c.l.b16 %v5878
  %v5935 = vunpack.c.h.b16 %v5878
  %v5936 = vunpack.c.l.b16 %v5879
  %v5937 = vunpack.c.h.b16 %v5879
  %v5938 = vunpack.c.l.b16 %v5880
  %v5939 = vunpack.c.h.b16 %v5880
  %v5940 = vunpack.c.l.b16 %v5881
  %v5941 = vunpack.c.h.b16 %v5881
  %v5942 = vunpack.c.l.b16 %v5882
  %v5943 = vunpack.c.h.b16 %v5882
  %v5944 = vunpack.c.l.b16 %v5883
  %v5945 = vunpack.c.h.b16 %v5883
  %v5946 = vunpack.c.l.b16 %v5884
  %v5947 = vunpack.c.h.b16 %v5884
  %v5948 = vunpack.c.l.b16 %v5885
  %v5949 = vunpack.c.h.b16 %v5885
  %v5950 = vunpack.c.l.b16 %v5886
  %v5951 = vunpack.c.h.b16 %v5886
  %v5952 = vunpack.c.l.b16 %v5887
  %v5953 = vunpack.c.h.b16 %v5887
  %v5954 = vunpack.c.l.b16 %v5888
  %v5955 = vunpack.c.h.b16 %v5888
  %v5956 = vunpack.c.l.b16 %v5889
  %v5957 = vunpack.c.h.b16 %v5889
  %v5958 = vunpack.c.l.b16 %v5890
  %v5959 = vunpack.c.h.b16 %v5890
  %v5960 = vunpack.c.l.b16 %v5891
  %v5961 = vunpack.c.h.b16 %v5891
  %v5962 = vunpack.c.l.b16 %v5892
  %v5963 = vunpack.c.h.b16 %v5892
  %v5964 = vunpack.c.l.b16 %v5893
  %v5965 = vunpack.c.h.b16 %v5893
  %v5966 = vunpack.c.l.b16 %v5894
  %v5967 = vunpack.c.h.b16 %v5894
  %v5968 = vunpack.c.l.b16 %v5895
  %v5969 = vunpack.c.h.b16 %v5895
  %v5970 = vunpack.c.l.b16 %v5896
  %v5971 = vunpack.c.h.b16 %v5896
  %v5972 = vunpack.c.l.b16 %v5897
  %v5973 = vunpack.c.h.b16 %v5897
  %v5974 = vunpack.c.l.b16 %v5898
  %v5975 = vunpack.c.h.b16 %v5898
  %v5976 = vunpack.c.l.b16 %v5899
  %v5977 = vunpack.c.h.b16 %v5899
  %v5978 = vunpack.c.l.b16 %v5900
  %v5979 = vunpack.c.h.b16 %v5900
  %v5980 = vunpack.c.l.b16 %v5901
  %v5981 = vunpack.c.h.b16 %v5901
  %v5982 = vunpack.c.l.b16 %v5902
  %v5983 = vunpack.c.h.b16 %v5902
  %v5984 = vunpack.c.l.b16 %v5903
  %v5985 = vunpack.c.h.b16 %v5903
  %v5986 = vunpack.c.l.b16 %v5904
  %v5987 = vunpack.c.h.b16 %v5904
  %v5988 = vunpack.c.l.b16 %v5905
  %v5989 = vunpack.c.h.b16 %v5905
  %v5990 = vpack.c.b16 %v5942, %v5934
  %v5991 = vpack.c.b16 %v5943, %v5935
  %v5992 = vpack.c.b16 %v5944, %v5936
  %v5993 = vpack.c.b16 %v5945, %v5937
  %v5994 = vpack.c.b16 %v5946, %v5938
  %v5995 = vpack.c.b16 %v5947, %v5939
  %v5996 = vpack.c.b16 %v5948, %v5940
  %v5997 = vpack.c.b16 %v5949, %v5941
  %v5998 = vpack.c.b16 %v5958, %v5950
  %v5999 = vpack.c.b16 %v5959, %v5951
  %v6000 = vpack.c.b16 %v5960, %v5952
  %v6001 = vpack.c.b16 %v5961, %v5953
  %v6002 = vpack.c.b16 %v5962, %v5954
  %v6003 = vpack.c.b16 %v5963, %v5955
  %v6004 = vpack.c.b16 %v5964, %v5956
  %v6005 = vpack.c.b16 %v5965, %v5957
  %v6006 = vpack.c.b16 %v5974, %v5966
  %v6007 = vpack.c.b16 %v5975, %v5967
  %v6008 = vpack.c.b16 %v5976, %v5968
  %v6009 = vpack.c.b16 %v5977, %v5969
  %v6010 = vpack.c.b16 %v5978, %v5970
  %v6011 = vpack.c.b16 %v5979, %v5971
  %v6012 = vpack.c.b16 %v5980, %v5972
  %v6013 = vpack.c.b16 %v5981, %v5973
  %v6014 = vpack.c.b16 %v5982, %v5982
  %v6015 = vpack.c.b16 %v5983, %v5983
  %v6016 = vpack.c.b16 %v5984, %v5984
  %v6017 = vpack.c.b16 %v5985, %v5985
  %v6018 = vpack.c.b16 %v5986, %v5986
  %v6019 = vpack.c.b16 %v5987, %v5987
  %v6020 = vpack.c.b16 %v5988, %v5988
  %v6021 = vpack.c.b16 %v5989, %v5989
  %v6047 = vsel %vm3666, %v5876, 0
  %v6050 = vsel %vm3691, %v6014, 0
  %v6053 = vsel %vm3691, %v6015, 0
  %v6056 = vsel %vm3691, %v6016, 0
  %v6059 = vsel %vm3691, %v6017, 0
  %v6062 = vsel %vm3691, %v6018, 0
  %v6065 = vsel %vm3691, %v6019, 0
  %v6068 = vsel %vm3691, %v6020, 0
  %v6071 = vsel %vm3691, %v6021, 0
  %6073 = vmatprep.subr.bf16.mxu0 %v5991
  %6074 = vmatpush1.bf16.msra.mxu0 %v5990
  %6075 = vmatprep.subr.bf16.mxu0 %v5999
  %6076 = vmatpush1.bf16.msra.mxu0 %v5998
  %6077 = vmatprep.subr.bf16.mxu0 %v6007
  %6078 = vmatpush1.bf16.msra.mxu0 %v6006
  %6079 = vmatprep.subr.bf16.mxu0 %v6053
  %6080 = vmatpush1.bf16.msra.mxu0 %v6050
  %6081 = vmatprep.subr.bf16.mxu0 0
  %6082 = vmatpush1.bf16.msra.mxu0 0
  %6083 = vmatprep.subr.bf16.mxu0 0
  %6084 = vmatpush1.bf16.msra.mxu0 0
  %6085 = vmatprep.subr.bf16.mxu0 0
  %6086 = vmatpush1.bf16.msra.mxu0 0
  %6087 = vmatprep.subr.bf16.mxu0 0
  %6088 = vmatpush1.bf16.msra.mxu0 0
  %6089 = vmatprep.subr.bf16.mxu0 0
  %6090 = vmatpush1.bf16.msra.mxu0 0
  %6091 = vmatprep.subr.bf16.mxu0 0
  %6092 = vmatpush1.bf16.msra.mxu0 0
  %6093 = vmatprep.subr.bf16.mxu0 0
  %6094 = vmatpush1.bf16.msra.mxu0 0
  %6095 = vmatprep.subr.bf16.mxu0 0
  %6096 = vmatpush1.bf16.msra.mxu0 0
  %6097 = vmatprep.subr.bf16.mxu0 0
  %6098 = vmatpush1.bf16.msra.mxu0 0
  %6099 = vmatprep.subr.bf16.mxu0 0
  %6100 = vmatpush1.bf16.msra.mxu0 0
  %6101 = vmatprep.subr.bf16.mxu0 0
  %6102 = vmatpush1.bf16.msra.mxu0 0
  %6103 = vmatprep.subr.bf16.mxu0 0
  %6104 = vmatpush1.bf16.msra.mxu0 0
  %6105 = vmatprep.mubr.bf16.mxu0 0
  %6106 = vmatmul.mubr.bf16.gmra.mrb[0].mxu0 %v6047
  %v6107 = vpop.f32.mrb[0].mxu0
  %v6108 = vadd.f32 0.0, %v6107
  %v6109 = vpop.f32.mrb[0].mxu0
  %v6110 = vadd.f32 0.0, %v6109
  %v6111 = vpop.f32.mrb[0].mxu0
  %v6112 = vpop.f32.mrb[0].mxu0
  %6113 = vdwg.mxu0
  %6114 = vmatprep.subr.bf16.mxu0 %v5993
  %6115 = vmatpush1.bf16.msra.mxu0 %v5992
  %6116 = vmatprep.subr.bf16.mxu0 %v6001
  %6117 = vmatpush1.bf16.msra.mxu0 %v6000
  %6118 = vmatprep.subr.bf16.mxu0 %v6009
  %6119 = vmatpush1.bf16.msra.mxu0 %v6008
  %6120 = vmatprep.subr.bf16.mxu0 %v6059
  %6121 = vmatpush1.bf16.msra.mxu0 %v6056
  %6122 = vmatprep.subr.bf16.mxu0 0
  %6123 = vmatpush1.bf16.msra.mxu0 0
  %6124 = vmatprep.subr.bf16.mxu0 0
  %6125 = vmatpush1.bf16.msra.mxu0 0
  %6126 = vmatprep.subr.bf16.mxu0 0
  %6127 = vmatpush1.bf16.msra.mxu0 0
  %6128 = vmatprep.subr.bf16.mxu0 0
  %6129 = vmatpush1.bf16.msra.mxu0 0
  %6130 = vmatprep.subr.bf16.mxu0 0
  %6131 = vmatpush1.bf16.msra.mxu0 0
  %6132 = vmatprep.subr.bf16.mxu0 0
  %6133 = vmatpush1.bf16.msra.mxu0 0
  %6134 = vmatprep.subr.bf16.mxu0 0
  %6135 = vmatpush1.bf16.msra.mxu0 0
  %6136 = vmatprep.subr.bf16.mxu0 0
  %6137 = vmatpush1.bf16.msra.mxu0 0
  %6138 = vmatprep.subr.bf16.mxu0 0
  %6139 = vmatpush1.bf16.msra.mxu0 0
  %6140 = vmatprep.subr.bf16.mxu0 0
  %6141 = vmatpush1.bf16.msra.mxu0 0
  %6142 = vmatprep.subr.bf16.mxu0 0
  %6143 = vmatpush1.bf16.msra.mxu0 0
  %6144 = vmatprep.subr.bf16.mxu0 0
  %6145 = vmatpush1.bf16.msra.mxu0 0
  %6146 = vmatprep.mubr.bf16.mxu0 0
  %6147 = vmatmul.mubr.bf16.gmra.mrb[0].mxu0 %v6047
  %v6148 = vpop.f32.mrb[0].mxu0
  %v6149 = vadd.f32 0.0, %v6148
  %v6150 = vpop.f32.mrb[0].mxu0
  %v6151 = vadd.f32 0.0, %v6150
  %v6152 = vpop.f32.mrb[0].mxu0
  %v6153 = vpop.f32.mrb[0].mxu0
  %6154 = vdwg.mxu0
  %6155 = vmatprep.subr.bf16.mxu0 %v5995
  %6156 = vmatpush1.bf16.msra.mxu0 %v5994
  %6157 = vmatprep.subr.bf16.mxu0 %v6003
  %6158 = vmatpush1.bf16.msra.mxu0 %v6002
  %6159 = vmatprep.subr.bf16.mxu0 %v6011
  %6160 = vmatpush1.bf16.msra.mxu0 %v6010
  %6161 = vmatprep.subr.bf16.mxu0 %v6065
  %6162 = vmatpush1.bf16.msra.mxu0 %v6062
  %6163 = vmatprep.subr.bf16.mxu0 0
  %6164 = vmatpush1.bf16.msra.mxu0 0
  %6165 = vmatprep.subr.bf16.mxu0 0
  %6166 = vmatpush1.bf16.msra.mxu0 0
  %6167 = vmatprep.subr.bf16.mxu0 0
  %6168 = vmatpush1.bf16.msra.mxu0 0
  %6169 = vmatprep.subr.bf16.mxu0 0
  %6170 = vmatpush1.bf16.msra.mxu0 0
  %6171 = vmatprep.subr.bf16.mxu0 0
  %6172 = vmatpush1.bf16.msra.mxu0 0
  %6173 = vmatprep.subr.bf16.mxu0 0
  %6174 = vmatpush1.bf16.msra.mxu0 0
  %6175 = vmatprep.subr.bf16.mxu0 0
  %6176 = vmatpush1.bf16.msra.mxu0 0
  %6177 = vmatprep.subr.bf16.mxu0 0
  %6178 = vmatpush1.bf16.msra.mxu0 0
  %6179 = vmatprep.subr.bf16.mxu0 0
  %6180 = vmatpush1.bf16.msra.mxu0 0
  %6181 = vmatprep.subr.bf16.mxu0 0
  %6182 = vmatpush1.bf16.msra.mxu0 0
  %6183 = vmatprep.subr.bf16.mxu0 0
  %6184 = vmatpush1.bf16.msra.mxu0 0
  %6185 = vmatprep.subr.bf16.mxu0 0
  %6186 = vmatpush1.bf16.msra.mxu0 0
  %6187 = vmatprep.mubr.bf16.mxu0 0
  %6188 = vmatmul.mubr.bf16.gmra.mrb[0].mxu0 %v6047
  %v6189 = vpop.f32.mrb[0].mxu0
  %v6190 = vadd.f32 0.0, %v6189
  %v6191 = vpop.f32.mrb[0].mxu0
  %v6192 = vadd.f32 0.0, %v6191
  %v6193 = vpop.f32.mrb[0].mxu0
  %v6194 = vpop.f32.mrb[0].mxu0
  %6195 = vdwg.mxu0
  %6196 = vmatprep.subr.bf16.mxu0 %v5997
  %6197 = vmatpush1.bf16.msra.mxu0 %v5996
  %6198 = vmatprep.subr.bf16.mxu0 %v6005
  %6199 = vmatpush1.bf16.msra.mxu0 %v6004
  %6200 = vmatprep.subr.bf16.mxu0 %v6013
  %6201 = vmatpush1.bf16.msra.mxu0 %v6012
  %6202 = vmatprep.subr.bf16.mxu0 %v6071
  %6203 = vmatpush1.bf16.msra.mxu0 %v6068
  %6204 = vmatprep.subr.bf16.mxu0 0
  %6205 = vmatpush1.bf16.msra.mxu0 0
  %6206 = vmatprep.subr.bf16.mxu0 0
  %6207 = vmatpush1.bf16.msra.mxu0 0
  %6208 = vmatprep.subr.bf16.mxu0 0
  %6209 = vmatpush1.bf16.msra.mxu0 0
  %6210 = vmatprep.subr.bf16.mxu0 0
  %6211 = vmatpush1.bf16.msra.mxu0 0
  %6212 = vmatprep.subr.bf16.mxu0 0
  %6213 = vmatpush1.bf16.msra.mxu0 0
  %6214 = vmatprep.subr.bf16.mxu0 0
  %6215 = vmatpush1.bf16.msra.mxu0 0
  %6216 = vmatprep.subr.bf16.mxu0 0
  %6217 = vmatpush1.bf16.msra.mxu0 0
  %6218 = vmatprep.subr.bf16.mxu0 0
  %6219 = vmatpush1.bf16.msra.mxu0 0
  %6220 = vmatprep.subr.bf16.mxu0 0
  %6221 = vmatpush1.bf16.msra.mxu0 0
  %6222 = vmatprep.subr.bf16.mxu0 0
  %6223 = vmatpush1.bf16.msra.mxu0 0
  %6224 = vmatprep.subr.bf16.mxu0 0
  %6225 = vmatpush1.bf16.msra.mxu0 0
  %6226 = vmatprep.subr.bf16.mxu0 0
  %6227 = vmatpush1.bf16.msra.mxu0 0
  %6228 = vmatprep.mubr.bf16.mxu0 0
  %6229 = vmatmul.mubr.bf16.gmra.mrb[0].mxu0 %v6047
  %v6230 = vpop.f32.mrb[0].mxu0
  %v6231 = vadd.f32 0.0, %v6230
  %v6232 = vpop.f32.mrb[0].mxu0
  %v6233 = vadd.f32 0.0, %v6232
  %v6234 = vpop.f32.mrb[0].mxu0
  %v6235 = vpop.f32.mrb[0].mxu0
  %6236 = vdwg.mxu0
  %v6237 = vadd.f32 %v5868, %v6108
  %v6238 = vadd.f32 %v5869, %v6110
  %v6239 = vadd.f32 %v5870, %v6149
  %v6240 = vadd.f32 %v5871, %v6151
  %v6241 = vadd.f32 %v5872, %v6190
  %v6242 = vadd.f32 %v5873, %v6192
  %v6243 = vadd.f32 %v5874, %v6231
  %v6244 = vadd.f32 %v5875, %v6233
  %v6245 = vpack.c.bf16 %v4406, %v4406
  %s6246 = scalar_lea.vmem %s11, 1120
  %v6247 = vld [vmem:[%s6246] sm:$0xff]
  %v6248 = vld [vmem:[%s6246 + $0x8] sm:$0xff]
  %v6249 = vld [vmem:[%s6246 + $0x10] sm:$0xff]
  %v6250 = vld [vmem:[%s6246 + $0x18] sm:$0xff]
  %v6251 = vld [vmem:[%s6246 + $0x20] sm:$0xff]
  %v6252 = vld [vmem:[%s6246 + $0x28] sm:$0xff]
  %v6253 = vld [vmem:[%s6246 + $0x30] sm:$0xff]
  %v6254 = vld [vmem:[%s6246 + $0x38] sm:$0xff]
  %v6255 = vld [vmem:[%s6246 + $0x40] sm:$0xff]
  %v6256 = vld [vmem:[%s6246 + $0x48] sm:$0xff]
  %v6257 = vld [vmem:[%s6246 + $0x50] sm:$0xff]
  %v6258 = vld [vmem:[%s6246 + $0x58] sm:$0xff]
  %v6259 = vld [vmem:[%s6246 + $0x60] sm:$0xff]
  %v6260 = vld [vmem:[%s6246 + $0x68] sm:$0xff]
  %v6261 = vld [vmem:[%s6246 + $0x70] sm:$0xff]
  %v6262 = vld [vmem:[%s6246 + $0x78] sm:$0xff]
  %v6263 = vld [vmem:[%s6246 + $0x80] sm:$0xff]
  %v6264 = vld [vmem:[%s6246 + $0x88] sm:$0xff]
  %v6265 = vld [vmem:[%s6246 + $0x90] sm:$0xff]
  %v6266 = vld [vmem:[%s6246 + $0x98] sm:$0xff]
  %v6267 = vld [vmem:[%s6246 + $0xa0] sm:$0xff]
  %v6268 = vld [vmem:[%s6246 + $0xa8] sm:$0xff]
  %v6269 = vld [vmem:[%s6246 + $0xb0] sm:$0xff]
  %v6270 = vld [vmem:[%s6246 + $0xb8] sm:$0xff]
  %v6271 = vld [vmem:[%s6246 + $0xc0] sm:$0x11]
  %v6272 = vld [vmem:[%s6246 + $0xc8] sm:$0x11]
  %v6273 = vld [vmem:[%s6246 + $0xd0] sm:$0x11]
  %v6274 = vld [vmem:[%s6246 + $0xd8] sm:$0x11]
  %v6303 = vunpack.c.l.b16 %v6247
  %v6304 = vunpack.c.h.b16 %v6247
  %v6305 = vunpack.c.l.b16 %v6248
  %v6306 = vunpack.c.h.b16 %v6248
  %v6307 = vunpack.c.l.b16 %v6249
  %v6308 = vunpack.c.h.b16 %v6249
  %v6309 = vunpack.c.l.b16 %v6250
  %v6310 = vunpack.c.h.b16 %v6250
  %v6311 = vunpack.c.l.b16 %v6251
  %v6312 = vunpack.c.h.b16 %v6251
  %v6313 = vunpack.c.l.b16 %v6252
  %v6314 = vunpack.c.h.b16 %v6252
  %v6315 = vunpack.c.l.b16 %v6253
  %v6316 = vunpack.c.h.b16 %v6253
  %v6317 = vunpack.c.l.b16 %v6254
  %v6318 = vunpack.c.h.b16 %v6254
  %v6319 = vunpack.c.l.b16 %v6255
  %v6320 = vunpack.c.h.b16 %v6255
  %v6321 = vunpack.c.l.b16 %v6256
  %v6322 = vunpack.c.h.b16 %v6256
  %v6323 = vunpack.c.l.b16 %v6257
  %v6324 = vunpack.c.h.b16 %v6257
  %v6325 = vunpack.c.l.b16 %v6258
  %v6326 = vunpack.c.h.b16 %v6258
  %v6327 = vunpack.c.l.b16 %v6259
  %v6328 = vunpack.c.h.b16 %v6259
  %v6329 = vunpack.c.l.b16 %v6260
  %v6330 = vunpack.c.h.b16 %v6260
  %v6331 = vunpack.c.l.b16 %v6261
  %v6332 = vunpack.c.h.b16 %v6261
  %v6333 = vunpack.c.l.b16 %v6262
  %v6334 = vunpack.c.h.b16 %v6262
  %v6335 = vunpack.c.l.b16 %v6263
  %v6336 = vunpack.c.h.b16 %v6263
  %v6337 = vunpack.c.l.b16 %v6264
  %v6338 = vunpack.c.h.b16 %v6264
  %v6339 = vunpack.c.l.b16 %v6265
  %v6340 = vunpack.c.h.b16 %v6265
  %v6341 = vunpack.c.l.b16 %v6266
  %v6342 = vunpack.c.h.b16 %v6266
  %v6343 = vunpack.c.l.b16 %v6267
  %v6344 = vunpack.c.h.b16 %v6267
  %v6345 = vunpack.c.l.b16 %v6268
  %v6346 = vunpack.c.h.b16 %v6268
  %v6347 = vunpack.c.l.b16 %v6269
  %v6348 = vunpack.c.h.b16 %v6269
  %v6349 = vunpack.c.l.b16 %v6270
  %v6350 = vunpack.c.h.b16 %v6270
  %v6351 = vunpack.c.l.b16 %v6271
  %v6352 = vunpack.c.h.b16 %v6271
  %v6353 = vunpack.c.l.b16 %v6272
  %v6354 = vunpack.c.h.b16 %v6272
  %v6355 = vunpack.c.l.b16 %v6273
  %v6356 = vunpack.c.h.b16 %v6273
  %v6357 = vunpack.c.l.b16 %v6274
  %v6358 = vunpack.c.h.b16 %v6274
  %v6359 = vpack.c.b16 %v6311, %v6303
  %v6360 = vpack.c.b16 %v6312, %v6304
  %v6361 = vpack.c.b16 %v6313, %v6305
  %v6362 = vpack.c.b16 %v6314, %v6306
  %v6363 = vpack.c.b16 %v6315, %v6307
  %v6364 = vpack.c.b16 %v6316, %v6308
  %v6365 = vpack.c.b16 %v6317, %v6309
  %v6366 = vpack.c.b16 %v6318, %v6310
  %v6367 = vpack.c.b16 %v6327, %v6319
  %v6368 = vpack.c.b16 %v6328, %v6320
  %v6369 = vpack.c.b16 %v6329, %v6321
  %v6370 = vpack.c.b16 %v6330, %v6322
  %v6371 = vpack.c.b16 %v6331, %v6323
  %v6372 = vpack.c.b16 %v6332, %v6324
  %v6373 = vpack.c.b16 %v6333, %v6325
  %v6374 = vpack.c.b16 %v6334, %v6326
  %v6375 = vpack.c.b16 %v6343, %v6335
  %v6376 = vpack.c.b16 %v6344, %v6336
  %v6377 = vpack.c.b16 %v6345, %v6337
  %v6378 = vpack.c.b16 %v6346, %v6338
  %v6379 = vpack.c.b16 %v6347, %v6339
  %v6380 = vpack.c.b16 %v6348, %v6340
  %v6381 = vpack.c.b16 %v6349, %v6341
  %v6382 = vpack.c.b16 %v6350, %v6342
  %v6383 = vpack.c.b16 %v6351, %v6351
  %v6384 = vpack.c.b16 %v6352, %v6352
  %v6385 = vpack.c.b16 %v6353, %v6353
  %v6386 = vpack.c.b16 %v6354, %v6354
  %v6387 = vpack.c.b16 %v6355, %v6355
  %v6388 = vpack.c.b16 %v6356, %v6356
  %v6389 = vpack.c.b16 %v6357, %v6357
  %v6390 = vpack.c.b16 %v6358, %v6358
  %v6416 = vsel %vm3666, %v6245, 0
  %v6419 = vsel %vm3691, %v6383, 0
  %v6422 = vsel %vm3691, %v6384, 0
  %v6425 = vsel %vm3691, %v6385, 0
  %v6428 = vsel %vm3691, %v6386, 0
  %v6431 = vsel %vm3691, %v6387, 0
  %v6434 = vsel %vm3691, %v6388, 0
  %v6437 = vsel %vm3691, %v6389, 0
  %v6440 = vsel %vm3691, %v6390, 0
  %6442 = vmatprep.subr.bf16.mxu0 %v6360
  %6443 = vmatpush1.bf16.msra.mxu0 %v6359
  %6444 = vmatprep.subr.bf16.mxu0 %v6368
  %6445 = vmatpush1.bf16.msra.mxu0 %v6367
  %6446 = vmatprep.subr.bf16.mxu0 %v6376
  %6447 = vmatpush1.bf16.msra.mxu0 %v6375
  %6448 = vmatprep.subr.bf16.mxu0 %v6422
  %6449 = vmatpush1.bf16.msra.mxu0 %v6419
  %6450 = vmatprep.subr.bf16.mxu0 0
  %6451 = vmatpush1.bf16.msra.mxu0 0
  %6452 = vmatprep.subr.bf16.mxu0 0
  %6453 = vmatpush1.bf16.msra.mxu0 0
  %6454 = vmatprep.subr.bf16.mxu0 0
  %6455 = vmatpush1.bf16.msra.mxu0 0
  %6456 = vmatprep.subr.bf16.mxu0 0
  %6457 = vmatpush1.bf16.msra.mxu0 0
  %6458 = vmatprep.subr.bf16.mxu0 0
  %6459 = vmatpush1.bf16.msra.mxu0 0
  %6460 = vmatprep.subr.bf16.mxu0 0
  %6461 = vmatpush1.bf16.msra.mxu0 0
  %6462 = vmatprep.subr.bf16.mxu0 0
  %6463 = vmatpush1.bf16.msra.mxu0 0
  %6464 = vmatprep.subr.bf16.mxu0 0
  %6465 = vmatpush1.bf16.msra.mxu0 0
  %6466 = vmatprep.subr.bf16.mxu0 0
  %6467 = vmatpush1.bf16.msra.mxu0 0
  %6468 = vmatprep.subr.bf16.mxu0 0
  %6469 = vmatpush1.bf16.msra.mxu0 0
  %6470 = vmatprep.subr.bf16.mxu0 0
  %6471 = vmatpush1.bf16.msra.mxu0 0
  %6472 = vmatprep.subr.bf16.mxu0 0
  %6473 = vmatpush1.bf16.msra.mxu0 0
  %6474 = vmatprep.mubr.bf16.mxu0 0
  %6475 = vmatmul.mubr.bf16.gmra.mrb[0].mxu0 %v6416
  %v6476 = vpop.f32.mrb[0].mxu0
  %v6477 = vadd.f32 0.0, %v6476
  %v6478 = vpop.f32.mrb[0].mxu0
  %v6479 = vadd.f32 0.0, %v6478
  %v6480 = vpop.f32.mrb[0].mxu0
  %v6481 = vpop.f32.mrb[0].mxu0
  %6482 = vdwg.mxu0
  %6483 = vmatprep.subr.bf16.mxu0 %v6362
  %6484 = vmatpush1.bf16.msra.mxu0 %v6361
  %6485 = vmatprep.subr.bf16.mxu0 %v6370
  %6486 = vmatpush1.bf16.msra.mxu0 %v6369
  %6487 = vmatprep.subr.bf16.mxu0 %v6378
  %6488 = vmatpush1.bf16.msra.mxu0 %v6377
  %6489 = vmatprep.subr.bf16.mxu0 %v6428
  %6490 = vmatpush1.bf16.msra.mxu0 %v6425
  %6491 = vmatprep.subr.bf16.mxu0 0
  %6492 = vmatpush1.bf16.msra.mxu0 0
  %6493 = vmatprep.subr.bf16.mxu0 0
  %6494 = vmatpush1.bf16.msra.mxu0 0
  %6495 = vmatprep.subr.bf16.mxu0 0
  %6496 = vmatpush1.bf16.msra.mxu0 0
  %6497 = vmatprep.subr.bf16.mxu0 0
  %6498 = vmatpush1.bf16.msra.mxu0 0
  %6499 = vmatprep.subr.bf16.mxu0 0
  %6500 = vmatpush1.bf16.msra.mxu0 0
  %6501 = vmatprep.subr.bf16.mxu0 0
  %6502 = vmatpush1.bf16.msra.mxu0 0
  %6503 = vmatprep.subr.bf16.mxu0 0
  %6504 = vmatpush1.bf16.msra.mxu0 0
  %6505 = vmatprep.subr.bf16.mxu0 0
  %6506 = vmatpush1.bf16.msra.mxu0 0
  %6507 = vmatprep.subr.bf16.mxu0 0
  %6508 = vmatpush1.bf16.msra.mxu0 0
  %6509 = vmatprep.subr.bf16.mxu0 0
  %6510 = vmatpush1.bf16.msra.mxu0 0
  %6511 = vmatprep.subr.bf16.mxu0 0
  %6512 = vmatpush1.bf16.msra.mxu0 0
  %6513 = vmatprep.subr.bf16.mxu0 0
  %6514 = vmatpush1.bf16.msra.mxu0 0
  %6515 = vmatprep.mubr.bf16.mxu0 0
  %6516 = vmatmul.mubr.bf16.gmra.mrb[0].mxu0 %v6416
  %v6517 = vpop.f32.mrb[0].mxu0
  %v6518 = vadd.f32 0.0, %v6517
  %v6519 = vpop.f32.mrb[0].mxu0
  %v6520 = vadd.f32 0.0, %v6519
  %v6521 = vpop.f32.mrb[0].mxu0
  %v6522 = vpop.f32.mrb[0].mxu0
  %6523 = vdwg.mxu0
  %6524 = vmatprep.subr.bf16.mxu0 %v6364
  %6525 = vmatpush1.bf16.msra.mxu0 %v6363
  %6526 = vmatprep.subr.bf16.mxu0 %v6372
  %6527 = vmatpush1.bf16.msra.mxu0 %v6371
  %6528 = vmatprep.subr.bf16.mxu0 %v6380
  %6529 = vmatpush1.bf16.msra.mxu0 %v6379
  %6530 = vmatprep.subr.bf16.mxu0 %v6434
  %6531 = vmatpush1.bf16.msra.mxu0 %v6431
  %6532 = vmatprep.subr.bf16.mxu0 0
  %6533 = vmatpush1.bf16.msra.mxu0 0
  %6534 = vmatprep.subr.bf16.mxu0 0
  %6535 = vmatpush1.bf16.msra.mxu0 0
  %6536 = vmatprep.subr.bf16.mxu0 0
  %6537 = vmatpush1.bf16.msra.mxu0 0
  %6538 = vmatprep.subr.bf16.mxu0 0
  %6539 = vmatpush1.bf16.msra.mxu0 0
  %6540 = vmatprep.subr.bf16.mxu0 0
  %6541 = vmatpush1.bf16.msra.mxu0 0
  %6542 = vmatprep.subr.bf16.mxu0 0
  %6543 = vmatpush1.bf16.msra.mxu0 0
  %6544 = vmatprep.subr.bf16.mxu0 0
  %6545 = vmatpush1.bf16.msra.mxu0 0
  %6546 = vmatprep.subr.bf16.mxu0 0
  %6547 = vmatpush1.bf16.msra.mxu0 0
  %6548 = vmatprep.subr.bf16.mxu0 0
  %6549 = vmatpush1.bf16.msra.mxu0 0
  %6550 = vmatprep.subr.bf16.mxu0 0
  %6551 = vmatpush1.bf16.msra.mxu0 0
  %6552 = vmatprep.subr.bf16.mxu0 0
  %6553 = vmatpush1.bf16.msra.mxu0 0
  %6554 = vmatprep.subr.bf16.mxu0 0
  %6555 = vmatpush1.bf16.msra.mxu0 0
  %6556 = vmatprep.mubr.bf16.mxu0 0
  %6557 = vmatmul.mubr.bf16.gmra.mrb[0].mxu0 %v6416
  %v6558 = vpop.f32.mrb[0].mxu0
  %v6559 = vadd.f32 0.0, %v6558
  %v6560 = vpop.f32.mrb[0].mxu0
  %v6561 = vadd.f32 0.0, %v6560
  %v6562 = vpop.f32.mrb[0].mxu0
  %v6563 = vpop.f32.mrb[0].mxu0
  %6564 = vdwg.mxu0
  %6565 = vmatprep.subr.bf16.mxu0 %v6366
  %6566 = vmatpush1.bf16.msra.mxu0 %v6365
  %6567 = vmatprep.subr.bf16.mxu0 %v6374
  %6568 = vmatpush1.bf16.msra.mxu0 %v6373
  %6569 = vmatprep.subr.bf16.mxu0 %v6382
  %6570 = vmatpush1.bf16.msra.mxu0 %v6381
  %6571 = vmatprep.subr.bf16.mxu0 %v6440
  %6572 = vmatpush1.bf16.msra.mxu0 %v6437
  %6573 = vmatprep.subr.bf16.mxu0 0
  %6574 = vmatpush1.bf16.msra.mxu0 0
  %6575 = vmatprep.subr.bf16.mxu0 0
  %6576 = vmatpush1.bf16.msra.mxu0 0
  %6577 = vmatprep.subr.bf16.mxu0 0
  %6578 = vmatpush1.bf16.msra.mxu0 0
  %6579 = vmatprep.subr.bf16.mxu0 0
  %6580 = vmatpush1.bf16.msra.mxu0 0
  %6581 = vmatprep.subr.bf16.mxu0 0
  %6582 = vmatpush1.bf16.msra.mxu0 0
  %6583 = vmatprep.subr.bf16.mxu0 0
  %6584 = vmatpush1.bf16.msra.mxu0 0
  %6585 = vmatprep.subr.bf16.mxu0 0
  %6586 = vmatpush1.bf16.msra.mxu0 0
  %6587 = vmatprep.subr.bf16.mxu0 0
  %6588 = vmatpush1.bf16.msra.mxu0 0
  %6589 = vmatprep.subr.bf16.mxu0 0
  %6590 = vmatpush1.bf16.msra.mxu0 0
  %6591 = vmatprep.subr.bf16.mxu0 0
  %6592 = vmatpush1.bf16.msra.mxu0 0
  %6593 = vmatprep.subr.bf16.mxu0 0
  %6594 = vmatpush1.bf16.msra.mxu0 0
  %6595 = vmatprep.subr.bf16.mxu0 0
  %6596 = vmatpush1.bf16.msra.mxu0 0
  %6597 = vmatprep.mubr.bf16.mxu0 0
  %6598 = vmatmul.mubr.bf16.gmra.mrb[0].mxu0 %v6416
  %v6599 = vpop.f32.mrb[0].mxu0
  %v6600 = vadd.f32 0.0, %v6599
  %v6601 = vpop.f32.mrb[0].mxu0
  %v6602 = vadd.f32 0.0, %v6601
  %v6603 = vpop.f32.mrb[0].mxu0
  %v6604 = vpop.f32.mrb[0].mxu0
  %6605 = vdwg.mxu0
  %v6606 = vadd.f32 %v6237, %v6477
  %v6607 = vadd.f32 %v6238, %v6479
  %v6608 = vadd.f32 %v6239, %v6518
  %v6609 = vadd.f32 %v6240, %v6520
  %v6610 = vadd.f32 %v6241, %v6559
  %v6611 = vadd.f32 %v6242, %v6561
  %v6612 = vadd.f32 %v6243, %v6600
  %v6613 = vadd.f32 %v6244, %v6602
  %v6614 = vpack.c.bf16 %v4407, %v4407
  %s6615 = scalar_lea.vmem %s11, 1344
  %v6616 = vld [vmem:[%s6615] sm:$0xff]
  %v6617 = vld [vmem:[%s6615 + $0x8] sm:$0xff]
  %v6618 = vld [vmem:[%s6615 + $0x10] sm:$0xff]
  %v6619 = vld [vmem:[%s6615 + $0x18] sm:$0xff]
  %v6620 = vld [vmem:[%s6615 + $0x20] sm:$0xff]
  %v6621 = vld [vmem:[%s6615 + $0x28] sm:$0xff]
  %v6622 = vld [vmem:[%s6615 + $0x30] sm:$0xff]
  %v6623 = vld [vmem:[%s6615 + $0x38] sm:$0xff]
  %v6624 = vld [vmem:[%s6615 + $0x40] sm:$0xff]
  %v6625 = vld [vmem:[%s6615 + $0x48] sm:$0xff]
  %v6626 = vld [vmem:[%s6615 + $0x50] sm:$0xff]
  %v6627 = vld [vmem:[%s6615 + $0x58] sm:$0xff]
  %v6628 = vld [vmem:[%s6615 + $0x60] sm:$0xff]
  %v6629 = vld [vmem:[%s6615 + $0x68] sm:$0xff]
  %v6630 = vld [vmem:[%s6615 + $0x70] sm:$0xff]
  %v6631 = vld [vmem:[%s6615 + $0x78] sm:$0xff]
  %v6632 = vld [vmem:[%s6615 + $0x80] sm:$0xff]
  %v6633 = vld [vmem:[%s6615 + $0x88] sm:$0xff]
  %v6634 = vld [vmem:[%s6615 + $0x90] sm:$0xff]
  %v6635 = vld [vmem:[%s6615 + $0x98] sm:$0xff]
  %v6636 = vld [vmem:[%s6615 + $0xa0] sm:$0xff]
  %v6637 = vld [vmem:[%s6615 + $0xa8] sm:$0xff]
  %v6638 = vld [vmem:[%s6615 + $0xb0] sm:$0xff]
  %v6639 = vld [vmem:[%s6615 + $0xb8] sm:$0xff]
  %v6640 = vld [vmem:[%s6615 + $0xc0] sm:$0x11]
  %v6641 = vld [vmem:[%s6615 + $0xc8] sm:$0x11]
  %v6642 = vld [vmem:[%s6615 + $0xd0] sm:$0x11]
  %v6643 = vld [vmem:[%s6615 + $0xd8] sm:$0x11]
  %v6672 = vunpack.c.l.b16 %v6616
  %v6673 = vunpack.c.h.b16 %v6616
  %v6674 = vunpack.c.l.b16 %v6617
  %v6675 = vunpack.c.h.b16 %v6617
  %v6676 = vunpack.c.l.b16 %v6618
  %v6677 = vunpack.c.h.b16 %v6618
  %v6678 = vunpack.c.l.b16 %v6619
  %v6679 = vunpack.c.h.b16 %v6619
  %v6680 = vunpack.c.l.b16 %v6620
  %v6681 = vunpack.c.h.b16 %v6620
  %v6682 = vunpack.c.l.b16 %v6621
  %v6683 = vunpack.c.h.b16 %v6621
  %v6684 = vunpack.c.l.b16 %v6622
  %v6685 = vunpack.c.h.b16 %v6622
  %v6686 = vunpack.c.l.b16 %v6623
  %v6687 = vunpack.c.h.b16 %v6623
  %v6688 = vunpack.c.l.b16 %v6624
  %v6689 = vunpack.c.h.b16 %v6624
  %v6690 = vunpack.c.l.b16 %v6625
  %v6691 = vunpack.c.h.b16 %v6625
  %v6692 = vunpack.c.l.b16 %v6626
  %v6693 = vunpack.c.h.b16 %v6626
  %v6694 = vunpack.c.l.b16 %v6627
  %v6695 = vunpack.c.h.b16 %v6627
  %v6696 = vunpack.c.l.b16 %v6628
  %v6697 = vunpack.c.h.b16 %v6628
  %v6698 = vunpack.c.l.b16 %v6629
  %v6699 = vunpack.c.h.b16 %v6629
  %v6700 = vunpack.c.l.b16 %v6630
  %v6701 = vunpack.c.h.b16 %v6630
  %v6702 = vunpack.c.l.b16 %v6631
  %v6703 = vunpack.c.h.b16 %v6631
  %v6704 = vunpack.c.l.b16 %v6632
  %v6705 = vunpack.c.h.b16 %v6632
  %v6706 = vunpack.c.l.b16 %v6633
  %v6707 = vunpack.c.h.b16 %v6633
  %v6708 = vunpack.c.l.b16 %v6634
  %v6709 = vunpack.c.h.b16 %v6634
  %v6710 = vunpack.c.l.b16 %v6635
  %v6711 = vunpack.c.h.b16 %v6635
  %v6712 = vunpack.c.l.b16 %v6636
  %v6713 = vunpack.c.h.b16 %v6636
  %v6714 = vunpack.c.l.b16 %v6637
  %v6715 = vunpack.c.h.b16 %v6637
  %v6716 = vunpack.c.l.b16 %v6638
  %v6717 = vunpack.c.h.b16 %v6638
  %v6718 = vunpack.c.l.b16 %v6639
  %v6719 = vunpack.c.h.b16 %v6639
  %v6720 = vunpack.c.l.b16 %v6640
  %v6721 = vunpack.c.h.b16 %v6640
  %v6722 = vunpack.c.l.b16 %v6641
  %v6723 = vunpack.c.h.b16 %v6641
  %v6724 = vunpack.c.l.b16 %v6642
  %v6725 = vunpack.c.h.b16 %v6642
  %v6726 = vunpack.c.l.b16 %v6643
  %v6727 = vunpack.c.h.b16 %v6643
  %v6728 = vpack.c.b16 %v6680, %v6672
  %v6729 = vpack.c.b16 %v6681, %v6673
  %v6730 = vpack.c.b16 %v6682, %v6674
  %v6731 = vpack.c.b16 %v6683, %v6675
  %v6732 = vpack.c.b16 %v6684, %v6676
  %v6733 = vpack.c.b16 %v6685, %v6677
  %v6734 = vpack.c.b16 %v6686, %v6678
  %v6735 = vpack.c.b16 %v6687, %v6679
  %v6736 = vpack.c.b16 %v6696, %v6688
  %v6737 = vpack.c.b16 %v6697, %v6689
  %v6738 = vpack.c.b16 %v6698, %v6690
  %v6739 = vpack.c.b16 %v6699, %v6691
  %v6740 = vpack.c.b16 %v6700, %v6692
  %v6741 = vpack.c.b16 %v6701, %v6693
  %v6742 = vpack.c.b16 %v6702, %v6694
  %v6743 = vpack.c.b16 %v6703, %v6695
  %v6744 = vpack.c.b16 %v6712, %v6704
  %v6745 = vpack.c.b16 %v6713, %v6705
  %v6746 = vpack.c.b16 %v6714, %v6706
  %v6747 = vpack.c.b16 %v6715, %v6707
  %v6748 = vpack.c.b16 %v6716, %v6708
  %v6749 = vpack.c.b16 %v6717, %v6709
  %v6750 = vpack.c.b16 %v6718, %v6710
  %v6751 = vpack.c.b16 %v6719, %v6711
  %v6752 = vpack.c.b16 %v6720, %v6720
  %v6753 = vpack.c.b16 %v6721, %v6721
  %v6754 = vpack.c.b16 %v6722, %v6722
  %v6755 = vpack.c.b16 %v6723, %v6723
  %v6756 = vpack.c.b16 %v6724, %v6724
  %v6757 = vpack.c.b16 %v6725, %v6725
  %v6758 = vpack.c.b16 %v6726, %v6726
  %v6759 = vpack.c.b16 %v6727, %v6727
  %v6785 = vsel %vm3666, %v6614, 0
  %v6788 = vsel %vm3691, %v6752, 0
  %v6791 = vsel %vm3691, %v6753, 0
  %v6794 = vsel %vm3691, %v6754, 0
  %v6797 = vsel %vm3691, %v6755, 0
  %v6800 = vsel %vm3691, %v6756, 0
  %v6803 = vsel %vm3691, %v6757, 0
  %v6806 = vsel %vm3691, %v6758, 0
  %v6809 = vsel %vm3691, %v6759, 0
  %6811 = vmatprep.subr.bf16.mxu0 %v6729
  %6812 = vmatpush1.bf16.msra.mxu0 %v6728
  %6813 = vmatprep.subr.bf16.mxu0 %v6737
  %6814 = vmatpush1.bf16.msra.mxu0 %v6736
  %6815 = vmatprep.subr.bf16.mxu0 %v6745
  %6816 = vmatpush1.bf16.msra.mxu0 %v6744
  %6817 = vmatprep.subr.bf16.mxu0 %v6791
  %6818 = vmatpush1.bf16.msra.mxu0 %v6788
  %6819 = vmatprep.subr.bf16.mxu0 0
  %6820 = vmatpush1.bf16.msra.mxu0 0
  %6821 = vmatprep.subr.bf16.mxu0 0
  %6822 = vmatpush1.bf16.msra.mxu0 0
  %6823 = vmatprep.subr.bf16.mxu0 0
  %6824 = vmatpush1.bf16.msra.mxu0 0
  %6825 = vmatprep.subr.bf16.mxu0 0
  %6826 = vmatpush1.bf16.msra.mxu0 0
  %6827 = vmatprep.subr.bf16.mxu0 0
  %6828 = vmatpush1.bf16.msra.mxu0 0
  %6829 = vmatprep.subr.bf16.mxu0 0
  %6830 = vmatpush1.bf16.msra.mxu0 0
  %6831 = vmatprep.subr.bf16.mxu0 0
  %6832 = vmatpush1.bf16.msra.mxu0 0
  %6833 = vmatprep.subr.bf16.mxu0 0
  %6834 = vmatpush1.bf16.msra.mxu0 0
  %6835 = vmatprep.subr.bf16.mxu0 0
  %6836 = vmatpush1.bf16.msra.mxu0 0
  %6837 = vmatprep.subr.bf16.mxu0 0
  %6838 = vmatpush1.bf16.msra.mxu0 0
  %6839 = vmatprep.subr.bf16.mxu0 0
  %6840 = vmatpush1.bf16.msra.mxu0 0
  %6841 = vmatprep.subr.bf16.mxu0 0
  %6842 = vmatpush1.bf16.msra.mxu0 0
  %6843 = vmatprep.mubr.bf16.mxu0 0
  %6844 = vmatmul.mubr.bf16.gmra.mrb[0].mxu0 %v6785
  %v6845 = vpop.f32.mrb[0].mxu0
  %v6846 = vadd.f32 0.0, %v6845
  %v6847 = vpop.f32.mrb[0].mxu0
  %v6848 = vadd.f32 0.0, %v6847
  %v6849 = vpop.f32.mrb[0].mxu0
  %v6850 = vpop.f32.mrb[0].mxu0
  %6851 = vdwg.mxu0
  %6852 = vmatprep.subr.bf16.mxu0 %v6731
  %6853 = vmatpush1.bf16.msra.mxu0 %v6730
  %6854 = vmatprep.subr.bf16.mxu0 %v6739
  %6855 = vmatpush1.bf16.msra.mxu0 %v6738
  %6856 = vmatprep.subr.bf16.mxu0 %v6747
  %6857 = vmatpush1.bf16.msra.mxu0 %v6746
  %6858 = vmatprep.subr.bf16.mxu0 %v6797
  %6859 = vmatpush1.bf16.msra.mxu0 %v6794
  %6860 = vmatprep.subr.bf16.mxu0 0
  %6861 = vmatpush1.bf16.msra.mxu0 0
  %6862 = vmatprep.subr.bf16.mxu0 0
  %6863 = vmatpush1.bf16.msra.mxu0 0
  %6864 = vmatprep.subr.bf16.mxu0 0
  %6865 = vmatpush1.bf16.msra.mxu0 0
  %6866 = vmatprep.subr.bf16.mxu0 0
  %6867 = vmatpush1.bf16.msra.mxu0 0
  %6868 = vmatprep.subr.bf16.mxu0 0
  %6869 = vmatpush1.bf16.msra.mxu0 0
  %6870 = vmatprep.subr.bf16.mxu0 0
  %6871 = vmatpush1.bf16.msra.mxu0 0
  %6872 = vmatprep.subr.bf16.mxu0 0
  %6873 = vmatpush1.bf16.msra.mxu0 0
  %6874 = vmatprep.subr.bf16.mxu0 0
  %6875 = vmatpush1.bf16.msra.mxu0 0
  %6876 = vmatprep.subr.bf16.mxu0 0
  %6877 = vmatpush1.bf16.msra.mxu0 0
  %6878 = vmatprep.subr.bf16.mxu0 0
  %6879 = vmatpush1.bf16.msra.mxu0 0
  %6880 = vmatprep.subr.bf16.mxu0 0
  %6881 = vmatpush1.bf16.msra.mxu0 0
  %6882 = vmatprep.subr.bf16.mxu0 0
  %6883 = vmatpush1.bf16.msra.mxu0 0
  %6884 = vmatprep.mubr.bf16.mxu0 0
  %6885 = vmatmul.mubr.bf16.gmra.mrb[0].mxu0 %v6785
  %v6886 = vpop.f32.mrb[0].mxu0
  %v6887 = vadd.f32 0.0, %v6886
  %v6888 = vpop.f32.mrb[0].mxu0
  %v6889 = vadd.f32 0.0, %v6888
  %v6890 = vpop.f32.mrb[0].mxu0
  %v6891 = vpop.f32.mrb[0].mxu0
  %6892 = vdwg.mxu0
  %6893 = vmatprep.subr.bf16.mxu0 %v6733
  %6894 = vmatpush1.bf16.msra.mxu0 %v6732
  %6895 = vmatprep.subr.bf16.mxu0 %v6741
  %6896 = vmatpush1.bf16.msra.mxu0 %v6740
  %6897 = vmatprep.subr.bf16.mxu0 %v6749
  %6898 = vmatpush1.bf16.msra.mxu0 %v6748
  %6899 = vmatprep.subr.bf16.mxu0 %v6803
  %6900 = vmatpush1.bf16.msra.mxu0 %v6800
  %6901 = vmatprep.subr.bf16.mxu0 0
  %6902 = vmatpush1.bf16.msra.mxu0 0
  %6903 = vmatprep.subr.bf16.mxu0 0
  %6904 = vmatpush1.bf16.msra.mxu0 0
  %6905 = vmatprep.subr.bf16.mxu0 0
  %6906 = vmatpush1.bf16.msra.mxu0 0
  %6907 = vmatprep.subr.bf16.mxu0 0
  %6908 = vmatpush1.bf16.msra.mxu0 0
  %6909 = vmatprep.subr.bf16.mxu0 0
  %6910 = vmatpush1.bf16.msra.mxu0 0
  %6911 = vmatprep.subr.bf16.mxu0 0
  %6912 = vmatpush1.bf16.msra.mxu0 0
  %6913 = vmatprep.subr.bf16.mxu0 0
  %6914 = vmatpush1.bf16.msra.mxu0 0
  %6915 = vmatprep.subr.bf16.mxu0 0
  %6916 = vmatpush1.bf16.msra.mxu0 0
  %6917 = vmatprep.subr.bf16.mxu0 0
  %6918 = vmatpush1.bf16.msra.mxu0 0
  %6919 = vmatprep.subr.bf16.mxu0 0
  %6920 = vmatpush1.bf16.msra.mxu0 0
  %6921 = vmatprep.subr.bf16.mxu0 0
  %6922 = vmatpush1.bf16.msra.mxu0 0
  %6923 = vmatprep.subr.bf16.mxu0 0
  %6924 = vmatpush1.bf16.msra.mxu0 0
  %6925 = vmatprep.mubr.bf16.mxu0 0
  %6926 = vmatmul.mubr.bf16.gmra.mrb[0].mxu0 %v6785
  %v6927 = vpop.f32.mrb[0].mxu0
  %v6928 = vadd.f32 0.0, %v6927
  %v6929 = vpop.f32.mrb[0].mxu0
  %v6930 = vadd.f32 0.0, %v6929
  %v6931 = vpop.f32.mrb[0].mxu0
  %v6932 = vpop.f32.mrb[0].mxu0
  %6933 = vdwg.mxu0
  %6934 = vmatprep.subr.bf16.mxu0 %v6735
  %6935 = vmatpush1.bf16.msra.mxu0 %v6734
  %6936 = vmatprep.subr.bf16.mxu0 %v6743
  %6937 = vmatpush1.bf16.msra.mxu0 %v6742
  %6938 = vmatprep.subr.bf16.mxu0 %v6751
  %6939 = vmatpush1.bf16.msra.mxu0 %v6750
  %6940 = vmatprep.subr.bf16.mxu0 %v6809
  %6941 = vmatpush1.bf16.msra.mxu0 %v6806
  %6942 = vmatprep.subr.bf16.mxu0 0
  %6943 = vmatpush1.bf16.msra.mxu0 0
  %6944 = vmatprep.subr.bf16.mxu0 0
  %6945 = vmatpush1.bf16.msra.mxu0 0
  %6946 = vmatprep.subr.bf16.mxu0 0
  %6947 = vmatpush1.bf16.msra.mxu0 0
  %6948 = vmatprep.subr.bf16.mxu0 0
  %6949 = vmatpush1.bf16.msra.mxu0 0
  %6950 = vmatprep.subr.bf16.mxu0 0
  %6951 = vmatpush1.bf16.msra.mxu0 0
  %6952 = vmatprep.subr.bf16.mxu0 0
  %6953 = vmatpush1.bf16.msra.mxu0 0
  %6954 = vmatprep.subr.bf16.mxu0 0
  %6955 = vmatpush1.bf16.msra.mxu0 0
  %6956 = vmatprep.subr.bf16.mxu0 0
  %6957 = vmatpush1.bf16.msra.mxu0 0
  %6958 = vmatprep.subr.bf16.mxu0 0
  %6959 = vmatpush1.bf16.msra.mxu0 0
  %6960 = vmatprep.subr.bf16.mxu0 0
  %6961 = vmatpush1.bf16.msra.mxu0 0
  %6962 = vmatprep.subr.bf16.mxu0 0
  %6963 = vmatpush1.bf16.msra.mxu0 0
  %6964 = vmatprep.subr.bf16.mxu0 0
  %6965 = vmatpush1.bf16.msra.mxu0 0
  %6966 = vmatprep.mubr.bf16.mxu0 0
  %6967 = vmatmul.mubr.bf16.gmra.mrb[0].mxu0 %v6785
  %v6968 = vpop.f32.mrb[0].mxu0
  %v6969 = vadd.f32 0.0, %v6968
  %v6970 = vpop.f32.mrb[0].mxu0
  %v6971 = vadd.f32 0.0, %v6970
  %v6972 = vpop.f32.mrb[0].mxu0
  %v6973 = vpop.f32.mrb[0].mxu0
  %6974 = vdwg.mxu0
  %v6975 = vadd.f32 %v6606, %v6846
  %v6976 = vadd.f32 %v6607, %v6848
  %v6977 = vadd.f32 %v6608, %v6887
  %v6978 = vadd.f32 %v6609, %v6889
  %v6979 = vadd.f32 %v6610, %v6928
  %v6980 = vadd.f32 %v6611, %v6930
  %v6981 = vadd.f32 %v6612, %v6969
  %v6982 = vadd.f32 %v6613, %v6971
  %v6983 = vpack.c.bf16 %v4408, %v4408
  %s6984 = scalar_lea.vmem %s11, 1568
  %v6985 = vld [vmem:[%s6984] sm:$0xff]
  %v6986 = vld [vmem:[%s6984 + $0x8] sm:$0xff]
  %v6987 = vld [vmem:[%s6984 + $0x10] sm:$0xff]
  %v6988 = vld [vmem:[%s6984 + $0x18] sm:$0xff]
  %v6989 = vld [vmem:[%s6984 + $0x20] sm:$0xff]
  %v6990 = vld [vmem:[%s6984 + $0x28] sm:$0xff]
  %v6991 = vld [vmem:[%s6984 + $0x30] sm:$0xff]
  %v6992 = vld [vmem:[%s6984 + $0x38] sm:$0xff]
  %v6993 = vld [vmem:[%s6984 + $0x40] sm:$0xff]
  %v6994 = vld [vmem:[%s6984 + $0x48] sm:$0xff]
  %v6995 = vld [vmem:[%s6984 + $0x50] sm:$0xff]
  %v6996 = vld [vmem:[%s6984 + $0x58] sm:$0xff]
  %v6997 = vld [vmem:[%s6984 + $0x60] sm:$0xff]
  %v6998 = vld [vmem:[%s6984 + $0x68] sm:$0xff]
  %v6999 = vld [vmem:[%s6984 + $0x70] sm:$0xff]
  %v7000 = vld [vmem:[%s6984 + $0x78] sm:$0xff]
  %v7001 = vld [vmem:[%s6984 + $0x80] sm:$0xff]
  %v7002 = vld [vmem:[%s6984 + $0x88] sm:$0xff]
  %v7003 = vld [vmem:[%s6984 + $0x90] sm:$0xff]
  %v7004 = vld [vmem:[%s6984 + $0x98] sm:$0xff]
  %v7005 = vld [vmem:[%s6984 + $0xa0] sm:$0xff]
  %v7006 = vld [vmem:[%s6984 + $0xa8] sm:$0xff]
  %v7007 = vld [vmem:[%s6984 + $0xb0] sm:$0xff]
  %v7008 = vld [vmem:[%s6984 + $0xb8] sm:$0xff]
  %v7009 = vld [vmem:[%s6984 + $0xc0] sm:$0x11]
  %v7010 = vld [vmem:[%s6984 + $0xc8] sm:$0x11]
  %v7011 = vld [vmem:[%s6984 + $0xd0] sm:$0x11]
  %v7012 = vld [vmem:[%s6984 + $0xd8] sm:$0x11]
  %v7041 = vunpack.c.l.b16 %v6985
  %v7042 = vunpack.c.h.b16 %v6985
  %v7043 = vunpack.c.l.b16 %v6986
  %v7044 = vunpack.c.h.b16 %v6986
  %v7045 = vunpack.c.l.b16 %v6987
  %v7046 = vunpack.c.h.b16 %v6987
  %v7047 = vunpack.c.l.b16 %v6988
  %v7048 = vunpack.c.h.b16 %v6988
  %v7049 = vunpack.c.l.b16 %v6989
  %v7050 = vunpack.c.h.b16 %v6989
  %v7051 = vunpack.c.l.b16 %v6990
  %v7052 = vunpack.c.h.b16 %v6990
  %v7053 = vunpack.c.l.b16 %v6991
  %v7054 = vunpack.c.h.b16 %v6991
  %v7055 = vunpack.c.l.b16 %v6992
  %v7056 = vunpack.c.h.b16 %v6992
  %v7057 = vunpack.c.l.b16 %v6993
  %v7058 = vunpack.c.h.b16 %v6993
  %v7059 = vunpack.c.l.b16 %v6994
  %v7060 = vunpack.c.h.b16 %v6994
  %v7061 = vunpack.c.l.b16 %v6995
  %v7062 = vunpack.c.h.b16 %v6995
  %v7063 = vunpack.c.l.b16 %v6996
  %v7064 = vunpack.c.h.b16 %v6996
  %v7065 = vunpack.c.l.b16 %v6997
  %v7066 = vunpack.c.h.b16 %v6997
  %v7067 = vunpack.c.l.b16 %v6998
  %v7068 = vunpack.c.h.b16 %v6998
  %v7069 = vunpack.c.l.b16 %v6999
  %v7070 = vunpack.c.h.b16 %v6999
  %v7071 = vunpack.c.l.b16 %v7000
  %v7072 = vunpack.c.h.b16 %v7000
  %v7073 = vunpack.c.l.b16 %v7001
  %v7074 = vunpack.c.h.b16 %v7001
  %v7075 = vunpack.c.l.b16 %v7002
  %v7076 = vunpack.c.h.b16 %v7002
  %v7077 = vunpack.c.l.b16 %v7003
  %v7078 = vunpack.c.h.b16 %v7003
  %v7079 = vunpack.c.l.b16 %v7004
  %v7080 = vunpack.c.h.b16 %v7004
  %v7081 = vunpack.c.l.b16 %v7005
  %v7082 = vunpack.c.h.b16 %v7005
  %v7083 = vunpack.c.l.b16 %v7006
  %v7084 = vunpack.c.h.b16 %v7006
  %v7085 = vunpack.c.l.b16 %v7007
  %v7086 = vunpack.c.h.b16 %v7007
  %v7087 = vunpack.c.l.b16 %v7008
  %v7088 = vunpack.c.h.b16 %v7008
  %v7089 = vunpack.c.l.b16 %v7009
  %v7090 = vunpack.c.h.b16 %v7009
  %v7091 = vunpack.c.l.b16 %v7010
  %v7092 = vunpack.c.h.b16 %v7010
  %v7093 = vunpack.c.l.b16 %v7011
  %v7094 = vunpack.c.h.b16 %v7011
  %v7095 = vunpack.c.l.b16 %v7012
  %v7096 = vunpack.c.h.b16 %v7012
  %v7097 = vpack.c.b16 %v7049, %v7041
  %v7098 = vpack.c.b16 %v7050, %v7042
  %v7099 = vpack.c.b16 %v7051, %v7043
  %v7100 = vpack.c.b16 %v7052, %v7044
  %v7101 = vpack.c.b16 %v7053, %v7045
  %v7102 = vpack.c.b16 %v7054, %v7046
  %v7103 = vpack.c.b16 %v7055, %v7047
  %v7104 = vpack.c.b16 %v7056, %v7048
  %v7105 = vpack.c.b16 %v7065, %v7057
  %v7106 = vpack.c.b16 %v7066, %v7058
  %v7107 = vpack.c.b16 %v7067, %v7059
  %v7108 = vpack.c.b16 %v7068, %v7060
  %v7109 = vpack.c.b16 %v7069, %v7061
  %v7110 = vpack.c.b16 %v7070, %v7062
  %v7111 = vpack.c.b16 %v7071, %v7063
  %v7112 = vpack.c.b16 %v7072, %v7064
  %v7113 = vpack.c.b16 %v7081, %v7073
  %v7114 = vpack.c.b16 %v7082, %v7074
  %v7115 = vpack.c.b16 %v7083, %v7075
  %v7116 = vpack.c.b16 %v7084, %v7076
  %v7117 = vpack.c.b16 %v7085, %v7077
  %v7118 = vpack.c.b16 %v7086, %v7078
  %v7119 = vpack.c.b16 %v7087, %v7079
  %v7120 = vpack.c.b16 %v7088, %v7080
  %v7121 = vpack.c.b16 %v7089, %v7089
  %v7122 = vpack.c.b16 %v7090, %v7090
  %v7123 = vpack.c.b16 %v7091, %v7091
  %v7124 = vpack.c.b16 %v7092, %v7092
  %v7125 = vpack.c.b16 %v7093, %v7093
  %v7126 = vpack.c.b16 %v7094, %v7094
  %v7127 = vpack.c.b16 %v7095, %v7095
  %v7128 = vpack.c.b16 %v7096, %v7096
  %v7154 = vsel %vm3666, %v6983, 0
  %v7157 = vsel %vm3691, %v7121, 0
  %v7160 = vsel %vm3691, %v7122, 0
  %v7163 = vsel %vm3691, %v7123, 0
  %v7166 = vsel %vm3691, %v7124, 0
  %v7169 = vsel %vm3691, %v7125, 0
  %v7172 = vsel %vm3691, %v7126, 0
  %v7175 = vsel %vm3691, %v7127, 0
  %v7178 = vsel %vm3691, %v7128, 0
  %7180 = vmatprep.subr.bf16.mxu0 %v7098
  %7181 = vmatpush1.bf16.msra.mxu0 %v7097
  %7182 = vmatprep.subr.bf16.mxu0 %v7106
  %7183 = vmatpush1.bf16.msra.mxu0 %v7105
  %7184 = vmatprep.subr.bf16.mxu0 %v7114
  %7185 = vmatpush1.bf16.msra.mxu0 %v7113
  %7186 = vmatprep.subr.bf16.mxu0 %v7160
  %7187 = vmatpush1.bf16.msra.mxu0 %v7157
  %7188 = vmatprep.subr.bf16.mxu0 0
  %7189 = vmatpush1.bf16.msra.mxu0 0
  %7190 = vmatprep.subr.bf16.mxu0 0
  %7191 = vmatpush1.bf16.msra.mxu0 0
  %7192 = vmatprep.subr.bf16.mxu0 0
  %7193 = vmatpush1.bf16.msra.mxu0 0
  %7194 = vmatprep.subr.bf16.mxu0 0
  %7195 = vmatpush1.bf16.msra.mxu0 0
  %7196 = vmatprep.subr.bf16.mxu0 0
  %7197 = vmatpush1.bf16.msra.mxu0 0
  %7198 = vmatprep.subr.bf16.mxu0 0
  %7199 = vmatpush1.bf16.msra.mxu0 0
  %7200 = vmatprep.subr.bf16.mxu0 0
  %7201 = vmatpush1.bf16.msra.mxu0 0
  %7202 = vmatprep.subr.bf16.mxu0 0
  %7203 = vmatpush1.bf16.msra.mxu0 0
  %7204 = vmatprep.subr.bf16.mxu0 0
  %7205 = vmatpush1.bf16.msra.mxu0 0
  %7206 = vmatprep.subr.bf16.mxu0 0
  %7207 = vmatpush1.bf16.msra.mxu0 0
  %7208 = vmatprep.subr.bf16.mxu0 0
  %7209 = vmatpush1.bf16.msra.mxu0 0
  %7210 = vmatprep.subr.bf16.mxu0 0
  %7211 = vmatpush1.bf16.msra.mxu0 0
  %7212 = vmatprep.mubr.bf16.mxu0 0
  %7213 = vmatmul.mubr.bf16.gmra.mrb[0].mxu0 %v7154
  %v7214 = vpop.f32.mrb[0].mxu0
  %v7215 = vadd.f32 0.0, %v7214
  %v7216 = vpop.f32.mrb[0].mxu0
  %v7217 = vadd.f32 0.0, %v7216
  %v7218 = vpop.f32.mrb[0].mxu0
  %v7219 = vpop.f32.mrb[0].mxu0
  %7220 = vdwg.mxu0
  %7221 = vmatprep.subr.bf16.mxu0 %v7100
  %7222 = vmatpush1.bf16.msra.mxu0 %v7099
  %7223 = vmatprep.subr.bf16.mxu0 %v7108
  %7224 = vmatpush1.bf16.msra.mxu0 %v7107
  %7225 = vmatprep.subr.bf16.mxu0 %v7116
  %7226 = vmatpush1.bf16.msra.mxu0 %v7115
  %7227 = vmatprep.subr.bf16.mxu0 %v7166
  %7228 = vmatpush1.bf16.msra.mxu0 %v7163
  %7229 = vmatprep.subr.bf16.mxu0 0
  %7230 = vmatpush1.bf16.msra.mxu0 0
  %7231 = vmatprep.subr.bf16.mxu0 0
  %7232 = vmatpush1.bf16.msra.mxu0 0
  %7233 = vmatprep.subr.bf16.mxu0 0
  %7234 = vmatpush1.bf16.msra.mxu0 0
  %7235 = vmatprep.subr.bf16.mxu0 0
  %7236 = vmatpush1.bf16.msra.mxu0 0
  %7237 = vmatprep.subr.bf16.mxu0 0
  %7238 = vmatpush1.bf16.msra.mxu0 0
  %7239 = vmatprep.subr.bf16.mxu0 0
  %7240 = vmatpush1.bf16.msra.mxu0 0
  %7241 = vmatprep.subr.bf16.mxu0 0
  %7242 = vmatpush1.bf16.msra.mxu0 0
  %7243 = vmatprep.subr.bf16.mxu0 0
  %7244 = vmatpush1.bf16.msra.mxu0 0
  %7245 = vmatprep.subr.bf16.mxu0 0
  %7246 = vmatpush1.bf16.msra.mxu0 0
  %7247 = vmatprep.subr.bf16.mxu0 0
  %7248 = vmatpush1.bf16.msra.mxu0 0
  %7249 = vmatprep.subr.bf16.mxu0 0
  %7250 = vmatpush1.bf16.msra.mxu0 0
  %7251 = vmatprep.subr.bf16.mxu0 0
  %7252 = vmatpush1.bf16.msra.mxu0 0
  %7253 = vmatprep.mubr.bf16.mxu0 0
  %7254 = vmatmul.mubr.bf16.gmra.mrb[0].mxu0 %v7154
  %v7255 = vpop.f32.mrb[0].mxu0
  %v7256 = vadd.f32 0.0, %v7255
  %v7257 = vpop.f32.mrb[0].mxu0
  %v7258 = vadd.f32 0.0, %v7257
  %v7259 = vpop.f32.mrb[0].mxu0
  %v7260 = vpop.f32.mrb[0].mxu0
  %7261 = vdwg.mxu0
  %7262 = vmatprep.subr.bf16.mxu0 %v7102
  %7263 = vmatpush1.bf16.msra.mxu0 %v7101
  %7264 = vmatprep.subr.bf16.mxu0 %v7110
  %7265 = vmatpush1.bf16.msra.mxu0 %v7109
  %7266 = vmatprep.subr.bf16.mxu0 %v7118
  %7267 = vmatpush1.bf16.msra.mxu0 %v7117
  %7268 = vmatprep.subr.bf16.mxu0 %v7172
  %7269 = vmatpush1.bf16.msra.mxu0 %v7169
  %7270 = vmatprep.subr.bf16.mxu0 0
  %7271 = vmatpush1.bf16.msra.mxu0 0
  %7272 = vmatprep.subr.bf16.mxu0 0
  %7273 = vmatpush1.bf16.msra.mxu0 0
  %7274 = vmatprep.subr.bf16.mxu0 0
  %7275 = vmatpush1.bf16.msra.mxu0 0
  %7276 = vmatprep.subr.bf16.mxu0 0
  %7277 = vmatpush1.bf16.msra.mxu0 0
  %7278 = vmatprep.subr.bf16.mxu0 0
  %7279 = vmatpush1.bf16.msra.mxu0 0
  %7280 = vmatprep.subr.bf16.mxu0 0
  %7281 = vmatpush1.bf16.msra.mxu0 0
  %7282 = vmatprep.subr.bf16.mxu0 0
  %7283 = vmatpush1.bf16.msra.mxu0 0
  %7284 = vmatprep.subr.bf16.mxu0 0
  %7285 = vmatpush1.bf16.msra.mxu0 0
  %7286 = vmatprep.subr.bf16.mxu0 0
  %7287 = vmatpush1.bf16.msra.mxu0 0
  %7288 = vmatprep.subr.bf16.mxu0 0
  %7289 = vmatpush1.bf16.msra.mxu0 0
  %7290 = vmatprep.subr.bf16.mxu0 0
  %7291 = vmatpush1.bf16.msra.mxu0 0
  %7292 = vmatprep.subr.bf16.mxu0 0
  %7293 = vmatpush1.bf16.msra.mxu0 0
  %7294 = vmatprep.mubr.bf16.mxu0 0
  %7295 = vmatmul.mubr.bf16.gmra.mrb[0].mxu0 %v7154
  %v7296 = vpop.f32.mrb[0].mxu0
  %v7297 = vadd.f32 0.0, %v7296
  %v7298 = vpop.f32.mrb[0].mxu0
  %v7299 = vadd.f32 0.0, %v7298
  %v7300 = vpop.f32.mrb[0].mxu0
  %v7301 = vpop.f32.mrb[0].mxu0
  %7302 = vdwg.mxu0
  %7303 = vmatprep.subr.bf16.mxu0 %v7104
  %7304 = vmatpush1.bf16.msra.mxu0 %v7103
  %7305 = vmatprep.subr.bf16.mxu0 %v7112
  %7306 = vmatpush1.bf16.msra.mxu0 %v7111
  %7307 = vmatprep.subr.bf16.mxu0 %v7120
  %7308 = vmatpush1.bf16.msra.mxu0 %v7119
  %7309 = vmatprep.subr.bf16.mxu0 %v7178
  %7310 = vmatpush1.bf16.msra.mxu0 %v7175
  %7311 = vmatprep.subr.bf16.mxu0 0
  %7312 = vmatpush1.bf16.msra.mxu0 0
  %7313 = vmatprep.subr.bf16.mxu0 0
  %7314 = vmatpush1.bf16.msra.mxu0 0
  %7315 = vmatprep.subr.bf16.mxu0 0
  %7316 = vmatpush1.bf16.msra.mxu0 0
  %7317 = vmatprep.subr.bf16.mxu0 0
  %7318 = vmatpush1.bf16.msra.mxu0 0
  %7319 = vmatprep.subr.bf16.mxu0 0
  %7320 = vmatpush1.bf16.msra.mxu0 0
  %7321 = vmatprep.subr.bf16.mxu0 0
  %7322 = vmatpush1.bf16.msra.mxu0 0
  %7323 = vmatprep.subr.bf16.mxu0 0
  %7324 = vmatpush1.bf16.msra.mxu0 0
  %7325 = vmatprep.subr.bf16.mxu0 0
  %7326 = vmatpush1.bf16.msra.mxu0 0
  %7327 = vmatprep.subr.bf16.mxu0 0
  %7328 = vmatpush1.bf16.msra.mxu0 0
  %7329 = vmatprep.subr.bf16.mxu0 0
  %7330 = vmatpush1.bf16.msra.mxu0 0
  %7331 = vmatprep.subr.bf16.mxu0 0
  %7332 = vmatpush1.bf16.msra.mxu0 0
  %7333 = vmatprep.subr.bf16.mxu0 0
  %7334 = vmatpush1.bf16.msra.mxu0 0
  %7335 = vmatprep.mubr.bf16.mxu0 0
  %7336 = vmatmul.mubr.bf16.gmra.mrb[0].mxu0 %v7154
  %v7337 = vpop.f32.mrb[0].mxu0
  %v7338 = vadd.f32 0.0, %v7337
  %v7339 = vpop.f32.mrb[0].mxu0
  %v7340 = vadd.f32 0.0, %v7339
  %v7341 = vpop.f32.mrb[0].mxu0
  %v7342 = vpop.f32.mrb[0].mxu0
  %7343 = vdwg.mxu0
  %v7344 = vadd.f32 %v6975, %v7215
  %v7345 = vadd.f32 %v6976, %v7217
  %v7346 = vadd.f32 %v6977, %v7256
  %v7347 = vadd.f32 %v6978, %v7258
  %v7348 = vadd.f32 %v6979, %v7297
  %v7349 = vadd.f32 %v6980, %v7299
  %v7350 = vadd.f32 %v6981, %v7338
  %v7351 = vadd.f32 %v6982, %v7340
  %v7352 = vpack.c.bf16 %v4409, %v4409
  %s7353 = scalar_lea.vmem %s11, 1792
  %v7354 = vld [vmem:[%s7353] sm:$0xff]
  %v7355 = vld [vmem:[%s7353 + $0x8] sm:$0xff]
  %v7356 = vld [vmem:[%s7353 + $0x10] sm:$0xff]
  %v7357 = vld [vmem:[%s7353 + $0x18] sm:$0xff]
  %v7358 = vld [vmem:[%s7353 + $0x20] sm:$0xff]
  %v7359 = vld [vmem:[%s7353 + $0x28] sm:$0xff]
  %v7360 = vld [vmem:[%s7353 + $0x30] sm:$0xff]
  %v7361 = vld [vmem:[%s7353 + $0x38] sm:$0xff]
  %v7362 = vld [vmem:[%s7353 + $0x40] sm:$0xff]
  %v7363 = vld [vmem:[%s7353 + $0x48] sm:$0xff]
  %v7364 = vld [vmem:[%s7353 + $0x50] sm:$0xff]
  %v7365 = vld [vmem:[%s7353 + $0x58] sm:$0xff]
  %v7366 = vld [vmem:[%s7353 + $0x60] sm:$0xff]
  %v7367 = vld [vmem:[%s7353 + $0x68] sm:$0xff]
  %v7368 = vld [vmem:[%s7353 + $0x70] sm:$0xff]
  %v7369 = vld [vmem:[%s7353 + $0x78] sm:$0xff]
  %v7370 = vld [vmem:[%s7353 + $0x80] sm:$0xff]
  %v7371 = vld [vmem:[%s7353 + $0x88] sm:$0xff]
  %v7372 = vld [vmem:[%s7353 + $0x90] sm:$0xff]
  %v7373 = vld [vmem:[%s7353 + $0x98] sm:$0xff]
  %v7374 = vld [vmem:[%s7353 + $0xa0] sm:$0xff]
  %v7375 = vld [vmem:[%s7353 + $0xa8] sm:$0xff]
  %v7376 = vld [vmem:[%s7353 + $0xb0] sm:$0xff]
  %v7377 = vld [vmem:[%s7353 + $0xb8] sm:$0xff]
  %v7378 = vld [vmem:[%s7353 + $0xc0] sm:$0x11]
  %v7379 = vld [vmem:[%s7353 + $0xc8] sm:$0x11]
  %v7380 = vld [vmem:[%s7353 + $0xd0] sm:$0x11]
  %v7381 = vld [vmem:[%s7353 + $0xd8] sm:$0x11]
  %v7410 = vunpack.c.l.b16 %v7354
  %v7411 = vunpack.c.h.b16 %v7354
  %v7412 = vunpack.c.l.b16 %v7355
  %v7413 = vunpack.c.h.b16 %v7355
  %v7414 = vunpack.c.l.b16 %v7356
  %v7415 = vunpack.c.h.b16 %v7356
  %v7416 = vunpack.c.l.b16 %v7357
  %v7417 = vunpack.c.h.b16 %v7357
  %v7418 = vunpack.c.l.b16 %v7358
  %v7419 = vunpack.c.h.b16 %v7358
  %v7420 = vunpack.c.l.b16 %v7359
  %v7421 = vunpack.c.h.b16 %v7359
  %v7422 = vunpack.c.l.b16 %v7360
  %v7423 = vunpack.c.h.b16 %v7360
  %v7424 = vunpack.c.l.b16 %v7361
  %v7425 = vunpack.c.h.b16 %v7361
  %v7426 = vunpack.c.l.b16 %v7362
  %v7427 = vunpack.c.h.b16 %v7362
  %v7428 = vunpack.c.l.b16 %v7363
  %v7429 = vunpack.c.h.b16 %v7363
  %v7430 = vunpack.c.l.b16 %v7364
  %v7431 = vunpack.c.h.b16 %v7364
  %v7432 = vunpack.c.l.b16 %v7365
  %v7433 = vunpack.c.h.b16 %v7365
  %v7434 = vunpack.c.l.b16 %v7366
  %v7435 = vunpack.c.h.b16 %v7366
  %v7436 = vunpack.c.l.b16 %v7367
  %v7437 = vunpack.c.h.b16 %v7367
  %v7438 = vunpack.c.l.b16 %v7368
  %v7439 = vunpack.c.h.b16 %v7368
  %v7440 = vunpack.c.l.b16 %v7369
  %v7441 = vunpack.c.h.b16 %v7369
  %v7442 = vunpack.c.l.b16 %v7370
  %v7443 = vunpack.c.h.b16 %v7370
  %v7444 = vunpack.c.l.b16 %v7371
  %v7445 = vunpack.c.h.b16 %v7371
  %v7446 = vunpack.c.l.b16 %v7372
  %v7447 = vunpack.c.h.b16 %v7372
  %v7448 = vunpack.c.l.b16 %v7373
  %v7449 = vunpack.c.h.b16 %v7373
  %v7450 = vunpack.c.l.b16 %v7374
  %v7451 = vunpack.c.h.b16 %v7374
  %v7452 = vunpack.c.l.b16 %v7375
  %v7453 = vunpack.c.h.b16 %v7375
  %v7454 = vunpack.c.l.b16 %v7376
  %v7455 = vunpack.c.h.b16 %v7376
  %v7456 = vunpack.c.l.b16 %v7377
  %v7457 = vunpack.c.h.b16 %v7377
  %v7458 = vunpack.c.l.b16 %v7378
  %v7459 = vunpack.c.h.b16 %v7378
  %v7460 = vunpack.c.l.b16 %v7379
  %v7461 = vunpack.c.h.b16 %v7379
  %v7462 = vunpack.c.l.b16 %v7380
  %v7463 = vunpack.c.h.b16 %v7380
  %v7464 = vunpack.c.l.b16 %v7381
  %v7465 = vunpack.c.h.b16 %v7381
  %v7466 = vpack.c.b16 %v7418, %v7410
  %v7467 = vpack.c.b16 %v7419, %v7411
  %v7468 = vpack.c.b16 %v7420, %v7412
  %v7469 = vpack.c.b16 %v7421, %v7413
  %v7470 = vpack.c.b16 %v7422, %v7414
  %v7471 = vpack.c.b16 %v7423, %v7415
  %v7472 = vpack.c.b16 %v7424, %v7416
  %v7473 = vpack.c.b16 %v7425, %v7417
  %v7474 = vpack.c.b16 %v7434, %v7426
  %v7475 = vpack.c.b16 %v7435, %v7427
  %v7476 = vpack.c.b16 %v7436, %v7428
  %v7477 = vpack.c.b16 %v7437, %v7429
  %v7478 = vpack.c.b16 %v7438, %v7430
  %v7479 = vpack.c.b16 %v7439, %v7431
  %v7480 = vpack.c.b16 %v7440, %v7432
  %v7481 = vpack.c.b16 %v7441, %v7433
  %v7482 = vpack.c.b16 %v7450, %v7442
  %v7483 = vpack.c.b16 %v7451, %v7443
  %v7484 = vpack.c.b16 %v7452, %v7444
  %v7485 = vpack.c.b16 %v7453, %v7445
  %v7486 = vpack.c.b16 %v7454, %v7446
  %v7487 = vpack.c.b16 %v7455, %v7447
  %v7488 = vpack.c.b16 %v7456, %v7448
  %v7489 = vpack.c.b16 %v7457, %v7449
  %v7490 = vpack.c.b16 %v7458, %v7458
  %v7491 = vpack.c.b16 %v7459, %v7459
  %v7492 = vpack.c.b16 %v7460, %v7460
  %v7493 = vpack.c.b16 %v7461, %v7461
  %v7494 = vpack.c.b16 %v7462, %v7462
  %v7495 = vpack.c.b16 %v7463, %v7463
  %v7496 = vpack.c.b16 %v7464, %v7464
  %v7497 = vpack.c.b16 %v7465, %v7465
  %v7523 = vsel %vm3666, %v7352, 0
  %v7526 = vsel %vm3691, %v7490, 0
  %v7529 = vsel %vm3691, %v7491, 0
  %v7532 = vsel %vm3691, %v7492, 0
  %v7535 = vsel %vm3691, %v7493, 0
  %v7538 = vsel %vm3691, %v7494, 0
  %v7541 = vsel %vm3691, %v7495, 0
  %v7544 = vsel %vm3691, %v7496, 0
  %v7547 = vsel %vm3691, %v7497, 0
  %7549 = vmatprep.subr.bf16.mxu0 %v7467
  %7550 = vmatpush1.bf16.msra.mxu0 %v7466
  %7551 = vmatprep.subr.bf16.mxu0 %v7475
  %7552 = vmatpush1.bf16.msra.mxu0 %v7474
  %7553 = vmatprep.subr.bf16.mxu0 %v7483
  %7554 = vmatpush1.bf16.msra.mxu0 %v7482
  %7555 = vmatprep.subr.bf16.mxu0 %v7529
  %7556 = vmatpush1.bf16.msra.mxu0 %v7526
  %7557 = vmatprep.subr.bf16.mxu0 0
  %7558 = vmatpush1.bf16.msra.mxu0 0
  %7559 = vmatprep.subr.bf16.mxu0 0
  %7560 = vmatpush1.bf16.msra.mxu0 0
  %7561 = vmatprep.subr.bf16.mxu0 0
  %7562 = vmatpush1.bf16.msra.mxu0 0
  %7563 = vmatprep.subr.bf16.mxu0 0
  %7564 = vmatpush1.bf16.msra.mxu0 0
  %7565 = vmatprep.subr.bf16.mxu0 0
  %7566 = vmatpush1.bf16.msra.mxu0 0
  %7567 = vmatprep.subr.bf16.mxu0 0
  %7568 = vmatpush1.bf16.msra.mxu0 0
  %7569 = vmatprep.subr.bf16.mxu0 0
  %7570 = vmatpush1.bf16.msra.mxu0 0
  %7571 = vmatprep.subr.bf16.mxu0 0
  %7572 = vmatpush1.bf16.msra.mxu0 0
  %7573 = vmatprep.subr.bf16.mxu0 0
  %7574 = vmatpush1.bf16.msra.mxu0 0
  %7575 = vmatprep.subr.bf16.mxu0 0
  %7576 = vmatpush1.bf16.msra.mxu0 0
  %7577 = vmatprep.subr.bf16.mxu0 0
  %7578 = vmatpush1.bf16.msra.mxu0 0
  %7579 = vmatprep.subr.bf16.mxu0 0
  %7580 = vmatpush1.bf16.msra.mxu0 0
  %7581 = vmatprep.mubr.bf16.mxu0 0
  %7582 = vmatmul.mubr.bf16.gmra.mrb[0].mxu0 %v7523
  %v7583 = vpop.f32.mrb[0].mxu0
  %v7584 = vadd.f32 0.0, %v7583
  %v7585 = vpop.f32.mrb[0].mxu0
  %v7586 = vadd.f32 0.0, %v7585
  %v7587 = vpop.f32.mrb[0].mxu0
  %v7588 = vpop.f32.mrb[0].mxu0
  %7589 = vdwg.mxu0
  %7590 = vmatprep.subr.bf16.mxu0 %v7469
  %7591 = vmatpush1.bf16.msra.mxu0 %v7468
  %7592 = vmatprep.subr.bf16.mxu0 %v7477
  %7593 = vmatpush1.bf16.msra.mxu0 %v7476
  %7594 = vmatprep.subr.bf16.mxu0 %v7485
  %7595 = vmatpush1.bf16.msra.mxu0 %v7484
  %7596 = vmatprep.subr.bf16.mxu0 %v7535
  %7597 = vmatpush1.bf16.msra.mxu0 %v7532
  %7598 = vmatprep.subr.bf16.mxu0 0
  %7599 = vmatpush1.bf16.msra.mxu0 0
  %7600 = vmatprep.subr.bf16.mxu0 0
  %7601 = vmatpush1.bf16.msra.mxu0 0
  %7602 = vmatprep.subr.bf16.mxu0 0
  %7603 = vmatpush1.bf16.msra.mxu0 0
  %7604 = vmatprep.subr.bf16.mxu0 0
  %7605 = vmatpush1.bf16.msra.mxu0 0
  %7606 = vmatprep.subr.bf16.mxu0 0
  %7607 = vmatpush1.bf16.msra.mxu0 0
  %7608 = vmatprep.subr.bf16.mxu0 0
  %7609 = vmatpush1.bf16.msra.mxu0 0
  %7610 = vmatprep.subr.bf16.mxu0 0
  %7611 = vmatpush1.bf16.msra.mxu0 0
  %7612 = vmatprep.subr.bf16.mxu0 0
  %7613 = vmatpush1.bf16.msra.mxu0 0
  %7614 = vmatprep.subr.bf16.mxu0 0
  %7615 = vmatpush1.bf16.msra.mxu0 0
  %7616 = vmatprep.subr.bf16.mxu0 0
  %7617 = vmatpush1.bf16.msra.mxu0 0
  %7618 = vmatprep.subr.bf16.mxu0 0
  %7619 = vmatpush1.bf16.msra.mxu0 0
  %7620 = vmatprep.subr.bf16.mxu0 0
  %7621 = vmatpush1.bf16.msra.mxu0 0
  %7622 = vmatprep.mubr.bf16.mxu0 0
  %7623 = vmatmul.mubr.bf16.gmra.mrb[0].mxu0 %v7523
  %v7624 = vpop.f32.mrb[0].mxu0
  %v7625 = vadd.f32 0.0, %v7624
  %v7626 = vpop.f32.mrb[0].mxu0
  %v7627 = vadd.f32 0.0, %v7626
  %v7628 = vpop.f32.mrb[0].mxu0
  %v7629 = vpop.f32.mrb[0].mxu0
  %7630 = vdwg.mxu0
  %7631 = vmatprep.subr.bf16.mxu0 %v7471
  %7632 = vmatpush1.bf16.msra.mxu0 %v7470
  %7633 = vmatprep.subr.bf16.mxu0 %v7479
  %7634 = vmatpush1.bf16.msra.mxu0 %v7478
  %7635 = vmatprep.subr.bf16.mxu0 %v7487
  %7636 = vmatpush1.bf16.msra.mxu0 %v7486
  %7637 = vmatprep.subr.bf16.mxu0 %v7541
  %7638 = vmatpush1.bf16.msra.mxu0 %v7538
  %7639 = vmatprep.subr.bf16.mxu0 0
  %7640 = vmatpush1.bf16.msra.mxu0 0
  %7641 = vmatprep.subr.bf16.mxu0 0
  %7642 = vmatpush1.bf16.msra.mxu0 0
  %7643 = vmatprep.subr.bf16.mxu0 0
  %7644 = vmatpush1.bf16.msra.mxu0 0
  %7645 = vmatprep.subr.bf16.mxu0 0
  %7646 = vmatpush1.bf16.msra.mxu0 0
  %7647 = vmatprep.subr.bf16.mxu0 0
  %7648 = vmatpush1.bf16.msra.mxu0 0
  %7649 = vmatprep.subr.bf16.mxu0 0
  %7650 = vmatpush1.bf16.msra.mxu0 0
  %7651 = vmatprep.subr.bf16.mxu0 0
  %7652 = vmatpush1.bf16.msra.mxu0 0
  %7653 = vmatprep.subr.bf16.mxu0 0
  %7654 = vmatpush1.bf16.msra.mxu0 0
  %7655 = vmatprep.subr.bf16.mxu0 0
  %7656 = vmatpush1.bf16.msra.mxu0 0
  %7657 = vmatprep.subr.bf16.mxu0 0
  %7658 = vmatpush1.bf16.msra.mxu0 0
  %7659 = vmatprep.subr.bf16.mxu0 0
  %7660 = vmatpush1.bf16.msra.mxu0 0
  %7661 = vmatprep.subr.bf16.mxu0 0
  %7662 = vmatpush1.bf16.msra.mxu0 0
  %7663 = vmatprep.mubr.bf16.mxu0 0
  %7664 = vmatmul.mubr.bf16.gmra.mrb[0].mxu0 %v7523
  %v7665 = vpop.f32.mrb[0].mxu0
  %v7666 = vadd.f32 0.0, %v7665
  %v7667 = vpop.f32.mrb[0].mxu0
  %v7668 = vadd.f32 0.0, %v7667
  %v7669 = vpop.f32.mrb[0].mxu0
  %v7670 = vpop.f32.mrb[0].mxu0
  %7671 = vdwg.mxu0
  %7672 = vmatprep.subr.bf16.mxu0 %v7473
  %7673 = vmatpush1.bf16.msra.mxu0 %v7472
  %7674 = vmatprep.subr.bf16.mxu0 %v7481
  %7675 = vmatpush1.bf16.msra.mxu0 %v7480
  %7676 = vmatprep.subr.bf16.mxu0 %v7489
  %7677 = vmatpush1.bf16.msra.mxu0 %v7488
  %7678 = vmatprep.subr.bf16.mxu0 %v7547
  %7679 = vmatpush1.bf16.msra.mxu0 %v7544
  %7680 = vmatprep.subr.bf16.mxu0 0
  %7681 = vmatpush1.bf16.msra.mxu0 0
  %7682 = vmatprep.subr.bf16.mxu0 0
  %7683 = vmatpush1.bf16.msra.mxu0 0
  %7684 = vmatprep.subr.bf16.mxu0 0
  %7685 = vmatpush1.bf16.msra.mxu0 0
  %7686 = vmatprep.subr.bf16.mxu0 0
  %7687 = vmatpush1.bf16.msra.mxu0 0
  %7688 = vmatprep.subr.bf16.mxu0 0
  %7689 = vmatpush1.bf16.msra.mxu0 0
  %7690 = vmatprep.subr.bf16.mxu0 0
  %7691 = vmatpush1.bf16.msra.mxu0 0
  %7692 = vmatprep.subr.bf16.mxu0 0
  %7693 = vmatpush1.bf16.msra.mxu0 0
  %7694 = vmatprep.subr.bf16.mxu0 0
  %7695 = vmatpush1.bf16.msra.mxu0 0
  %7696 = vmatprep.subr.bf16.mxu0 0
  %7697 = vmatpush1.bf16.msra.mxu0 0
  %7698 = vmatprep.subr.bf16.mxu0 0
  %7699 = vmatpush1.bf16.msra.mxu0 0
  %7700 = vmatprep.subr.bf16.mxu0 0
  %7701 = vmatpush1.bf16.msra.mxu0 0
  %7702 = vmatprep.subr.bf16.mxu0 0
  %7703 = vmatpush1.bf16.msra.mxu0 0
  %7704 = vmatprep.mubr.bf16.mxu0 0
  %7705 = vmatmul.mubr.bf16.gmra.mrb[0].mxu0 %v7523
  %v7706 = vpop.f32.mrb[0].mxu0
  %v7707 = vadd.f32 0.0, %v7706
  %v7708 = vpop.f32.mrb[0].mxu0
  %v7709 = vadd.f32 0.0, %v7708
  %v7710 = vpop.f32.mrb[0].mxu0
  %v7711 = vpop.f32.mrb[0].mxu0
  %7712 = vdwg.mxu0
  %v7713 = vadd.f32 %v7344, %v7584
  %v7714 = vadd.f32 %v7345, %v7586
  %v7715 = vadd.f32 %v7346, %v7625
  %v7716 = vadd.f32 %v7347, %v7627
  %v7717 = vadd.f32 %v7348, %v7666
  %v7718 = vadd.f32 %v7349, %v7668
  %v7719 = vadd.f32 %v7350, %v7707
  %v7720 = vadd.f32 %v7351, %v7709
  %v7721 = vpack.c.bf16 %v4410, %v4410
  %s7722 = scalar_lea.vmem %s11, 2016
  %v7723 = vld [vmem:[%s7722] sm:$0xff]
  %v7724 = vld [vmem:[%s7722 + $0x8] sm:$0xff]
  %v7725 = vld [vmem:[%s7722 + $0x10] sm:$0xff]
  %v7726 = vld [vmem:[%s7722 + $0x18] sm:$0xff]
  %v7727 = vld [vmem:[%s7722 + $0x20] sm:$0xff]
  %v7728 = vld [vmem:[%s7722 + $0x28] sm:$0xff]
  %v7729 = vld [vmem:[%s7722 + $0x30] sm:$0xff]
  %v7730 = vld [vmem:[%s7722 + $0x38] sm:$0xff]
  %v7731 = vld [vmem:[%s7722 + $0x40] sm:$0xff]
  %v7732 = vld [vmem:[%s7722 + $0x48] sm:$0xff]
  %v7733 = vld [vmem:[%s7722 + $0x50] sm:$0xff]
  %v7734 = vld [vmem:[%s7722 + $0x58] sm:$0xff]
  %v7735 = vld [vmem:[%s7722 + $0x60] sm:$0xff]
  %v7736 = vld [vmem:[%s7722 + $0x68] sm:$0xff]
  %v7737 = vld [vmem:[%s7722 + $0x70] sm:$0xff]
  %v7738 = vld [vmem:[%s7722 + $0x78] sm:$0xff]
  %v7739 = vld [vmem:[%s7722 + $0x80] sm:$0xff]
  %v7740 = vld [vmem:[%s7722 + $0x88] sm:$0xff]
  %v7741 = vld [vmem:[%s7722 + $0x90] sm:$0xff]
  %v7742 = vld [vmem:[%s7722 + $0x98] sm:$0xff]
  %v7743 = vld [vmem:[%s7722 + $0xa0] sm:$0xff]
  %v7744 = vld [vmem:[%s7722 + $0xa8] sm:$0xff]
  %v7745 = vld [vmem:[%s7722 + $0xb0] sm:$0xff]
  %v7746 = vld [vmem:[%s7722 + $0xb8] sm:$0xff]
  %v7747 = vld [vmem:[%s7722 + $0xc0] sm:$0x11]
  %v7748 = vld [vmem:[%s7722 + $0xc8] sm:$0x11]
  %v7749 = vld [vmem:[%s7722 + $0xd0] sm:$0x11]
  %v7750 = vld [vmem:[%s7722 + $0xd8] sm:$0x11]
  %v7779 = vunpack.c.l.b16 %v7723
  %v7780 = vunpack.c.h.b16 %v7723
  %v7781 = vunpack.c.l.b16 %v7724
  %v7782 = vunpack.c.h.b16 %v7724
  %v7783 = vunpack.c.l.b16 %v7725
  %v7784 = vunpack.c.h.b16 %v7725
  %v7785 = vunpack.c.l.b16 %v7726
  %v7786 = vunpack.c.h.b16 %v7726
  %v7787 = vunpack.c.l.b16 %v7727
  %v7788 = vunpack.c.h.b16 %v7727
  %v7789 = vunpack.c.l.b16 %v7728
  %v7790 = vunpack.c.h.b16 %v7728
  %v7791 = vunpack.c.l.b16 %v7729
  %v7792 = vunpack.c.h.b16 %v7729
  %v7793 = vunpack.c.l.b16 %v7730
  %v7794 = vunpack.c.h.b16 %v7730
  %v7795 = vunpack.c.l.b16 %v7731
  %v7796 = vunpack.c.h.b16 %v7731
  %v7797 = vunpack.c.l.b16 %v7732
  %v7798 = vunpack.c.h.b16 %v7732
  %v7799 = vunpack.c.l.b16 %v7733
  %v7800 = vunpack.c.h.b16 %v7733
  %v7801 = vunpack.c.l.b16 %v7734
  %v7802 = vunpack.c.h.b16 %v7734
  %v7803 = vunpack.c.l.b16 %v7735
  %v7804 = vunpack.c.h.b16 %v7735
  %v7805 = vunpack.c.l.b16 %v7736
  %v7806 = vunpack.c.h.b16 %v7736
  %v7807 = vunpack.c.l.b16 %v7737
  %v7808 = vunpack.c.h.b16 %v7737
  %v7809 = vunpack.c.l.b16 %v7738
  %v7810 = vunpack.c.h.b16 %v7738
  %v7811 = vunpack.c.l.b16 %v7739
  %v7812 = vunpack.c.h.b16 %v7739
  %v7813 = vunpack.c.l.b16 %v7740
  %v7814 = vunpack.c.h.b16 %v7740
  %v7815 = vunpack.c.l.b16 %v7741
  %v7816 = vunpack.c.h.b16 %v7741
  %v7817 = vunpack.c.l.b16 %v7742
  %v7818 = vunpack.c.h.b16 %v7742
  %v7819 = vunpack.c.l.b16 %v7743
  %v7820 = vunpack.c.h.b16 %v7743
  %v7821 = vunpack.c.l.b16 %v7744
  %v7822 = vunpack.c.h.b16 %v7744
  %v7823 = vunpack.c.l.b16 %v7745
  %v7824 = vunpack.c.h.b16 %v7745
  %v7825 = vunpack.c.l.b16 %v7746
  %v7826 = vunpack.c.h.b16 %v7746
  %v7827 = vunpack.c.l.b16 %v7747
  %v7828 = vunpack.c.h.b16 %v7747
  %v7829 = vunpack.c.l.b16 %v7748
  %v7830 = vunpack.c.h.b16 %v7748
  %v7831 = vunpack.c.l.b16 %v7749
  %v7832 = vunpack.c.h.b16 %v7749
  %v7833 = vunpack.c.l.b16 %v7750
  %v7834 = vunpack.c.h.b16 %v7750
  %v7835 = vpack.c.b16 %v7787, %v7779
  %v7836 = vpack.c.b16 %v7788, %v7780
  %v7837 = vpack.c.b16 %v7789, %v7781
  %v7838 = vpack.c.b16 %v7790, %v7782
  %v7839 = vpack.c.b16 %v7791, %v7783
  %v7840 = vpack.c.b16 %v7792, %v7784
  %v7841 = vpack.c.b16 %v7793, %v7785
  %v7842 = vpack.c.b16 %v7794, %v7786
  %v7843 = vpack.c.b16 %v7803, %v7795
  %v7844 = vpack.c.b16 %v7804, %v7796
  %v7845 = vpack.c.b16 %v7805, %v7797
  %v7846 = vpack.c.b16 %v7806, %v7798
  %v7847 = vpack.c.b16 %v7807, %v7799
  %v7848 = vpack.c.b16 %v7808, %v7800
  %v7849 = vpack.c.b16 %v7809, %v7801
  %v7850 = vpack.c.b16 %v7810, %v7802
  %v7851 = vpack.c.b16 %v7819, %v7811
  %v7852 = vpack.c.b16 %v7820, %v7812
  %v7853 = vpack.c.b16 %v7821, %v7813
  %v7854 = vpack.c.b16 %v7822, %v7814
  %v7855 = vpack.c.b16 %v7823, %v7815
  %v7856 = vpack.c.b16 %v7824, %v7816
  %v7857 = vpack.c.b16 %v7825, %v7817
  %v7858 = vpack.c.b16 %v7826, %v7818
  %v7859 = vpack.c.b16 %v7827, %v7827
  %v7860 = vpack.c.b16 %v7828, %v7828
  %v7861 = vpack.c.b16 %v7829, %v7829
  %v7862 = vpack.c.b16 %v7830, %v7830
  %v7863 = vpack.c.b16 %v7831, %v7831
  %v7864 = vpack.c.b16 %v7832, %v7832
  %v7865 = vpack.c.b16 %v7833, %v7833
  %v7866 = vpack.c.b16 %v7834, %v7834
  %v7892 = vsel %vm3666, %v7721, 0
  %v7895 = vsel %vm3691, %v7859, 0
  %v7898 = vsel %vm3691, %v7860, 0
  %v7901 = vsel %vm3691, %v7861, 0
  %v7904 = vsel %vm3691, %v7862, 0
  %v7907 = vsel %vm3691, %v7863, 0
  %v7910 = vsel %vm3691, %v7864, 0
  %v7913 = vsel %vm3691, %v7865, 0
  %v7916 = vsel %vm3691, %v7866, 0
  %7918 = vmatprep.subr.bf16.mxu0 %v7836
  %7919 = vmatpush1.bf16.msra.mxu0 %v7835
  %7920 = vmatprep.subr.bf16.mxu0 %v7844
  %7921 = vmatpush1.bf16.msra.mxu0 %v7843
  %7922 = vmatprep.subr.bf16.mxu0 %v7852
  %7923 = vmatpush1.bf16.msra.mxu0 %v7851
  %7924 = vmatprep.subr.bf16.mxu0 %v7898
  %7925 = vmatpush1.bf16.msra.mxu0 %v7895
  %7926 = vmatprep.subr.bf16.mxu0 0
  %7927 = vmatpush1.bf16.msra.mxu0 0
  %7928 = vmatprep.subr.bf16.mxu0 0
  %7929 = vmatpush1.bf16.msra.mxu0 0
  %7930 = vmatprep.subr.bf16.mxu0 0
  %7931 = vmatpush1.bf16.msra.mxu0 0
  %7932 = vmatprep.subr.bf16.mxu0 0
  %7933 = vmatpush1.bf16.msra.mxu0 0
  %7934 = vmatprep.subr.bf16.mxu0 0
  %7935 = vmatpush1.bf16.msra.mxu0 0
  %7936 = vmatprep.subr.bf16.mxu0 0
  %7937 = vmatpush1.bf16.msra.mxu0 0
  %7938 = vmatprep.subr.bf16.mxu0 0
  %7939 = vmatpush1.bf16.msra.mxu0 0
  %7940 = vmatprep.subr.bf16.mxu0 0
  %7941 = vmatpush1.bf16.msra.mxu0 0
  %7942 = vmatprep.subr.bf16.mxu0 0
  %7943 = vmatpush1.bf16.msra.mxu0 0
  %7944 = vmatprep.subr.bf16.mxu0 0
  %7945 = vmatpush1.bf16.msra.mxu0 0
  %7946 = vmatprep.subr.bf16.mxu0 0
  %7947 = vmatpush1.bf16.msra.mxu0 0
  %7948 = vmatprep.subr.bf16.mxu0 0
  %7949 = vmatpush1.bf16.msra.mxu0 0
  %7950 = vmatprep.mubr.bf16.mxu0 0
  %7951 = vmatmul.mubr.bf16.gmra.mrb[0].mxu0 %v7892
  %v7952 = vpop.f32.mrb[0].mxu0
  %v7953 = vadd.f32 0.0, %v7952
  %v7954 = vpop.f32.mrb[0].mxu0
  %v7955 = vadd.f32 0.0, %v7954
  %v7956 = vpop.f32.mrb[0].mxu0
  %v7957 = vpop.f32.mrb[0].mxu0
  %7958 = vdwg.mxu0
  %7959 = vmatprep.subr.bf16.mxu0 %v7838
  %7960 = vmatpush1.bf16.msra.mxu0 %v7837
  %7961 = vmatprep.subr.bf16.mxu0 %v7846
  %7962 = vmatpush1.bf16.msra.mxu0 %v7845
  %7963 = vmatprep.subr.bf16.mxu0 %v7854
  %7964 = vmatpush1.bf16.msra.mxu0 %v7853
  %7965 = vmatprep.subr.bf16.mxu0 %v7904
  %7966 = vmatpush1.bf16.msra.mxu0 %v7901
  %7967 = vmatprep.subr.bf16.mxu0 0
  %7968 = vmatpush1.bf16.msra.mxu0 0
  %7969 = vmatprep.subr.bf16.mxu0 0
  %7970 = vmatpush1.bf16.msra.mxu0 0
  %7971 = vmatprep.subr.bf16.mxu0 0
  %7972 = vmatpush1.bf16.msra.mxu0 0
  %7973 = vmatprep.subr.bf16.mxu0 0
  %7974 = vmatpush1.bf16.msra.mxu0 0
  %7975 = vmatprep.subr.bf16.mxu0 0
  %7976 = vmatpush1.bf16.msra.mxu0 0
  %7977 = vmatprep.subr.bf16.mxu0 0
  %7978 = vmatpush1.bf16.msra.mxu0 0
  %7979 = vmatprep.subr.bf16.mxu0 0
  %7980 = vmatpush1.bf16.msra.mxu0 0
  %7981 = vmatprep.subr.bf16.mxu0 0
  %7982 = vmatpush1.bf16.msra.mxu0 0
  %7983 = vmatprep.subr.bf16.mxu0 0
  %7984 = vmatpush1.bf16.msra.mxu0 0
  %7985 = vmatprep.subr.bf16.mxu0 0
  %7986 = vmatpush1.bf16.msra.mxu0 0
  %7987 = vmatprep.subr.bf16.mxu0 0
  %7988 = vmatpush1.bf16.msra.mxu0 0
  %7989 = vmatprep.subr.bf16.mxu0 0
  %7990 = vmatpush1.bf16.msra.mxu0 0
  %7991 = vmatprep.mubr.bf16.mxu0 0
  %7992 = vmatmul.mubr.bf16.gmra.mrb[0].mxu0 %v7892
  %v7993 = vpop.f32.mrb[0].mxu0
  %v7994 = vadd.f32 0.0, %v7993
  %v7995 = vpop.f32.mrb[0].mxu0
  %v7996 = vadd.f32 0.0, %v7995
  %v7997 = vpop.f32.mrb[0].mxu0
  %v7998 = vpop.f32.mrb[0].mxu0
  %7999 = vdwg.mxu0
  %8000 = vmatprep.subr.bf16.mxu0 %v7840
  %8001 = vmatpush1.bf16.msra.mxu0 %v7839
  %8002 = vmatprep.subr.bf16.mxu0 %v7848
  %8003 = vmatpush1.bf16.msra.mxu0 %v7847
  %8004 = vmatprep.subr.bf16.mxu0 %v7856
  %8005 = vmatpush1.bf16.msra.mxu0 %v7855
  %8006 = vmatprep.subr.bf16.mxu0 %v7910
  %8007 = vmatpush1.bf16.msra.mxu0 %v7907
  %8008 = vmatprep.subr.bf16.mxu0 0
  %8009 = vmatpush1.bf16.msra.mxu0 0
  %8010 = vmatprep.subr.bf16.mxu0 0
  %8011 = vmatpush1.bf16.msra.mxu0 0
  %8012 = vmatprep.subr.bf16.mxu0 0
  %8013 = vmatpush1.bf16.msra.mxu0 0
  %8014 = vmatprep.subr.bf16.mxu0 0
  %8015 = vmatpush1.bf16.msra.mxu0 0
  %8016 = vmatprep.subr.bf16.mxu0 0
  %8017 = vmatpush1.bf16.msra.mxu0 0
  %8018 = vmatprep.subr.bf16.mxu0 0
  %8019 = vmatpush1.bf16.msra.mxu0 0
  %8020 = vmatprep.subr.bf16.mxu0 0
  %8021 = vmatpush1.bf16.msra.mxu0 0
  %8022 = vmatprep.subr.bf16.mxu0 0
  %8023 = vmatpush1.bf16.msra.mxu0 0
  %8024 = vmatprep.subr.bf16.mxu0 0
  %8025 = vmatpush1.bf16.msra.mxu0 0
  %8026 = vmatprep.subr.bf16.mxu0 0
  %8027 = vmatpush1.bf16.msra.mxu0 0
  %8028 = vmatprep.subr.bf16.mxu0 0
  %8029 = vmatpush1.bf16.msra.mxu0 0
  %8030 = vmatprep.subr.bf16.mxu0 0
  %8031 = vmatpush1.bf16.msra.mxu0 0
  %8032 = vmatprep.mubr.bf16.mxu0 0
  %8033 = vmatmul.mubr.bf16.gmra.mrb[0].mxu0 %v7892
  %v8034 = vpop.f32.mrb[0].mxu0
  %v8035 = vadd.f32 0.0, %v8034
  %v8036 = vpop.f32.mrb[0].mxu0
  %v8037 = vadd.f32 0.0, %v8036
  %v8038 = vpop.f32.mrb[0].mxu0
  %v8039 = vpop.f32.mrb[0].mxu0
  %8040 = vdwg.mxu0
  %8041 = vmatprep.subr.bf16.mxu0 %v7842
  %8042 = vmatpush1.bf16.msra.mxu0 %v7841
  %8043 = vmatprep.subr.bf16.mxu0 %v7850
  %8044 = vmatpush1.bf16.msra.mxu0 %v7849
  %8045 = vmatprep.subr.bf16.mxu0 %v7858
  %8046 = vmatpush1.bf16.msra.mxu0 %v7857
  %8047 = vmatprep.subr.bf16.mxu0 %v7916
  %8048 = vmatpush1.bf16.msra.mxu0 %v7913
  %8049 = vmatprep.subr.bf16.mxu0 0
  %8050 = vmatpush1.bf16.msra.mxu0 0
  %8051 = vmatprep.subr.bf16.mxu0 0
  %8052 = vmatpush1.bf16.msra.mxu0 0
  %8053 = vmatprep.subr.bf16.mxu0 0
  %8054 = vmatpush1.bf16.msra.mxu0 0
  %8055 = vmatprep.subr.bf16.mxu0 0
  %8056 = vmatpush1.bf16.msra.mxu0 0
  %8057 = vmatprep.subr.bf16.mxu0 0
  %8058 = vmatpush1.bf16.msra.mxu0 0
  %8059 = vmatprep.subr.bf16.mxu0 0
  %8060 = vmatpush1.bf16.msra.mxu0 0
  %8061 = vmatprep.subr.bf16.mxu0 0
  %8062 = vmatpush1.bf16.msra.mxu0 0
  %8063 = vmatprep.subr.bf16.mxu0 0
  %8064 = vmatpush1.bf16.msra.mxu0 0
  %8065 = vmatprep.subr.bf16.mxu0 0
  %8066 = vmatpush1.bf16.msra.mxu0 0
  %8067 = vmatprep.subr.bf16.mxu0 0
  %8068 = vmatpush1.bf16.msra.mxu0 0
  %8069 = vmatprep.subr.bf16.mxu0 0
  %8070 = vmatpush1.bf16.msra.mxu0 0
  %8071 = vmatprep.subr.bf16.mxu0 0
  %8072 = vmatpush1.bf16.msra.mxu0 0
  %8073 = vmatprep.mubr.bf16.mxu0 0
  %8074 = vmatmul.mubr.bf16.gmra.mrb[0].mxu0 %v7892
  %v8075 = vpop.f32.mrb[0].mxu0
  %v8076 = vadd.f32 0.0, %v8075
  %v8077 = vpop.f32.mrb[0].mxu0
  %v8078 = vadd.f32 0.0, %v8077
  %v8079 = vpop.f32.mrb[0].mxu0
  %v8080 = vpop.f32.mrb[0].mxu0
  %8081 = vdwg.mxu0
  %v8082 = vadd.f32 %v7713, %v7953
  %v8083 = vadd.f32 %v7714, %v7955
  %v8084 = vadd.f32 %v7715, %v7994
  %v8085 = vadd.f32 %v7716, %v7996
  %v8086 = vadd.f32 %v7717, %v8035
  %v8087 = vadd.f32 %v7718, %v8037
  %v8088 = vadd.f32 %v7719, %v8076
  %v8089 = vadd.f32 %v7720, %v8078
  %v8090 = vpack.c.bf16 %v4411, %v4411
  %s8091 = scalar_lea.vmem %s11, 2240
  %v8092 = vld [vmem:[%s8091] sm:$0xff]
  %v8093 = vld [vmem:[%s8091 + $0x8] sm:$0xff]
  %v8094 = vld [vmem:[%s8091 + $0x10] sm:$0xff]
  %v8095 = vld [vmem:[%s8091 + $0x18] sm:$0xff]
  %v8096 = vld [vmem:[%s8091 + $0x20] sm:$0xff]
  %v8097 = vld [vmem:[%s8091 + $0x28] sm:$0xff]
  %v8098 = vld [vmem:[%s8091 + $0x30] sm:$0xff]
  %v8099 = vld [vmem:[%s8091 + $0x38] sm:$0xff]
  %v8100 = vld [vmem:[%s8091 + $0x40] sm:$0xff]
  %v8101 = vld [vmem:[%s8091 + $0x48] sm:$0xff]
  %v8102 = vld [vmem:[%s8091 + $0x50] sm:$0xff]
  %v8103 = vld [vmem:[%s8091 + $0x58] sm:$0xff]
  %v8104 = vld [vmem:[%s8091 + $0x60] sm:$0xff]
  %v8105 = vld [vmem:[%s8091 + $0x68] sm:$0xff]
  %v8106 = vld [vmem:[%s8091 + $0x70] sm:$0xff]
  %v8107 = vld [vmem:[%s8091 + $0x78] sm:$0xff]
  %v8108 = vld [vmem:[%s8091 + $0x80] sm:$0xff]
  %v8109 = vld [vmem:[%s8091 + $0x88] sm:$0xff]
  %v8110 = vld [vmem:[%s8091 + $0x90] sm:$0xff]
  %v8111 = vld [vmem:[%s8091 + $0x98] sm:$0xff]
  %v8112 = vld [vmem:[%s8091 + $0xa0] sm:$0xff]
  %v8113 = vld [vmem:[%s8091 + $0xa8] sm:$0xff]
  %v8114 = vld [vmem:[%s8091 + $0xb0] sm:$0xff]
  %v8115 = vld [vmem:[%s8091 + $0xb8] sm:$0xff]
  %v8116 = vld [vmem:[%s8091 + $0xc0] sm:$0x11]
  %v8117 = vld [vmem:[%s8091 + $0xc8] sm:$0x11]
  %v8118 = vld [vmem:[%s8091 + $0xd0] sm:$0x11]
  %v8119 = vld [vmem:[%s8091 + $0xd8] sm:$0x11]
  %v8148 = vunpack.c.l.b16 %v8092
  %v8149 = vunpack.c.h.b16 %v8092
  %v8150 = vunpack.c.l.b16 %v8093
  %v8151 = vunpack.c.h.b16 %v8093
  %v8152 = vunpack.c.l.b16 %v8094
  %v8153 = vunpack.c.h.b16 %v8094
  %v8154 = vunpack.c.l.b16 %v8095
  %v8155 = vunpack.c.h.b16 %v8095
  %v8156 = vunpack.c.l.b16 %v8096
  %v8157 = vunpack.c.h.b16 %v8096
  %v8158 = vunpack.c.l.b16 %v8097
  %v8159 = vunpack.c.h.b16 %v8097
  %v8160 = vunpack.c.l.b16 %v8098
  %v8161 = vunpack.c.h.b16 %v8098
  %v8162 = vunpack.c.l.b16 %v8099
  %v8163 = vunpack.c.h.b16 %v8099
  %v8164 = vunpack.c.l.b16 %v8100
  %v8165 = vunpack.c.h.b16 %v8100
  %v8166 = vunpack.c.l.b16 %v8101
  %v8167 = vunpack.c.h.b16 %v8101
  %v8168 = vunpack.c.l.b16 %v8102
  %v8169 = vunpack.c.h.b16 %v8102
  %v8170 = vunpack.c.l.b16 %v8103
  %v8171 = vunpack.c.h.b16 %v8103
  %v8172 = vunpack.c.l.b16 %v8104
  %v8173 = vunpack.c.h.b16 %v8104
  %v8174 = vunpack.c.l.b16 %v8105
  %v8175 = vunpack.c.h.b16 %v8105
  %v8176 = vunpack.c.l.b16 %v8106
  %v8177 = vunpack.c.h.b16 %v8106
  %v8178 = vunpack.c.l.b16 %v8107
  %v8179 = vunpack.c.h.b16 %v8107
  %v8180 = vunpack.c.l.b16 %v8108
  %v8181 = vunpack.c.h.b16 %v8108
  %v8182 = vunpack.c.l.b16 %v8109
  %v8183 = vunpack.c.h.b16 %v8109
  %v8184 = vunpack.c.l.b16 %v8110
  %v8185 = vunpack.c.h.b16 %v8110
  %v8186 = vunpack.c.l.b16 %v8111
  %v8187 = vunpack.c.h.b16 %v8111
  %v8188 = vunpack.c.l.b16 %v8112
  %v8189 = vunpack.c.h.b16 %v8112
  %v8190 = vunpack.c.l.b16 %v8113
  %v8191 = vunpack.c.h.b16 %v8113
  %v8192 = vunpack.c.l.b16 %v8114
  %v8193 = vunpack.c.h.b16 %v8114
  %v8194 = vunpack.c.l.b16 %v8115
  %v8195 = vunpack.c.h.b16 %v8115
  %v8196 = vunpack.c.l.b16 %v8116
  %v8197 = vunpack.c.h.b16 %v8116
  %v8198 = vunpack.c.l.b16 %v8117
  %v8199 = vunpack.c.h.b16 %v8117
  %v8200 = vunpack.c.l.b16 %v8118
  %v8201 = vunpack.c.h.b16 %v8118
  %v8202 = vunpack.c.l.b16 %v8119
  %v8203 = vunpack.c.h.b16 %v8119
  %v8204 = vpack.c.b16 %v8156, %v8148
  %v8205 = vpack.c.b16 %v8157, %v8149
  %v8206 = vpack.c.b16 %v8158, %v8150
  %v8207 = vpack.c.b16 %v8159, %v8151
  %v8208 = vpack.c.b16 %v8160, %v8152
  %v8209 = vpack.c.b16 %v8161, %v8153
  %v8210 = vpack.c.b16 %v8162, %v8154
  %v8211 = vpack.c.b16 %v8163, %v8155
  %v8212 = vpack.c.b16 %v8172, %v8164
  %v8213 = vpack.c.b16 %v8173, %v8165
  %v8214 = vpack.c.b16 %v8174, %v8166
  %v8215 = vpack.c.b16 %v8175, %v8167
  %v8216 = vpack.c.b16 %v8176, %v8168
  %v8217 = vpack.c.b16 %v8177, %v8169
  %v8218 = vpack.c.b16 %v8178, %v8170
  %v8219 = vpack.c.b16 %v8179, %v8171
  %v8220 = vpack.c.b16 %v8188, %v8180
  %v8221 = vpack.c.b16 %v8189, %v8181
  %v8222 = vpack.c.b16 %v8190, %v8182
  %v8223 = vpack.c.b16 %v8191, %v8183
  %v8224 = vpack.c.b16 %v8192, %v8184
  %v8225 = vpack.c.b16 %v8193, %v8185
  %v8226 = vpack.c.b16 %v8194, %v8186
  %v8227 = vpack.c.b16 %v8195, %v8187
  %v8228 = vpack.c.b16 %v8196, %v8196
  %v8229 = vpack.c.b16 %v8197, %v8197
  %v8230 = vpack.c.b16 %v8198, %v8198
  %v8231 = vpack.c.b16 %v8199, %v8199
  %v8232 = vpack.c.b16 %v8200, %v8200
  %v8233 = vpack.c.b16 %v8201, %v8201
  %v8234 = vpack.c.b16 %v8202, %v8202
  %v8235 = vpack.c.b16 %v8203, %v8203
  %v8261 = vsel %vm3666, %v8090, 0
  %v8264 = vsel %vm3691, %v8228, 0
  %v8267 = vsel %vm3691, %v8229, 0
  %v8270 = vsel %vm3691, %v8230, 0
  %v8273 = vsel %vm3691, %v8231, 0
  %v8276 = vsel %vm3691, %v8232, 0
  %v8279 = vsel %vm3691, %v8233, 0
  %v8282 = vsel %vm3691, %v8234, 0
  %v8285 = vsel %vm3691, %v8235, 0
  %8287 = vmatprep.subr.bf16.mxu0 %v8205
  %8288 = vmatpush1.bf16.msra.mxu0 %v8204
  %8289 = vmatprep.subr.bf16.mxu0 %v8213
  %8290 = vmatpush1.bf16.msra.mxu0 %v8212
  %8291 = vmatprep.subr.bf16.mxu0 %v8221
  %8292 = vmatpush1.bf16.msra.mxu0 %v8220
  %8293 = vmatprep.subr.bf16.mxu0 %v8267
  %8294 = vmatpush1.bf16.msra.mxu0 %v8264
  %8295 = vmatprep.subr.bf16.mxu0 0
  %8296 = vmatpush1.bf16.msra.mxu0 0
  %8297 = vmatprep.subr.bf16.mxu0 0
  %8298 = vmatpush1.bf16.msra.mxu0 0
  %8299 = vmatprep.subr.bf16.mxu0 0
  %8300 = vmatpush1.bf16.msra.mxu0 0
  %8301 = vmatprep.subr.bf16.mxu0 0
  %8302 = vmatpush1.bf16.msra.mxu0 0
  %8303 = vmatprep.subr.bf16.mxu0 0
  %8304 = vmatpush1.bf16.msra.mxu0 0
  %8305 = vmatprep.subr.bf16.mxu0 0
  %8306 = vmatpush1.bf16.msra.mxu0 0
  %8307 = vmatprep.subr.bf16.mxu0 0
  %8308 = vmatpush1.bf16.msra.mxu0 0
  %8309 = vmatprep.subr.bf16.mxu0 0
  %8310 = vmatpush1.bf16.msra.mxu0 0
  %8311 = vmatprep.subr.bf16.mxu0 0
  %8312 = vmatpush1.bf16.msra.mxu0 0
  %8313 = vmatprep.subr.bf16.mxu0 0
  %8314 = vmatpush1.bf16.msra.mxu0 0
  %8315 = vmatprep.subr.bf16.mxu0 0
  %8316 = vmatpush1.bf16.msra.mxu0 0
  %8317 = vmatprep.subr.bf16.mxu0 0
  %8318 = vmatpush1.bf16.msra.mxu0 0
  %8319 = vmatprep.mubr.bf16.mxu0 0
  %8320 = vmatmul.mubr.bf16.gmra.mrb[0].mxu0 %v8261
  %v8321 = vpop.f32.mrb[0].mxu0
  %v8322 = vadd.f32 0.0, %v8321
  %v8323 = vpop.f32.mrb[0].mxu0
  %v8324 = vadd.f32 0.0, %v8323
  %v8325 = vpop.f32.mrb[0].mxu0
  %v8326 = vpop.f32.mrb[0].mxu0
  %8327 = vdwg.mxu0
  %8328 = vmatprep.subr.bf16.mxu0 %v8207
  %8329 = vmatpush1.bf16.msra.mxu0 %v8206
  %8330 = vmatprep.subr.bf16.mxu0 %v8215
  %8331 = vmatpush1.bf16.msra.mxu0 %v8214
  %8332 = vmatprep.subr.bf16.mxu0 %v8223
  %8333 = vmatpush1.bf16.msra.mxu0 %v8222
  %8334 = vmatprep.subr.bf16.mxu0 %v8273
  %8335 = vmatpush1.bf16.msra.mxu0 %v8270
  %8336 = vmatprep.subr.bf16.mxu0 0
  %8337 = vmatpush1.bf16.msra.mxu0 0
  %8338 = vmatprep.subr.bf16.mxu0 0
  %8339 = vmatpush1.bf16.msra.mxu0 0
  %8340 = vmatprep.subr.bf16.mxu0 0
  %8341 = vmatpush1.bf16.msra.mxu0 0
  %8342 = vmatprep.subr.bf16.mxu0 0
  %8343 = vmatpush1.bf16.msra.mxu0 0
  %8344 = vmatprep.subr.bf16.mxu0 0
  %8345 = vmatpush1.bf16.msra.mxu0 0
  %8346 = vmatprep.subr.bf16.mxu0 0
  %8347 = vmatpush1.bf16.msra.mxu0 0
  %8348 = vmatprep.subr.bf16.mxu0 0
  %8349 = vmatpush1.bf16.msra.mxu0 0
  %8350 = vmatprep.subr.bf16.mxu0 0
  %8351 = vmatpush1.bf16.msra.mxu0 0
  %8352 = vmatprep.subr.bf16.mxu0 0
  %8353 = vmatpush1.bf16.msra.mxu0 0
  %8354 = vmatprep.subr.bf16.mxu0 0
  %8355 = vmatpush1.bf16.msra.mxu0 0
  %8356 = vmatprep.subr.bf16.mxu0 0
  %8357 = vmatpush1.bf16.msra.mxu0 0
  %8358 = vmatprep.subr.bf16.mxu0 0
  %8359 = vmatpush1.bf16.msra.mxu0 0
  %8360 = vmatprep.mubr.bf16.mxu0 0
  %8361 = vmatmul.mubr.bf16.gmra.mrb[0].mxu0 %v8261
  %v8362 = vpop.f32.mrb[0].mxu0
  %v8363 = vadd.f32 0.0, %v8362
  %v8364 = vpop.f32.mrb[0].mxu0
  %v8365 = vadd.f32 0.0, %v8364
  %v8366 = vpop.f32.mrb[0].mxu0
  %v8367 = vpop.f32.mrb[0].mxu0
  %8368 = vdwg.mxu0
  %8369 = vmatprep.subr.bf16.mxu0 %v8209
  %8370 = vmatpush1.bf16.msra.mxu0 %v8208
  %8371 = vmatprep.subr.bf16.mxu0 %v8217
  %8372 = vmatpush1.bf16.msra.mxu0 %v8216
  %8373 = vmatprep.subr.bf16.mxu0 %v8225
  %8374 = vmatpush1.bf16.msra.mxu0 %v8224
  %8375 = vmatprep.subr.bf16.mxu0 %v8279
  %8376 = vmatpush1.bf16.msra.mxu0 %v8276
  %8377 = vmatprep.subr.bf16.mxu0 0
  %8378 = vmatpush1.bf16.msra.mxu0 0
  %8379 = vmatprep.subr.bf16.mxu0 0
  %8380 = vmatpush1.bf16.msra.mxu0 0
  %8381 = vmatprep.subr.bf16.mxu0 0
  %8382 = vmatpush1.bf16.msra.mxu0 0
  %8383 = vmatprep.subr.bf16.mxu0 0
  %8384 = vmatpush1.bf16.msra.mxu0 0
  %8385 = vmatprep.subr.bf16.mxu0 0
  %8386 = vmatpush1.bf16.msra.mxu0 0
  %8387 = vmatprep.subr.bf16.mxu0 0
  %8388 = vmatpush1.bf16.msra.mxu0 0
  %8389 = vmatprep.subr.bf16.mxu0 0
  %8390 = vmatpush1.bf16.msra.mxu0 0
  %8391 = vmatprep.subr.bf16.mxu0 0
  %8392 = vmatpush1.bf16.msra.mxu0 0
  %8393 = vmatprep.subr.bf16.mxu0 0
  %8394 = vmatpush1.bf16.msra.mxu0 0
  %8395 = vmatprep.subr.bf16.mxu0 0
  %8396 = vmatpush1.bf16.msra.mxu0 0
  %8397 = vmatprep.subr.bf16.mxu0 0
  %8398 = vmatpush1.bf16.msra.mxu0 0
  %8399 = vmatprep.subr.bf16.mxu0 0
  %8400 = vmatpush1.bf16.msra.mxu0 0
  %8401 = vmatprep.mubr.bf16.mxu0 0
  %8402 = vmatmul.mubr.bf16.gmra.mrb[0].mxu0 %v8261
  %v8403 = vpop.f32.mrb[0].mxu0
  %v8404 = vadd.f32 0.0, %v8403
  %v8405 = vpop.f32.mrb[0].mxu0
  %v8406 = vadd.f32 0.0, %v8405
  %v8407 = vpop.f32.mrb[0].mxu0
  %v8408 = vpop.f32.mrb[0].mxu0
  %8409 = vdwg.mxu0
  %8410 = vmatprep.subr.bf16.mxu0 %v8211
  %8411 = vmatpush1.bf16.msra.mxu0 %v8210
  %8412 = vmatprep.subr.bf16.mxu0 %v8219
  %8413 = vmatpush1.bf16.msra.mxu0 %v8218
  %8414 = vmatprep.subr.bf16.mxu0 %v8227
  %8415 = vmatpush1.bf16.msra.mxu0 %v8226
  %8416 = vmatprep.subr.bf16.mxu0 %v8285
  %8417 = vmatpush1.bf16.msra.mxu0 %v8282
  %8418 = vmatprep.subr.bf16.mxu0 0
  %8419 = vmatpush1.bf16.msra.mxu0 0
  %8420 = vmatprep.subr.bf16.mxu0 0
  %8421 = vmatpush1.bf16.msra.mxu0 0
  %8422 = vmatprep.subr.bf16.mxu0 0
  %8423 = vmatpush1.bf16.msra.mxu0 0
  %8424 = vmatprep.subr.bf16.mxu0 0
  %8425 = vmatpush1.bf16.msra.mxu0 0
  %8426 = vmatprep.subr.bf16.mxu0 0
  %8427 = vmatpush1.bf16.msra.mxu0 0
  %8428 = vmatprep.subr.bf16.mxu0 0
  %8429 = vmatpush1.bf16.msra.mxu0 0
  %8430 = vmatprep.subr.bf16.mxu0 0
  %8431 = vmatpush1.bf16.msra.mxu0 0
  %8432 = vmatprep.subr.bf16.mxu0 0
  %8433 = vmatpush1.bf16.msra.mxu0 0
  %8434 = vmatprep.subr.bf16.mxu0 0
  %8435 = vmatpush1.bf16.msra.mxu0 0
  %8436 = vmatprep.subr.bf16.mxu0 0
  %8437 = vmatpush1.bf16.msra.mxu0 0
  %8438 = vmatprep.subr.bf16.mxu0 0
  %8439 = vmatpush1.bf16.msra.mxu0 0
  %8440 = vmatprep.subr.bf16.mxu0 0
  %8441 = vmatpush1.bf16.msra.mxu0 0
  %8442 = vmatprep.mubr.bf16.mxu0 0
  %8443 = vmatmul.mubr.bf16.gmra.mrb[0].mxu0 %v8261
  %v8444 = vpop.f32.mrb[0].mxu0
  %v8445 = vadd.f32 0.0, %v8444
  %v8446 = vpop.f32.mrb[0].mxu0
  %v8447 = vadd.f32 0.0, %v8446
  %v8448 = vpop.f32.mrb[0].mxu0
  %v8449 = vpop.f32.mrb[0].mxu0
  %8450 = vdwg.mxu0
  %v8451 = vadd.f32 %v8082, %v8322
  %v8452 = vadd.f32 %v8083, %v8324
  %v8453 = vadd.f32 %v8084, %v8363
  %v8454 = vadd.f32 %v8085, %v8365
  %v8455 = vadd.f32 %v8086, %v8404
  %v8456 = vadd.f32 %v8087, %v8406
  %v8457 = vadd.f32 %v8088, %v8445
  %v8458 = vadd.f32 %v8089, %v8447
  %v8459 = vpack.c.bf16 %v4412, %v4412
  %s8460 = scalar_lea.vmem %s11, 2464
  %v8461 = vld [vmem:[%s8460] sm:$0xff]
  %v8462 = vld [vmem:[%s8460 + $0x8] sm:$0xff]
  %v8463 = vld [vmem:[%s8460 + $0x10] sm:$0xff]
  %v8464 = vld [vmem:[%s8460 + $0x18] sm:$0xff]
  %v8465 = vld [vmem:[%s8460 + $0x20] sm:$0xff]
  %v8466 = vld [vmem:[%s8460 + $0x28] sm:$0xff]
  %v8467 = vld [vmem:[%s8460 + $0x30] sm:$0xff]
  %v8468 = vld [vmem:[%s8460 + $0x38] sm:$0xff]
  %v8469 = vld [vmem:[%s8460 + $0x40] sm:$0xff]
  %v8470 = vld [vmem:[%s8460 + $0x48] sm:$0xff]
  %v8471 = vld [vmem:[%s8460 + $0x50] sm:$0xff]
  %v8472 = vld [vmem:[%s8460 + $0x58] sm:$0xff]
  %v8473 = vld [vmem:[%s8460 + $0x60] sm:$0xff]
  %v8474 = vld [vmem:[%s8460 + $0x68] sm:$0xff]
  %v8475 = vld [vmem:[%s8460 + $0x70] sm:$0xff]
  %v8476 = vld [vmem:[%s8460 + $0x78] sm:$0xff]
  %v8477 = vld [vmem:[%s8460 + $0x80] sm:$0xff]
  %v8478 = vld [vmem:[%s8460 + $0x88] sm:$0xff]
  %v8479 = vld [vmem:[%s8460 + $0x90] sm:$0xff]
  %v8480 = vld [vmem:[%s8460 + $0x98] sm:$0xff]
  %v8481 = vld [vmem:[%s8460 + $0xa0] sm:$0xff]
  %v8482 = vld [vmem:[%s8460 + $0xa8] sm:$0xff]
  %v8483 = vld [vmem:[%s8460 + $0xb0] sm:$0xff]
  %v8484 = vld [vmem:[%s8460 + $0xb8] sm:$0xff]
  %v8485 = vld [vmem:[%s8460 + $0xc0] sm:$0x11]
  %v8486 = vld [vmem:[%s8460 + $0xc8] sm:$0x11]
  %v8487 = vld [vmem:[%s8460 + $0xd0] sm:$0x11]
  %v8488 = vld [vmem:[%s8460 + $0xd8] sm:$0x11]
  %v8517 = vunpack.c.l.b16 %v8461
  %v8518 = vunpack.c.h.b16 %v8461
  %v8519 = vunpack.c.l.b16 %v8462
  %v8520 = vunpack.c.h.b16 %v8462
  %v8521 = vunpack.c.l.b16 %v8463
  %v8522 = vunpack.c.h.b16 %v8463
  %v8523 = vunpack.c.l.b16 %v8464
  %v8524 = vunpack.c.h.b16 %v8464
  %v8525 = vunpack.c.l.b16 %v8465
  %v8526 = vunpack.c.h.b16 %v8465
  %v8527 = vunpack.c.l.b16 %v8466
  %v8528 = vunpack.c.h.b16 %v8466
  %v8529 = vunpack.c.l.b16 %v8467
  %v8530 = vunpack.c.h.b16 %v8467
  %v8531 = vunpack.c.l.b16 %v8468
  %v8532 = vunpack.c.h.b16 %v8468
  %v8533 = vunpack.c.l.b16 %v8469
  %v8534 = vunpack.c.h.b16 %v8469
  %v8535 = vunpack.c.l.b16 %v8470
  %v8536 = vunpack.c.h.b16 %v8470
  %v8537 = vunpack.c.l.b16 %v8471
  %v8538 = vunpack.c.h.b16 %v8471
  %v8539 = vunpack.c.l.b16 %v8472
  %v8540 = vunpack.c.h.b16 %v8472
  %v8541 = vunpack.c.l.b16 %v8473
  %v8542 = vunpack.c.h.b16 %v8473
  %v8543 = vunpack.c.l.b16 %v8474
  %v8544 = vunpack.c.h.b16 %v8474
  %v8545 = vunpack.c.l.b16 %v8475
  %v8546 = vunpack.c.h.b16 %v8475
  %v8547 = vunpack.c.l.b16 %v8476
  %v8548 = vunpack.c.h.b16 %v8476
  %v8549 = vunpack.c.l.b16 %v8477
  %v8550 = vunpack.c.h.b16 %v8477
  %v8551 = vunpack.c.l.b16 %v8478
  %v8552 = vunpack.c.h.b16 %v8478
  %v8553 = vunpack.c.l.b16 %v8479
  %v8554 = vunpack.c.h.b16 %v8479
  %v8555 = vunpack.c.l.b16 %v8480
  %v8556 = vunpack.c.h.b16 %v8480
  %v8557 = vunpack.c.l.b16 %v8481
  %v8558 = vunpack.c.h.b16 %v8481
  %v8559 = vunpack.c.l.b16 %v8482
  %v8560 = vunpack.c.h.b16 %v8482
  %v8561 = vunpack.c.l.b16 %v8483
  %v8562 = vunpack.c.h.b16 %v8483
  %v8563 = vunpack.c.l.b16 %v8484
  %v8564 = vunpack.c.h.b16 %v8484
  %v8565 = vunpack.c.l.b16 %v8485
  %v8566 = vunpack.c.h.b16 %v8485
  %v8567 = vunpack.c.l.b16 %v8486
  %v8568 = vunpack.c.h.b16 %v8486
  %v8569 = vunpack.c.l.b16 %v8487
  %v8570 = vunpack.c.h.b16 %v8487
  %v8571 = vunpack.c.l.b16 %v8488
  %v8572 = vunpack.c.h.b16 %v8488
  %v8573 = vpack.c.b16 %v8525, %v8517
  %v8574 = vpack.c.b16 %v8526, %v8518
  %v8575 = vpack.c.b16 %v8527, %v8519
  %v8576 = vpack.c.b16 %v8528, %v8520
  %v8577 = vpack.c.b16 %v8529, %v8521
  %v8578 = vpack.c.b16 %v8530, %v8522
  %v8579 = vpack.c.b16 %v8531, %v8523
  %v8580 = vpack.c.b16 %v8532, %v8524
  %v8581 = vpack.c.b16 %v8541, %v8533
  %v8582 = vpack.c.b16 %v8542, %v8534
  %v8583 = vpack.c.b16 %v8543, %v8535
  %v8584 = vpack.c.b16 %v8544, %v8536
  %v8585 = vpack.c.b16 %v8545, %v8537
  %v8586 = vpack.c.b16 %v8546, %v8538
  %v8587 = vpack.c.b16 %v8547, %v8539
  %v8588 = vpack.c.b16 %v8548, %v8540
  %v8589 = vpack.c.b16 %v8557, %v8549
  %v8590 = vpack.c.b16 %v8558, %v8550
  %v8591 = vpack.c.b16 %v8559, %v8551
  %v8592 = vpack.c.b16 %v8560, %v8552
  %v8593 = vpack.c.b16 %v8561, %v8553
  %v8594 = vpack.c.b16 %v8562, %v8554
  %v8595 = vpack.c.b16 %v8563, %v8555
  %v8596 = vpack.c.b16 %v8564, %v8556
  %v8597 = vpack.c.b16 %v8565, %v8565
  %v8598 = vpack.c.b16 %v8566, %v8566
  %v8599 = vpack.c.b16 %v8567, %v8567
  %v8600 = vpack.c.b16 %v8568, %v8568
  %v8601 = vpack.c.b16 %v8569, %v8569
  %v8602 = vpack.c.b16 %v8570, %v8570
  %v8603 = vpack.c.b16 %v8571, %v8571
  %v8604 = vpack.c.b16 %v8572, %v8572
  %v8630 = vsel %vm3666, %v8459, 0
  %v8633 = vsel %vm3691, %v8597, 0
  %v8636 = vsel %vm3691, %v8598, 0
  %v8639 = vsel %vm3691, %v8599, 0
  %v8642 = vsel %vm3691, %v8600, 0
  %v8645 = vsel %vm3691, %v8601, 0
  %v8648 = vsel %vm3691, %v8602, 0
  %v8651 = vsel %vm3691, %v8603, 0
  %v8654 = vsel %vm3691, %v8604, 0
  %8656 = vmatprep.subr.bf16.mxu0 %v8574
  %8657 = vmatpush1.bf16.msra.mxu0 %v8573
  %8658 = vmatprep.subr.bf16.mxu0 %v8582
  %8659 = vmatpush1.bf16.msra.mxu0 %v8581
  %8660 = vmatprep.subr.bf16.mxu0 %v8590
  %8661 = vmatpush1.bf16.msra.mxu0 %v8589
  %8662 = vmatprep.subr.bf16.mxu0 %v8636
  %8663 = vmatpush1.bf16.msra.mxu0 %v8633
  %8664 = vmatprep.subr.bf16.mxu0 0
  %8665 = vmatpush1.bf16.msra.mxu0 0
  %8666 = vmatprep.subr.bf16.mxu0 0
  %8667 = vmatpush1.bf16.msra.mxu0 0
  %8668 = vmatprep.subr.bf16.mxu0 0
  %8669 = vmatpush1.bf16.msra.mxu0 0
  %8670 = vmatprep.subr.bf16.mxu0 0
  %8671 = vmatpush1.bf16.msra.mxu0 0
  %8672 = vmatprep.subr.bf16.mxu0 0
  %8673 = vmatpush1.bf16.msra.mxu0 0
  %8674 = vmatprep.subr.bf16.mxu0 0
  %8675 = vmatpush1.bf16.msra.mxu0 0
  %8676 = vmatprep.subr.bf16.mxu0 0
  %8677 = vmatpush1.bf16.msra.mxu0 0
  %8678 = vmatprep.subr.bf16.mxu0 0
  %8679 = vmatpush1.bf16.msra.mxu0 0
  %8680 = vmatprep.subr.bf16.mxu0 0
  %8681 = vmatpush1.bf16.msra.mxu0 0
  %8682 = vmatprep.subr.bf16.mxu0 0
  %8683 = vmatpush1.bf16.msra.mxu0 0
  %8684 = vmatprep.subr.bf16.mxu0 0
  %8685 = vmatpush1.bf16.msra.mxu0 0
  %8686 = vmatprep.subr.bf16.mxu0 0
  %8687 = vmatpush1.bf16.msra.mxu0 0
  %8688 = vmatprep.mubr.bf16.mxu0 0
  %8689 = vmatmul.mubr.bf16.gmra.mrb[0].mxu0 %v8630
  %v8690 = vpop.f32.mrb[0].mxu0
  %v8691 = vadd.f32 0.0, %v8690
  %v8692 = vpop.f32.mrb[0].mxu0
  %v8693 = vadd.f32 0.0, %v8692
  %v8694 = vpop.f32.mrb[0].mxu0
  %v8695 = vpop.f32.mrb[0].mxu0
  %8696 = vdwg.mxu0
  %8697 = vmatprep.subr.bf16.mxu0 %v8576
  %8698 = vmatpush1.bf16.msra.mxu0 %v8575
  %8699 = vmatprep.subr.bf16.mxu0 %v8584
  %8700 = vmatpush1.bf16.msra.mxu0 %v8583
  %8701 = vmatprep.subr.bf16.mxu0 %v8592
  %8702 = vmatpush1.bf16.msra.mxu0 %v8591
  %8703 = vmatprep.subr.bf16.mxu0 %v8642
  %8704 = vmatpush1.bf16.msra.mxu0 %v8639
  %8705 = vmatprep.subr.bf16.mxu0 0
  %8706 = vmatpush1.bf16.msra.mxu0 0
  %8707 = vmatprep.subr.bf16.mxu0 0
  %8708 = vmatpush1.bf16.msra.mxu0 0
  %8709 = vmatprep.subr.bf16.mxu0 0
  %8710 = vmatpush1.bf16.msra.mxu0 0
  %8711 = vmatprep.subr.bf16.mxu0 0
  %8712 = vmatpush1.bf16.msra.mxu0 0
  %8713 = vmatprep.subr.bf16.mxu0 0
  %8714 = vmatpush1.bf16.msra.mxu0 0
  %8715 = vmatprep.subr.bf16.mxu0 0
  %8716 = vmatpush1.bf16.msra.mxu0 0
  %8717 = vmatprep.subr.bf16.mxu0 0
  %8718 = vmatpush1.bf16.msra.mxu0 0
  %8719 = vmatprep.subr.bf16.mxu0 0
  %8720 = vmatpush1.bf16.msra.mxu0 0
  %8721 = vmatprep.subr.bf16.mxu0 0
  %8722 = vmatpush1.bf16.msra.mxu0 0
  %8723 = vmatprep.subr.bf16.mxu0 0
  %8724 = vmatpush1.bf16.msra.mxu0 0
  %8725 = vmatprep.subr.bf16.mxu0 0
  %8726 = vmatpush1.bf16.msra.mxu0 0
  %8727 = vmatprep.subr.bf16.mxu0 0
  %8728 = vmatpush1.bf16.msra.mxu0 0
  %8729 = vmatprep.mubr.bf16.mxu0 0
  %8730 = vmatmul.mubr.bf16.gmra.mrb[0].mxu0 %v8630
  %v8731 = vpop.f32.mrb[0].mxu0
  %v8732 = vadd.f32 0.0, %v8731
  %v8733 = vpop.f32.mrb[0].mxu0
  %v8734 = vadd.f32 0.0, %v8733
  %v8735 = vpop.f32.mrb[0].mxu0
  %v8736 = vpop.f32.mrb[0].mxu0
  %8737 = vdwg.mxu0
  %8738 = vmatprep.subr.bf16.mxu0 %v8578
  %8739 = vmatpush1.bf16.msra.mxu0 %v8577
  %8740 = vmatprep.subr.bf16.mxu0 %v8586
  %8741 = vmatpush1.bf16.msra.mxu0 %v8585
  %8742 = vmatprep.subr.bf16.mxu0 %v8594
  %8743 = vmatpush1.bf16.msra.mxu0 %v8593
  %8744 = vmatprep.subr.bf16.mxu0 %v8648
  %8745 = vmatpush1.bf16.msra.mxu0 %v8645
  %8746 = vmatprep.subr.bf16.mxu0 0
  %8747 = vmatpush1.bf16.msra.mxu0 0
  %8748 = vmatprep.subr.bf16.mxu0 0
  %8749 = vmatpush1.bf16.msra.mxu0 0
  %8750 = vmatprep.subr.bf16.mxu0 0
  %8751 = vmatpush1.bf16.msra.mxu0 0
  %8752 = vmatprep.subr.bf16.mxu0 0
  %8753 = vmatpush1.bf16.msra.mxu0 0
  %8754 = vmatprep.subr.bf16.mxu0 0
  %8755 = vmatpush1.bf16.msra.mxu0 0
  %8756 = vmatprep.subr.bf16.mxu0 0
  %8757 = vmatpush1.bf16.msra.mxu0 0
  %8758 = vmatprep.subr.bf16.mxu0 0
  %8759 = vmatpush1.bf16.msra.mxu0 0
  %8760 = vmatprep.subr.bf16.mxu0 0
  %8761 = vmatpush1.bf16.msra.mxu0 0
  %8762 = vmatprep.subr.bf16.mxu0 0
  %8763 = vmatpush1.bf16.msra.mxu0 0
  %8764 = vmatprep.subr.bf16.mxu0 0
  %8765 = vmatpush1.bf16.msra.mxu0 0
  %8766 = vmatprep.subr.bf16.mxu0 0
  %8767 = vmatpush1.bf16.msra.mxu0 0
  %8768 = vmatprep.subr.bf16.mxu0 0
  %8769 = vmatpush1.bf16.msra.mxu0 0
  %8770 = vmatprep.mubr.bf16.mxu0 0
  %8771 = vmatmul.mubr.bf16.gmra.mrb[0].mxu0 %v8630
  %v8772 = vpop.f32.mrb[0].mxu0
  %v8773 = vadd.f32 0.0, %v8772
  %v8774 = vpop.f32.mrb[0].mxu0
  %v8775 = vadd.f32 0.0, %v8774
  %v8776 = vpop.f32.mrb[0].mxu0
  %v8777 = vpop.f32.mrb[0].mxu0
  %8778 = vdwg.mxu0
  %8779 = vmatprep.subr.bf16.mxu0 %v8580
  %8780 = vmatpush1.bf16.msra.mxu0 %v8579
  %8781 = vmatprep.subr.bf16.mxu0 %v8588
  %8782 = vmatpush1.bf16.msra.mxu0 %v8587
  %8783 = vmatprep.subr.bf16.mxu0 %v8596
  %8784 = vmatpush1.bf16.msra.mxu0 %v8595
  %8785 = vmatprep.subr.bf16.mxu0 %v8654
  %8786 = vmatpush1.bf16.msra.mxu0 %v8651
  %8787 = vmatprep.subr.bf16.mxu0 0
  %8788 = vmatpush1.bf16.msra.mxu0 0
  %8789 = vmatprep.subr.bf16.mxu0 0
  %8790 = vmatpush1.bf16.msra.mxu0 0
  %8791 = vmatprep.subr.bf16.mxu0 0
  %8792 = vmatpush1.bf16.msra.mxu0 0
  %8793 = vmatprep.subr.bf16.mxu0 0
  %8794 = vmatpush1.bf16.msra.mxu0 0
  %8795 = vmatprep.subr.bf16.mxu0 0
  %8796 = vmatpush1.bf16.msra.mxu0 0
  %8797 = vmatprep.subr.bf16.mxu0 0
  %8798 = vmatpush1.bf16.msra.mxu0 0
  %8799 = vmatprep.subr.bf16.mxu0 0
  %8800 = vmatpush1.bf16.msra.mxu0 0
  %8801 = vmatprep.subr.bf16.mxu0 0
  %8802 = vmatpush1.bf16.msra.mxu0 0
  %8803 = vmatprep.subr.bf16.mxu0 0
  %8804 = vmatpush1.bf16.msra.mxu0 0
  %8805 = vmatprep.subr.bf16.mxu0 0
  %8806 = vmatpush1.bf16.msra.mxu0 0
  %8807 = vmatprep.subr.bf16.mxu0 0
  %8808 = vmatpush1.bf16.msra.mxu0 0
  %8809 = vmatprep.subr.bf16.mxu0 0
  %8810 = vmatpush1.bf16.msra.mxu0 0
  %8811 = vmatprep.mubr.bf16.mxu0 0
  %8812 = vmatmul.mubr.bf16.gmra.mrb[0].mxu0 %v8630
  %v8813 = vpop.f32.mrb[0].mxu0
  %v8814 = vadd.f32 0.0, %v8813
  %v8815 = vpop.f32.mrb[0].mxu0
  %v8816 = vadd.f32 0.0, %v8815
  %v8817 = vpop.f32.mrb[0].mxu0
  %v8818 = vpop.f32.mrb[0].mxu0
  %8819 = vdwg.mxu0
  %v8820 = vadd.f32 %v8451, %v8691
  %v8821 = vadd.f32 %v8452, %v8693
  %v8822 = vadd.f32 %v8453, %v8732
  %v8823 = vadd.f32 %v8454, %v8734
  %v8824 = vadd.f32 %v8455, %v8773
  %v8825 = vadd.f32 %v8456, %v8775
  %v8826 = vadd.f32 %v8457, %v8814
  %v8827 = vadd.f32 %v8458, %v8816
  %v8828 = vpack.c.bf16 %v4413, %v4413
  %s8829 = scalar_lea.vmem %s11, 2688
  %v8830 = vld [vmem:[%s8829] sm:$0xff]
  %v8831 = vld [vmem:[%s8829 + $0x8] sm:$0xff]
  %v8832 = vld [vmem:[%s8829 + $0x10] sm:$0xff]
  %v8833 = vld [vmem:[%s8829 + $0x18] sm:$0xff]
  %v8834 = vld [vmem:[%s8829 + $0x20] sm:$0xff]
  %v8835 = vld [vmem:[%s8829 + $0x28] sm:$0xff]
  %v8836 = vld [vmem:[%s8829 + $0x30] sm:$0xff]
  %v8837 = vld [vmem:[%s8829 + $0x38] sm:$0xff]
  %v8838 = vld [vmem:[%s8829 + $0x40] sm:$0xff]
  %v8839 = vld [vmem:[%s8829 + $0x48] sm:$0xff]
  %v8840 = vld [vmem:[%s8829 + $0x50] sm:$0xff]
  %v8841 = vld [vmem:[%s8829 + $0x58] sm:$0xff]
  %v8842 = vld [vmem:[%s8829 + $0x60] sm:$0xff]
  %v8843 = vld [vmem:[%s8829 + $0x68] sm:$0xff]
  %v8844 = vld [vmem:[%s8829 + $0x70] sm:$0xff]
  %v8845 = vld [vmem:[%s8829 + $0x78] sm:$0xff]
  %v8846 = vld [vmem:[%s8829 + $0x80] sm:$0xff]
  %v8847 = vld [vmem:[%s8829 + $0x88] sm:$0xff]
  %v8848 = vld [vmem:[%s8829 + $0x90] sm:$0xff]
  %v8849 = vld [vmem:[%s8829 + $0x98] sm:$0xff]
  %v8850 = vld [vmem:[%s8829 + $0xa0] sm:$0xff]
  %v8851 = vld [vmem:[%s8829 + $0xa8] sm:$0xff]
  %v8852 = vld [vmem:[%s8829 + $0xb0] sm:$0xff]
  %v8853 = vld [vmem:[%s8829 + $0xb8] sm:$0xff]
  %v8854 = vld [vmem:[%s8829 + $0xc0] sm:$0x11]
  %v8855 = vld [vmem:[%s8829 + $0xc8] sm:$0x11]
  %v8856 = vld [vmem:[%s8829 + $0xd0] sm:$0x11]
  %v8857 = vld [vmem:[%s8829 + $0xd8] sm:$0x11]
  %v8886 = vunpack.c.l.b16 %v8830
  %v8887 = vunpack.c.h.b16 %v8830
  %v8888 = vunpack.c.l.b16 %v8831
  %v8889 = vunpack.c.h.b16 %v8831
  %v8890 = vunpack.c.l.b16 %v8832
  %v8891 = vunpack.c.h.b16 %v8832
  %v8892 = vunpack.c.l.b16 %v8833
  %v8893 = vunpack.c.h.b16 %v8833
  %v8894 = vunpack.c.l.b16 %v8834
  %v8895 = vunpack.c.h.b16 %v8834
  %v8896 = vunpack.c.l.b16 %v8835
  %v8897 = vunpack.c.h.b16 %v8835
  %v8898 = vunpack.c.l.b16 %v8836
  %v8899 = vunpack.c.h.b16 %v8836
  %v8900 = vunpack.c.l.b16 %v8837
  %v8901 = vunpack.c.h.b16 %v8837
  %v8902 = vunpack.c.l.b16 %v8838
  %v8903 = vunpack.c.h.b16 %v8838
  %v8904 = vunpack.c.l.b16 %v8839
  %v8905 = vunpack.c.h.b16 %v8839
  %v8906 = vunpack.c.l.b16 %v8840
  %v8907 = vunpack.c.h.b16 %v8840
  %v8908 = vunpack.c.l.b16 %v8841
  %v8909 = vunpack.c.h.b16 %v8841
  %v8910 = vunpack.c.l.b16 %v8842
  %v8911 = vunpack.c.h.b16 %v8842
  %v8912 = vunpack.c.l.b16 %v8843
  %v8913 = vunpack.c.h.b16 %v8843
  %v8914 = vunpack.c.l.b16 %v8844
  %v8915 = vunpack.c.h.b16 %v8844
  %v8916 = vunpack.c.l.b16 %v8845
  %v8917 = vunpack.c.h.b16 %v8845
  %v8918 = vunpack.c.l.b16 %v8846
  %v8919 = vunpack.c.h.b16 %v8846
  %v8920 = vunpack.c.l.b16 %v8847
  %v8921 = vunpack.c.h.b16 %v8847
  %v8922 = vunpack.c.l.b16 %v8848
  %v8923 = vunpack.c.h.b16 %v8848
  %v8924 = vunpack.c.l.b16 %v8849
  %v8925 = vunpack.c.h.b16 %v8849
  %v8926 = vunpack.c.l.b16 %v8850
  %v8927 = vunpack.c.h.b16 %v8850
  %v8928 = vunpack.c.l.b16 %v8851
  %v8929 = vunpack.c.h.b16 %v8851
  %v8930 = vunpack.c.l.b16 %v8852
  %v8931 = vunpack.c.h.b16 %v8852
  %v8932 = vunpack.c.l.b16 %v8853
  %v8933 = vunpack.c.h.b16 %v8853
  %v8934 = vunpack.c.l.b16 %v8854
  %v8935 = vunpack.c.h.b16 %v8854
  %v8936 = vunpack.c.l.b16 %v8855
  %v8937 = vunpack.c.h.b16 %v8855
  %v8938 = vunpack.c.l.b16 %v8856
  %v8939 = vunpack.c.h.b16 %v8856
  %v8940 = vunpack.c.l.b16 %v8857
  %v8941 = vunpack.c.h.b16 %v8857
  %v8942 = vpack.c.b16 %v8894, %v8886
  %v8943 = vpack.c.b16 %v8895, %v8887
  %v8944 = vpack.c.b16 %v8896, %v8888
  %v8945 = vpack.c.b16 %v8897, %v8889
  %v8946 = vpack.c.b16 %v8898, %v8890
  %v8947 = vpack.c.b16 %v8899, %v8891
  %v8948 = vpack.c.b16 %v8900, %v8892
  %v8949 = vpack.c.b16 %v8901, %v8893
  %v8950 = vpack.c.b16 %v8910, %v8902
  %v8951 = vpack.c.b16 %v8911, %v8903
  %v8952 = vpack.c.b16 %v8912, %v8904
  %v8953 = vpack.c.b16 %v8913, %v8905
  %v8954 = vpack.c.b16 %v8914, %v8906
  %v8955 = vpack.c.b16 %v8915, %v8907
  %v8956 = vpack.c.b16 %v8916, %v8908
  %v8957 = vpack.c.b16 %v8917, %v8909
  %v8958 = vpack.c.b16 %v8926, %v8918
  %v8959 = vpack.c.b16 %v8927, %v8919
  %v8960 = vpack.c.b16 %v8928, %v8920
  %v8961 = vpack.c.b16 %v8929, %v8921
  %v8962 = vpack.c.b16 %v8930, %v8922
  %v8963 = vpack.c.b16 %v8931, %v8923
  %v8964 = vpack.c.b16 %v8932, %v8924
  %v8965 = vpack.c.b16 %v8933, %v8925
  %v8966 = vpack.c.b16 %v8934, %v8934
  %v8967 = vpack.c.b16 %v8935, %v8935
  %v8968 = vpack.c.b16 %v8936, %v8936
  %v8969 = vpack.c.b16 %v8937, %v8937
  %v8970 = vpack.c.b16 %v8938, %v8938
  %v8971 = vpack.c.b16 %v8939, %v8939
  %v8972 = vpack.c.b16 %v8940, %v8940
  %v8973 = vpack.c.b16 %v8941, %v8941
  %v8999 = vsel %vm3666, %v8828, 0
  %v9002 = vsel %vm3691, %v8966, 0
  %v9005 = vsel %vm3691, %v8967, 0
  %v9008 = vsel %vm3691, %v8968, 0
  %v9011 = vsel %vm3691, %v8969, 0
  %v9014 = vsel %vm3691, %v8970, 0
  %v9017 = vsel %vm3691, %v8971, 0
  %v9020 = vsel %vm3691, %v8972, 0
  %v9023 = vsel %vm3691, %v8973, 0
  %9025 = vmatprep.subr.bf16.mxu0 %v8943
  %9026 = vmatpush1.bf16.msra.mxu0 %v8942
  %9027 = vmatprep.subr.bf16.mxu0 %v8951
  %9028 = vmatpush1.bf16.msra.mxu0 %v8950
  %9029 = vmatprep.subr.bf16.mxu0 %v8959
  %9030 = vmatpush1.bf16.msra.mxu0 %v8958
  %9031 = vmatprep.subr.bf16.mxu0 %v9005
  %9032 = vmatpush1.bf16.msra.mxu0 %v9002
  %9033 = vmatprep.subr.bf16.mxu0 0
  %9034 = vmatpush1.bf16.msra.mxu0 0
  %9035 = vmatprep.subr.bf16.mxu0 0
  %9036 = vmatpush1.bf16.msra.mxu0 0
  %9037 = vmatprep.subr.bf16.mxu0 0
  %9038 = vmatpush1.bf16.msra.mxu0 0
  %9039 = vmatprep.subr.bf16.mxu0 0
  %9040 = vmatpush1.bf16.msra.mxu0 0
  %9041 = vmatprep.subr.bf16.mxu0 0
  %9042 = vmatpush1.bf16.msra.mxu0 0
  %9043 = vmatprep.subr.bf16.mxu0 0
  %9044 = vmatpush1.bf16.msra.mxu0 0
  %9045 = vmatprep.subr.bf16.mxu0 0
  %9046 = vmatpush1.bf16.msra.mxu0 0
  %9047 = vmatprep.subr.bf16.mxu0 0
  %9048 = vmatpush1.bf16.msra.mxu0 0
  %9049 = vmatprep.subr.bf16.mxu0 0
  %9050 = vmatpush1.bf16.msra.mxu0 0
  %9051 = vmatprep.subr.bf16.mxu0 0
  %9052 = vmatpush1.bf16.msra.mxu0 0
  %9053 = vmatprep.subr.bf16.mxu0 0
  %9054 = vmatpush1.bf16.msra.mxu0 0
  %9055 = vmatprep.subr.bf16.mxu0 0
  %9056 = vmatpush1.bf16.msra.mxu0 0
  %9057 = vmatprep.mubr.bf16.mxu0 0
  %9058 = vmatmul.mubr.bf16.gmra.mrb[0].mxu0 %v8999
  %v9059 = vpop.f32.mrb[0].mxu0
  %v9060 = vadd.f32 0.0, %v9059
  %v9061 = vpop.f32.mrb[0].mxu0
  %v9062 = vadd.f32 0.0, %v9061
  %v9063 = vpop.f32.mrb[0].mxu0
  %v9064 = vpop.f32.mrb[0].mxu0
  %9065 = vdwg.mxu0
  %9066 = vmatprep.subr.bf16.mxu0 %v8945
  %9067 = vmatpush1.bf16.msra.mxu0 %v8944
  %9068 = vmatprep.subr.bf16.mxu0 %v8953
  %9069 = vmatpush1.bf16.msra.mxu0 %v8952
  %9070 = vmatprep.subr.bf16.mxu0 %v8961
  %9071 = vmatpush1.bf16.msra.mxu0 %v8960
  %9072 = vmatprep.subr.bf16.mxu0 %v9011
  %9073 = vmatpush1.bf16.msra.mxu0 %v9008
  %9074 = vmatprep.subr.bf16.mxu0 0
  %9075 = vmatpush1.bf16.msra.mxu0 0
  %9076 = vmatprep.subr.bf16.mxu0 0
  %9077 = vmatpush1.bf16.msra.mxu0 0
  %9078 = vmatprep.subr.bf16.mxu0 0
  %9079 = vmatpush1.bf16.msra.mxu0 0
  %9080 = vmatprep.subr.bf16.mxu0 0
  %9081 = vmatpush1.bf16.msra.mxu0 0
  %9082 = vmatprep.subr.bf16.mxu0 0
  %9083 = vmatpush1.bf16.msra.mxu0 0
  %9084 = vmatprep.subr.bf16.mxu0 0
  %9085 = vmatpush1.bf16.msra.mxu0 0
  %9086 = vmatprep.subr.bf16.mxu0 0
  %9087 = vmatpush1.bf16.msra.mxu0 0
  %9088 = vmatprep.subr.bf16.mxu0 0
  %9089 = vmatpush1.bf16.msra.mxu0 0
  %9090 = vmatprep.subr.bf16.mxu0 0
  %9091 = vmatpush1.bf16.msra.mxu0 0
  %9092 = vmatprep.subr.bf16.mxu0 0
  %9093 = vmatpush1.bf16.msra.mxu0 0
  %9094 = vmatprep.subr.bf16.mxu0 0
  %9095 = vmatpush1.bf16.msra.mxu0 0
  %9096 = vmatprep.subr.bf16.mxu0 0
  %9097 = vmatpush1.bf16.msra.mxu0 0
  %9098 = vmatprep.mubr.bf16.mxu0 0
  %9099 = vmatmul.mubr.bf16.gmra.mrb[0].mxu0 %v8999
  %v9100 = vpop.f32.mrb[0].mxu0
  %v9101 = vadd.f32 0.0, %v9100
  %v9102 = vpop.f32.mrb[0].mxu0
  %v9103 = vadd.f32 0.0, %v9102
  %v9104 = vpop.f32.mrb[0].mxu0
  %v9105 = vpop.f32.mrb[0].mxu0
  %9106 = vdwg.mxu0
  %9107 = vmatprep.subr.bf16.mxu0 %v8947
  %9108 = vmatpush1.bf16.msra.mxu0 %v8946
  %9109 = vmatprep.subr.bf16.mxu0 %v8955
  %9110 = vmatpush1.bf16.msra.mxu0 %v8954
  %9111 = vmatprep.subr.bf16.mxu0 %v8963
  %9112 = vmatpush1.bf16.msra.mxu0 %v8962
  %9113 = vmatprep.subr.bf16.mxu0 %v9017
  %9114 = vmatpush1.bf16.msra.mxu0 %v9014
  %9115 = vmatprep.subr.bf16.mxu0 0
  %9116 = vmatpush1.bf16.msra.mxu0 0
  %9117 = vmatprep.subr.bf16.mxu0 0
  %9118 = vmatpush1.bf16.msra.mxu0 0
  %9119 = vmatprep.subr.bf16.mxu0 0
  %9120 = vmatpush1.bf16.msra.mxu0 0
  %9121 = vmatprep.subr.bf16.mxu0 0
  %9122 = vmatpush1.bf16.msra.mxu0 0
  %9123 = vmatprep.subr.bf16.mxu0 0
  %9124 = vmatpush1.bf16.msra.mxu0 0
  %9125 = vmatprep.subr.bf16.mxu0 0
  %9126 = vmatpush1.bf16.msra.mxu0 0
  %9127 = vmatprep.subr.bf16.mxu0 0
  %9128 = vmatpush1.bf16.msra.mxu0 0
  %9129 = vmatprep.subr.bf16.mxu0 0
  %9130 = vmatpush1.bf16.msra.mxu0 0
  %9131 = vmatprep.subr.bf16.mxu0 0
  %9132 = vmatpush1.bf16.msra.mxu0 0
  %9133 = vmatprep.subr.bf16.mxu0 0
  %9134 = vmatpush1.bf16.msra.mxu0 0
  %9135 = vmatprep.subr.bf16.mxu0 0
  %9136 = vmatpush1.bf16.msra.mxu0 0
  %9137 = vmatprep.subr.bf16.mxu0 0
  %9138 = vmatpush1.bf16.msra.mxu0 0
  %9139 = vmatprep.mubr.bf16.mxu0 0
  %9140 = vmatmul.mubr.bf16.gmra.mrb[0].mxu0 %v8999
  %v9141 = vpop.f32.mrb[0].mxu0
  %v9142 = vadd.f32 0.0, %v9141
  %v9143 = vpop.f32.mrb[0].mxu0
  %v9144 = vadd.f32 0.0, %v9143
  %v9145 = vpop.f32.mrb[0].mxu0
  %v9146 = vpop.f32.mrb[0].mxu0
  %9147 = vdwg.mxu0
  %9148 = vmatprep.subr.bf16.mxu0 %v8949
  %9149 = vmatpush1.bf16.msra.mxu0 %v8948
  %9150 = vmatprep.subr.bf16.mxu0 %v8957
  %9151 = vmatpush1.bf16.msra.mxu0 %v8956
  %9152 = vmatprep.subr.bf16.mxu0 %v8965
  %9153 = vmatpush1.bf16.msra.mxu0 %v8964
  %9154 = vmatprep.subr.bf16.mxu0 %v9023
  %9155 = vmatpush1.bf16.msra.mxu0 %v9020
  %9156 = vmatprep.subr.bf16.mxu0 0
  %9157 = vmatpush1.bf16.msra.mxu0 0
  %9158 = vmatprep.subr.bf16.mxu0 0
  %9159 = vmatpush1.bf16.msra.mxu0 0
  %9160 = vmatprep.subr.bf16.mxu0 0
  %9161 = vmatpush1.bf16.msra.mxu0 0
  %9162 = vmatprep.subr.bf16.mxu0 0
  %9163 = vmatpush1.bf16.msra.mxu0 0
  %9164 = vmatprep.subr.bf16.mxu0 0
  %9165 = vmatpush1.bf16.msra.mxu0 0
  %9166 = vmatprep.subr.bf16.mxu0 0
  %9167 = vmatpush1.bf16.msra.mxu0 0
  %9168 = vmatprep.subr.bf16.mxu0 0
  %9169 = vmatpush1.bf16.msra.mxu0 0
  %9170 = vmatprep.subr.bf16.mxu0 0
  %9171 = vmatpush1.bf16.msra.mxu0 0
  %9172 = vmatprep.subr.bf16.mxu0 0
  %9173 = vmatpush1.bf16.msra.mxu0 0
  %9174 = vmatprep.subr.bf16.mxu0 0
  %9175 = vmatpush1.bf16.msra.mxu0 0
  %9176 = vmatprep.subr.bf16.mxu0 0
  %9177 = vmatpush1.bf16.msra.mxu0 0
  %9178 = vmatprep.subr.bf16.mxu0 0
  %9179 = vmatpush1.bf16.msra.mxu0 0
  %9180 = vmatprep.mubr.bf16.mxu0 0
  %9181 = vmatmul.mubr.bf16.gmra.mrb[0].mxu0 %v8999
  %v9182 = vpop.f32.mrb[0].mxu0
  %v9183 = vadd.f32 0.0, %v9182
  %v9184 = vpop.f32.mrb[0].mxu0
  %v9185 = vadd.f32 0.0, %v9184
  %v9186 = vpop.f32.mrb[0].mxu0
  %v9187 = vpop.f32.mrb[0].mxu0
  %9188 = vdwg.mxu0
  %v9189 = vadd.f32 %v8820, %v9060
  %v9190 = vadd.f32 %v8821, %v9062
  %v9191 = vadd.f32 %v8822, %v9101
  %v9192 = vadd.f32 %v8823, %v9103
  %v9193 = vadd.f32 %v8824, %v9142
  %v9194 = vadd.f32 %v8825, %v9144
  %v9195 = vadd.f32 %v8826, %v9183
  %v9196 = vadd.f32 %v8827, %v9185
  %v9197 = vpack.c.bf16 %v4414, %v4414
  %s9198 = scalar_lea.vmem %s11, 2912
  %v9199 = vld [vmem:[%s9198] sm:$0xff]
  %v9200 = vld [vmem:[%s9198 + $0x8] sm:$0xff]
  %v9201 = vld [vmem:[%s9198 + $0x10] sm:$0xff]
  %v9202 = vld [vmem:[%s9198 + $0x18] sm:$0xff]
  %v9203 = vld [vmem:[%s9198 + $0x20] sm:$0xff]
  %v9204 = vld [vmem:[%s9198 + $0x28] sm:$0xff]
  %v9205 = vld [vmem:[%s9198 + $0x30] sm:$0xff]
  %v9206 = vld [vmem:[%s9198 + $0x38] sm:$0xff]
  %v9207 = vld [vmem:[%s9198 + $0x40] sm:$0xff]
  %v9208 = vld [vmem:[%s9198 + $0x48] sm:$0xff]
  %v9209 = vld [vmem:[%s9198 + $0x50] sm:$0xff]
  %v9210 = vld [vmem:[%s9198 + $0x58] sm:$0xff]
  %v9211 = vld [vmem:[%s9198 + $0x60] sm:$0xff]
  %v9212 = vld [vmem:[%s9198 + $0x68] sm:$0xff]
  %v9213 = vld [vmem:[%s9198 + $0x70] sm:$0xff]
  %v9214 = vld [vmem:[%s9198 + $0x78] sm:$0xff]
  %v9215 = vld [vmem:[%s9198 + $0x80] sm:$0xff]
  %v9216 = vld [vmem:[%s9198 + $0x88] sm:$0xff]
  %v9217 = vld [vmem:[%s9198 + $0x90] sm:$0xff]
  %v9218 = vld [vmem:[%s9198 + $0x98] sm:$0xff]
  %v9219 = vld [vmem:[%s9198 + $0xa0] sm:$0xff]
  %v9220 = vld [vmem:[%s9198 + $0xa8] sm:$0xff]
  %v9221 = vld [vmem:[%s9198 + $0xb0] sm:$0xff]
  %v9222 = vld [vmem:[%s9198 + $0xb8] sm:$0xff]
  %v9223 = vld [vmem:[%s9198 + $0xc0] sm:$0x11]
  %v9224 = vld [vmem:[%s9198 + $0xc8] sm:$0x11]
  %v9225 = vld [vmem:[%s9198 + $0xd0] sm:$0x11]
  %v9226 = vld [vmem:[%s9198 + $0xd8] sm:$0x11]
  %v9255 = vunpack.c.l.b16 %v9199
  %v9256 = vunpack.c.h.b16 %v9199
  %v9257 = vunpack.c.l.b16 %v9200
  %v9258 = vunpack.c.h.b16 %v9200
  %v9259 = vunpack.c.l.b16 %v9201
  %v9260 = vunpack.c.h.b16 %v9201
  %v9261 = vunpack.c.l.b16 %v9202
  %v9262 = vunpack.c.h.b16 %v9202
  %v9263 = vunpack.c.l.b16 %v9203
  %v9264 = vunpack.c.h.b16 %v9203
  %v9265 = vunpack.c.l.b16 %v9204
  %v9266 = vunpack.c.h.b16 %v9204
  %v9267 = vunpack.c.l.b16 %v9205
  %v9268 = vunpack.c.h.b16 %v9205
  %v9269 = vunpack.c.l.b16 %v9206
  %v9270 = vunpack.c.h.b16 %v9206
  %v9271 = vunpack.c.l.b16 %v9207
  %v9272 = vunpack.c.h.b16 %v9207
  %v9273 = vunpack.c.l.b16 %v9208
  %v9274 = vunpack.c.h.b16 %v9208
  %v9275 = vunpack.c.l.b16 %v9209
  %v9276 = vunpack.c.h.b16 %v9209
  %v9277 = vunpack.c.l.b16 %v9210
  %v9278 = vunpack.c.h.b16 %v9210
  %v9279 = vunpack.c.l.b16 %v9211
  %v9280 = vunpack.c.h.b16 %v9211
  %v9281 = vunpack.c.l.b16 %v9212
  %v9282 = vunpack.c.h.b16 %v9212
  %v9283 = vunpack.c.l.b16 %v9213
  %v9284 = vunpack.c.h.b16 %v9213
  %v9285 = vunpack.c.l.b16 %v9214
  %v9286 = vunpack.c.h.b16 %v9214
  %v9287 = vunpack.c.l.b16 %v9215
  %v9288 = vunpack.c.h.b16 %v9215
  %v9289 = vunpack.c.l.b16 %v9216
  %v9290 = vunpack.c.h.b16 %v9216
  %v9291 = vunpack.c.l.b16 %v9217
  %v9292 = vunpack.c.h.b16 %v9217
  %v9293 = vunpack.c.l.b16 %v9218
  %v9294 = vunpack.c.h.b16 %v9218
  %v9295 = vunpack.c.l.b16 %v9219
  %v9296 = vunpack.c.h.b16 %v9219
  %v9297 = vunpack.c.l.b16 %v9220
  %v9298 = vunpack.c.h.b16 %v9220
  %v9299 = vunpack.c.l.b16 %v9221
  %v9300 = vunpack.c.h.b16 %v9221
  %v9301 = vunpack.c.l.b16 %v9222
  %v9302 = vunpack.c.h.b16 %v9222
  %v9303 = vunpack.c.l.b16 %v9223
  %v9304 = vunpack.c.h.b16 %v9223
  %v9305 = vunpack.c.l.b16 %v9224
  %v9306 = vunpack.c.h.b16 %v9224
  %v9307 = vunpack.c.l.b16 %v9225
  %v9308 = vunpack.c.h.b16 %v9225
  %v9309 = vunpack.c.l.b16 %v9226
  %v9310 = vunpack.c.h.b16 %v9226
  %v9311 = vpack.c.b16 %v9263, %v9255
  %v9312 = vpack.c.b16 %v9264, %v9256
  %v9313 = vpack.c.b16 %v9265, %v9257
  %v9314 = vpack.c.b16 %v9266, %v9258
  %v9315 = vpack.c.b16 %v9267, %v9259
  %v9316 = vpack.c.b16 %v9268, %v9260
  %v9317 = vpack.c.b16 %v9269, %v9261
  %v9318 = vpack.c.b16 %v9270, %v9262
  %v9319 = vpack.c.b16 %v9279, %v9271
  %v9320 = vpack.c.b16 %v9280, %v9272
  %v9321 = vpack.c.b16 %v9281, %v9273
  %v9322 = vpack.c.b16 %v9282, %v9274
  %v9323 = vpack.c.b16 %v9283, %v9275
  %v9324 = vpack.c.b16 %v9284, %v9276
  %v9325 = vpack.c.b16 %v9285, %v9277
  %v9326 = vpack.c.b16 %v9286, %v9278
  %v9327 = vpack.c.b16 %v9295, %v9287
  %v9328 = vpack.c.b16 %v9296, %v9288
  %v9329 = vpack.c.b16 %v9297, %v9289
  %v9330 = vpack.c.b16 %v9298, %v9290
  %v9331 = vpack.c.b16 %v9299, %v9291
  %v9332 = vpack.c.b16 %v9300, %v9292
  %v9333 = vpack.c.b16 %v9301, %v9293
  %v9334 = vpack.c.b16 %v9302, %v9294
  %v9335 = vpack.c.b16 %v9303, %v9303
  %v9336 = vpack.c.b16 %v9304, %v9304
  %v9337 = vpack.c.b16 %v9305, %v9305
  %v9338 = vpack.c.b16 %v9306, %v9306
  %v9339 = vpack.c.b16 %v9307, %v9307
  %v9340 = vpack.c.b16 %v9308, %v9308
  %v9341 = vpack.c.b16 %v9309, %v9309
  %v9342 = vpack.c.b16 %v9310, %v9310
  %v9368 = vsel %vm3666, %v9197, 0
  %v9371 = vsel %vm3691, %v9335, 0
  %v9374 = vsel %vm3691, %v9336, 0
  %v9377 = vsel %vm3691, %v9337, 0
  %v9380 = vsel %vm3691, %v9338, 0
  %v9383 = vsel %vm3691, %v9339, 0
  %v9386 = vsel %vm3691, %v9340, 0
  %v9389 = vsel %vm3691, %v9341, 0
  %v9392 = vsel %vm3691, %v9342, 0
  %9394 = vmatprep.subr.bf16.mxu0 %v9312
  %9395 = vmatpush1.bf16.msra.mxu0 %v9311
  %9396 = vmatprep.subr.bf16.mxu0 %v9320
  %9397 = vmatpush1.bf16.msra.mxu0 %v9319
  %9398 = vmatprep.subr.bf16.mxu0 %v9328
  %9399 = vmatpush1.bf16.msra.mxu0 %v9327
  %9400 = vmatprep.subr.bf16.mxu0 %v9374
  %9401 = vmatpush1.bf16.msra.mxu0 %v9371
  %9402 = vmatprep.subr.bf16.mxu0 0
  %9403 = vmatpush1.bf16.msra.mxu0 0
  %9404 = vmatprep.subr.bf16.mxu0 0
  %9405 = vmatpush1.bf16.msra.mxu0 0
  %9406 = vmatprep.subr.bf16.mxu0 0
  %9407 = vmatpush1.bf16.msra.mxu0 0
  %9408 = vmatprep.subr.bf16.mxu0 0
  %9409 = vmatpush1.bf16.msra.mxu0 0
  %9410 = vmatprep.subr.bf16.mxu0 0
  %9411 = vmatpush1.bf16.msra.mxu0 0
  %9412 = vmatprep.subr.bf16.mxu0 0
  %9413 = vmatpush1.bf16.msra.mxu0 0
  %9414 = vmatprep.subr.bf16.mxu0 0
  %9415 = vmatpush1.bf16.msra.mxu0 0
  %9416 = vmatprep.subr.bf16.mxu0 0
  %9417 = vmatpush1.bf16.msra.mxu0 0
  %9418 = vmatprep.subr.bf16.mxu0 0
  %9419 = vmatpush1.bf16.msra.mxu0 0
  %9420 = vmatprep.subr.bf16.mxu0 0
  %9421 = vmatpush1.bf16.msra.mxu0 0
  %9422 = vmatprep.subr.bf16.mxu0 0
  %9423 = vmatpush1.bf16.msra.mxu0 0
  %9424 = vmatprep.subr.bf16.mxu0 0
  %9425 = vmatpush1.bf16.msra.mxu0 0
  %9426 = vmatprep.mubr.bf16.mxu0 0
  %9427 = vmatmul.mubr.bf16.gmra.mrb[0].mxu0 %v9368
  %v9428 = vpop.f32.mrb[0].mxu0
  %v9429 = vadd.f32 0.0, %v9428
  %v9430 = vpop.f32.mrb[0].mxu0
  %v9431 = vadd.f32 0.0, %v9430
  %v9432 = vpop.f32.mrb[0].mxu0
  %v9433 = vpop.f32.mrb[0].mxu0
  %9434 = vdwg.mxu0
  %9435 = vmatprep.subr.bf16.mxu0 %v9314
  %9436 = vmatpush1.bf16.msra.mxu0 %v9313
  %9437 = vmatprep.subr.bf16.mxu0 %v9322
  %9438 = vmatpush1.bf16.msra.mxu0 %v9321
  %9439 = vmatprep.subr.bf16.mxu0 %v9330
  %9440 = vmatpush1.bf16.msra.mxu0 %v9329
  %9441 = vmatprep.subr.bf16.mxu0 %v9380
  %9442 = vmatpush1.bf16.msra.mxu0 %v9377
  %9443 = vmatprep.subr.bf16.mxu0 0
  %9444 = vmatpush1.bf16.msra.mxu0 0
  %9445 = vmatprep.subr.bf16.mxu0 0
  %9446 = vmatpush1.bf16.msra.mxu0 0
  %9447 = vmatprep.subr.bf16.mxu0 0
  %9448 = vmatpush1.bf16.msra.mxu0 0
  %9449 = vmatprep.subr.bf16.mxu0 0
  %9450 = vmatpush1.bf16.msra.mxu0 0
  %9451 = vmatprep.subr.bf16.mxu0 0
  %9452 = vmatpush1.bf16.msra.mxu0 0
  %9453 = vmatprep.subr.bf16.mxu0 0
  %9454 = vmatpush1.bf16.msra.mxu0 0
  %9455 = vmatprep.subr.bf16.mxu0 0
  %9456 = vmatpush1.bf16.msra.mxu0 0
  %9457 = vmatprep.subr.bf16.mxu0 0
  %9458 = vmatpush1.bf16.msra.mxu0 0
  %9459 = vmatprep.subr.bf16.mxu0 0
  %9460 = vmatpush1.bf16.msra.mxu0 0
  %9461 = vmatprep.subr.bf16.mxu0 0
  %9462 = vmatpush1.bf16.msra.mxu0 0
  %9463 = vmatprep.subr.bf16.mxu0 0
  %9464 = vmatpush1.bf16.msra.mxu0 0
  %9465 = vmatprep.subr.bf16.mxu0 0
  %9466 = vmatpush1.bf16.msra.mxu0 0
  %9467 = vmatprep.mubr.bf16.mxu0 0
  %9468 = vmatmul.mubr.bf16.gmra.mrb[0].mxu0 %v9368
  %v9469 = vpop.f32.mrb[0].mxu0
  %v9470 = vadd.f32 0.0, %v9469
  %v9471 = vpop.f32.mrb[0].mxu0
  %v9472 = vadd.f32 0.0, %v9471
  %v9473 = vpop.f32.mrb[0].mxu0
  %v9474 = vpop.f32.mrb[0].mxu0
  %9475 = vdwg.mxu0
  %9476 = vmatprep.subr.bf16.mxu0 %v9316
  %9477 = vmatpush1.bf16.msra.mxu0 %v9315
  %9478 = vmatprep.subr.bf16.mxu0 %v9324
  %9479 = vmatpush1.bf16.msra.mxu0 %v9323
  %9480 = vmatprep.subr.bf16.mxu0 %v9332
  %9481 = vmatpush1.bf16.msra.mxu0 %v9331
  %9482 = vmatprep.subr.bf16.mxu0 %v9386
  %9483 = vmatpush1.bf16.msra.mxu0 %v9383
  %9484 = vmatprep.subr.bf16.mxu0 0
  %9485 = vmatpush1.bf16.msra.mxu0 0
  %9486 = vmatprep.subr.bf16.mxu0 0
  %9487 = vmatpush1.bf16.msra.mxu0 0
  %9488 = vmatprep.subr.bf16.mxu0 0
  %9489 = vmatpush1.bf16.msra.mxu0 0
  %9490 = vmatprep.subr.bf16.mxu0 0
  %9491 = vmatpush1.bf16.msra.mxu0 0
  %9492 = vmatprep.subr.bf16.mxu0 0
  %9493 = vmatpush1.bf16.msra.mxu0 0
  %9494 = vmatprep.subr.bf16.mxu0 0
  %9495 = vmatpush1.bf16.msra.mxu0 0
  %9496 = vmatprep.subr.bf16.mxu0 0
  %9497 = vmatpush1.bf16.msra.mxu0 0
  %9498 = vmatprep.subr.bf16.mxu0 0
  %9499 = vmatpush1.bf16.msra.mxu0 0
  %9500 = vmatprep.subr.bf16.mxu0 0
  %9501 = vmatpush1.bf16.msra.mxu0 0
  %9502 = vmatprep.subr.bf16.mxu0 0
  %9503 = vmatpush1.bf16.msra.mxu0 0
  %9504 = vmatprep.subr.bf16.mxu0 0
  %9505 = vmatpush1.bf16.msra.mxu0 0
  %9506 = vmatprep.subr.bf16.mxu0 0
  %9507 = vmatpush1.bf16.msra.mxu0 0
  %9508 = vmatprep.mubr.bf16.mxu0 0
  %9509 = vmatmul.mubr.bf16.gmra.mrb[0].mxu0 %v9368
  %v9510 = vpop.f32.mrb[0].mxu0
  %v9511 = vadd.f32 0.0, %v9510
  %v9512 = vpop.f32.mrb[0].mxu0
  %v9513 = vadd.f32 0.0, %v9512
  %v9514 = vpop.f32.mrb[0].mxu0
  %v9515 = vpop.f32.mrb[0].mxu0
  %9516 = vdwg.mxu0
  %9517 = vmatprep.subr.bf16.mxu0 %v9318
  %9518 = vmatpush1.bf16.msra.mxu0 %v9317
  %9519 = vmatprep.subr.bf16.mxu0 %v9326
  %9520 = vmatpush1.bf16.msra.mxu0 %v9325
  %9521 = vmatprep.subr.bf16.mxu0 %v9334
  %9522 = vmatpush1.bf16.msra.mxu0 %v9333
  %9523 = vmatprep.subr.bf16.mxu0 %v9392
  %9524 = vmatpush1.bf16.msra.mxu0 %v9389
  %9525 = vmatprep.subr.bf16.mxu0 0
  %9526 = vmatpush1.bf16.msra.mxu0 0
  %9527 = vmatprep.subr.bf16.mxu0 0
  %9528 = vmatpush1.bf16.msra.mxu0 0
  %9529 = vmatprep.subr.bf16.mxu0 0
  %9530 = vmatpush1.bf16.msra.mxu0 0
  %9531 = vmatprep.subr.bf16.mxu0 0
  %9532 = vmatpush1.bf16.msra.mxu0 0
  %9533 = vmatprep.subr.bf16.mxu0 0
  %9534 = vmatpush1.bf16.msra.mxu0 0
  %9535 = vmatprep.subr.bf16.mxu0 0
  %9536 = vmatpush1.bf16.msra.mxu0 0
  %9537 = vmatprep.subr.bf16.mxu0 0
  %9538 = vmatpush1.bf16.msra.mxu0 0
  %9539 = vmatprep.subr.bf16.mxu0 0
  %9540 = vmatpush1.bf16.msra.mxu0 0
  %9541 = vmatprep.subr.bf16.mxu0 0
  %9542 = vmatpush1.bf16.msra.mxu0 0
  %9543 = vmatprep.subr.bf16.mxu0 0
  %9544 = vmatpush1.bf16.msra.mxu0 0
  %9545 = vmatprep.subr.bf16.mxu0 0
  %9546 = vmatpush1.bf16.msra.mxu0 0
  %9547 = vmatprep.subr.bf16.mxu0 0
  %9548 = vmatpush1.bf16.msra.mxu0 0
  %9549 = vmatprep.mubr.bf16.mxu0 0
  %9550 = vmatmul.mubr.bf16.gmra.mrb[0].mxu0 %v9368
  %v9551 = vpop.f32.mrb[0].mxu0
  %v9552 = vadd.f32 0.0, %v9551
  %v9553 = vpop.f32.mrb[0].mxu0
  %v9554 = vadd.f32 0.0, %v9553
  %v9555 = vpop.f32.mrb[0].mxu0
  %v9556 = vpop.f32.mrb[0].mxu0
  %9557 = vdwg.mxu0
  %v9558 = vadd.f32 %v9189, %v9429
  %v9559 = vadd.f32 %v9190, %v9431
  %v9560 = vadd.f32 %v9191, %v9470
  %v9561 = vadd.f32 %v9192, %v9472
  %v9562 = vadd.f32 %v9193, %v9511
  %v9563 = vadd.f32 %v9194, %v9513
  %v9564 = vadd.f32 %v9195, %v9552
  %v9565 = vadd.f32 %v9196, %v9554
  %v9566 = vpack.c.bf16 %v4415, %v4415
  %s9567 = scalar_lea.vmem %s11, 3136
  %v9568 = vld [vmem:[%s9567] sm:$0xff]
  %v9569 = vld [vmem:[%s9567 + $0x8] sm:$0xff]
  %v9570 = vld [vmem:[%s9567 + $0x10] sm:$0xff]
  %v9571 = vld [vmem:[%s9567 + $0x18] sm:$0xff]
  %v9572 = vld [vmem:[%s9567 + $0x20] sm:$0xff]
  %v9573 = vld [vmem:[%s9567 + $0x28] sm:$0xff]
  %v9574 = vld [vmem:[%s9567 + $0x30] sm:$0xff]
  %v9575 = vld [vmem:[%s9567 + $0x38] sm:$0xff]
  %v9576 = vld [vmem:[%s9567 + $0x40] sm:$0xff]
  %v9577 = vld [vmem:[%s9567 + $0x48] sm:$0xff]
  %v9578 = vld [vmem:[%s9567 + $0x50] sm:$0xff]
  %v9579 = vld [vmem:[%s9567 + $0x58] sm:$0xff]
  %v9580 = vld [vmem:[%s9567 + $0x60] sm:$0xff]
  %v9581 = vld [vmem:[%s9567 + $0x68] sm:$0xff]
  %v9582 = vld [vmem:[%s9567 + $0x70] sm:$0xff]
  %v9583 = vld [vmem:[%s9567 + $0x78] sm:$0xff]
  %v9584 = vld [vmem:[%s9567 + $0x80] sm:$0xff]
  %v9585 = vld [vmem:[%s9567 + $0x88] sm:$0xff]
  %v9586 = vld [vmem:[%s9567 + $0x90] sm:$0xff]
  %v9587 = vld [vmem:[%s9567 + $0x98] sm:$0xff]
  %v9588 = vld [vmem:[%s9567 + $0xa0] sm:$0xff]
  %v9589 = vld [vmem:[%s9567 + $0xa8] sm:$0xff]
  %v9590 = vld [vmem:[%s9567 + $0xb0] sm:$0xff]
  %v9591 = vld [vmem:[%s9567 + $0xb8] sm:$0xff]
  %v9592 = vld [vmem:[%s9567 + $0xc0] sm:$0x11]
  %v9593 = vld [vmem:[%s9567 + $0xc8] sm:$0x11]
  %v9594 = vld [vmem:[%s9567 + $0xd0] sm:$0x11]
  %v9595 = vld [vmem:[%s9567 + $0xd8] sm:$0x11]
  %v9624 = vunpack.c.l.b16 %v9568
  %v9625 = vunpack.c.h.b16 %v9568
  %v9626 = vunpack.c.l.b16 %v9569
  %v9627 = vunpack.c.h.b16 %v9569
  %v9628 = vunpack.c.l.b16 %v9570
  %v9629 = vunpack.c.h.b16 %v9570
  %v9630 = vunpack.c.l.b16 %v9571
  %v9631 = vunpack.c.h.b16 %v9571
  %v9632 = vunpack.c.l.b16 %v9572
  %v9633 = vunpack.c.h.b16 %v9572
  %v9634 = vunpack.c.l.b16 %v9573
  %v9635 = vunpack.c.h.b16 %v9573
  %v9636 = vunpack.c.l.b16 %v9574
  %v9637 = vunpack.c.h.b16 %v9574
  %v9638 = vunpack.c.l.b16 %v9575
  %v9639 = vunpack.c.h.b16 %v9575
  %v9640 = vunpack.c.l.b16 %v9576
  %v9641 = vunpack.c.h.b16 %v9576
  %v9642 = vunpack.c.l.b16 %v9577
  %v9643 = vunpack.c.h.b16 %v9577
  %v9644 = vunpack.c.l.b16 %v9578
  %v9645 = vunpack.c.h.b16 %v9578
  %v9646 = vunpack.c.l.b16 %v9579
  %v9647 = vunpack.c.h.b16 %v9579
  %v9648 = vunpack.c.l.b16 %v9580
  %v9649 = vunpack.c.h.b16 %v9580
  %v9650 = vunpack.c.l.b16 %v9581
  %v9651 = vunpack.c.h.b16 %v9581
  %v9652 = vunpack.c.l.b16 %v9582
  %v9653 = vunpack.c.h.b16 %v9582
  %v9654 = vunpack.c.l.b16 %v9583
  %v9655 = vunpack.c.h.b16 %v9583
  %v9656 = vunpack.c.l.b16 %v9584
  %v9657 = vunpack.c.h.b16 %v9584
  %v9658 = vunpack.c.l.b16 %v9585
  %v9659 = vunpack.c.h.b16 %v9585
  %v9660 = vunpack.c.l.b16 %v9586
  %v9661 = vunpack.c.h.b16 %v9586
  %v9662 = vunpack.c.l.b16 %v9587
  %v9663 = vunpack.c.h.b16 %v9587
  %v9664 = vunpack.c.l.b16 %v9588
  %v9665 = vunpack.c.h.b16 %v9588
  %v9666 = vunpack.c.l.b16 %v9589
  %v9667 = vunpack.c.h.b16 %v9589
  %v9668 = vunpack.c.l.b16 %v9590
  %v9669 = vunpack.c.h.b16 %v9590
  %v9670 = vunpack.c.l.b16 %v9591
  %v9671 = vunpack.c.h.b16 %v9591
  %v9672 = vunpack.c.l.b16 %v9592
  %v9673 = vunpack.c.h.b16 %v9592
  %v9674 = vunpack.c.l.b16 %v9593
  %v9675 = vunpack.c.h.b16 %v9593
  %v9676 = vunpack.c.l.b16 %v9594
  %v9677 = vunpack.c.h.b16 %v9594
  %v9678 = vunpack.c.l.b16 %v9595
  %v9679 = vunpack.c.h.b16 %v9595
  %v9680 = vpack.c.b16 %v9632, %v9624
  %v9681 = vpack.c.b16 %v9633, %v9625
  %v9682 = vpack.c.b16 %v9634, %v9626
  %v9683 = vpack.c.b16 %v9635, %v9627
  %v9684 = vpack.c.b16 %v9636, %v9628
  %v9685 = vpack.c.b16 %v9637, %v9629
  %v9686 = vpack.c.b16 %v9638, %v9630
  %v9687 = vpack.c.b16 %v9639, %v9631
  %v9688 = vpack.c.b16 %v9648, %v9640
  %v9689 = vpack.c.b16 %v9649, %v9641
  %v9690 = vpack.c.b16 %v9650, %v9642
  %v9691 = vpack.c.b16 %v9651, %v9643
  %v9692 = vpack.c.b16 %v9652, %v9644
  %v9693 = vpack.c.b16 %v9653, %v9645
  %v9694 = vpack.c.b16 %v9654, %v9646
  %v9695 = vpack.c.b16 %v9655, %v9647
  %v9696 = vpack.c.b16 %v9664, %v9656
  %v9697 = vpack.c.b16 %v9665, %v9657
  %v9698 = vpack.c.b16 %v9666, %v9658
  %v9699 = vpack.c.b16 %v9667, %v9659
  %v9700 = vpack.c.b16 %v9668, %v9660
  %v9701 = vpack.c.b16 %v9669, %v9661
  %v9702 = vpack.c.b16 %v9670, %v9662
  %v9703 = vpack.c.b16 %v9671, %v9663
  %v9704 = vpack.c.b16 %v9672, %v9672
  %v9705 = vpack.c.b16 %v9673, %v9673
  %v9706 = vpack.c.b16 %v9674, %v9674
  %v9707 = vpack.c.b16 %v9675, %v9675
  %v9708 = vpack.c.b16 %v9676, %v9676
  %v9709 = vpack.c.b16 %v9677, %v9677
  %v9710 = vpack.c.b16 %v9678, %v9678
  %v9711 = vpack.c.b16 %v9679, %v9679
  %v9737 = vsel %vm3666, %v9566, 0
  %v9740 = vsel %vm3691, %v9704, 0
  %v9743 = vsel %vm3691, %v9705, 0
  %v9746 = vsel %vm3691, %v9706, 0
  %v9749 = vsel %vm3691, %v9707, 0
  %v9752 = vsel %vm3691, %v9708, 0
  %v9755 = vsel %vm3691, %v9709, 0
  %v9758 = vsel %vm3691, %v9710, 0
  %v9761 = vsel %vm3691, %v9711, 0
  %9763 = vmatprep.subr.bf16.mxu0 %v9681
  %9764 = vmatpush1.bf16.msra.mxu0 %v9680
  %9765 = vmatprep.subr.bf16.mxu0 %v9689
  %9766 = vmatpush1.bf16.msra.mxu0 %v9688
  %9767 = vmatprep.subr.bf16.mxu0 %v9697
  %9768 = vmatpush1.bf16.msra.mxu0 %v9696
  %9769 = vmatprep.subr.bf16.mxu0 %v9743
  %9770 = vmatpush1.bf16.msra.mxu0 %v9740
  %9771 = vmatprep.subr.bf16.mxu0 0
  %9772 = vmatpush1.bf16.msra.mxu0 0
  %9773 = vmatprep.subr.bf16.mxu0 0
  %9774 = vmatpush1.bf16.msra.mxu0 0
  %9775 = vmatprep.subr.bf16.mxu0 0
  %9776 = vmatpush1.bf16.msra.mxu0 0
  %9777 = vmatprep.subr.bf16.mxu0 0
  %9778 = vmatpush1.bf16.msra.mxu0 0
  %9779 = vmatprep.subr.bf16.mxu0 0
  %9780 = vmatpush1.bf16.msra.mxu0 0
  %9781 = vmatprep.subr.bf16.mxu0 0
  %9782 = vmatpush1.bf16.msra.mxu0 0
  %9783 = vmatprep.subr.bf16.mxu0 0
  %9784 = vmatpush1.bf16.msra.mxu0 0
  %9785 = vmatprep.subr.bf16.mxu0 0
  %9786 = vmatpush1.bf16.msra.mxu0 0
  %9787 = vmatprep.subr.bf16.mxu0 0
  %9788 = vmatpush1.bf16.msra.mxu0 0
  %9789 = vmatprep.subr.bf16.mxu0 0
  %9790 = vmatpush1.bf16.msra.mxu0 0
  %9791 = vmatprep.subr.bf16.mxu0 0
  %9792 = vmatpush1.bf16.msra.mxu0 0
  %9793 = vmatprep.subr.bf16.mxu0 0
  %9794 = vmatpush1.bf16.msra.mxu0 0
  %9795 = vmatprep.mubr.bf16.mxu0 0
  %9796 = vmatmul.mubr.bf16.gmra.mrb[0].mxu0 %v9737
  %v9797 = vpop.f32.mrb[0].mxu0
  %v9798 = vadd.f32 0.0, %v9797
  %v9799 = vpop.f32.mrb[0].mxu0
  %v9800 = vadd.f32 0.0, %v9799
  %v9801 = vpop.f32.mrb[0].mxu0
  %v9802 = vpop.f32.mrb[0].mxu0
  %9803 = vdwg.mxu0
  %9804 = vmatprep.subr.bf16.mxu0 %v9683
  %9805 = vmatpush1.bf16.msra.mxu0 %v9682
  %9806 = vmatprep.subr.bf16.mxu0 %v9691
  %9807 = vmatpush1.bf16.msra.mxu0 %v9690
  %9808 = vmatprep.subr.bf16.mxu0 %v9699
  %9809 = vmatpush1.bf16.msra.mxu0 %v9698
  %9810 = vmatprep.subr.bf16.mxu0 %v9749
  %9811 = vmatpush1.bf16.msra.mxu0 %v9746
  %9812 = vmatprep.subr.bf16.mxu0 0
  %9813 = vmatpush1.bf16.msra.mxu0 0
  %9814 = vmatprep.subr.bf16.mxu0 0
  %9815 = vmatpush1.bf16.msra.mxu0 0
  %9816 = vmatprep.subr.bf16.mxu0 0
  %9817 = vmatpush1.bf16.msra.mxu0 0
  %9818 = vmatprep.subr.bf16.mxu0 0
  %9819 = vmatpush1.bf16.msra.mxu0 0
  %9820 = vmatprep.subr.bf16.mxu0 0
  %9821 = vmatpush1.bf16.msra.mxu0 0
  %9822 = vmatprep.subr.bf16.mxu0 0
  %9823 = vmatpush1.bf16.msra.mxu0 0
  %9824 = vmatprep.subr.bf16.mxu0 0
  %9825 = vmatpush1.bf16.msra.mxu0 0
  %9826 = vmatprep.subr.bf16.mxu0 0
  %9827 = vmatpush1.bf16.msra.mxu0 0
  %9828 = vmatprep.subr.bf16.mxu0 0
  %9829 = vmatpush1.bf16.msra.mxu0 0
  %9830 = vmatprep.subr.bf16.mxu0 0
  %9831 = vmatpush1.bf16.msra.mxu0 0
  %9832 = vmatprep.subr.bf16.mxu0 0
  %9833 = vmatpush1.bf16.msra.mxu0 0
  %9834 = vmatprep.subr.bf16.mxu0 0
  %9835 = vmatpush1.bf16.msra.mxu0 0
  %9836 = vmatprep.mubr.bf16.mxu0 0
  %9837 = vmatmul.mubr.bf16.gmra.mrb[0].mxu0 %v9737
  %v9838 = vpop.f32.mrb[0].mxu0
  %v9839 = vadd.f32 0.0, %v9838
  %v9840 = vpop.f32.mrb[0].mxu0
  %v9841 = vadd.f32 0.0, %v9840
  %v9842 = vpop.f32.mrb[0].mxu0
  %v9843 = vpop.f32.mrb[0].mxu0
  %9844 = vdwg.mxu0
  %9845 = vmatprep.subr.bf16.mxu0 %v9685
  %9846 = vmatpush1.bf16.msra.mxu0 %v9684
  %9847 = vmatprep.subr.bf16.mxu0 %v9693
  %9848 = vmatpush1.bf16.msra.mxu0 %v9692
  %9849 = vmatprep.subr.bf16.mxu0 %v9701
  %9850 = vmatpush1.bf16.msra.mxu0 %v9700
  %9851 = vmatprep.subr.bf16.mxu0 %v9755
  %9852 = vmatpush1.bf16.msra.mxu0 %v9752
  %9853 = vmatprep.subr.bf16.mxu0 0
  %9854 = vmatpush1.bf16.msra.mxu0 0
  %9855 = vmatprep.subr.bf16.mxu0 0
  %9856 = vmatpush1.bf16.msra.mxu0 0
  %9857 = vmatprep.subr.bf16.mxu0 0
  %9858 = vmatpush1.bf16.msra.mxu0 0
  %9859 = vmatprep.subr.bf16.mxu0 0
  %9860 = vmatpush1.bf16.msra.mxu0 0
  %9861 = vmatprep.subr.bf16.mxu0 0
  %9862 = vmatpush1.bf16.msra.mxu0 0
  %9863 = vmatprep.subr.bf16.mxu0 0
  %9864 = vmatpush1.bf16.msra.mxu0 0
  %9865 = vmatprep.subr.bf16.mxu0 0
  %9866 = vmatpush1.bf16.msra.mxu0 0
  %9867 = vmatprep.subr.bf16.mxu0 0
  %9868 = vmatpush1.bf16.msra.mxu0 0
  %9869 = vmatprep.subr.bf16.mxu0 0
  %9870 = vmatpush1.bf16.msra.mxu0 0
  %9871 = vmatprep.subr.bf16.mxu0 0
  %9872 = vmatpush1.bf16.msra.mxu0 0
  %9873 = vmatprep.subr.bf16.mxu0 0
  %9874 = vmatpush1.bf16.msra.mxu0 0
  %9875 = vmatprep.subr.bf16.mxu0 0
  %9876 = vmatpush1.bf16.msra.mxu0 0
  %9877 = vmatprep.mubr.bf16.mxu0 0
  %9878 = vmatmul.mubr.bf16.gmra.mrb[0].mxu0 %v9737
  %v9879 = vpop.f32.mrb[0].mxu0
  %v9880 = vadd.f32 0.0, %v9879
  %v9881 = vpop.f32.mrb[0].mxu0
  %v9882 = vadd.f32 0.0, %v9881
  %v9883 = vpop.f32.mrb[0].mxu0
  %v9884 = vpop.f32.mrb[0].mxu0
  %9885 = vdwg.mxu0
  %9886 = vmatprep.subr.bf16.mxu0 %v9687
  %9887 = vmatpush1.bf16.msra.mxu0 %v9686
  %9888 = vmatprep.subr.bf16.mxu0 %v9695
  %9889 = vmatpush1.bf16.msra.mxu0 %v9694
  %9890 = vmatprep.subr.bf16.mxu0 %v9703
  %9891 = vmatpush1.bf16.msra.mxu0 %v9702
  %9892 = vmatprep.subr.bf16.mxu0 %v9761
  %9893 = vmatpush1.bf16.msra.mxu0 %v9758
  %9894 = vmatprep.subr.bf16.mxu0 0
  %9895 = vmatpush1.bf16.msra.mxu0 0
  %9896 = vmatprep.subr.bf16.mxu0 0
  %9897 = vmatpush1.bf16.msra.mxu0 0
  %9898 = vmatprep.subr.bf16.mxu0 0
  %9899 = vmatpush1.bf16.msra.mxu0 0
  %9900 = vmatprep.subr.bf16.mxu0 0
  %9901 = vmatpush1.bf16.msra.mxu0 0
  %9902 = vmatprep.subr.bf16.mxu0 0
  %9903 = vmatpush1.bf16.msra.mxu0 0
  %9904 = vmatprep.subr.bf16.mxu0 0
  %9905 = vmatpush1.bf16.msra.mxu0 0
  %9906 = vmatprep.subr.bf16.mxu0 0
  %9907 = vmatpush1.bf16.msra.mxu0 0
  %9908 = vmatprep.subr.bf16.mxu0 0
  %9909 = vmatpush1.bf16.msra.mxu0 0
  %9910 = vmatprep.subr.bf16.mxu0 0
  %9911 = vmatpush1.bf16.msra.mxu0 0
  %9912 = vmatprep.subr.bf16.mxu0 0
  %9913 = vmatpush1.bf16.msra.mxu0 0
  %9914 = vmatprep.subr.bf16.mxu0 0
  %9915 = vmatpush1.bf16.msra.mxu0 0
  %9916 = vmatprep.subr.bf16.mxu0 0
  %9917 = vmatpush1.bf16.msra.mxu0 0
  %9918 = vmatprep.mubr.bf16.mxu0 0
  %9919 = vmatmul.mubr.bf16.gmra.mrb[0].mxu0 %v9737
  %v9920 = vpop.f32.mrb[0].mxu0
  %v9921 = vadd.f32 0.0, %v9920
  %v9922 = vpop.f32.mrb[0].mxu0
  %v9923 = vadd.f32 0.0, %v9922
  %v9924 = vpop.f32.mrb[0].mxu0
  %v9925 = vpop.f32.mrb[0].mxu0
  %9926 = vdwg.mxu0
  %v9927 = vadd.f32 %v9558, %v9798
  %v9928 = vadd.f32 %v9559, %v9800
  %v9929 = vadd.f32 %v9560, %v9839
  %v9930 = vadd.f32 %v9561, %v9841
  %v9931 = vadd.f32 %v9562, %v9880
  %v9932 = vadd.f32 %v9563, %v9882
  %v9933 = vadd.f32 %v9564, %v9921
  %v9934 = vadd.f32 %v9565, %v9923
  %v9935 = vpack.c.bf16 %v4416, %v4416
  %s9936 = scalar_lea.vmem %s11, 3360
  %v9937 = vld [vmem:[%s9936] sm:$0xff]
  %v9938 = vld [vmem:[%s9936 + $0x8] sm:$0xff]
  %v9939 = vld [vmem:[%s9936 + $0x10] sm:$0xff]
  %v9940 = vld [vmem:[%s9936 + $0x18] sm:$0xff]
  %v9941 = vld [vmem:[%s9936 + $0x20] sm:$0xff]
  %v9942 = vld [vmem:[%s9936 + $0x28] sm:$0xff]
  %v9943 = vld [vmem:[%s9936 + $0x30] sm:$0xff]
  %v9944 = vld [vmem:[%s9936 + $0x38] sm:$0xff]
  %v9945 = vld [vmem:[%s9936 + $0x40] sm:$0xff]
  %v9946 = vld [vmem:[%s9936 + $0x48] sm:$0xff]
  %v9947 = vld [vmem:[%s9936 + $0x50] sm:$0xff]
  %v9948 = vld [vmem:[%s9936 + $0x58] sm:$0xff]
  %v9949 = vld [vmem:[%s9936 + $0x60] sm:$0xff]
  %v9950 = vld [vmem:[%s9936 + $0x68] sm:$0xff]
  %v9951 = vld [vmem:[%s9936 + $0x70] sm:$0xff]
  %v9952 = vld [vmem:[%s9936 + $0x78] sm:$0xff]
  %v9953 = vld [vmem:[%s9936 + $0x80] sm:$0xff]
  %v9954 = vld [vmem:[%s9936 + $0x88] sm:$0xff]
  %v9955 = vld [vmem:[%s9936 + $0x90] sm:$0xff]
  %v9956 = vld [vmem:[%s9936 + $0x98] sm:$0xff]
  %v9957 = vld [vmem:[%s9936 + $0xa0] sm:$0xff]
  %v9958 = vld [vmem:[%s9936 + $0xa8] sm:$0xff]
  %v9959 = vld [vmem:[%s9936 + $0xb0] sm:$0xff]
  %v9960 = vld [vmem:[%s9936 + $0xb8] sm:$0xff]
  %v9961 = vld [vmem:[%s9936 + $0xc0] sm:$0x11]
  %v9962 = vld [vmem:[%s9936 + $0xc8] sm:$0x11]
  %v9963 = vld [vmem:[%s9936 + $0xd0] sm:$0x11]
  %v9964 = vld [vmem:[%s9936 + $0xd8] sm:$0x11]
  %v9993 = vunpack.c.l.b16 %v9937
  %v9994 = vunpack.c.h.b16 %v9937
  %v9995 = vunpack.c.l.b16 %v9938
  %v9996 = vunpack.c.h.b16 %v9938
  %v9997 = vunpack.c.l.b16 %v9939
  %v9998 = vunpack.c.h.b16 %v9939
  %v9999 = vunpack.c.l.b16 %v9940
  %v10000 = vunpack.c.h.b16 %v9940
  %v10001 = vunpack.c.l.b16 %v9941
  %v10002 = vunpack.c.h.b16 %v9941
  %v10003 = vunpack.c.l.b16 %v9942
  %v10004 = vunpack.c.h.b16 %v9942
  %v10005 = vunpack.c.l.b16 %v9943
  %v10006 = vunpack.c.h.b16 %v9943
  %v10007 = vunpack.c.l.b16 %v9944
  %v10008 = vunpack.c.h.b16 %v9944
  %v10009 = vunpack.c.l.b16 %v9945
  %v10010 = vunpack.c.h.b16 %v9945
  %v10011 = vunpack.c.l.b16 %v9946
  %v10012 = vunpack.c.h.b16 %v9946
  %v10013 = vunpack.c.l.b16 %v9947
  %v10014 = vunpack.c.h.b16 %v9947
  %v10015 = vunpack.c.l.b16 %v9948
  %v10016 = vunpack.c.h.b16 %v9948
  %v10017 = vunpack.c.l.b16 %v9949
  %v10018 = vunpack.c.h.b16 %v9949
  %v10019 = vunpack.c.l.b16 %v9950
  %v10020 = vunpack.c.h.b16 %v9950
  %v10021 = vunpack.c.l.b16 %v9951
  %v10022 = vunpack.c.h.b16 %v9951
  %v10023 = vunpack.c.l.b16 %v9952
  %v10024 = vunpack.c.h.b16 %v9952
  %v10025 = vunpack.c.l.b16 %v9953
  %v10026 = vunpack.c.h.b16 %v9953
  %v10027 = vunpack.c.l.b16 %v9954
  %v10028 = vunpack.c.h.b16 %v9954
  %v10029 = vunpack.c.l.b16 %v9955
  %v10030 = vunpack.c.h.b16 %v9955
  %v10031 = vunpack.c.l.b16 %v9956
  %v10032 = vunpack.c.h.b16 %v9956
  %v10033 = vunpack.c.l.b16 %v9957
  %v10034 = vunpack.c.h.b16 %v9957
  %v10035 = vunpack.c.l.b16 %v9958
  %v10036 = vunpack.c.h.b16 %v9958
  %v10037 = vunpack.c.l.b16 %v9959
  %v10038 = vunpack.c.h.b16 %v9959
  %v10039 = vunpack.c.l.b16 %v9960
  %v10040 = vunpack.c.h.b16 %v9960
  %v10041 = vunpack.c.l.b16 %v9961
  %v10042 = vunpack.c.h.b16 %v9961
  %v10043 = vunpack.c.l.b16 %v9962
  %v10044 = vunpack.c.h.b16 %v9962
  %v10045 = vunpack.c.l.b16 %v9963
  %v10046 = vunpack.c.h.b16 %v9963
  %v10047 = vunpack.c.l.b16 %v9964
  %v10048 = vunpack.c.h.b16 %v9964
  %v10049 = vpack.c.b16 %v10001, %v9993
  %v10050 = vpack.c.b16 %v10002, %v9994
  %v10051 = vpack.c.b16 %v10003, %v9995
  %v10052 = vpack.c.b16 %v10004, %v9996
  %v10053 = vpack.c.b16 %v10005, %v9997
  %v10054 = vpack.c.b16 %v10006, %v9998
  %v10055 = vpack.c.b16 %v10007, %v9999
  %v10056 = vpack.c.b16 %v10008, %v10000
  %v10057 = vpack.c.b16 %v10017, %v10009
  %v10058 = vpack.c.b16 %v10018, %v10010
  %v10059 = vpack.c.b16 %v10019, %v10011
  %v10060 = vpack.c.b16 %v10020, %v10012
  %v10061 = vpack.c.b16 %v10021, %v10013
  %v10062 = vpack.c.b16 %v10022, %v10014
  %v10063 = vpack.c.b16 %v10023, %v10015
  %v10064 = vpack.c.b16 %v10024, %v10016
  %v10065 = vpack.c.b16 %v10033, %v10025
  %v10066 = vpack.c.b16 %v10034, %v10026
  %v10067 = vpack.c.b16 %v10035, %v10027
  %v10068 = vpack.c.b16 %v10036, %v10028
  %v10069 = vpack.c.b16 %v10037, %v10029
  %v10070 = vpack.c.b16 %v10038, %v10030
  %v10071 = vpack.c.b16 %v10039, %v10031
  %v10072 = vpack.c.b16 %v10040, %v10032
  %v10073 = vpack.c.b16 %v10041, %v10041
  %v10074 = vpack.c.b16 %v10042, %v10042
  %v10075 = vpack.c.b16 %v10043, %v10043
  %v10076 = vpack.c.b16 %v10044, %v10044
  %v10077 = vpack.c.b16 %v10045, %v10045
  %v10078 = vpack.c.b16 %v10046, %v10046
  %v10079 = vpack.c.b16 %v10047, %v10047
  %v10080 = vpack.c.b16 %v10048, %v10048
  %v10106 = vsel %vm3666, %v9935, 0
  %v10109 = vsel %vm3691, %v10073, 0
  %v10112 = vsel %vm3691, %v10074, 0
  %v10115 = vsel %vm3691, %v10075, 0
  %v10118 = vsel %vm3691, %v10076, 0
  %v10121 = vsel %vm3691, %v10077, 0
  %v10124 = vsel %vm3691, %v10078, 0
  %v10127 = vsel %vm3691, %v10079, 0
  %v10130 = vsel %vm3691, %v10080, 0
  %10132 = vmatprep.subr.bf16.mxu0 %v10050
  %10133 = vmatpush1.bf16.msra.mxu0 %v10049
  %10134 = vmatprep.subr.bf16.mxu0 %v10058
  %10135 = vmatpush1.bf16.msra.mxu0 %v10057
  %10136 = vmatprep.subr.bf16.mxu0 %v10066
  %10137 = vmatpush1.bf16.msra.mxu0 %v10065
  %10138 = vmatprep.subr.bf16.mxu0 %v10112
  %10139 = vmatpush1.bf16.msra.mxu0 %v10109
  %10140 = vmatprep.subr.bf16.mxu0 0
  %10141 = vmatpush1.bf16.msra.mxu0 0
  %10142 = vmatprep.subr.bf16.mxu0 0
  %10143 = vmatpush1.bf16.msra.mxu0 0
  %10144 = vmatprep.subr.bf16.mxu0 0
  %10145 = vmatpush1.bf16.msra.mxu0 0
  %10146 = vmatprep.subr.bf16.mxu0 0
  %10147 = vmatpush1.bf16.msra.mxu0 0
  %10148 = vmatprep.subr.bf16.mxu0 0
  %10149 = vmatpush1.bf16.msra.mxu0 0
  %10150 = vmatprep.subr.bf16.mxu0 0
  %10151 = vmatpush1.bf16.msra.mxu0 0
  %10152 = vmatprep.subr.bf16.mxu0 0
  %10153 = vmatpush1.bf16.msra.mxu0 0
  %10154 = vmatprep.subr.bf16.mxu0 0
  %10155 = vmatpush1.bf16.msra.mxu0 0
  %10156 = vmatprep.subr.bf16.mxu0 0
  %10157 = vmatpush1.bf16.msra.mxu0 0
  %10158 = vmatprep.subr.bf16.mxu0 0
  %10159 = vmatpush1.bf16.msra.mxu0 0
  %10160 = vmatprep.subr.bf16.mxu0 0
  %10161 = vmatpush1.bf16.msra.mxu0 0
  %10162 = vmatprep.subr.bf16.mxu0 0
  %10163 = vmatpush1.bf16.msra.mxu0 0
  %10164 = vmatprep.mubr.bf16.mxu0 0
  %10165 = vmatmul.mubr.bf16.gmra.mrb[0].mxu0 %v10106
  %v10166 = vpop.f32.mrb[0].mxu0
  %v10167 = vadd.f32 0.0, %v10166
  %v10168 = vpop.f32.mrb[0].mxu0
  %v10169 = vadd.f32 0.0, %v10168
  %v10170 = vpop.f32.mrb[0].mxu0
  %v10171 = vpop.f32.mrb[0].mxu0
  %10172 = vdwg.mxu0
  %10173 = vmatprep.subr.bf16.mxu0 %v10052
  %10174 = vmatpush1.bf16.msra.mxu0 %v10051
  %10175 = vmatprep.subr.bf16.mxu0 %v10060
  %10176 = vmatpush1.bf16.msra.mxu0 %v10059
  %10177 = vmatprep.subr.bf16.mxu0 %v10068
  %10178 = vmatpush1.bf16.msra.mxu0 %v10067
  %10179 = vmatprep.subr.bf16.mxu0 %v10118
  %10180 = vmatpush1.bf16.msra.mxu0 %v10115
  %10181 = vmatprep.subr.bf16.mxu0 0
  %10182 = vmatpush1.bf16.msra.mxu0 0
  %10183 = vmatprep.subr.bf16.mxu0 0
  %10184 = vmatpush1.bf16.msra.mxu0 0
  %10185 = vmatprep.subr.bf16.mxu0 0
  %10186 = vmatpush1.bf16.msra.mxu0 0
  %10187 = vmatprep.subr.bf16.mxu0 0
  %10188 = vmatpush1.bf16.msra.mxu0 0
  %10189 = vmatprep.subr.bf16.mxu0 0
  %10190 = vmatpush1.bf16.msra.mxu0 0
  %10191 = vmatprep.subr.bf16.mxu0 0
  %10192 = vmatpush1.bf16.msra.mxu0 0
  %10193 = vmatprep.subr.bf16.mxu0 0
  %10194 = vmatpush1.bf16.msra.mxu0 0
  %10195 = vmatprep.subr.bf16.mxu0 0
  %10196 = vmatpush1.bf16.msra.mxu0 0
  %10197 = vmatprep.subr.bf16.mxu0 0
  %10198 = vmatpush1.bf16.msra.mxu0 0
  %10199 = vmatprep.subr.bf16.mxu0 0
  %10200 = vmatpush1.bf16.msra.mxu0 0
  %10201 = vmatprep.subr.bf16.mxu0 0
  %10202 = vmatpush1.bf16.msra.mxu0 0
  %10203 = vmatprep.subr.bf16.mxu0 0
  %10204 = vmatpush1.bf16.msra.mxu0 0
  %10205 = vmatprep.mubr.bf16.mxu0 0
  %10206 = vmatmul.mubr.bf16.gmra.mrb[0].mxu0 %v10106
  %v10207 = vpop.f32.mrb[0].mxu0
  %v10208 = vadd.f32 0.0, %v10207
  %v10209 = vpop.f32.mrb[0].mxu0
  %v10210 = vadd.f32 0.0, %v10209
  %v10211 = vpop.f32.mrb[0].mxu0
  %v10212 = vpop.f32.mrb[0].mxu0
  %10213 = vdwg.mxu0
  %10214 = vmatprep.subr.bf16.mxu0 %v10054
  %10215 = vmatpush1.bf16.msra.mxu0 %v10053
  %10216 = vmatprep.subr.bf16.mxu0 %v10062
  %10217 = vmatpush1.bf16.msra.mxu0 %v10061
  %10218 = vmatprep.subr.bf16.mxu0 %v10070
  %10219 = vmatpush1.bf16.msra.mxu0 %v10069
  %10220 = vmatprep.subr.bf16.mxu0 %v10124
  %10221 = vmatpush1.bf16.msra.mxu0 %v10121
  %10222 = vmatprep.subr.bf16.mxu0 0
  %10223 = vmatpush1.bf16.msra.mxu0 0
  %10224 = vmatprep.subr.bf16.mxu0 0
  %10225 = vmatpush1.bf16.msra.mxu0 0
  %10226 = vmatprep.subr.bf16.mxu0 0
  %10227 = vmatpush1.bf16.msra.mxu0 0
  %10228 = vmatprep.subr.bf16.mxu0 0
  %10229 = vmatpush1.bf16.msra.mxu0 0
  %10230 = vmatprep.subr.bf16.mxu0 0
  %10231 = vmatpush1.bf16.msra.mxu0 0
  %10232 = vmatprep.subr.bf16.mxu0 0
  %10233 = vmatpush1.bf16.msra.mxu0 0
  %10234 = vmatprep.subr.bf16.mxu0 0
  %10235 = vmatpush1.bf16.msra.mxu0 0
  %10236 = vmatprep.subr.bf16.mxu0 0
  %10237 = vmatpush1.bf16.msra.mxu0 0
  %10238 = vmatprep.subr.bf16.mxu0 0
  %10239 = vmatpush1.bf16.msra.mxu0 0
  %10240 = vmatprep.subr.bf16.mxu0 0
  %10241 = vmatpush1.bf16.msra.mxu0 0
  %10242 = vmatprep.subr.bf16.mxu0 0
  %10243 = vmatpush1.bf16.msra.mxu0 0
  %10244 = vmatprep.subr.bf16.mxu0 0
  %10245 = vmatpush1.bf16.msra.mxu0 0
  %10246 = vmatprep.mubr.bf16.mxu0 0
  %10247 = vmatmul.mubr.bf16.gmra.mrb[0].mxu0 %v10106
  %v10248 = vpop.f32.mrb[0].mxu0
  %v10249 = vadd.f32 0.0, %v10248
  %v10250 = vpop.f32.mrb[0].mxu0
  %v10251 = vadd.f32 0.0, %v10250
  %v10252 = vpop.f32.mrb[0].mxu0
  %v10253 = vpop.f32.mrb[0].mxu0
  %10254 = vdwg.mxu0
  %10255 = vmatprep.subr.bf16.mxu0 %v10056
  %10256 = vmatpush1.bf16.msra.mxu0 %v10055
  %10257 = vmatprep.subr.bf16.mxu0 %v10064
  %10258 = vmatpush1.bf16.msra.mxu0 %v10063
  %10259 = vmatprep.subr.bf16.mxu0 %v10072
  %10260 = vmatpush1.bf16.msra.mxu0 %v10071
  %10261 = vmatprep.subr.bf16.mxu0 %v10130
  %10262 = vmatpush1.bf16.msra.mxu0 %v10127
  %10263 = vmatprep.subr.bf16.mxu0 0
  %10264 = vmatpush1.bf16.msra.mxu0 0
  %10265 = vmatprep.subr.bf16.mxu0 0
  %10266 = vmatpush1.bf16.msra.mxu0 0
  %10267 = vmatprep.subr.bf16.mxu0 0
  %10268 = vmatpush1.bf16.msra.mxu0 0
  %10269 = vmatprep.subr.bf16.mxu0 0
  %10270 = vmatpush1.bf16.msra.mxu0 0
  %10271 = vmatprep.subr.bf16.mxu0 0
  %10272 = vmatpush1.bf16.msra.mxu0 0
  %10273 = vmatprep.subr.bf16.mxu0 0
  %10274 = vmatpush1.bf16.msra.mxu0 0
  %10275 = vmatprep.subr.bf16.mxu0 0
  %10276 = vmatpush1.bf16.msra.mxu0 0
  %10277 = vmatprep.subr.bf16.mxu0 0
  %10278 = vmatpush1.bf16.msra.mxu0 0
  %10279 = vmatprep.subr.bf16.mxu0 0
  %10280 = vmatpush1.bf16.msra.mxu0 0
  %10281 = vmatprep.subr.bf16.mxu0 0
  %10282 = vmatpush1.bf16.msra.mxu0 0
  %10283 = vmatprep.subr.bf16.mxu0 0
  %10284 = vmatpush1.bf16.msra.mxu0 0
  %10285 = vmatprep.subr.bf16.mxu0 0
  %10286 = vmatpush1.bf16.msra.mxu0 0
  %10287 = vmatprep.mubr.bf16.mxu0 0
  %10288 = vmatmul.mubr.bf16.gmra.mrb[0].mxu0 %v10106
  %v10289 = vpop.f32.mrb[0].mxu0
  %v10290 = vadd.f32 0.0, %v10289
  %v10291 = vpop.f32.mrb[0].mxu0
  %v10292 = vadd.f32 0.0, %v10291
  %v10293 = vpop.f32.mrb[0].mxu0
  %v10294 = vpop.f32.mrb[0].mxu0
  %10295 = vdwg.mxu0
  %v10296 = vadd.f32 %v9927, %v10167
  %v10297 = vadd.f32 %v9928, %v10169
  %v10298 = vadd.f32 %v9929, %v10208
  %v10299 = vadd.f32 %v9930, %v10210
  %v10300 = vadd.f32 %v9931, %v10249
  %v10301 = vadd.f32 %v9932, %v10251
  %v10302 = vadd.f32 %v9933, %v10290
  %v10303 = vadd.f32 %v9934, %v10292
  %v10304 = vld [vmem:[%s12] sm:$0xff]
  %v10306 = vlaneseq
  %v10307 = vshrl.u32 %v10306, 7
  %v10308 = vsub.s32 0, %v10307
  %v10309 = vrot.slane %v10304, %v10308
  %v10310 = vlaneseq
  %v10311 = vshrl.u32 %v10310, 7
  %v10312 = vsub.s32 1, %v10311
  %v10313 = vrot.slane %v10304, %v10312
  %v10314 = vlaneseq
  %v10315 = vshrl.u32 %v10314, 7
  %v10316 = vsub.s32 2, %v10315
  %v10317 = vrot.slane %v10304, %v10316
  %v10318 = vlaneseq
  %v10319 = vshrl.u32 %v10318, 7
  %v10320 = vsub.s32 3, %v10319
  %v10321 = vrot.slane %v10304, %v10320
  %v10322 = vlaneseq
  %v10323 = vshrl.u32 %v10322, 7
  %v10324 = vsub.s32 4, %v10323
  %v10325 = vrot.slane %v10304, %v10324
  %v10326 = vlaneseq
  %v10327 = vshrl.u32 %v10326, 7
  %v10328 = vsub.s32 5, %v10327
  %v10329 = vrot.slane %v10304, %v10328
  %v10330 = vlaneseq
  %v10331 = vshrl.u32 %v10330, 7
  %v10332 = vsub.s32 6, %v10331
  %v10333 = vrot.slane %v10304, %v10332
  %v10334 = vlaneseq
  %v10335 = vshrl.u32 %v10334, 7
  %v10336 = vsub.s32 7, %v10335
  %v10337 = vrot.slane %v10304, %v10336
  %v10346 = vadd.f32 %v10296, %v10309
  %v10347 = vadd.f32 %v10297, %v10313
  %v10348 = vadd.f32 %v10298, %v10317
  %v10349 = vadd.f32 %v10299, %v10321
  %v10350 = vadd.f32 %v10300, %v10325
  %v10351 = vadd.f32 %v10301, %v10329
  %v10352 = vadd.f32 %v10302, %v10333
  %v10353 = vadd.f32 %v10303, %v10337
  %v10354 = vpack.c.bf16 %v10346, %v10346
  %v10355 = vpack.c.bf16 %v10347, %v10347
  %v10356 = vpack.c.bf16 %v10348, %v10348
  %v10357 = vpack.c.bf16 %v10349, %v10349
  %v10358 = vpack.c.bf16 %v10350, %v10350
  %v10359 = vpack.c.bf16 %v10351, %v10351
  %v10360 = vpack.c.bf16 %v10352, %v10352
  %v10361 = vpack.c.bf16 %v10353, %v10353
  %v10362 = vld [vmem:[%s13] sm:$0xf]
  %v10363 = vld [vmem:[%s13 + $0x4] sm:$0xf]
  %v10364 = vld [vmem:[%s13 + $0x8] sm:$0xf]
  %v10365 = vld [vmem:[%s13 + $0xc] sm:$0xf]
  %v10366 = vld [vmem:[%s13 + $0x10] sm:$0xf]
  %v10367 = vld [vmem:[%s13 + $0x14] sm:$0xf]
  %v10368 = vld [vmem:[%s13 + $0x18] sm:$0xf]
  %v10369 = vld [vmem:[%s13 + $0x1c] sm:$0xf]
  %v10370 = vld [vmem:[%s13 + $0x20] sm:$0xf]
  %v10371 = vld [vmem:[%s13 + $0x24] sm:$0xf]
  %v10372 = vld [vmem:[%s13 + $0x28] sm:$0xf]
  %v10373 = vld [vmem:[%s13 + $0x2c] sm:$0xf]
  %v10374 = vld [vmem:[%s13 + $0x30] sm:$0xf]
  %v10375 = vld [vmem:[%s13 + $0x34] sm:$0xf]
  %v10376 = vld [vmem:[%s13 + $0x38] sm:$0xf]
  %v10377 = vld [vmem:[%s13 + $0x3c] sm:$0xf]
  %v10378 = vld [vmem:[%s13 + $0x40] sm:$0xf]
  %v10379 = vld [vmem:[%s13 + $0x44] sm:$0xf]
  %v10380 = vld [vmem:[%s13 + $0x48] sm:$0xf]
  %v10381 = vld [vmem:[%s13 + $0x4c] sm:$0xf]
  %v10382 = vld [vmem:[%s13 + $0x50] sm:$0xf]
  %v10383 = vld [vmem:[%s13 + $0x54] sm:$0xf]
  %v10384 = vld [vmem:[%s13 + $0x58] sm:$0xf]
  %v10385 = vld [vmem:[%s13 + $0x5c] sm:$0xf]
  %v10386 = vld [vmem:[%s13 + $0x60] sm:$0xf]
  %v10387 = vld [vmem:[%s13 + $0x64] sm:$0xf]
  %v10388 = vld [vmem:[%s13 + $0x68] sm:$0xf]
  %v10389 = vld [vmem:[%s13 + $0x6c] sm:$0xf]
  %v10390 = vld [vmem:[%s13 + $0x70] sm:$0xf]
  %v10391 = vld [vmem:[%s13 + $0x74] sm:$0xf]
  %v10392 = vld [vmem:[%s13 + $0x78] sm:$0xf]
  %v10393 = vld [vmem:[%s13 + $0x7c] sm:$0xf]
  %v10394 = vld [vmem:[%s13 + $0x80] sm:$0xf]
  %v10395 = vld [vmem:[%s13 + $0x84] sm:$0xf]
  %v10396 = vld [vmem:[%s13 + $0x88] sm:$0xf]
  %v10397 = vld [vmem:[%s13 + $0x8c] sm:$0xf]
  %v10398 = vld [vmem:[%s13 + $0x90] sm:$0xf]
  %v10399 = vld [vmem:[%s13 + $0x94] sm:$0xf]
  %v10400 = vld [vmem:[%s13 + $0x98] sm:$0xf]
  %v10401 = vld [vmem:[%s13 + $0x9c] sm:$0xf]
  %v10402 = vld [vmem:[%s13 + $0xa0] sm:$0xf]
  %v10403 = vld [vmem:[%s13 + $0xa4] sm:$0xf]
  %v10404 = vld [vmem:[%s13 + $0xa8] sm:$0xf]
  %v10405 = vld [vmem:[%s13 + $0xac] sm:$0xf]
  %v10406 = vld [vmem:[%s13 + $0xb0] sm:$0xf]
  %v10407 = vld [vmem:[%s13 + $0xb4] sm:$0xf]
  %v10408 = vld [vmem:[%s13 + $0xb8] sm:$0xf]
  %v10409 = vld [vmem:[%s13 + $0xbc] sm:$0xf]
  %v10410 = vld [vmem:[%s13 + $0xc0] sm:$0xf]
  %v10411 = vld [vmem:[%s13 + $0xc4] sm:$0xf]
  %v10412 = vld [vmem:[%s13 + $0xc8] sm:$0xf]
  %v10413 = vld [vmem:[%s13 + $0xcc] sm:$0xf]
  %v10414 = vld [vmem:[%s13 + $0xd0] sm:$0xf]
  %v10415 = vld [vmem:[%s13 + $0xd4] sm:$0xf]
  %v10416 = vld [vmem:[%s13 + $0xd8] sm:$0xf]
  %v10417 = vld [vmem:[%s13 + $0xdc] sm:$0xf]
  %v10418 = vld [vmem:[%s13 + $0xe0] sm:$0xf]
  %v10419 = vld [vmem:[%s13 + $0xe4] sm:$0xf]
  %v10420 = vld [vmem:[%s13 + $0xe8] sm:$0xf]
  %v10421 = vld [vmem:[%s13 + $0xec] sm:$0xf]
  %v10422 = vld [vmem:[%s13 + $0xf0] sm:$0xf]
  %v10423 = vld [vmem:[%s13 + $0xf4] sm:$0xf]
  %v10424 = vld [vmem:[%s13 + $0xf8] sm:$0xf]
  %v10425 = vld [vmem:[%s13 + $0xfc] sm:$0xf]
  %v10426 = vld [vmem:[%s13 + $0x100] sm:$0xf]
  %v10427 = vld [vmem:[%s13 + $0x104] sm:$0xf]
  %v10428 = vld [vmem:[%s13 + $0x108] sm:$0xf]
  %v10429 = vld [vmem:[%s13 + $0x10c] sm:$0xf]
  %v10430 = vld [vmem:[%s13 + $0x110] sm:$0xf]
  %v10431 = vld [vmem:[%s13 + $0x114] sm:$0xf]
  %v10432 = vld [vmem:[%s13 + $0x118] sm:$0xf]
  %v10433 = vld [vmem:[%s13 + $0x11c] sm:$0xf]
  %v10434 = vld [vmem:[%s13 + $0x120] sm:$0xf]
  %v10435 = vld [vmem:[%s13 + $0x124] sm:$0xf]
  %v10436 = vld [vmem:[%s13 + $0x128] sm:$0xf]
  %v10437 = vld [vmem:[%s13 + $0x12c] sm:$0xf]
  %v10438 = vld [vmem:[%s13 + $0x130] sm:$0xf]
  %v10439 = vld [vmem:[%s13 + $0x134] sm:$0xf]
  %v10440 = vld [vmem:[%s13 + $0x138] sm:$0xf]
  %v10441 = vld [vmem:[%s13 + $0x13c] sm:$0xf]
  %v10442 = vld [vmem:[%s13 + $0x140] sm:$0xf]
  %v10443 = vld [vmem:[%s13 + $0x144] sm:$0xf]
  %v10444 = vld [vmem:[%s13 + $0x148] sm:$0xf]
  %v10445 = vld [vmem:[%s13 + $0x14c] sm:$0xf]
  %v10446 = vld [vmem:[%s13 + $0x150] sm:$0xf]
  %v10447 = vld [vmem:[%s13 + $0x154] sm:$0xf]
  %v10448 = vld [vmem:[%s13 + $0x158] sm:$0xf]
  %v10449 = vld [vmem:[%s13 + $0x15c] sm:$0xf]
  %v10450 = vld [vmem:[%s13 + $0x160] sm:$0xf]
  %v10451 = vld [vmem:[%s13 + $0x164] sm:$0xf]
  %v10452 = vld [vmem:[%s13 + $0x168] sm:$0xf]
  %v10453 = vld [vmem:[%s13 + $0x16c] sm:$0xf]
  %v10454 = vld [vmem:[%s13 + $0x170] sm:$0xf]
  %v10455 = vld [vmem:[%s13 + $0x174] sm:$0xf]
  %v10456 = vld [vmem:[%s13 + $0x178] sm:$0xf]
  %v10457 = vld [vmem:[%s13 + $0x17c] sm:$0xf]
  %v10458 = vld [vmem:[%s13 + $0x180] sm:$0xf]
  %v10459 = vld [vmem:[%s13 + $0x184] sm:$0xf]
  %v10460 = vld [vmem:[%s13 + $0x188] sm:$0xf]
  %v10461 = vld [vmem:[%s13 + $0x18c] sm:$0xf]
  %v10462 = vld [vmem:[%s13 + $0x190] sm:$0xf]
  %v10463 = vld [vmem:[%s13 + $0x194] sm:$0xf]
  %v10464 = vld [vmem:[%s13 + $0x198] sm:$0xf]
  %v10465 = vld [vmem:[%s13 + $0x19c] sm:$0xf]
  %v10466 = vld [vmem:[%s13 + $0x1a0] sm:$0xf]
  %v10467 = vld [vmem:[%s13 + $0x1a4] sm:$0xf]
  %v10468 = vld [vmem:[%s13 + $0x1a8] sm:$0xf]
  %v10469 = vld [vmem:[%s13 + $0x1ac] sm:$0xf]
  %v10470 = vld [vmem:[%s13 + $0x1b0] sm:$0xf]
  %v10471 = vld [vmem:[%s13 + $0x1b4] sm:$0xf]
  %v10472 = vld [vmem:[%s13 + $0x1b8] sm:$0xf]
  %v10473 = vld [vmem:[%s13 + $0x1bc] sm:$0xf]
  %v10474 = vld [vmem:[%s13 + $0x1c0] sm:$0xf]
  %v10475 = vld [vmem:[%s13 + $0x1c4] sm:$0xf]
  %v10476 = vld [vmem:[%s13 + $0x1c8] sm:$0xf]
  %v10477 = vld [vmem:[%s13 + $0x1cc] sm:$0xf]
  %v10478 = vld [vmem:[%s13 + $0x1d0] sm:$0xf]
  %v10479 = vld [vmem:[%s13 + $0x1d4] sm:$0xf]
  %v10480 = vld [vmem:[%s13 + $0x1d8] sm:$0xf]
  %v10481 = vld [vmem:[%s13 + $0x1dc] sm:$0xf]
  %v10482 = vld [vmem:[%s13 + $0x1e0] sm:$0xf]
  %v10483 = vld [vmem:[%s13 + $0x1e4] sm:$0xf]
  %v10484 = vld [vmem:[%s13 + $0x1e8] sm:$0xf]
  %v10485 = vld [vmem:[%s13 + $0x1ec] sm:$0xf]
  %v10486 = vld [vmem:[%s13 + $0x1f0] sm:$0xf]
  %v10487 = vld [vmem:[%s13 + $0x1f4] sm:$0xf]
  %v10488 = vld [vmem:[%s13 + $0x1f8] sm:$0xf]
  %v10489 = vld [vmem:[%s13 + $0x1fc] sm:$0xf]
  %v10490 = vld [vmem:[%s14] sm:$0x1]
  %v10492 = vlaneseq
  %v10493 = vshrl.u32 %v10492, 7
  %v10494 = vsub.s32 0, %v10493
  %v10495 = vrot.slane %v10490, %v10494
  %v10625 = vunpack.c.l.b16 %v10362
  %v10626 = vunpack.c.l.b16 %v10363
  %v10627 = vunpack.c.l.b16 %v10364
  %v10628 = vunpack.c.l.b16 %v10365
  %v10629 = vunpack.c.l.b16 %v10366
  %v10630 = vunpack.c.l.b16 %v10367
  %v10631 = vunpack.c.l.b16 %v10368
  %v10632 = vunpack.c.l.b16 %v10369
  %v10633 = vunpack.c.l.b16 %v10370
  %v10634 = vunpack.c.l.b16 %v10371
  %v10635 = vunpack.c.l.b16 %v10372
  %v10636 = vunpack.c.l.b16 %v10373
  %v10637 = vunpack.c.l.b16 %v10374
  %v10638 = vunpack.c.l.b16 %v10375
  %v10639 = vunpack.c.l.b16 %v10376
  %v10640 = vunpack.c.l.b16 %v10377
  %v10641 = vunpack.c.l.b16 %v10378
  %v10642 = vunpack.c.l.b16 %v10379
  %v10643 = vunpack.c.l.b16 %v10380
  %v10644 = vunpack.c.l.b16 %v10381
  %v10645 = vunpack.c.l.b16 %v10382
  %v10646 = vunpack.c.l.b16 %v10383
  %v10647 = vunpack.c.l.b16 %v10384
  %v10648 = vunpack.c.l.b16 %v10385
  %v10649 = vunpack.c.l.b16 %v10386
  %v10650 = vunpack.c.l.b16 %v10387
  %v10651 = vunpack.c.l.b16 %v10388
  %v10652 = vunpack.c.l.b16 %v10389
  %v10653 = vunpack.c.l.b16 %v10390
  %v10654 = vunpack.c.l.b16 %v10391
  %v10655 = vunpack.c.l.b16 %v10392
  %v10656 = vunpack.c.l.b16 %v10393
  %v10657 = vunpack.c.l.b16 %v10394
  %v10658 = vunpack.c.l.b16 %v10395
  %v10659 = vunpack.c.l.b16 %v10396
  %v10660 = vunpack.c.l.b16 %v10397
  %v10661 = vunpack.c.l.b16 %v10398
  %v10662 = vunpack.c.l.b16 %v10399
  %v10663 = vunpack.c.l.b16 %v10400
  %v10664 = vunpack.c.l.b16 %v10401
  %v10665 = vunpack.c.l.b16 %v10402
  %v10666 = vunpack.c.l.b16 %v10403
  %v10667 = vunpack.c.l.b16 %v10404
  %v10668 = vunpack.c.l.b16 %v10405
  %v10669 = vunpack.c.l.b16 %v10406
  %v10670 = vunpack.c.l.b16 %v10407
  %v10671 = vunpack.c.l.b16 %v10408
  %v10672 = vunpack.c.l.b16 %v10409
  %v10673 = vunpack.c.l.b16 %v10410
  %v10674 = vunpack.c.l.b16 %v10411
  %v10675 = vunpack.c.l.b16 %v10412
  %v10676 = vunpack.c.l.b16 %v10413
  %v10677 = vunpack.c.l.b16 %v10414
  %v10678 = vunpack.c.l.b16 %v10415
  %v10679 = vunpack.c.l.b16 %v10416
  %v10680 = vunpack.c.l.b16 %v10417
  %v10681 = vunpack.c.l.b16 %v10418
  %v10682 = vunpack.c.l.b16 %v10419
  %v10683 = vunpack.c.l.b16 %v10420
  %v10684 = vunpack.c.l.b16 %v10421
  %v10685 = vunpack.c.l.b16 %v10422
  %v10686 = vunpack.c.l.b16 %v10423
  %v10687 = vunpack.c.l.b16 %v10424
  %v10688 = vunpack.c.l.b16 %v10425
  %v10689 = vunpack.c.l.b16 %v10426
  %v10690 = vunpack.c.l.b16 %v10427
  %v10691 = vunpack.c.l.b16 %v10428
  %v10692 = vunpack.c.l.b16 %v10429
  %v10693 = vunpack.c.l.b16 %v10430
  %v10694 = vunpack.c.l.b16 %v10431
  %v10695 = vunpack.c.l.b16 %v10432
  %v10696 = vunpack.c.l.b16 %v10433
  %v10697 = vunpack.c.l.b16 %v10434
  %v10698 = vunpack.c.l.b16 %v10435
  %v10699 = vunpack.c.l.b16 %v10436
  %v10700 = vunpack.c.l.b16 %v10437
  %v10701 = vunpack.c.l.b16 %v10438
  %v10702 = vunpack.c.l.b16 %v10439
  %v10703 = vunpack.c.l.b16 %v10440
  %v10704 = vunpack.c.l.b16 %v10441
  %v10705 = vunpack.c.l.b16 %v10442
  %v10706 = vunpack.c.l.b16 %v10443
  %v10707 = vunpack.c.l.b16 %v10444
  %v10708 = vunpack.c.l.b16 %v10445
  %v10709 = vunpack.c.l.b16 %v10446
  %v10710 = vunpack.c.l.b16 %v10447
  %v10711 = vunpack.c.l.b16 %v10448
  %v10712 = vunpack.c.l.b16 %v10449
  %v10713 = vunpack.c.l.b16 %v10450
  %v10714 = vunpack.c.l.b16 %v10451
  %v10715 = vunpack.c.l.b16 %v10452
  %v10716 = vunpack.c.l.b16 %v10453
  %v10717 = vunpack.c.l.b16 %v10454
  %v10718 = vunpack.c.l.b16 %v10455
  %v10719 = vunpack.c.l.b16 %v10456
  %v10720 = vunpack.c.l.b16 %v10457
  %v10721 = vunpack.c.l.b16 %v10458
  %v10722 = vunpack.c.l.b16 %v10459
  %v10723 = vunpack.c.l.b16 %v10460
  %v10724 = vunpack.c.l.b16 %v10461
  %v10725 = vunpack.c.l.b16 %v10462
  %v10726 = vunpack.c.l.b16 %v10463
  %v10727 = vunpack.c.l.b16 %v10464
  %v10728 = vunpack.c.l.b16 %v10465
  %v10729 = vunpack.c.l.b16 %v10466
  %v10730 = vunpack.c.l.b16 %v10467
  %v10731 = vunpack.c.l.b16 %v10468
  %v10732 = vunpack.c.l.b16 %v10469
  %v10733 = vunpack.c.l.b16 %v10470
  %v10734 = vunpack.c.l.b16 %v10471
  %v10735 = vunpack.c.l.b16 %v10472
  %v10736 = vunpack.c.l.b16 %v10473
  %v10737 = vunpack.c.l.b16 %v10474
  %v10738 = vunpack.c.l.b16 %v10475
  %v10739 = vunpack.c.l.b16 %v10476
  %v10740 = vunpack.c.l.b16 %v10477
  %v10741 = vunpack.c.l.b16 %v10478
  %v10742 = vunpack.c.l.b16 %v10479
  %v10743 = vunpack.c.l.b16 %v10480
  %v10744 = vunpack.c.l.b16 %v10481
  %v10745 = vunpack.c.l.b16 %v10482
  %v10746 = vunpack.c.l.b16 %v10483
  %v10747 = vunpack.c.l.b16 %v10484
  %v10748 = vunpack.c.l.b16 %v10485
  %v10749 = vunpack.c.l.b16 %v10486
  %v10750 = vunpack.c.l.b16 %v10487
  %v10751 = vunpack.c.l.b16 %v10488
  %v10752 = vunpack.c.l.b16 %v10489
  %v10753 = vpack.c.b16 %v10626, %v10625
  %v10754 = vpack.c.b16 %v10628, %v10627
  %v10755 = vpack.c.b16 %v10630, %v10629
  %v10756 = vpack.c.b16 %v10632, %v10631
  %v10757 = vpack.c.b16 %v10634, %v10633
  %v10758 = vpack.c.b16 %v10636, %v10635
  %v10759 = vpack.c.b16 %v10638, %v10637
  %v10760 = vpack.c.b16 %v10640, %v10639
  %v10761 = vpack.c.b16 %v10642, %v10641
  %v10762 = vpack.c.b16 %v10644, %v10643
  %v10763 = vpack.c.b16 %v10646, %v10645
  %v10764 = vpack.c.b16 %v10648, %v10647
  %v10765 = vpack.c.b16 %v10650, %v10649
  %v10766 = vpack.c.b16 %v10652, %v10651
  %v10767 = vpack.c.b16 %v10654, %v10653
  %v10768 = vpack.c.b16 %v10656, %v10655
  %v10769 = vpack.c.b16 %v10658, %v10657
  %v10770 = vpack.c.b16 %v10660, %v10659
  %v10771 = vpack.c.b16 %v10662, %v10661
  %v10772 = vpack.c.b16 %v10664, %v10663
  %v10773 = vpack.c.b16 %v10666, %v10665
  %v10774 = vpack.c.b16 %v10668, %v10667
  %v10775 = vpack.c.b16 %v10670, %v10669
  %v10776 = vpack.c.b16 %v10672, %v10671
  %v10777 = vpack.c.b16 %v10674, %v10673
  %v10778 = vpack.c.b16 %v10676, %v10675
  %v10779 = vpack.c.b16 %v10678, %v10677
  %v10780 = vpack.c.b16 %v10680, %v10679
  %v10781 = vpack.c.b16 %v10682, %v10681
  %v10782 = vpack.c.b16 %v10684, %v10683
  %v10783 = vpack.c.b16 %v10686, %v10685
  %v10784 = vpack.c.b16 %v10688, %v10687
  %v10785 = vpack.c.b16 %v10690, %v10689
  %v10786 = vpack.c.b16 %v10692, %v10691
  %v10787 = vpack.c.b16 %v10694, %v10693
  %v10788 = vpack.c.b16 %v10696, %v10695
  %v10789 = vpack.c.b16 %v10698, %v10697
  %v10790 = vpack.c.b16 %v10700, %v10699
  %v10791 = vpack.c.b16 %v10702, %v10701
  %v10792 = vpack.c.b16 %v10704, %v10703
  %v10793 = vpack.c.b16 %v10706, %v10705
  %v10794 = vpack.c.b16 %v10708, %v10707
  %v10795 = vpack.c.b16 %v10710, %v10709
  %v10796 = vpack.c.b16 %v10712, %v10711
  %v10797 = vpack.c.b16 %v10714, %v10713
  %v10798 = vpack.c.b16 %v10716, %v10715
  %v10799 = vpack.c.b16 %v10718, %v10717
  %v10800 = vpack.c.b16 %v10720, %v10719
  %v10801 = vpack.c.b16 %v10722, %v10721
  %v10802 = vpack.c.b16 %v10724, %v10723
  %v10803 = vpack.c.b16 %v10726, %v10725
  %v10804 = vpack.c.b16 %v10728, %v10727
  %v10805 = vpack.c.b16 %v10730, %v10729
  %v10806 = vpack.c.b16 %v10732, %v10731
  %v10807 = vpack.c.b16 %v10734, %v10733
  %v10808 = vpack.c.b16 %v10736, %v10735
  %v10809 = vpack.c.b16 %v10738, %v10737
  %v10810 = vpack.c.b16 %v10740, %v10739
  %v10811 = vpack.c.b16 %v10742, %v10741
  %v10812 = vpack.c.b16 %v10744, %v10743
  %v10813 = vpack.c.b16 %v10746, %v10745
  %v10814 = vpack.c.b16 %v10748, %v10747
  %v10815 = vpack.c.b16 %v10750, %v10749
  %v10816 = vpack.c.b16 %v10752, %v10751
  %10881 = vmatprep.subr.bf16.mxu0 0
  %10882 = vmatpush1.bf16.msra.mxu0 %v10753
  %10883 = vmatprep.subr.bf16.mxu0 0
  %10884 = vmatpush1.bf16.msra.mxu0 %v10754
  %10885 = vmatprep.subr.bf16.mxu0 0
  %10886 = vmatpush1.bf16.msra.mxu0 %v10755
  %10887 = vmatprep.subr.bf16.mxu0 0
  %10888 = vmatpush1.bf16.msra.mxu0 %v10756
  %10889 = vmatprep.subr.bf16.mxu0 0
  %10890 = vmatpush1.bf16.msra.mxu0 %v10757
  %10891 = vmatprep.subr.bf16.mxu0 0
  %10892 = vmatpush1.bf16.msra.mxu0 %v10758
  %10893 = vmatprep.subr.bf16.mxu0 0
  %10894 = vmatpush1.bf16.msra.mxu0 %v10759
  %10895 = vmatprep.subr.bf16.mxu0 0
  %10896 = vmatpush1.bf16.msra.mxu0 %v10760
  %10897 = vmatprep.subr.bf16.mxu0 0
  %10898 = vmatpush1.bf16.msra.mxu0 %v10761
  %10899 = vmatprep.subr.bf16.mxu0 0
  %10900 = vmatpush1.bf16.msra.mxu0 %v10762
  %10901 = vmatprep.subr.bf16.mxu0 0
  %10902 = vmatpush1.bf16.msra.mxu0 %v10763
  %10903 = vmatprep.subr.bf16.mxu0 0
  %10904 = vmatpush1.bf16.msra.mxu0 %v10764
  %10905 = vmatprep.subr.bf16.mxu0 0
  %10906 = vmatpush1.bf16.msra.mxu0 %v10765
  %10907 = vmatprep.subr.bf16.mxu0 0
  %10908 = vmatpush1.bf16.msra.mxu0 %v10766
  %10909 = vmatprep.subr.bf16.mxu0 0
  %10910 = vmatpush1.bf16.msra.mxu0 %v10767
  %10911 = vmatprep.subr.bf16.mxu0 0
  %10912 = vmatpush1.bf16.msra.mxu0 %v10768
  %10913 = vmatprep.mubr.bf16.mxu0 %v10355
  %10914 = vmatmul.mubr.bf16.gmra.mrb[0].mxu0 %v10354
  %v10915 = vpop.f32.mrb[0].mxu0
  %v10916 = vadd.f32 %v10495, %v10915
  %v10917 = vpop.f32.mrb[0].mxu0
  %v10918 = vpop.f32.mrb[0].mxu0
  %v10919 = vpop.f32.mrb[0].mxu0
  %10920 = vdwg.mxu0
  %10921 = vmatprep.subr.bf16.mxu0 0
  %10922 = vmatpush1.bf16.msra.mxu0 %v10769
  %10923 = vmatprep.subr.bf16.mxu0 0
  %10924 = vmatpush1.bf16.msra.mxu0 %v10770
  %10925 = vmatprep.subr.bf16.mxu0 0
  %10926 = vmatpush1.bf16.msra.mxu0 %v10771
  %10927 = vmatprep.subr.bf16.mxu0 0
  %10928 = vmatpush1.bf16.msra.mxu0 %v10772
  %10929 = vmatprep.subr.bf16.mxu0 0
  %10930 = vmatpush1.bf16.msra.mxu0 %v10773
  %10931 = vmatprep.subr.bf16.mxu0 0
  %10932 = vmatpush1.bf16.msra.mxu0 %v10774
  %10933 = vmatprep.subr.bf16.mxu0 0
  %10934 = vmatpush1.bf16.msra.mxu0 %v10775
  %10935 = vmatprep.subr.bf16.mxu0 0
  %10936 = vmatpush1.bf16.msra.mxu0 %v10776
  %10937 = vmatprep.subr.bf16.mxu0 0
  %10938 = vmatpush1.bf16.msra.mxu0 %v10777
  %10939 = vmatprep.subr.bf16.mxu0 0
  %10940 = vmatpush1.bf16.msra.mxu0 %v10778
  %10941 = vmatprep.subr.bf16.mxu0 0
  %10942 = vmatpush1.bf16.msra.mxu0 %v10779
  %10943 = vmatprep.subr.bf16.mxu0 0
  %10944 = vmatpush1.bf16.msra.mxu0 %v10780
  %10945 = vmatprep.subr.bf16.mxu0 0
  %10946 = vmatpush1.bf16.msra.mxu0 %v10781
  %10947 = vmatprep.subr.bf16.mxu0 0
  %10948 = vmatpush1.bf16.msra.mxu0 %v10782
  %10949 = vmatprep.subr.bf16.mxu0 0
  %10950 = vmatpush1.bf16.msra.mxu0 %v10783
  %10951 = vmatprep.subr.bf16.mxu0 0
  %10952 = vmatpush1.bf16.msra.mxu0 %v10784
  %10953 = vmatprep.mubr.bf16.mxu0 %v10357
  %10954 = vmatmul.mubr.bf16.gmra.mrb[0].mxu0 %v10356
  %v10955 = vpop.f32.mrb[0].mxu0
  %v10956 = vadd.f32 %v10916, %v10955
  %v10957 = vpop.f32.mrb[0].mxu0
  %v10958 = vpop.f32.mrb[0].mxu0
  %v10959 = vpop.f32.mrb[0].mxu0
  %10960 = vdwg.mxu0
  %10961 = vmatprep.subr.bf16.mxu0 0
  %10962 = vmatpush1.bf16.msra.mxu0 %v10785
  %10963 = vmatprep.subr.bf16.mxu0 0
  %10964 = vmatpush1.bf16.msra.mxu0 %v10786
  %10965 = vmatprep.subr.bf16.mxu0 0
  %10966 = vmatpush1.bf16.msra.mxu0 %v10787
  %10967 = vmatprep.subr.bf16.mxu0 0
  %10968 = vmatpush1.bf16.msra.mxu0 %v10788
  %10969 = vmatprep.subr.bf16.mxu0 0
  %10970 = vmatpush1.bf16.msra.mxu0 %v10789
  %10971 = vmatprep.subr.bf16.mxu0 0
  %10972 = vmatpush1.bf16.msra.mxu0 %v10790
  %10973 = vmatprep.subr.bf16.mxu0 0
  %10974 = vmatpush1.bf16.msra.mxu0 %v10791
  %10975 = vmatprep.subr.bf16.mxu0 0
  %10976 = vmatpush1.bf16.msra.mxu0 %v10792
  %10977 = vmatprep.subr.bf16.mxu0 0
  %10978 = vmatpush1.bf16.msra.mxu0 %v10793
  %10979 = vmatprep.subr.bf16.mxu0 0
  %10980 = vmatpush1.bf16.msra.mxu0 %v10794
  %10981 = vmatprep.subr.bf16.mxu0 0
  %10982 = vmatpush1.bf16.msra.mxu0 %v10795
  %10983 = vmatprep.subr.bf16.mxu0 0
  %10984 = vmatpush1.bf16.msra.mxu0 %v10796
  %10985 = vmatprep.subr.bf16.mxu0 0
  %10986 = vmatpush1.bf16.msra.mxu0 %v10797
  %10987 = vmatprep.subr.bf16.mxu0 0
  %10988 = vmatpush1.bf16.msra.mxu0 %v10798
  %10989 = vmatprep.subr.bf16.mxu0 0
  %10990 = vmatpush1.bf16.msra.mxu0 %v10799
  %10991 = vmatprep.subr.bf16.mxu0 0
  %10992 = vmatpush1.bf16.msra.mxu0 %v10800
  %10993 = vmatprep.mubr.bf16.mxu0 %v10359
  %10994 = vmatmul.mubr.bf16.gmra.mrb[0].mxu0 %v10358
  %v10995 = vpop.f32.mrb[0].mxu0
  %v10996 = vadd.f32 %v10956, %v10995
  %v10997 = vpop.f32.mrb[0].mxu0
  %v10998 = vpop.f32.mrb[0].mxu0
  %v10999 = vpop.f32.mrb[0].mxu0
  %11000 = vdwg.mxu0
  %11001 = vmatprep.subr.bf16.mxu0 0
  %11002 = vmatpush1.bf16.msra.mxu0 %v10801
  %11003 = vmatprep.subr.bf16.mxu0 0
  %11004 = vmatpush1.bf16.msra.mxu0 %v10802
  %11005 = vmatprep.subr.bf16.mxu0 0
  %11006 = vmatpush1.bf16.msra.mxu0 %v10803
  %11007 = vmatprep.subr.bf16.mxu0 0
  %11008 = vmatpush1.bf16.msra.mxu0 %v10804
  %11009 = vmatprep.subr.bf16.mxu0 0
  %11010 = vmatpush1.bf16.msra.mxu0 %v10805
  %11011 = vmatprep.subr.bf16.mxu0 0
  %11012 = vmatpush1.bf16.msra.mxu0 %v10806
  %11013 = vmatprep.subr.bf16.mxu0 0
  %11014 = vmatpush1.bf16.msra.mxu0 %v10807
  %11015 = vmatprep.subr.bf16.mxu0 0
  %11016 = vmatpush1.bf16.msra.mxu0 %v10808
  %11017 = vmatprep.subr.bf16.mxu0 0
  %11018 = vmatpush1.bf16.msra.mxu0 %v10809
  %11019 = vmatprep.subr.bf16.mxu0 0
  %11020 = vmatpush1.bf16.msra.mxu0 %v10810
  %11021 = vmatprep.subr.bf16.mxu0 0
  %11022 = vmatpush1.bf16.msra.mxu0 %v10811
  %11023 = vmatprep.subr.bf16.mxu0 0
  %11024 = vmatpush1.bf16.msra.mxu0 %v10812
  %11025 = vmatprep.subr.bf16.mxu0 0
  %11026 = vmatpush1.bf16.msra.mxu0 %v10813
  %11027 = vmatprep.subr.bf16.mxu0 0
  %11028 = vmatpush1.bf16.msra.mxu0 %v10814
  %11029 = vmatprep.subr.bf16.mxu0 0
  %11030 = vmatpush1.bf16.msra.mxu0 %v10815
  %11031 = vmatprep.subr.bf16.mxu0 0
  %11032 = vmatpush1.bf16.msra.mxu0 %v10816
  %11033 = vmatprep.mubr.bf16.mxu0 %v10361
  %11034 = vmatmul.mubr.bf16.gmra.mrb[0].mxu0 %v10360
  %v11035 = vpop.f32.mrb[0].mxu0
  %v11036 = vadd.f32 %v10996, %v11035
  %v11037 = vpop.f32.mrb[0].mxu0
  %v11038 = vpop.f32.mrb[0].mxu0
  %v11039 = vpop.f32.mrb[0].mxu0
  %11040 = vdwg.mxu0
  %vm11041 = vcmask 130048
  %11042 = vst.msk [vmem:[%s15] sm:$0xff] %vm11041, %v11036
  // Predicated region
  $region62: #{fcn_forward.1} parent=0 // pred_check
    _
  $region63: #{fcn_forward.1} parent=0 // pred_check_branch
    %11044 = sbr.rel (0) target = $region65
  $region64: #{fcn_forward.1} parent=0 // pred_region
    _
  $region65: #{fcn_forward.1} parent=0 // pred_fallthru
    _
  // Predicated region
  $region66: #{fcn_forward.1} parent=0 // pred_check
    _
  $region67: #{fcn_forward.1} parent=0 // pred_check_branch
    %11046 = sbr.rel (0) target = $region69
  $region68: #{fcn_forward.1} parent=0 // pred_region
    _
  $region69: #{fcn_forward.1} parent=0 // pred_fallthru
    _

</llo_original>
